<compile_context>
chip_gen: v5e
topology: v5e:2x2
jax: 0.10.0
libtpu: 0.0.40
codegen_flags: <defaults>
</compile_context>

<pallas_src>
import math
import functools

import numpy as np
import jax
import jax.numpy as jnp
from jax.experimental import pallas as pl
from jax.experimental.pallas import tpu as pltpu

EPS_LN = 1e-5      # nn.LayerNorm default eps
EPS_ATTN = 1e-8    # Token_performer epsilon


# ----------------------------------------------------------------------------
# Fused kernel: upsample (matmul) + Token_performer, feature-major layout.
# Per grid step (one batch element) every activation is (D, T): features on
# sublanes, tokens on lanes.
# ----------------------------------------------------------------------------
def _swt_up4_kernel(x_ref, ut_ref, wkqv_ref, wprm_ref, wproj_ref, w1_ref,
                    w2_ref, vec_ref, out_ref, *, dim, emb, m, offs):
    bf = jnp.bfloat16
    o_g1, o_b1, o_bkqv, o_bproj, o_g2, o_b2, o_bm1, o_bm2 = offs
    g1 = vec_ref[o_g1:o_g1 + dim]
    b1 = vec_ref[o_b1:o_b1 + dim]
    bkqv = vec_ref[o_bkqv:o_bkqv + 3 * emb + 1]
    bproj = vec_ref[o_bproj:o_bproj + emb]
    g2 = vec_ref[o_g2:o_g2 + emb]
    b2 = vec_ref[o_b2:o_b2 + emb]
    bm1 = vec_ref[o_bm1:o_bm1 + emb]
    bm2 = vec_ref[o_bm2:o_bm2 + emb]

    xf = x_ref[0]                                                 # (C_in, Hin*Win)

    # --- 1) bilinear upsample (align_corners=True), lane-dense matmul.
    #     Kept f32: LN over only `dim`=4 channels amplifies rounding here.
    up = jnp.dot(xf, ut_ref[...], preferred_element_type=jnp.float32)  # (C_in, T)

    # --- 2) LayerNorm over channels (sublane axis) ---
    mu = jnp.mean(up, axis=0, keepdims=True)
    var = jnp.mean((up - mu) ** 2, axis=0, keepdims=True)
    xn = (up - mu) * jax.lax.rsqrt(var + EPS_LN) * g1 + b1        # (C_in, T)

    # --- 3) kqv projection (bf16 MXU); row 3*emb is a constant 1.0 row that
    #        later yields ksum / D for free inside the attention matmuls.
    kqv = jnp.dot(wkqv_ref[...], xn.astype(bf),
                  preferred_element_type=jnp.float32) + bkqv      # (3*emb+1, T)
    k = kqv[0:emb]
    q = kqv[emb:2 * emb]
    v = kqv[2 * emb:3 * emb]
    v1 = kqv[2 * emb:3 * emb + 1]                                 # [v ; ones]

    # --- 4) positive random features; 1/sqrt(m) folded into the exponent ---
    w_bf = wprm_ref[...]                                          # (m, emb) bf16
    wtx_k = jnp.dot(w_bf, k.astype(bf), preferred_element_type=jnp.float32)
    wtx_q = jnp.dot(w_bf, q.astype(bf), preferred_element_type=jnp.float32)
    half_log_m = 0.5 * math.log(m)
    kp = jnp.exp(wtx_k - 0.5 * jnp.sum(k * k, axis=0, keepdims=True) - half_log_m)
    qp = jnp.exp(wtx_q - 0.5 * jnp.sum(q * q, axis=0, keepdims=True) - half_log_m)

    # --- 5) linear attention; ksum & D ride along via the ones row ---
    kp_b = kp.astype(bf)
    qp_b = qp.astype(bf)
    # kptv1[n, j] = sum_t v1[n, t] * kp[j, t]   (last row n==emb gives ksum)
    kptv1 = jax.lax.dot_general(v1.astype(bf), kp_b, (((1,), (1,)), ((), ())),
                                preferred_element_type=jnp.float32)  # (emb+1, m)
    y1 = jnp.dot(kptv1.astype(bf), qp_b,
                 preferred_element_type=jnp.float32)                 # (emb+1, T)
    inv_d = pl.reciprocal(y1[emb:emb + 1] + EPS_ATTN, approx=True)   # (1, T) EUP
    y_attn = y1[0:emb] * inv_d                                       # (emb, T)

    # projection + skip through v (dropout = identity, eval mode)
    y = v + (jnp.dot(wproj_ref[...], y_attn.astype(bf),
                     preferred_element_type=jnp.float32) + bproj)

    # --- 6) LayerNorm 2 + MLP (tanh GELU -> EUP) + residual ---
    mu2 = jnp.mean(y, axis=0, keepdims=True)
    var2 = jnp.mean((y - mu2) ** 2, axis=0, keepdims=True)
    yn = (y - mu2) * jax.lax.rsqrt(var2 + EPS_LN) * g2 + b2

    h = jnp.dot(w1_ref[...], yn.astype(bf),
                preferred_element_type=jnp.float32) + bm1
    h = jax.nn.gelu(h, approximate=True)
    h = jnp.dot(w2_ref[...], h.astype(bf),
                preferred_element_type=jnp.float32) + bm2

    # output already transposed: (emb, T), lane-dense
    out_ref[0] = (y + h).astype(out_ref.dtype)


# ----------------------------------------------------------------------------
# Interpolation matrix (align_corners=True, matches nn.UpsamplingBilinear2d),
# built on host and cached per static geometry.
# ----------------------------------------------------------------------------
def _interp_matrix_np(in_size, out_size):
    src = np.arange(out_size, dtype=np.float64) * (in_size - 1) / max(out_size - 1, 1)
    lo = np.floor(src)
    frac = (src - lo).astype(np.float32)
    lo_i = np.clip(lo.astype(np.int64), 0, in_size - 1)
    hi_i = np.clip(lo_i + 1, 0, in_size - 1)
    mat = np.zeros((out_size, in_size), np.float32)
    mat[np.arange(out_size), lo_i] += 1.0 - frac
    mat[np.arange(out_size), hi_i] += frac
    return mat


@functools.lru_cache(maxsize=None)
def _upsample_matrix(h_in, w_in, h_out, w_out):
    uh = _interp_matrix_np(h_in, h_out)                  # (Hout, Hin)
    uw = _interp_matrix_np(w_in, w_out)                  # (Wout, Win)
    return jnp.asarray(np.kron(uh, uw).T, jnp.float32)   # (Hin*Win, T)


def _pack_columns(vecs):
    """Stack (L_i, 1) f32 column vectors into one array with 8-aligned offsets."""
    chunks, offs, off = [], [], 0
    for v in vecs:
        v = jnp.asarray(v, jnp.float32).reshape(-1, 1)
        length = v.shape[0]
        padded = ((length + 7) // 8) * 8
        if padded > length:
            v = jnp.concatenate([v, jnp.zeros((padded - length, 1), jnp.float32)], 0)
        chunks.append(v)
        offs.append(off)
        off += padded
    return jnp.concatenate(chunks, axis=0), tuple(offs)


# ----------------------------------------------------------------------------
# One-time constant preparation (cache the result across forward calls).
# ----------------------------------------------------------------------------
def swt_up4_prepare(params, H, W, up_scale):
    dim = params['g1'].shape[0]
    emb = params['wproj'].shape[0]
    m = params['wprm'].shape[0]
    Hout, Wout = int(round(H * up_scale)), int(round(W * up_scale))
    bf = jnp.bfloat16

    ut = _upsample_matrix(H, W, Hout, Wout)                       # f32 (see note)

    # Extend kqv weight/bias with a zero row / bias 1 -> constant-ones row in
    # kqv, which turns ksum / D into free extra MXU rows downstream.
    wkqv_ext = jnp.concatenate(
        [params['wkqv'], jnp.zeros((1, dim), jnp.float32)], axis=0).astype(bf)
    bkqv_ext = jnp.concatenate(
        [params['bkqv'], jnp.ones((1, 1), jnp.float32)], axis=0)

    vecs, offs = _pack_columns([params['g1'], params['b1'], bkqv_ext,
                                params['bproj'], params['g2'], params['b2'],
                                params['bm1'], params['bm2']])

    return dict(dim=dim, emb=emb, m=m, H=H, W=W, Hout=Hout, Wout=Wout,
                ut=ut, wkqv=wkqv_ext, wprm=params['wprm'].astype(bf),
                wproj=params['wproj'].astype(bf), w1=params['w1'].astype(bf),
                w2=params['w2'].astype(bf), vecs=vecs, offs=offs)


# ----------------------------------------------------------------------------
# Forward pass: one fused pallas_call over the batch.
# ----------------------------------------------------------------------------
def swt_up4_apply(x, prep, SC=None, reshape=True):
    # TODO(synk): optional SC skip-connection concat path not implemented (SC=None assumed).
    assert SC is None
    B, C_in, H, W = x.shape
    assert (H, W) == (prep['H'], prep['W']) and C_in == prep['dim']
    emb, m, dim = prep['emb'], prep['m'], prep['dim']
    T = prep['Hout'] * prep['Wout']

    xf = x.reshape(B, C_in, H * W).astype(jnp.float32)
    weights = [prep['ut'], prep['wkqv'], prep['wprm'], prep['wproj'],
               prep['w1'], prep['w2'], prep['vecs']]

    def full_spec(a):
        n = a.ndim
        return pl.BlockSpec(a.shape, lambda b, _n=n: (0,) * _n)

    kernel = functools.partial(_swt_up4_kernel, dim=dim, emb=emb, m=m,
                               offs=prep['offs'])
    out = pl.pallas_call(
        kernel,
        out_shape=jax.ShapeDtypeStruct((B, emb, T), jnp.float32),
        grid=(B,),
        in_specs=[pl.BlockSpec((1, C_in, H * W), lambda b: (b, 0, 0))]
                 + [full_spec(a) for a in weights],
        out_specs=pl.BlockSpec((1, emb, T), lambda b: (b, 0, 0)),
        compiler_params=pltpu.CompilerParams(dimension_semantics=("parallel",)),
    )(xf, *weights)

    if reshape:
        return out.reshape(B, emb, prep['Hout'], prep['Wout'])
    return jnp.transpose(out, (0, 2, 1))


def swt_up4(x, params, up_scale, size=None, SC=None, reshape=True):
    """Convenience wrapper matching the PyTorch forward signature."""
    B, C_in, H, W = x.shape
    Hout, Wout = int(round(H * up_scale)), int(round(W * up_scale))
    if size is not None:
        # the reshape target must match the actual upsample output size
        assert (int(size[0] * up_scale), int(size[1] * up_scale)) == (Hout, Wout)
    prep = swt_up4_prepare(params, H, W, up_scale)
    return swt_up4_apply(x, prep, SC=SC, reshape=reshape)


# ----------------------------------------------------------------------------
# Parameter init (PyTorch-style orientations: Linear weights are (out, in),
# biases / LN params are column vectors so they broadcast along the token/lane
# axis inside the kernel).
# ----------------------------------------------------------------------------
def init_params(key, dim, emb, m):
    ks = jax.random.split(key, 5)

    def lin(k, fan_in, fan_out):
        bound = 1.0 / math.sqrt(fan_in)
        kw, kb = jax.random.split(k)
        w = jax.random.uniform(kw, (fan_out, fan_in), jnp.float32, -bound, bound)
        b = jax.random.uniform(kb, (fan_out, 1), jnp.float32, -bound, bound)
        return w, b

    wkqv, bkqv = lin(ks[0], dim, 3 * emb)
    wproj, bproj = lin(ks[1], emb, emb)
    w1, bm1 = lin(ks[2], emb, emb)
    w2, bm2 = lin(ks[3], emb, emb)
    # performer random features: orthogonal rows scaled by sqrt(m)
    g = jax.random.normal(ks[4], (emb, m), jnp.float32)
    qmat, _ = jnp.linalg.qr(g)                  # (emb, m) orthonormal columns
    wprm = qmat.T * math.sqrt(m)                # (m, emb)
    return dict(
        g1=jnp.ones((dim, 1), jnp.float32), b1=jnp.zeros((dim, 1), jnp.float32),
        wkqv=wkqv, bkqv=bkqv, wprm=wprm, wproj=wproj, bproj=bproj,
        g2=jnp.ones((emb, 1), jnp.float32), b2=jnp.zeros((emb, 1), jnp.float32),
        w1=w1, bm1=bm1, w2=w2, bm2=bm2)


# ----------------------------------------------------------------------------
# Pure-JAX f32 reference (standard token layout) for the correctness check.
# ----------------------------------------------------------------------------
def swt_up4_ref(x, params, up_scale, size):
    B, C, H, W = x.shape
    Hout, Wout = int(round(H * up_scale)), int(round(W * up_scale))
    hi = jax.lax.Precision.HIGHEST
    uh = jnp.asarray(_interp_matrix_np(H, Hout))
    uw = jnp.asarray(_interp_matrix_np(W, Wout))
    up = jnp.einsum('bchw,yh,xw->bcyx', x, uh, uw, precision=hi)
    tok = up.reshape(B, C, Hout * Wout).transpose(0, 2, 1)        # (B, T, C)

    emb = params['wproj'].shape[0]
    m = params['wprm'].shape[0]
    mu = tok.mean(-1, keepdims=True)
    var = ((tok - mu) ** 2).mean(-1, keepdims=True)
    xn = (tok - mu) * jax.lax.rsqrt(var + EPS_LN) * params['g1'][:, 0] + params['b1'][:, 0]
    kqv = jnp.einsum('btd,ed->bte', xn, params['wkqv'], precision=hi) + params['bkqv'][:, 0]
    k, q, v = kqv[..., :emb], kqv[..., emb:2 * emb], kqv[..., 2 * emb:]

    w = params['wprm']

    def prm(z):
        xd = 0.5 * jnp.sum(z * z, -1, keepdims=True)
        wtx = jnp.einsum('bte,me->btm', z, w, precision=hi)
        return jnp.exp(wtx - xd) / math.sqrt(m)

    kp, qp = prm(k), prm(q)
    D = jnp.einsum('btm,bm->bt', qp, kp.sum(1), precision=hi)[..., None]
    kptv = jnp.einsum('btn,btm->bnm', v, kp, precision=hi)
    y = jnp.einsum('btm,bnm->btn', qp, kptv, precision=hi) / (D + EPS_ATTN)
    y = v + (jnp.einsum('btn,on->bto', y, params['wproj'], precision=hi) + params['bproj'][:, 0])
    mu2 = y.mean(-1, keepdims=True)
    var2 = ((y - mu2) ** 2).mean(-1, keepdims=True)
    yn = (y - mu2) * jax.lax.rsqrt(var2 + EPS_LN) * params['g2'][:, 0] + params['b2'][:, 0]
    h = jnp.einsum('bte,oe->bto', yn, params['w1'], precision=hi) + params['bm1'][:, 0]
    h = jax.nn.gelu(h, approximate=False)
    h = jnp.einsum('bte,oe->bto', h, params['w2'], precision=hi) + params['bm2'][:, 0]
    out = y + h                                                   # (B, T, emb)
    return out.transpose(0, 2, 1).reshape(B, emb, Hout, Wout)


if __name__ == "__main__":
    key = jax.random.PRNGKey(0)
    kx, kp_ = jax.random.split(key)

    # module config: SWT_up4(up_scale=2, in_channel=4, out_channel=64)
    B, C_in, H = 2, 4, 16
    up_scale, out_channel = 2, 64
    dim = C_in                      # Token_performer dim = in_channel
    emb = out_channel               # 64
    m = int(emb * 0.5)              # 32 performer random features

    x = jax.random.normal(kx, (B, C_in, H, H), jnp.float32)
    params = init_params(kp_, dim, emb, m)

    prep = swt_up4_prepare(params, H, H, up_scale)   # cached constants
    y = swt_up4_apply(x, prep)
    jax.block_until_ready(y)

    assert y.shape == (B, out_channel, H * up_scale, H * up_scale), y.shape
    assert bool(jnp.all(jnp.isfinite(y)))

    ref = swt_up4_ref(x, params, up_scale, size=(H, H))
    rel_err = float(jnp.max(jnp.abs(y - ref)) / (jnp.max(jnp.abs(ref)) + 1e-6))
    # bf16-MXU + tanh-GELU error budget; pure-f32 variant matches to ~1e-6.
    assert rel_err < 2.5e-2, rel_err

    print("KERNEL_OK")
</pallas_src>

<mosaic_0001>
module attributes {stable_mosaic.version = 11 : i64} {
  func.func @_swt_up4_kernel(%arg0: i32, %arg1: memref<1x4x256xf32, #tpu.memory_space<vmem>>, %arg2: memref<256x1024xf32, #tpu.memory_space<vmem>>, %arg3: memref<193x4xbf16, #tpu.memory_space<vmem>>, %arg4: memref<32x64xbf16, #tpu.memory_space<vmem>>, %arg5: memref<64x64xbf16, #tpu.memory_space<vmem>>, %arg6: memref<64x64xbf16, #tpu.memory_space<vmem>>, %arg7: memref<64x64xbf16, #tpu.memory_space<vmem>>, %arg8: memref<536x1xf32, #tpu.memory_space<vmem>>, %arg9: memref<1x64x1024xf32, #tpu.memory_space<vmem>>) attributes {dimension_semantics = [#tpu.dimension_semantics<parallel>], iteration_bounds = array<i64: 2>, scalar_prefetch = 0 : i64, scratch_operands = 0 : i64, tpu.core_type = #tpu.core_type<tc>, window_params = [{transform_indices = @transform_0, window_bounds = array<i64: 1, 4, 256>}, {pipeline_mode = #tpu.pipeline_mode<synchronous>, transform_indices = @transform_1, window_bounds = array<i64: 256, 1024>}, {pipeline_mode = #tpu.pipeline_mode<synchronous>, transform_indices = @transform_2, window_bounds = array<i64: 193, 4>}, {pipeline_mode = #tpu.pipeline_mode<synchronous>, transform_indices = @transform_3, window_bounds = array<i64: 32, 64>}, {pipeline_mode = #tpu.pipeline_mode<synchronous>, transform_indices = @transform_4, window_bounds = array<i64: 64, 64>}, {pipeline_mode = #tpu.pipeline_mode<synchronous>, transform_indices = @transform_5, window_bounds = array<i64: 64, 64>}, {pipeline_mode = #tpu.pipeline_mode<synchronous>, transform_indices = @transform_6, window_bounds = array<i64: 64, 64>}, {pipeline_mode = #tpu.pipeline_mode<synchronous>, transform_indices = @transform_7, window_bounds = array<i64: 536, 1>}, {transform_indices = @transform_8, window_bounds = array<i64: 1, 64, 1024>}]} {
    %c0 = arith.constant 0 : index
    %c0_0 = arith.constant 0 : index
    %0 = vector.load %arg8[%c0, %c0_0] : memref<536x1xf32, #tpu.memory_space<vmem>>, vector<4x1xf32>
    %c8 = arith.constant 8 : index
    %c0_1 = arith.constant 0 : index
    %1 = vector.load %arg8[%c8, %c0_1] : memref<536x1xf32, #tpu.memory_space<vmem>>, vector<4x1xf32>
    %c16 = arith.constant 16 : index
    %c0_2 = arith.constant 0 : index
    %2 = vector.load %arg8[%c16, %c0_2] : memref<536x1xf32, #tpu.memory_space<vmem>>, vector<193x1xf32>
    %c216 = arith.constant 216 : index
    %c0_3 = arith.constant 0 : index
    %3 = vector.load %arg8[%c216, %c0_3] : memref<536x1xf32, #tpu.memory_space<vmem>>, vector<64x1xf32>
    %c280 = arith.constant 280 : index
    %c0_4 = arith.constant 0 : index
    %4 = vector.load %arg8[%c280, %c0_4] : memref<536x1xf32, #tpu.memory_space<vmem>>, vector<64x1xf32>
    %c344 = arith.constant 344 : index
    %c0_5 = arith.constant 0 : index
    %5 = vector.load %arg8[%c344, %c0_5] : memref<536x1xf32, #tpu.memory_space<vmem>>, vector<64x1xf32>
    %c408 = arith.constant 408 : index
    %c0_6 = arith.constant 0 : index
    %6 = vector.load %arg8[%c408, %c0_6] : memref<536x1xf32, #tpu.memory_space<vmem>>, vector<64x1xf32>
    %c472 = arith.constant 472 : index
    %c0_7 = arith.constant 0 : index
    %7 = vector.load %arg8[%c472, %c0_7] : memref<536x1xf32, #tpu.memory_space<vmem>>, vector<64x1xf32>
    %c0_8 = arith.constant 0 : index
    %c0_9 = arith.constant 0 : index
    %c0_10 = arith.constant 0 : index
    %8 = vector.load %arg1[%c0_8, %c0_9, %c0_10] : memref<1x4x256xf32, #tpu.memory_space<vmem>>, vector<1x4x256xf32>
    %9 = vector.shape_cast %8 : vector<1x4x256xf32> to vector<4x256xf32>
    %c0_11 = arith.constant 0 : index
    %c0_12 = arith.constant 0 : index
    %10 = vector.load %arg2[%c0_11, %c0_12] : memref<256x1024xf32, #tpu.memory_space<vmem>>, vector<256x1024xf32>
    %cst = arith.constant dense<0.000000e+00> : vector<4x1024xf32>
    %11 = tpu.matmul %9, %10, %cst {dimension_numbers = #tpu.dot_dimension_numbers<[1], [0], [0], [1], [0, 0, 1, 1], [], []>} : vector<4x256xf32>, vector<256x1024xf32>, vector<4x1024xf32> -> vector<4x1024xf32>
    %cst_13 = arith.constant dense<0.000000e+00> : vector<1024xf32>
    %12 = vector.multi_reduction <add>, %11, %cst_13 [0] : vector<4x1024xf32> to vector<1024xf32>
    %13 = vector.shape_cast %12 : vector<1024xf32> to vector<1x1024xf32>
    %cst_14 = arith.constant 4.000000e+00 : f32
    %14 = vector.broadcast %cst_14 : f32 to vector<1x1024xf32>
    %15 = arith.divf %13, %14 : vector<1x1024xf32>
    %16 = vector.broadcast %15 : vector<1x1024xf32> to vector<4x1024xf32>
    %17 = arith.subf %11, %16 : vector<4x1024xf32>
    %18 = arith.mulf %17, %17 : vector<4x1024xf32>
    %cst_15 = arith.constant dense<0.000000e+00> : vector<1024xf32>
    %19 = vector.multi_reduction <add>, %18, %cst_15 [0] : vector<4x1024xf32> to vector<1024xf32>
    %20 = vector.shape_cast %19 : vector<1024xf32> to vector<1x1024xf32>
    %cst_16 = arith.constant 4.000000e+00 : f32
    %21 = vector.broadcast %cst_16 : f32 to vector<1x1024xf32>
    %22 = arith.divf %20, %21 : vector<1x1024xf32>
    %23 = vector.broadcast %15 : vector<1x1024xf32> to vector<4x1024xf32>
    %24 = arith.subf %11, %23 : vector<4x1024xf32>
    %cst_17 = arith.constant 9.99999974E-6 : f32
    %25 = vector.broadcast %cst_17 : f32 to vector<1x1024xf32>
    %26 = arith.addf %22, %25 : vector<1x1024xf32>
    %27 = math.rsqrt %26 : vector<1x1024xf32>
    %28 = vector.broadcast %27 : vector<1x1024xf32> to vector<4x1024xf32>
    %29 = arith.mulf %24, %28 : vector<4x1024xf32>
    %30 = vector.broadcast %0 : vector<4x1xf32> to vector<4x1024xf32>
    %31 = arith.mulf %29, %30 : vector<4x1024xf32>
    %32 = vector.broadcast %1 : vector<4x1xf32> to vector<4x1024xf32>
    %33 = arith.addf %31, %32 : vector<4x1024xf32>
    %c0_18 = arith.constant 0 : index
    %c0_19 = arith.constant 0 : index
    %34 = vector.load %arg3[%c0_18, %c0_19] : memref<193x4xbf16, #tpu.memory_space<vmem>>, vector<193x4xbf16>
    %35 = arith.truncf %33 : vector<4x1024xf32> to vector<4x1024xbf16>
    %cst_20 = arith.constant dense<0.000000e+00> : vector<193x1024xf32>
    %36 = tpu.matmul %34, %35, %cst_20 {dimension_numbers = #tpu.dot_dimension_numbers<[1], [0], [0], [1], [0, 0, 1, 1], [], []>} : vector<193x4xbf16>, vector<4x1024xbf16>, vector<193x1024xf32> -> vector<193x1024xf32>
    %37 = vector.broadcast %2 : vector<193x1xf32> to vector<193x1024xf32>
    %38 = arith.addf %36, %37 : vector<193x1024xf32>
    %39 = vector.extract_strided_slice %38 {offsets = [0, 0], sizes = [64, 1024], strides = [1, 1]} : vector<193x1024xf32> to vector<64x1024xf32>
    %40 = vector.extract_strided_slice %38 {offsets = [64, 0], sizes = [64, 1024], strides = [1, 1]} : vector<193x1024xf32> to vector<64x1024xf32>
    %41 = vector.extract_strided_slice %38 {offsets = [128, 0], sizes = [64, 1024], strides = [1, 1]} : vector<193x1024xf32> to vector<64x1024xf32>
    %42 = vector.extract_strided_slice %38 {offsets = [128, 0], sizes = [65, 1024], strides = [1, 1]} : vector<193x1024xf32> to vector<65x1024xf32>
    %c0_21 = arith.constant 0 : index
    %c0_22 = arith.constant 0 : index
    %43 = vector.load %arg4[%c0_21, %c0_22] : memref<32x64xbf16, #tpu.memory_space<vmem>>, vector<32x64xbf16>
    %44 = arith.truncf %39 : vector<64x1024xf32> to vector<64x1024xbf16>
    %cst_23 = arith.constant dense<0.000000e+00> : vector<32x1024xf32>
    %45 = tpu.matmul %43, %44, %cst_23 {dimension_numbers = #tpu.dot_dimension_numbers<[1], [0], [0], [1], [0, 0, 1, 1], [], []>} : vector<32x64xbf16>, vector<64x1024xbf16>, vector<32x1024xf32> -> vector<32x1024xf32>
    %46 = arith.truncf %40 : vector<64x1024xf32> to vector<64x1024xbf16>
    %cst_24 = arith.constant dense<0.000000e+00> : vector<32x1024xf32>
    %47 = tpu.matmul %43, %46, %cst_24 {dimension_numbers = #tpu.dot_dimension_numbers<[1], [0], [0], [1], [0, 0, 1, 1], [], []>} : vector<32x64xbf16>, vector<64x1024xbf16>, vector<32x1024xf32> -> vector<32x1024xf32>
    %48 = arith.mulf %39, %39 : vector<64x1024xf32>
    %cst_25 = arith.constant dense<0.000000e+00> : vector<1024xf32>
    %49 = vector.multi_reduction <add>, %48, %cst_25 [0] : vector<64x1024xf32> to vector<1024xf32>
    %50 = vector.shape_cast %49 : vector<1024xf32> to vector<1x1024xf32>
    %cst_26 = arith.constant 5.000000e-01 : f32
    %51 = vector.broadcast %cst_26 : f32 to vector<1x1024xf32>
    %52 = arith.mulf %51, %50 : vector<1x1024xf32>
    %53 = vector.broadcast %52 : vector<1x1024xf32> to vector<32x1024xf32>
    %54 = arith.subf %45, %53 : vector<32x1024xf32>
    %cst_27 = arith.constant 1.73286796 : f32
    %55 = vector.broadcast %cst_27 : f32 to vector<32x1024xf32>
    %56 = arith.subf %54, %55 : vector<32x1024xf32>
    %57 = math.exp %56 : vector<32x1024xf32>
    %58 = arith.mulf %40, %40 : vector<64x1024xf32>
    %cst_28 = arith.constant dense<0.000000e+00> : vector<1024xf32>
    %59 = vector.multi_reduction <add>, %58, %cst_28 [0] : vector<64x1024xf32> to vector<1024xf32>
    %60 = vector.shape_cast %59 : vector<1024xf32> to vector<1x1024xf32>
    %cst_29 = arith.constant 5.000000e-01 : f32
    %61 = vector.broadcast %cst_29 : f32 to vector<1x1024xf32>
    %62 = arith.mulf %61, %60 : vector<1x1024xf32>
    %63 = vector.broadcast %62 : vector<1x1024xf32> to vector<32x1024xf32>
    %64 = arith.subf %47, %63 : vector<32x1024xf32>
    %cst_30 = arith.constant 1.73286796 : f32
    %65 = vector.broadcast %cst_30 : f32 to vector<32x1024xf32>
    %66 = arith.subf %64, %65 : vector<32x1024xf32>
    %67 = math.exp %66 : vector<32x1024xf32>
    %68 = arith.truncf %57 : vector<32x1024xf32> to vector<32x1024xbf16>
    %69 = arith.truncf %67 : vector<32x1024xf32> to vector<32x1024xbf16>
    %70 = arith.truncf %42 : vector<65x1024xf32> to vector<65x1024xbf16>
    %cst_31 = arith.constant dense<0.000000e+00> : vector<65x32xf32>
    %71 = tpu.matmul %70, %68, %cst_31 {dimension_numbers = #tpu.dot_dimension_numbers<[1], [1], [0], [0], [0, 0, 1, 0], [], []>} : vector<65x1024xbf16>, vector<32x1024xbf16>, vector<65x32xf32> -> vector<65x32xf32>
    %72 = arith.truncf %71 : vector<65x32xf32> to vector<65x32xbf16>
    %cst_32 = arith.constant dense<0.000000e+00> : vector<65x1024xf32>
    %73 = tpu.matmul %72, %69, %cst_32 {dimension_numbers = #tpu.dot_dimension_numbers<[1], [0], [0], [1], [0, 0, 1, 1], [], []>} : vector<65x32xbf16>, vector<32x1024xbf16>, vector<65x1024xf32> -> vector<65x1024xf32>
    %74 = vector.extract_strided_slice %73 {offsets = [64, 0], sizes = [1, 1024], strides = [1, 1]} : vector<65x1024xf32> to vector<1x1024xf32>
    %cst_33 = arith.constant 9.99999993E-9 : f32
    %75 = vector.broadcast %cst_33 : f32 to vector<1x1024xf32>
    %76 = arith.addf %74, %75 : vector<1x1024xf32>
    %77 = tpu.reciprocal %76 {approx = true} : vector<1x1024xf32> -> vector<1x1024xf32>
    %78 = vector.extract_strided_slice %73 {offsets = [0, 0], sizes = [64, 1024], strides = [1, 1]} : vector<65x1024xf32> to vector<64x1024xf32>
    %79 = vector.broadcast %77 : vector<1x1024xf32> to vector<64x1024xf32>
    %80 = arith.mulf %78, %79 : vector<64x1024xf32>
    %c0_34 = arith.constant 0 : index
    %c0_35 = arith.constant 0 : index
    %81 = vector.load %arg5[%c0_34, %c0_35] : memref<64x64xbf16, #tpu.memory_space<vmem>>, vector<64x64xbf16>
    %82 = arith.truncf %80 : vector<64x1024xf32> to vector<64x1024xbf16>
    %cst_36 = arith.constant dense<0.000000e+00> : vector<64x1024xf32>
    %83 = tpu.matmul %81, %82, %cst_36 {dimension_numbers = #tpu.dot_dimension_numbers<[1], [0], [0], [1], [0, 0, 1, 1], [], []>} : vector<64x64xbf16>, vector<64x1024xbf16>, vector<64x1024xf32> -> vector<64x1024xf32>
    %84 = vector.broadcast %3 : vector<64x1xf32> to vector<64x1024xf32>
    %85 = arith.addf %83, %84 : vector<64x1024xf32>
    %86 = arith.addf %41, %85 : vector<64x1024xf32>
    %cst_37 = arith.constant dense<0.000000e+00> : vector<1024xf32>
    %87 = vector.multi_reduction <add>, %86, %cst_37 [0] : vector<64x1024xf32> to vector<1024xf32>
    %88 = vector.shape_cast %87 : vector<1024xf32> to vector<1x1024xf32>
    %cst_38 = arith.constant 6.400000e+01 : f32
    %89 = vector.broadcast %cst_38 : f32 to vector<1x1024xf32>
    %90 = arith.divf %88, %89 : vector<1x1024xf32>
    %91 = vector.broadcast %90 : vector<1x1024xf32> to vector<64x1024xf32>
    %92 = arith.subf %86, %91 : vector<64x1024xf32>
    %93 = arith.mulf %92, %92 : vector<64x1024xf32>
    %cst_39 = arith.constant dense<0.000000e+00> : vector<1024xf32>
    %94 = vector.multi_reduction <add>, %93, %cst_39 [0] : vector<64x1024xf32> to vector<1024xf32>
    %95 = vector.shape_cast %94 : vector<1024xf32> to vector<1x1024xf32>
    %cst_40 = arith.constant 6.400000e+01 : f32
    %96 = vector.broadcast %cst_40 : f32 to vector<1x1024xf32>
    %97 = arith.divf %95, %96 : vector<1x1024xf32>
    %98 = vector.broadcast %90 : vector<1x1024xf32> to vector<64x1024xf32>
    %99 = arith.subf %86, %98 : vector<64x1024xf32>
    %cst_41 = arith.constant 9.99999974E-6 : f32
    %100 = vector.broadcast %cst_41 : f32 to vector<1x1024xf32>
    %101 = arith.addf %97, %100 : vector<1x1024xf32>
    %102 = math.rsqrt %101 : vector<1x1024xf32>
    %103 = vector.broadcast %102 : vector<1x1024xf32> to vector<64x1024xf32>
    %104 = arith.mulf %99, %103 : vector<64x1024xf32>
    %105 = vector.broadcast %4 : vector<64x1xf32> to vector<64x1024xf32>
    %106 = arith.mulf %104, %105 : vector<64x1024xf32>
    %107 = vector.broadcast %5 : vector<64x1xf32> to vector<64x1024xf32>
    %108 = arith.addf %106, %107 : vector<64x1024xf32>
    %c0_42 = arith.constant 0 : index
    %c0_43 = arith.constant 0 : index
    %109 = vector.load %arg6[%c0_42, %c0_43] : memref<64x64xbf16, #tpu.memory_space<vmem>>, vector<64x64xbf16>
    %110 = arith.truncf %108 : vector<64x1024xf32> to vector<64x1024xbf16>
    %cst_44 = arith.constant dense<0.000000e+00> : vector<64x1024xf32>
    %111 = tpu.matmul %109, %110, %cst_44 {dimension_numbers = #tpu.dot_dimension_numbers<[1], [0], [0], [1], [0, 0, 1, 1], [], []>} : vector<64x64xbf16>, vector<64x1024xbf16>, vector<64x1024xf32> -> vector<64x1024xf32>
    %112 = vector.broadcast %6 : vector<64x1xf32> to vector<64x1024xf32>
    %113 = arith.addf %111, %112 : vector<64x1024xf32>
    %114 = arith.mulf %113, %113 : vector<64x1024xf32>
    %115 = arith.mulf %113, %114 : vector<64x1024xf32>
    %cst_45 = arith.constant 4.471500e-02 : f32
    %116 = vector.broadcast %cst_45 : f32 to vector<64x1024xf32>
    %117 = arith.mulf %116, %115 : vector<64x1024xf32>
    %118 = arith.addf %113, %117 : vector<64x1024xf32>
    %cst_46 = arith.constant 0.797884583 : f32
    %119 = vector.broadcast %cst_46 : f32 to vector<64x1024xf32>
    %120 = arith.mulf %119, %118 : vector<64x1024xf32>
    %121 = math.tanh %120 : vector<64x1024xf32>
    %cst_47 = arith.constant 1.000000e+00 : f32
    %122 = vector.broadcast %cst_47 : f32 to vector<64x1024xf32>
    %123 = arith.addf %122, %121 : vector<64x1024xf32>
    %cst_48 = arith.constant 5.000000e-01 : f32
    %124 = vector.broadcast %cst_48 : f32 to vector<64x1024xf32>
    %125 = arith.mulf %124, %123 : vector<64x1024xf32>
    %126 = arith.mulf %113, %125 : vector<64x1024xf32>
    %c0_49 = arith.constant 0 : index
    %c0_50 = arith.constant 0 : index
    %127 = vector.load %arg7[%c0_49, %c0_50] : memref<64x64xbf16, #tpu.memory_space<vmem>>, vector<64x64xbf16>
    %128 = arith.truncf %126 : vector<64x1024xf32> to vector<64x1024xbf16>
    %cst_51 = arith.constant dense<0.000000e+00> : vector<64x1024xf32>
    %129 = tpu.matmul %127, %128, %cst_51 {dimension_numbers = #tpu.dot_dimension_numbers<[1], [0], [0], [1], [0, 0, 1, 1], [], []>} : vector<64x64xbf16>, vector<64x1024xbf16>, vector<64x1024xf32> -> vector<64x1024xf32>
    %130 = vector.broadcast %7 : vector<64x1xf32> to vector<64x1024xf32>
    %131 = arith.addf %129, %130 : vector<64x1024xf32>
    %132 = arith.addf %86, %131 : vector<64x1024xf32>
    %c0_52 = arith.constant 0 : index
    %c0_53 = arith.constant 0 : index
    %c0_54 = arith.constant 0 : index
    %133 = vector.load %arg9[%c0_52, %c0_53, %c0_54] : memref<1x64x1024xf32, #tpu.memory_space<vmem>>, vector<1x64x1024xf32>
    %134 = vector.shape_cast %133 : vector<1x64x1024xf32> to vector<64x1024xf32>
    %135 = vector.shape_cast %132 : vector<64x1024xf32> to vector<1x64x1024xf32>
    tpu.vector_store %arg9[%c0_52, %c0_53, %c0_54], %135 {strides = array<i32>} : memref<1x64x1024xf32, #tpu.memory_space<vmem>>, vector<1x64x1024xf32>,
    return
  }
  func.func @transform_0(%arg0: i32) -> (i32, i32, i32) {
    %c0_i32 = arith.constant 0 : i32
    %c0_i32_0 = arith.constant 0 : i32
    %c0_i32_1 = arith.constant 0 : i32
    return %arg0, %c0_i32, %c0_i32_0 : i32, i32, i32
  }
  func.func @transform_1(%arg0: i32) -> (i32, i32) {
    %c0_i32 = arith.constant 0 : i32
    %c0_i32_0 = arith.constant 0 : i32
    %c0_i32_1 = arith.constant 0 : i32
    return %c0_i32, %c0_i32_0 : i32, i32
  }
  func.func @transform_2(%arg0: i32) -> (i32, i32) {
    %c0_i32 = arith.constant 0 : i32
    %c0_i32_0 = arith.constant 0 : i32
    %c0_i32_1 = arith.constant 0 : i32
    return %c0_i32, %c0_i32_0 : i32, i32
  }
  func.func @transform_3(%arg0: i32) -> (i32, i32) {
    %c0_i32 = arith.constant 0 : i32
    %c0_i32_0 = arith.constant 0 : i32
    %c0_i32_1 = arith.constant 0 : i32
    return %c0_i32, %c0_i32_0 : i32, i32
  }
  func.func @transform_4(%arg0: i32) -> (i32, i32) {
    %c0_i32 = arith.constant 0 : i32
    %c0_i32_0 = arith.constant 0 : i32
    %c0_i32_1 = arith.constant 0 : i32
    return %c0_i32, %c0_i32_0 : i32, i32
  }
  func.func @transform_5(%arg0: i32) -> (i32, i32) {
    %c0_i32 = arith.constant 0 : i32
    %c0_i32_0 = arith.constant 0 : i32
    %c0_i32_1 = arith.constant 0 : i32
    return %c0_i32, %c0_i32_0 : i32, i32
  }
  func.func @transform_6(%arg0: i32) -> (i32, i32) {
    %c0_i32 = arith.constant 0 : i32
    %c0_i32_0 = arith.constant 0 : i32
    %c0_i32_1 = arith.constant 0 : i32
    return %c0_i32, %c0_i32_0 : i32, i32
  }
  func.func @transform_7(%arg0: i32) -> (i32, i32) {
    %c0_i32 = arith.constant 0 : i32
    %c0_i32_0 = arith.constant 0 : i32
    %c0_i32_1 = arith.constant 0 : i32
    return %c0_i32, %c0_i32_0 : i32, i32
  }
  func.func @transform_8(%arg0: i32) -> (i32, i32, i32) {
    %c0_i32 = arith.constant 0 : i32
    %c0_i32_0 = arith.constant 0 : i32
    %c0_i32_1 = arith.constant 0 : i32
    return %arg0, %c0_i32, %c0_i32_0 : i32, i32, i32
  }
}

</mosaic_0001>

<llo_original>
// kernel: tpu_custom_call.1
$region0: #{tpu_custom_call.1}
  #allocation0 [shape = 'u32[]', space=smem, size = 0x4, offset = 0x4, fixed_abs, tag = 'smem constant byte address 0x4 - core index']
  #allocation1 [shape = 'u32[72,128]{1,0:T(1,128)}', space=vmem, size = 0x9000, scoped, tag = 'internal scratch']
  %s0 = inlined_call_operand.vmem [shape: f32[2,4,256], index: 0, kind: input, shape index: {}]
  %s1 = inlined_call_operand.hbm [shape: f32[256,1024], index: 1, kind: input, shape index: {}]
  %s2 = inlined_call_operand.vmem [shape: bf16[193,4], index: 2, kind: input, shape index: {}]
  %s3 = inlined_call_operand.vmem [shape: bf16[32,64], index: 3, kind: input, shape index: {}]
  %s4 = inlined_call_operand.vmem [shape: bf16[64,64], index: 4, kind: input, shape index: {}]
  %s5 = inlined_call_operand.vmem [shape: bf16[64,64], index: 5, kind: input, shape index: {}]
  %s6 = inlined_call_operand.vmem [shape: bf16[64,64], index: 6, kind: input, shape index: {}]
  %s7 = inlined_call_operand.vmem [shape: f32[536,1], index: 7, kind: input, shape index: {}]
  %s8 = inlined_call_operand.hbm [shape: f32[2,64,1024], index: 8, kind: output, shape index: {}]
  %s9 = sld [smem:[#allocation0]]
  $region69: #{tpu_custom_call.1} parent=0
    _
  %s11 = ssub.s32 1, %s9
  %s12 = scalar_select 0, %s11, %s9
  $region1: #{tpu_custom_call.1} parent=0
    #allocation2 [shape = 'u8[1048576]{0}', space=vmem, size = 0x100000, scoped, tag = 'input window, operand 1, single buffered']
    #allocation3 [shape = 's32[2]{0}', space=sflag, size = 0x8, scoped, tag = 'scoped memory for tpu_custom_call.1']
    #allocation4 [shape = 's32[2]{0}', space=sflag, size = 0x8, scoped, tag = 'scoped memory for tpu_custom_call.1']
    #allocation5 [shape = 'u8[524288]{0}', space=vmem, size = 0x80000, scoped, tag = 'output window, operand 0']
    %13 = vsyncpa [#allocation3], 0
    %14 = vsyncpa [#allocation4], 0
    %s15 = scalar_lea.sflag [#allocation4], 1
    %16 = vsyncpa %s15, 0
    loop: start=0, step=1, limit=4
    $region2: #{tpu_custom_call.1} parent=1 // loop_pre_header
      _
    $region3: #{tpu_custom_call.1} parent=1 // loop_header
      %s18 = sphi 0, %s22
      %p19 = scmp.ge.s32.totalorder %s18, 4
      %s28 = sphi 0, %s30
      %s31 = sphi 0, %s28
      %s32 = sphi 0, %s31
      %s48 = sphi 0, %s32
      %s52 = sphi 0, %s52
      %s54 = sphi 0, %s52
      %s55 = sphi 0, %s54
      %s69 = sphi 0, %s55
      %s73 = sphi 0, %s73
      %s75 = sphi 0, %s73
      %s76 = sphi 0, %s75
      %s90 = sphi 0, %s76
      %s94 = sphi 0, %s94
      %s96 = sphi 0, %s94
      %s97 = sphi 0, %s96
      %s111 = sphi 0, %s97
      %s115 = sphi 0, %s115
      %s117 = sphi 0, %s115
      %s118 = sphi 0, %s117
      %s132 = sphi 0, %s118
      %s136 = sphi 0, %s136
      %s138 = sphi 0, %s136
      %s139 = sphi 0, %s138
      %s153 = sphi 0, %s139
      %s157 = sphi 0, %s157
      %s159 = sphi 0, %s157
      %s160 = sphi 0, %s159
      %s174 = sphi 0, %s160
      %s178 = sphi 0, %s178
      %s180 = sphi 0, %s178
      %s181 = sphi 0, %s180
      %s195 = sphi 0, %s181
      %s201 = sphi 0, %s203
      %s204 = sphi 0, %s201
      %s205 = sphi 0, %s204
      %s221 = sphi 0, %s205
    $region4: #{tpu_custom_call.1} parent=1 // loop_header_branch
      %21 = sbr.rel (%p19) target = $region8
    $region5: #{tpu_custom_call.1} parent=1 // loop_body
      %s23 = ssub.s32 %s18, 1
      %s24 = ssub.s32 %s18, 2
      %s25 = sadd.s32 %s18, 1
      %s26 = ssub.s32 %s18, %s25
      %p27 = scmp.eq.s32.totalorder %s26, 0
      %s29 = sadd.s32 %s28, 1
      %s30 = scalar_select %p27, %s28, %s29
      %p33 = pneg %p27
      %p34 = scmp.eq.s32.totalorder %s18, 1
      %p35 = por %p33, %p34
      %p36 = scmp.ne.s32.totalorder %s28, %s31
      %p37 = scmp.eq.s32.totalorder %s18, 0
      %p38 = por %p36, %p37
      %p39 = scmp.ne.s32.totalorder %s28, %s31
      %p40 = scmp.eq.s32.totalorder %s23, 1
      %p41 = por %p39, %p40
      %p42 = scmp.ne.s32.totalorder %s31, %s32
      %p43 = scmp.eq.s32.totalorder %s23, 0
      %p44 = por %p42, %p43
      %p45 = scmp.ne.s32.totalorder %s31, %s32
      %p46 = scmp.eq.s32.totalorder %s24, 1
      %p47 = por %p45, %p46
      %p49 = scmp.ne.s32.totalorder %s32, %s48
      %p50 = scmp.eq.s32.totalorder %s24, 0
      %p51 = por %p49, %p50
      %s53 = sadd.s32 %s52, 1
      %p56 = scmp.eq.s32.totalorder %s18, 1
      %p57 = scmp.ne.s32.totalorder %s52, %s54
      %p58 = scmp.eq.s32.totalorder %s18, 0
      %p59 = por %p57, %p58
      %p60 = scmp.ne.s32.totalorder %s52, %s54
      %p61 = scmp.eq.s32.totalorder %s23, 1
      %p62 = por %p60, %p61
      %p63 = scmp.ne.s32.totalorder %s54, %s55
      %p64 = scmp.eq.s32.totalorder %s23, 0
      %p65 = por %p63, %p64
      %p66 = scmp.ne.s32.totalorder %s54, %s55
      %p67 = scmp.eq.s32.totalorder %s24, 1
      %p68 = por %p66, %p67
      %p70 = scmp.ne.s32.totalorder %s55, %s69
      %p71 = scmp.eq.s32.totalorder %s24, 0
      %p72 = por %p70, %p71
      %s74 = sadd.s32 %s73, 1
      %p77 = scmp.eq.s32.totalorder %s18, 1
      %p78 = scmp.ne.s32.totalorder %s73, %s75
      %p79 = scmp.eq.s32.totalorder %s18, 0
      %p80 = por %p78, %p79
      %p81 = scmp.ne.s32.totalorder %s73, %s75
      %p82 = scmp.eq.s32.totalorder %s23, 1
      %p83 = por %p81, %p82
      %p84 = scmp.ne.s32.totalorder %s75, %s76
      %p85 = scmp.eq.s32.totalorder %s23, 0
      %p86 = por %p84, %p85
      %p87 = scmp.ne.s32.totalorder %s75, %s76
      %p88 = scmp.eq.s32.totalorder %s24, 1
      %p89 = por %p87, %p88
      %p91 = scmp.ne.s32.totalorder %s76, %s90
      %p92 = scmp.eq.s32.totalorder %s24, 0
      %p93 = por %p91, %p92
      %s95 = sadd.s32 %s94, 1
      %p98 = scmp.eq.s32.totalorder %s18, 1
      %p99 = scmp.ne.s32.totalorder %s94, %s96
      %p100 = scmp.eq.s32.totalorder %s18, 0
      %p101 = por %p99, %p100
      %p102 = scmp.ne.s32.totalorder %s94, %s96
      %p103 = scmp.eq.s32.totalorder %s23, 1
      %p104 = por %p102, %p103
      %p105 = scmp.ne.s32.totalorder %s96, %s97
      %p106 = scmp.eq.s32.totalorder %s23, 0
      %p107 = por %p105, %p106
      %p108 = scmp.ne.s32.totalorder %s96, %s97
      %p109 = scmp.eq.s32.totalorder %s24, 1
      %p110 = por %p108, %p109
      %p112 = scmp.ne.s32.totalorder %s97, %s111
      %p113 = scmp.eq.s32.totalorder %s24, 0
      %p114 = por %p112, %p113
      %s116 = sadd.s32 %s115, 1
      %p119 = scmp.eq.s32.totalorder %s18, 1
      %p120 = scmp.ne.s32.totalorder %s115, %s117
      %p121 = scmp.eq.s32.totalorder %s18, 0
      %p122 = por %p120, %p121
      %p123 = scmp.ne.s32.totalorder %s115, %s117
      %p124 = scmp.eq.s32.totalorder %s23, 1
      %p125 = por %p123, %p124
      %p126 = scmp.ne.s32.totalorder %s117, %s118
      %p127 = scmp.eq.s32.totalorder %s23, 0
      %p128 = por %p126, %p127
      %p129 = scmp.ne.s32.totalorder %s117, %s118
      %p130 = scmp.eq.s32.totalorder %s24, 1
      %p131 = por %p129, %p130
      %p133 = scmp.ne.s32.totalorder %s118, %s132
      %p134 = scmp.eq.s32.totalorder %s24, 0
      %p135 = por %p133, %p134
      %s137 = sadd.s32 %s136, 1
      %p140 = scmp.eq.s32.totalorder %s18, 1
      %p141 = scmp.ne.s32.totalorder %s136, %s138
      %p142 = scmp.eq.s32.totalorder %s18, 0
      %p143 = por %p141, %p142
      %p144 = scmp.ne.s32.totalorder %s136, %s138
      %p145 = scmp.eq.s32.totalorder %s23, 1
      %p146 = por %p144, %p145
      %p147 = scmp.ne.s32.totalorder %s138, %s139
      %p148 = scmp.eq.s32.totalorder %s23, 0
      %p149 = por %p147, %p148
      %p150 = scmp.ne.s32.totalorder %s138, %s139
      %p151 = scmp.eq.s32.totalorder %s24, 1
      %p152 = por %p150, %p151
      %p154 = scmp.ne.s32.totalorder %s139, %s153
      %p155 = scmp.eq.s32.totalorder %s24, 0
      %p156 = por %p154, %p155
      %s158 = sadd.s32 %s157, 1
      %p161 = scmp.eq.s32.totalorder %s18, 1
      %p162 = scmp.ne.s32.totalorder %s157, %s159
      %p163 = scmp.eq.s32.totalorder %s18, 0
      %p164 = por %p162, %p163
      %p165 = scmp.ne.s32.totalorder %s157, %s159
      %p166 = scmp.eq.s32.totalorder %s23, 1
      %p167 = por %p165, %p166
      %p168 = scmp.ne.s32.totalorder %s159, %s160
      %p169 = scmp.eq.s32.totalorder %s23, 0
      %p170 = por %p168, %p169
      %p171 = scmp.ne.s32.totalorder %s159, %s160
      %p172 = scmp.eq.s32.totalorder %s24, 1
      %p173 = por %p171, %p172
      %p175 = scmp.ne.s32.totalorder %s160, %s174
      %p176 = scmp.eq.s32.totalorder %s24, 0
      %p177 = por %p175, %p176
      %s179 = sadd.s32 %s178, 1
      %p182 = scmp.eq.s32.totalorder %s18, 1
      %p183 = scmp.ne.s32.totalorder %s178, %s180
      %p184 = scmp.eq.s32.totalorder %s18, 0
      %p185 = por %p183, %p184
      %p186 = scmp.ne.s32.totalorder %s178, %s180
      %p187 = scmp.eq.s32.totalorder %s23, 1
      %p188 = por %p186, %p187
      %p189 = scmp.ne.s32.totalorder %s180, %s181
      %p190 = scmp.eq.s32.totalorder %s23, 0
      %p191 = por %p189, %p190
      %p192 = scmp.ne.s32.totalorder %s180, %s181
      %p193 = scmp.eq.s32.totalorder %s24, 1
      %p194 = por %p192, %p193
      %p196 = scmp.ne.s32.totalorder %s181, %s195
      %p197 = scmp.eq.s32.totalorder %s24, 0
      %p198 = por %p196, %p197
      %s199 = ssub.s32 %s18, %s25
      %p200 = scmp.eq.s32.totalorder %s199, 0
      %s202 = sadd.s32 %s201, 1
      %s203 = scalar_select %p200, %s201, %s202
      %p206 = pneg %p200
      %p207 = scmp.eq.s32.totalorder %s18, 1
      %p208 = por %p206, %p207
      %p209 = scmp.ne.s32.totalorder %s201, %s204
      %p210 = scmp.eq.s32.totalorder %s18, 0
      %p211 = por %p209, %p210
      %p212 = scmp.ne.s32.totalorder %s201, %s204
      %p213 = scmp.eq.s32.totalorder %s23, 1
      %p214 = por %p212, %p213
      %p215 = scmp.ne.s32.totalorder %s204, %s205
      %p216 = scmp.eq.s32.totalorder %s23, 0
      %p217 = por %p215, %p216
      %p218 = scmp.ne.s32.totalorder %s204, %s205
      %p219 = scmp.eq.s32.totalorder %s24, 1
      %p220 = por %p218, %p219
      %p222 = scmp.ne.s32.totalorder %s205, %s221
      %p223 = scmp.eq.s32.totalorder %s24, 0
      %p224 = por %p222, %p223
      %p225 = scmp.le.s32.totalorder 1, %s18
      %p226 = scmp.lt.s32.totalorder %s18, 3
      %p227 = pnand %p225, %p226
      %p228 = pneg %p227
      // Predicated region
      $region9: #{tpu_custom_call.1} parent=5 // pred_check
        _
      $region10: #{tpu_custom_call.1} parent=5 // pred_check_branch
        %230 = sbr.rel (%p227) target = $region12
      $region11: #{tpu_custom_call.1} parent=5 // pred_region
        %s231 = ssub.s32 %s18, 1
        // Predicated region
        $region13: #{tpu_custom_call.1} parent=11 // pred_check
          %p232 = pneg %p65
        $region14: #{tpu_custom_call.1} parent=11 // pred_check_branch
          %234 = sbr.rel (%p232) target = $region16
        $region15: #{tpu_custom_call.1} parent=11 // pred_region
          %236 = vsyncadd [#allocation3], 0
          %s237 = sshll.u32 %s1, 4
          %s238 = int_to_ptr.hbm [resolvable:$true] %s237
          %s239 = sshll.u32 [#allocation2], 4
          %s240 = int_to_ptr.vmem [resolvable:$true] %s239
          %245 = dma.hbm_to_vmem [thread:$0]  %s238, 32768, %s240, [#allocation3], 1024, 1024, 64
        $region16: #{tpu_custom_call.1} parent=11 // pred_fallthru
          _
        // Predicated region
        $region17: #{tpu_custom_call.1} parent=11 // pred_check
          %p246 = pneg %p86
        $region18: #{tpu_custom_call.1} parent=11 // pred_check_branch
          %248 = sbr.rel (%p246) target = $region20
        $region19: #{tpu_custom_call.1} parent=11 // pred_region
          _
        $region20: #{tpu_custom_call.1} parent=11 // pred_fallthru
          _
        // Predicated region
        $region21: #{tpu_custom_call.1} parent=11 // pred_check
          %p249 = pneg %p107
        $region22: #{tpu_custom_call.1} parent=11 // pred_check_branch
          %251 = sbr.rel (%p249) target = $region24
        $region23: #{tpu_custom_call.1} parent=11 // pred_region
          _
        $region24: #{tpu_custom_call.1} parent=11 // pred_fallthru
          _
        // Predicated region
        $region25: #{tpu_custom_call.1} parent=11 // pred_check
          %p252 = pneg %p128
        $region26: #{tpu_custom_call.1} parent=11 // pred_check_branch
          %254 = sbr.rel (%p252) target = $region28
        $region27: #{tpu_custom_call.1} parent=11 // pred_region
          _
        $region28: #{tpu_custom_call.1} parent=11 // pred_fallthru
          _
        // Predicated region
        $region29: #{tpu_custom_call.1} parent=11 // pred_check
          %p255 = pneg %p149
        $region30: #{tpu_custom_call.1} parent=11 // pred_check_branch
          %257 = sbr.rel (%p255) target = $region32
        $region31: #{tpu_custom_call.1} parent=11 // pred_region
          _
        $region32: #{tpu_custom_call.1} parent=11 // pred_fallthru
          _
        // Predicated region
        $region33: #{tpu_custom_call.1} parent=11 // pred_check
          %p258 = pneg %p170
        $region34: #{tpu_custom_call.1} parent=11 // pred_check_branch
          %260 = sbr.rel (%p258) target = $region36
        $region35: #{tpu_custom_call.1} parent=11 // pred_region
          _
        $region36: #{tpu_custom_call.1} parent=11 // pred_fallthru
          _
        // Predicated region
        $region37: #{tpu_custom_call.1} parent=11 // pred_check
          %p261 = pneg %p191
        $region38: #{tpu_custom_call.1} parent=11 // pred_check_branch
          %263 = sbr.rel (%p261) target = $region40
        $region39: #{tpu_custom_call.1} parent=11 // pred_region
          _
        $region40: #{tpu_custom_call.1} parent=11 // pred_fallthru
          _
      $region12: #{tpu_custom_call.1} parent=5 // pred_fallthru
        _
      %p264 = scmp.lt.s32.totalorder %s18, 2
      // Predicated region
      $region41: #{tpu_custom_call.1} parent=5 // pred_check
        %p265 = pneg %p264
      $region42: #{tpu_custom_call.1} parent=5 // pred_check_branch
        %267 = sbr.rel (%p265) target = $region44
      $region43: #{tpu_custom_call.1} parent=5 // pred_region
        // Predicated region
        $region45: #{tpu_custom_call.1} parent=43 // pred_check
          %p268 = pneg %p38
        $region46: #{tpu_custom_call.1} parent=43 // pred_check_branch
          %270 = sbr.rel (%p268) target = $region48
        $region47: #{tpu_custom_call.1} parent=43 // pred_region
          %p271 = scmp.lt.s32.totalorder %s18, 1
          %s272 = scalar_select %p271, %s18, 1
          %s273 = smul.addr %s272, 2
          %s274 = smul.addr %s273, 4
          %s275 = scalar_lea.vmem %s0, %s274
        $region48: #{tpu_custom_call.1} parent=43 // pred_fallthru
          _
      $region44: #{tpu_custom_call.1} parent=5 // pred_fallthru
        _
      %p276 = scmp.le.s32.totalorder 1, %s18
      %p277 = scmp.lt.s32.totalorder %s18, 3
      %p278 = pnand %p276, %p277
      %p279 = pneg %p278
      // Predicated region
      $region49: #{tpu_custom_call.1} parent=5 // pred_check
        _
      $region50: #{tpu_custom_call.1} parent=5 // pred_check_branch
        %281 = sbr.rel (%p278) target = $region52
      $region51: #{tpu_custom_call.1} parent=5 // pred_region
        %s282 = ssub.s32 %s18, 1
        // Predicated region
        $region53: #{tpu_custom_call.1} parent=51 // pred_check
          %p283 = pneg %p65
        $region54: #{tpu_custom_call.1} parent=51 // pred_check_branch
          %285 = sbr.rel (%p283) target = $region56
        $region55: #{tpu_custom_call.1} parent=51 // pred_region
          %287 = dma.done [#allocation3], 32768
        $region56: #{tpu_custom_call.1} parent=51 // pred_fallthru
          _
        %p288 = scmp.lt.s32.totalorder %s23, 1
        %s289 = scalar_select %p288, %s23, 1
        %s290 = smul.addr %s289, 2
        %s291 = smul.addr %s290, 4
        %s292 = scalar_lea.vmem %s0, %s291
        %p293 = pneg %p44
        %p294 = pneg %p41
        %p295 = pneg %p65
        %p296 = pneg %p62
        %p297 = pneg %p86
        %p298 = pneg %p83
        %p299 = pneg %p107
        %p300 = pneg %p104
        %p301 = pneg %p128
        %p302 = pneg %p125
        %p303 = pneg %p149
        %p304 = pneg %p146
        %p305 = pneg %p170
        %p306 = pneg %p167
        %p307 = pneg %p191
        %p308 = pneg %p188
        %p309 = pneg %p217
        %p310 = pneg %p214
        %s311 = sand.u32 %s204, 1
        %s312 = scalar_lea.sflag [#allocation4], %s311
        %s313 = sand.u32 %s204, 1
        %s314 = smul.addr %s313, 512
        %s315 = scalar_lea.vmem [#allocation5], %s314
        %p316 = scmp.lt.s32.totalorder %s23, 1
        %s317 = scalar_select %p316, %s23, 1
        %s318 = smul.addr %s317, 2
        %s319 = smul.addr %s318, 4
        %s320 = scalar_lea.vmem %s0, %s319
        %v322 = vld [vmem:[%s7] sm:$0xf]
        %v323 = vld [vmem:[%s7 + $0x8] sm:$0xf]
        %v324 = vld [vmem:[%s7 + $0x10] sm:$0xff]
        %v325 = vld [vmem:[%s7 + $0x18] sm:$0xff]
        %v326 = vld [vmem:[%s7 + $0x20] sm:$0xff]
        %v327 = vld [vmem:[%s7 + $0x28] sm:$0xff]
        %v328 = vld [vmem:[%s7 + $0x30] sm:$0xff]
        %v329 = vld [vmem:[%s7 + $0x38] sm:$0xff]
        %v330 = vld [vmem:[%s7 + $0x40] sm:$0xff]
        %v331 = vld [vmem:[%s7 + $0x48] sm:$0xff]
        %v332 = vld [vmem:[%s7 + $0x50] sm:$0xff]
        %v333 = vld [vmem:[%s7 + $0x58] sm:$0xff]
        %v334 = vld [vmem:[%s7 + $0x60] sm:$0xff]
        %v335 = vld [vmem:[%s7 + $0x68] sm:$0xff]
        %v336 = vld [vmem:[%s7 + $0x70] sm:$0xff]
        %v337 = vld [vmem:[%s7 + $0x78] sm:$0xff]
        %v338 = vld [vmem:[%s7 + $0x80] sm:$0xff]
        %v339 = vld [vmem:[%s7 + $0x88] sm:$0xff]
        %v340 = vld [vmem:[%s7 + $0x90] sm:$0xff]
        %v341 = vld [vmem:[%s7 + $0x98] sm:$0xff]
        %v342 = vld [vmem:[%s7 + $0xa0] sm:$0xff]
        %v343 = vld [vmem:[%s7 + $0xa8] sm:$0xff]
        %v344 = vld [vmem:[%s7 + $0xb0] sm:$0xff]
        %v345 = vld [vmem:[%s7 + $0xb8] sm:$0xff]
        %v346 = vld [vmem:[%s7 + $0xc0] sm:$0xff]
        %v347 = vld [vmem:[%s7 + $0xc8] sm:$0xff]
        %v348 = vld [vmem:[%s7 + $0xd0] sm:$0x1]
        %v349 = vld [vmem:[%s7 + $0xd8] sm:$0xff]
        %v350 = vld [vmem:[%s7 + $0xe0] sm:$0xff]
        %v351 = vld [vmem:[%s7 + $0xe8] sm:$0xff]
        %v352 = vld [vmem:[%s7 + $0xf0] sm:$0xff]
        %v353 = vld [vmem:[%s7 + $0xf8] sm:$0xff]
        %v354 = vld [vmem:[%s7 + $0x100] sm:$0xff]
        %v355 = vld [vmem:[%s7 + $0x108] sm:$0xff]
        %v356 = vld [vmem:[%s7 + $0x110] sm:$0xff]
        %v357 = vld [vmem:[%s7 + $0x118] sm:$0xff]
        %v358 = vld [vmem:[%s7 + $0x120] sm:$0xff]
        %v359 = vld [vmem:[%s7 + $0x128] sm:$0xff]
        %v360 = vld [vmem:[%s7 + $0x130] sm:$0xff]
        %v361 = vld [vmem:[%s7 + $0x138] sm:$0xff]
        %v362 = vld [vmem:[%s7 + $0x140] sm:$0xff]
        %v363 = vld [vmem:[%s7 + $0x148] sm:$0xff]
        %v364 = vld [vmem:[%s7 + $0x150] sm:$0xff]
        %v365 = vld [vmem:[%s7 + $0x158] sm:$0xff]
        %v366 = vld [vmem:[%s7 + $0x160] sm:$0xff]
        %v367 = vld [vmem:[%s7 + $0x168] sm:$0xff]
        %v368 = vld [vmem:[%s7 + $0x170] sm:$0xff]
        %v369 = vld [vmem:[%s7 + $0x178] sm:$0xff]
        %v370 = vld [vmem:[%s7 + $0x180] sm:$0xff]
        %v371 = vld [vmem:[%s7 + $0x188] sm:$0xff]
        %v372 = vld [vmem:[%s7 + $0x190] sm:$0xff]
        %v373 = vld [vmem:[%s7 + $0x198] sm:$0xff]
        %v374 = vld [vmem:[%s7 + $0x1a0] sm:$0xff]
        %v375 = vld [vmem:[%s7 + $0x1a8] sm:$0xff]
        %v376 = vld [vmem:[%s7 + $0x1b0] sm:$0xff]
        %v377 = vld [vmem:[%s7 + $0x1b8] sm:$0xff]
        %v378 = vld [vmem:[%s7 + $0x1c0] sm:$0xff]
        %v379 = vld [vmem:[%s7 + $0x1c8] sm:$0xff]
        %v380 = vld [vmem:[%s7 + $0x1d0] sm:$0xff]
        %v381 = vld [vmem:[%s7 + $0x1d8] sm:$0xff]
        %v382 = vld [vmem:[%s7 + $0x1e0] sm:$0xff]
        %v383 = vld [vmem:[%s7 + $0x1e8] sm:$0xff]
        %v384 = vld [vmem:[%s7 + $0x1f0] sm:$0xff]
        %v385 = vld [vmem:[%s7 + $0x1f8] sm:$0xff]
        %v386 = vld [vmem:[%s7 + $0x200] sm:$0xff]
        %v387 = vld [vmem:[%s7 + $0x208] sm:$0xff]
        %v388 = vld [vmem:[%s7 + $0x210] sm:$0xff]
        %v389 = vld [vmem:[%s320] sm:$0xff]
        %v390 = vld [vmem:[#allocation2] sm:$0xff]
        %v391 = vld [vmem:[#allocation2 + $0x8] sm:$0xff]
        %v392 = vld [vmem:[#allocation2 + $0x10] sm:$0xff]
        %v393 = vld [vmem:[#allocation2 + $0x18] sm:$0xff]
        %v394 = vld [vmem:[#allocation2 + $0x20] sm:$0xff]
        %v395 = vld [vmem:[#allocation2 + $0x28] sm:$0xff]
        %v396 = vld [vmem:[#allocation2 + $0x30] sm:$0xff]
        %v397 = vld [vmem:[#allocation2 + $0x38] sm:$0xff]
        %v398 = vld [vmem:[#allocation2 + $0x40] sm:$0xff]
        %v399 = vld [vmem:[#allocation2 + $0x48] sm:$0xff]
        %v400 = vld [vmem:[#allocation2 + $0x50] sm:$0xff]
        %v401 = vld [vmem:[#allocation2 + $0x58] sm:$0xff]
        %v402 = vld [vmem:[#allocation2 + $0x60] sm:$0xff]
        %v403 = vld [vmem:[#allocation2 + $0x68] sm:$0xff]
        %v404 = vld [vmem:[#allocation2 + $0x70] sm:$0xff]
        %v405 = vld [vmem:[#allocation2 + $0x78] sm:$0xff]
        %v406 = vld [vmem:[#allocation2 + $0x80] sm:$0xff]
        %v407 = vld [vmem:[#allocation2 + $0x88] sm:$0xff]
        %v408 = vld [vmem:[#allocation2 + $0x90] sm:$0xff]
        %v409 = vld [vmem:[#allocation2 + $0x98] sm:$0xff]
        %v410 = vld [vmem:[#allocation2 + $0xa0] sm:$0xff]
        %v411 = vld [vmem:[#allocation2 + $0xa8] sm:$0xff]
        %v412 = vld [vmem:[#allocation2 + $0xb0] sm:$0xff]
        %v413 = vld [vmem:[#allocation2 + $0xb8] sm:$0xff]
        %v414 = vld [vmem:[#allocation2 + $0xc0] sm:$0xff]
        %v415 = vld [vmem:[#allocation2 + $0xc8] sm:$0xff]
        %v416 = vld [vmem:[#allocation2 + $0xd0] sm:$0xff]
        %v417 = vld [vmem:[#allocation2 + $0xd8] sm:$0xff]
        %v418 = vld [vmem:[#allocation2 + $0xe0] sm:$0xff]
        %v419 = vld [vmem:[#allocation2 + $0xe8] sm:$0xff]
        %v420 = vld [vmem:[#allocation2 + $0xf0] sm:$0xff]
        %v421 = vld [vmem:[#allocation2 + $0xf8] sm:$0xff]
        %v422 = vld [vmem:[#allocation2 + $0x100] sm:$0xff]
        %v423 = vld [vmem:[#allocation2 + $0x108] sm:$0xff]
        %v424 = vld [vmem:[#allocation2 + $0x110] sm:$0xff]
        %v425 = vld [vmem:[#allocation2 + $0x118] sm:$0xff]
        %v426 = vld [vmem:[#allocation2 + $0x120] sm:$0xff]
        %v427 = vld [vmem:[#allocation2 + $0x128] sm:$0xff]
        %v428 = vld [vmem:[#allocation2 + $0x130] sm:$0xff]
        %v429 = vld [vmem:[#allocation2 + $0x138] sm:$0xff]
        %v430 = vld [vmem:[#allocation2 + $0x140] sm:$0xff]
        %v431 = vld [vmem:[#allocation2 + $0x148] sm:$0xff]
        %v432 = vld [vmem:[#allocation2 + $0x150] sm:$0xff]
        %v433 = vld [vmem:[#allocation2 + $0x158] sm:$0xff]
        %v434 = vld [vmem:[#allocation2 + $0x160] sm:$0xff]
        %v435 = vld [vmem:[#allocation2 + $0x168] sm:$0xff]
        %v436 = vld [vmem:[#allocation2 + $0x170] sm:$0xff]
        %v437 = vld [vmem:[#allocation2 + $0x178] sm:$0xff]
        %v438 = vld [vmem:[#allocation2 + $0x180] sm:$0xff]
        %v439 = vld [vmem:[#allocation2 + $0x188] sm:$0xff]
        %v440 = vld [vmem:[#allocation2 + $0x190] sm:$0xff]
        %v441 = vld [vmem:[#allocation2 + $0x198] sm:$0xff]
        %v442 = vld [vmem:[#allocation2 + $0x1a0] sm:$0xff]
        %v443 = vld [vmem:[#allocation2 + $0x1a8] sm:$0xff]
        %v444 = vld [vmem:[#allocation2 + $0x1b0] sm:$0xff]
        %v445 = vld [vmem:[#allocation2 + $0x1b8] sm:$0xff]
        %v446 = vld [vmem:[#allocation2 + $0x1c0] sm:$0xff]
        %v447 = vld [vmem:[#allocation2 + $0x1c8] sm:$0xff]
        %v448 = vld [vmem:[#allocation2 + $0x1d0] sm:$0xff]
        %v449 = vld [vmem:[#allocation2 + $0x1d8] sm:$0xff]
        %v450 = vld [vmem:[#allocation2 + $0x1e0] sm:$0xff]
        %v451 = vld [vmem:[#allocation2 + $0x1e8] sm:$0xff]
        %v452 = vld [vmem:[#allocation2 + $0x1f0] sm:$0xff]
        %v453 = vld [vmem:[#allocation2 + $0x1f8] sm:$0xff]
        %v454 = vld [vmem:[#allocation2 + $0x200] sm:$0xff]
        %v455 = vld [vmem:[#allocation2 + $0x208] sm:$0xff]
        %v456 = vld [vmem:[#allocation2 + $0x210] sm:$0xff]
        %v457 = vld [vmem:[#allocation2 + $0x218] sm:$0xff]
        %v458 = vld [vmem:[#allocation2 + $0x220] sm:$0xff]
        %v459 = vld [vmem:[#allocation2 + $0x228] sm:$0xff]
        %v460 = vld [vmem:[#allocation2 + $0x230] sm:$0xff]
        %v461 = vld [vmem:[#allocation2 + $0x238] sm:$0xff]
        %v462 = vld [vmem:[#allocation2 + $0x240] sm:$0xff]
        %v463 = vld [vmem:[#allocation2 + $0x248] sm:$0xff]
        %v464 = vld [vmem:[#allocation2 + $0x250] sm:$0xff]
        %v465 = vld [vmem:[#allocation2 + $0x258] sm:$0xff]
        %v466 = vld [vmem:[#allocation2 + $0x260] sm:$0xff]
        %v467 = vld [vmem:[#allocation2 + $0x268] sm:$0xff]
        %v468 = vld [vmem:[#allocation2 + $0x270] sm:$0xff]
        %v469 = vld [vmem:[#allocation2 + $0x278] sm:$0xff]
        %v470 = vld [vmem:[#allocation2 + $0x280] sm:$0xff]
        %v471 = vld [vmem:[#allocation2 + $0x288] sm:$0xff]
        %v472 = vld [vmem:[#allocation2 + $0x290] sm:$0xff]
        %v473 = vld [vmem:[#allocation2 + $0x298] sm:$0xff]
        %v474 = vld [vmem:[#allocation2 + $0x2a0] sm:$0xff]
        %v475 = vld [vmem:[#allocation2 + $0x2a8] sm:$0xff]
        %v476 = vld [vmem:[#allocation2 + $0x2b0] sm:$0xff]
        %v477 = vld [vmem:[#allocation2 + $0x2b8] sm:$0xff]
        %v478 = vld [vmem:[#allocation2 + $0x2c0] sm:$0xff]
        %v479 = vld [vmem:[#allocation2 + $0x2c8] sm:$0xff]
        %v480 = vld [vmem:[#allocation2 + $0x2d0] sm:$0xff]
        %v481 = vld [vmem:[#allocation2 + $0x2d8] sm:$0xff]
        %v482 = vld [vmem:[#allocation2 + $0x2e0] sm:$0xff]
        %v483 = vld [vmem:[#allocation2 + $0x2e8] sm:$0xff]
        %v484 = vld [vmem:[#allocation2 + $0x2f0] sm:$0xff]
        %v485 = vld [vmem:[#allocation2 + $0x2f8] sm:$0xff]
        %v486 = vld [vmem:[#allocation2 + $0x300] sm:$0xff]
        %v487 = vld [vmem:[#allocation2 + $0x308] sm:$0xff]
        %v488 = vld [vmem:[#allocation2 + $0x310] sm:$0xff]
        %v489 = vld [vmem:[#allocation2 + $0x318] sm:$0xff]
        %v490 = vld [vmem:[#allocation2 + $0x320] sm:$0xff]
        %v491 = vld [vmem:[#allocation2 + $0x328] sm:$0xff]
        %v492 = vld [vmem:[#allocation2 + $0x330] sm:$0xff]
        %v493 = vld [vmem:[#allocation2 + $0x338] sm:$0xff]
        %v494 = vld [vmem:[#allocation2 + $0x340] sm:$0xff]
        %v495 = vld [vmem:[#allocation2 + $0x348] sm:$0xff]
        %v496 = vld [vmem:[#allocation2 + $0x350] sm:$0xff]
        %v497 = vld [vmem:[#allocation2 + $0x358] sm:$0xff]
        %v498 = vld [vmem:[#allocation2 + $0x360] sm:$0xff]
        %v499 = vld [vmem:[#allocation2 + $0x368] sm:$0xff]
        %v500 = vld [vmem:[#allocation2 + $0x370] sm:$0xff]
        %v501 = vld [vmem:[#allocation2 + $0x378] sm:$0xff]
        %v502 = vld [vmem:[#allocation2 + $0x380] sm:$0xff]
        %v503 = vld [vmem:[#allocation2 + $0x388] sm:$0xff]
        %v504 = vld [vmem:[#allocation2 + $0x390] sm:$0xff]
        %v505 = vld [vmem:[#allocation2 + $0x398] sm:$0xff]
        %v506 = vld [vmem:[#allocation2 + $0x3a0] sm:$0xff]
        %v507 = vld [vmem:[#allocation2 + $0x3a8] sm:$0xff]
        %v508 = vld [vmem:[#allocation2 + $0x3b0] sm:$0xff]
        %v509 = vld [vmem:[#allocation2 + $0x3b8] sm:$0xff]
        %v510 = vld [vmem:[#allocation2 + $0x3c0] sm:$0xff]
        %v511 = vld [vmem:[#allocation2 + $0x3c8] sm:$0xff]
        %v512 = vld [vmem:[#allocation2 + $0x3d0] sm:$0xff]
        %v513 = vld [vmem:[#allocation2 + $0x3d8] sm:$0xff]
        %v514 = vld [vmem:[#allocation2 + $0x3e0] sm:$0xff]
        %v515 = vld [vmem:[#allocation2 + $0x3e8] sm:$0xff]
        %v516 = vld [vmem:[#allocation2 + $0x3f0] sm:$0xff]
        %v517 = vld [vmem:[#allocation2 + $0x3f8] sm:$0xff]
        %v518 = vld [vmem:[#allocation2 + $0x400] sm:$0xff]
        %v519 = vld [vmem:[#allocation2 + $0x408] sm:$0xff]
        %v520 = vld [vmem:[#allocation2 + $0x410] sm:$0xff]
        %v521 = vld [vmem:[#allocation2 + $0x418] sm:$0xff]
        %v522 = vld [vmem:[#allocation2 + $0x420] sm:$0xff]
        %v523 = vld [vmem:[#allocation2 + $0x428] sm:$0xff]
        %v524 = vld [vmem:[#allocation2 + $0x430] sm:$0xff]
        %v525 = vld [vmem:[#allocation2 + $0x438] sm:$0xff]
        %v526 = vld [vmem:[#allocation2 + $0x440] sm:$0xff]
        %v527 = vld [vmem:[#allocation2 + $0x448] sm:$0xff]
        %v528 = vld [vmem:[#allocation2 + $0x450] sm:$0xff]
        %v529 = vld [vmem:[#allocation2 + $0x458] sm:$0xff]
        %v530 = vld [vmem:[#allocation2 + $0x460] sm:$0xff]
        %v531 = vld [vmem:[#allocation2 + $0x468] sm:$0xff]
        %v532 = vld [vmem:[#allocation2 + $0x470] sm:$0xff]
        %v533 = vld [vmem:[#allocation2 + $0x478] sm:$0xff]
        %v534 = vld [vmem:[#allocation2 + $0x480] sm:$0xff]
        %v535 = vld [vmem:[#allocation2 + $0x488] sm:$0xff]
        %v536 = vld [vmem:[#allocation2 + $0x490] sm:$0xff]
        %v537 = vld [vmem:[#allocation2 + $0x498] sm:$0xff]
        %v538 = vld [vmem:[#allocation2 + $0x4a0] sm:$0xff]
        %v539 = vld [vmem:[#allocation2 + $0x4a8] sm:$0xff]
        %v540 = vld [vmem:[#allocation2 + $0x4b0] sm:$0xff]
        %v541 = vld [vmem:[#allocation2 + $0x4b8] sm:$0xff]
        %v542 = vld [vmem:[#allocation2 + $0x4c0] sm:$0xff]
        %v543 = vld [vmem:[#allocation2 + $0x4c8] sm:$0xff]
        %v544 = vld [vmem:[#allocation2 + $0x4d0] sm:$0xff]
        %v545 = vld [vmem:[#allocation2 + $0x4d8] sm:$0xff]
        %v546 = vld [vmem:[#allocation2 + $0x4e0] sm:$0xff]
        %v547 = vld [vmem:[#allocation2 + $0x4e8] sm:$0xff]
        %v548 = vld [vmem:[#allocation2 + $0x4f0] sm:$0xff]
        %v549 = vld [vmem:[#allocation2 + $0x4f8] sm:$0xff]
        %v550 = vld [vmem:[#allocation2 + $0x500] sm:$0xff]
        %v551 = vld [vmem:[#allocation2 + $0x508] sm:$0xff]
        %v552 = vld [vmem:[#allocation2 + $0x510] sm:$0xff]
        %v553 = vld [vmem:[#allocation2 + $0x518] sm:$0xff]
        %v554 = vld [vmem:[#allocation2 + $0x520] sm:$0xff]
        %v555 = vld [vmem:[#allocation2 + $0x528] sm:$0xff]
        %v556 = vld [vmem:[#allocation2 + $0x530] sm:$0xff]
        %v557 = vld [vmem:[#allocation2 + $0x538] sm:$0xff]
        %v558 = vld [vmem:[#allocation2 + $0x540] sm:$0xff]
        %v559 = vld [vmem:[#allocation2 + $0x548] sm:$0xff]
        %v560 = vld [vmem:[#allocation2 + $0x550] sm:$0xff]
        %v561 = vld [vmem:[#allocation2 + $0x558] sm:$0xff]
        %v562 = vld [vmem:[#allocation2 + $0x560] sm:$0xff]
        %v563 = vld [vmem:[#allocation2 + $0x568] sm:$0xff]
        %v564 = vld [vmem:[#allocation2 + $0x570] sm:$0xff]
        %v565 = vld [vmem:[#allocation2 + $0x578] sm:$0xff]
        %v566 = vld [vmem:[#allocation2 + $0x580] sm:$0xff]
        %v567 = vld [vmem:[#allocation2 + $0x588] sm:$0xff]
        %v568 = vld [vmem:[#allocation2 + $0x590] sm:$0xff]
        %v569 = vld [vmem:[#allocation2 + $0x598] sm:$0xff]
        %v570 = vld [vmem:[#allocation2 + $0x5a0] sm:$0xff]
        %v571 = vld [vmem:[#allocation2 + $0x5a8] sm:$0xff]
        %v572 = vld [vmem:[#allocation2 + $0x5b0] sm:$0xff]
        %v573 = vld [vmem:[#allocation2 + $0x5b8] sm:$0xff]
        %v574 = vld [vmem:[#allocation2 + $0x5c0] sm:$0xff]
        %v575 = vld [vmem:[#allocation2 + $0x5c8] sm:$0xff]
        %v576 = vld [vmem:[#allocation2 + $0x5d0] sm:$0xff]
        %v577 = vld [vmem:[#allocation2 + $0x5d8] sm:$0xff]
        %v578 = vld [vmem:[#allocation2 + $0x5e0] sm:$0xff]
        %v579 = vld [vmem:[#allocation2 + $0x5e8] sm:$0xff]
        %v580 = vld [vmem:[#allocation2 + $0x5f0] sm:$0xff]
        %v581 = vld [vmem:[#allocation2 + $0x5f8] sm:$0xff]
        %v582 = vld [vmem:[#allocation2 + $0x600] sm:$0xff]
        %v583 = vld [vmem:[#allocation2 + $0x608] sm:$0xff]
        %v584 = vld [vmem:[#allocation2 + $0x610] sm:$0xff]
        %v585 = vld [vmem:[#allocation2 + $0x618] sm:$0xff]
        %v586 = vld [vmem:[#allocation2 + $0x620] sm:$0xff]
        %v587 = vld [vmem:[#allocation2 + $0x628] sm:$0xff]
        %v588 = vld [vmem:[#allocation2 + $0x630] sm:$0xff]
        %v589 = vld [vmem:[#allocation2 + $0x638] sm:$0xff]
        %v590 = vld [vmem:[#allocation2 + $0x640] sm:$0xff]
        %v591 = vld [vmem:[#allocation2 + $0x648] sm:$0xff]
        %v592 = vld [vmem:[#allocation2 + $0x650] sm:$0xff]
        %v593 = vld [vmem:[#allocation2 + $0x658] sm:$0xff]
        %v594 = vld [vmem:[#allocation2 + $0x660] sm:$0xff]
        %v595 = vld [vmem:[#allocation2 + $0x668] sm:$0xff]
        %v596 = vld [vmem:[#allocation2 + $0x670] sm:$0xff]
        %v597 = vld [vmem:[#allocation2 + $0x678] sm:$0xff]
        %v598 = vld [vmem:[#allocation2 + $0x680] sm:$0xff]
        %v599 = vld [vmem:[#allocation2 + $0x688] sm:$0xff]
        %v600 = vld [vmem:[#allocation2 + $0x690] sm:$0xff]
        %v601 = vld [vmem:[#allocation2 + $0x698] sm:$0xff]
        %v602 = vld [vmem:[#allocation2 + $0x6a0] sm:$0xff]
        %v603 = vld [vmem:[#allocation2 + $0x6a8] sm:$0xff]
        %v604 = vld [vmem:[#allocation2 + $0x6b0] sm:$0xff]
        %v605 = vld [vmem:[#allocation2 + $0x6b8] sm:$0xff]
        %v606 = vld [vmem:[#allocation2 + $0x6c0] sm:$0xff]
        %v607 = vld [vmem:[#allocation2 + $0x6c8] sm:$0xff]
        %v608 = vld [vmem:[#allocation2 + $0x6d0] sm:$0xff]
        %v609 = vld [vmem:[#allocation2 + $0x6d8] sm:$0xff]
        %v610 = vld [vmem:[#allocation2 + $0x6e0] sm:$0xff]
        %v611 = vld [vmem:[#allocation2 + $0x6e8] sm:$0xff]
        %v612 = vld [vmem:[#allocation2 + $0x6f0] sm:$0xff]
        %v613 = vld [vmem:[#allocation2 + $0x6f8] sm:$0xff]
        %v614 = vld [vmem:[#allocation2 + $0x700] sm:$0xff]
        %v615 = vld [vmem:[#allocation2 + $0x708] sm:$0xff]
        %v616 = vld [vmem:[#allocation2 + $0x710] sm:$0xff]
        %v617 = vld [vmem:[#allocation2 + $0x718] sm:$0xff]
        %v618 = vld [vmem:[#allocation2 + $0x720] sm:$0xff]
        %v619 = vld [vmem:[#allocation2 + $0x728] sm:$0xff]
        %v620 = vld [vmem:[#allocation2 + $0x730] sm:$0xff]
        %v621 = vld [vmem:[#allocation2 + $0x738] sm:$0xff]
        %v622 = vld [vmem:[#allocation2 + $0x740] sm:$0xff]
        %v623 = vld [vmem:[#allocation2 + $0x748] sm:$0xff]
        %v624 = vld [vmem:[#allocation2 + $0x750] sm:$0xff]
        %v625 = vld [vmem:[#allocation2 + $0x758] sm:$0xff]
        %v626 = vld [vmem:[#allocation2 + $0x760] sm:$0xff]
        %v627 = vld [vmem:[#allocation2 + $0x768] sm:$0xff]
        %v628 = vld [vmem:[#allocation2 + $0x770] sm:$0xff]
        %v629 = vld [vmem:[#allocation2 + $0x778] sm:$0xff]
        %v630 = vld [vmem:[#allocation2 + $0x780] sm:$0xff]
        %v631 = vld [vmem:[#allocation2 + $0x788] sm:$0xff]
        %v632 = vld [vmem:[#allocation2 + $0x790] sm:$0xff]
        %v633 = vld [vmem:[#allocation2 + $0x798] sm:$0xff]
        %v634 = vld [vmem:[#allocation2 + $0x7a0] sm:$0xff]
        %v635 = vld [vmem:[#allocation2 + $0x7a8] sm:$0xff]
        %v636 = vld [vmem:[#allocation2 + $0x7b0] sm:$0xff]
        %v637 = vld [vmem:[#allocation2 + $0x7b8] sm:$0xff]
        %v638 = vld [vmem:[#allocation2 + $0x7c0] sm:$0xff]
        %v639 = vld [vmem:[#allocation2 + $0x7c8] sm:$0xff]
        %v640 = vld [vmem:[#allocation2 + $0x7d0] sm:$0xff]
        %v641 = vld [vmem:[#allocation2 + $0x7d8] sm:$0xff]
        %v642 = vld [vmem:[#allocation2 + $0x7e0] sm:$0xff]
        %v643 = vld [vmem:[#allocation2 + $0x7e8] sm:$0xff]
        %v644 = vld [vmem:[#allocation2 + $0x7f0] sm:$0xff]
        %v645 = vld [vmem:[#allocation2 + $0x7f8] sm:$0xff]
        %647 = vst [vmem:[#allocation1] ss:$2 sm:$0xff] %v389
        %v648 = vld.sshfl [vmem:[#allocation1] sm:$0xff pattern:$0x75316420]
        %v649 = vld.sshfl [vmem:[#allocation1 + $0x8] sm:$0xff pattern:$0x75316420]
        %652 = vmatpush.msra.mxu0 %v510
        %653 = vmatpush.msra.mxu0 %v502
        %654 = vmatpush.msra.mxu0 %v494
        %655 = vmatpush.msra.mxu0 %v486
        %656 = vmatpush.msra.mxu0 %v478
        %657 = vmatpush.msra.mxu0 %v470
        %658 = vmatpush.msra.mxu0 %v462
        %659 = vmatpush.msra.mxu0 %v454
        %660 = vmatpush.msra.mxu0 %v446
        %661 = vmatpush.msra.mxu0 %v438
        %662 = vmatpush.msra.mxu0 %v430
        %663 = vmatpush.msra.mxu0 %v422
        %664 = vmatpush.msra.mxu0 %v414
        %665 = vmatpush.msra.mxu0 %v406
        %666 = vmatpush.msra.mxu0 %v398
        %667 = vmatpush.msra.mxu0 %v390
        %668 = vmatmul.f32.gmra.mxu0 %v648
        %v669 = vpop.f32.mrf.mxu0
        %v670 = vadd.f32 0.0, %v669
        %671 = vdwg.mxu0
        %672 = vmatpush.msra.mxu0 %v638
        %673 = vmatpush.msra.mxu0 %v630
        %674 = vmatpush.msra.mxu0 %v622
        %675 = vmatpush.msra.mxu0 %v614
        %676 = vmatpush.msra.mxu0 %v606
        %677 = vmatpush.msra.mxu0 %v598
        %678 = vmatpush.msra.mxu0 %v590
        %679 = vmatpush.msra.mxu0 %v582
        %680 = vmatpush.msra.mxu0 %v574
        %681 = vmatpush.msra.mxu0 %v566
        %682 = vmatpush.msra.mxu0 %v558
        %683 = vmatpush.msra.mxu0 %v550
        %684 = vmatpush.msra.mxu0 %v542
        %685 = vmatpush.msra.mxu0 %v534
        %686 = vmatpush.msra.mxu0 %v526
        %687 = vmatpush.msra.mxu0 %v518
        %688 = vmatmul.f32.gmra.mxu0 %v649
        %v689 = vpop.f32.mrf.mxu0
        %v690 = vadd.f32 %v670, %v689
        %691 = vdwg.mxu0
        %692 = vmatpush.msra.mxu0 %v511
        %693 = vmatpush.msra.mxu0 %v503
        %694 = vmatpush.msra.mxu0 %v495
        %695 = vmatpush.msra.mxu0 %v487
        %696 = vmatpush.msra.mxu0 %v479
        %697 = vmatpush.msra.mxu0 %v471
        %698 = vmatpush.msra.mxu0 %v463
        %699 = vmatpush.msra.mxu0 %v455
        %700 = vmatpush.msra.mxu0 %v447
        %701 = vmatpush.msra.mxu0 %v439
        %702 = vmatpush.msra.mxu0 %v431
        %703 = vmatpush.msra.mxu0 %v423
        %704 = vmatpush.msra.mxu0 %v415
        %705 = vmatpush.msra.mxu0 %v407
        %706 = vmatpush.msra.mxu0 %v399
        %707 = vmatpush.msra.mxu0 %v391
        %708 = vmatmul.f32.gmra.mxu0 %v648
        %v709 = vpop.f32.mrf.mxu0
        %v710 = vadd.f32 0.0, %v709
        %711 = vdwg.mxu0
        %712 = vmatpush.msra.mxu0 %v639
        %713 = vmatpush.msra.mxu0 %v631
        %714 = vmatpush.msra.mxu0 %v623
        %715 = vmatpush.msra.mxu0 %v615
        %716 = vmatpush.msra.mxu0 %v607
        %717 = vmatpush.msra.mxu0 %v599
        %718 = vmatpush.msra.mxu0 %v591
        %719 = vmatpush.msra.mxu0 %v583
        %720 = vmatpush.msra.mxu0 %v575
        %721 = vmatpush.msra.mxu0 %v567
        %722 = vmatpush.msra.mxu0 %v559
        %723 = vmatpush.msra.mxu0 %v551
        %724 = vmatpush.msra.mxu0 %v543
        %725 = vmatpush.msra.mxu0 %v535
        %726 = vmatpush.msra.mxu0 %v527
        %727 = vmatpush.msra.mxu0 %v519
        %728 = vmatmul.f32.gmra.mxu0 %v649
        %v729 = vpop.f32.mrf.mxu0
        %v730 = vadd.f32 %v710, %v729
        %731 = vdwg.mxu0
        %732 = vmatpush.msra.mxu0 %v512
        %733 = vmatpush.msra.mxu0 %v504
        %734 = vmatpush.msra.mxu0 %v496
        %735 = vmatpush.msra.mxu0 %v488
        %736 = vmatpush.msra.mxu0 %v480
        %737 = vmatpush.msra.mxu0 %v472
        %738 = vmatpush.msra.mxu0 %v464
        %739 = vmatpush.msra.mxu0 %v456
        %740 = vmatpush.msra.mxu0 %v448
        %741 = vmatpush.msra.mxu0 %v440
        %742 = vmatpush.msra.mxu0 %v432
        %743 = vmatpush.msra.mxu0 %v424
        %744 = vmatpush.msra.mxu0 %v416
        %745 = vmatpush.msra.mxu0 %v408
        %746 = vmatpush.msra.mxu0 %v400
        %747 = vmatpush.msra.mxu0 %v392
        %748 = vmatmul.f32.gmra.mxu0 %v648
        %v749 = vpop.f32.mrf.mxu0
        %v750 = vadd.f32 0.0, %v749
        %751 = vdwg.mxu0
        %752 = vmatpush.msra.mxu0 %v640
        %753 = vmatpush.msra.mxu0 %v632
        %754 = vmatpush.msra.mxu0 %v624
        %755 = vmatpush.msra.mxu0 %v616
        %756 = vmatpush.msra.mxu0 %v608
        %757 = vmatpush.msra.mxu0 %v600
        %758 = vmatpush.msra.mxu0 %v592
        %759 = vmatpush.msra.mxu0 %v584
        %760 = vmatpush.msra.mxu0 %v576
        %761 = vmatpush.msra.mxu0 %v568
        %762 = vmatpush.msra.mxu0 %v560
        %763 = vmatpush.msra.mxu0 %v552
        %764 = vmatpush.msra.mxu0 %v544
        %765 = vmatpush.msra.mxu0 %v536
        %766 = vmatpush.msra.mxu0 %v528
        %767 = vmatpush.msra.mxu0 %v520
        %768 = vmatmul.f32.gmra.mxu0 %v649
        %v769 = vpop.f32.mrf.mxu0
        %v770 = vadd.f32 %v750, %v769
        %771 = vdwg.mxu0
        %772 = vmatpush.msra.mxu0 %v513
        %773 = vmatpush.msra.mxu0 %v505
        %774 = vmatpush.msra.mxu0 %v497
        %775 = vmatpush.msra.mxu0 %v489
        %776 = vmatpush.msra.mxu0 %v481
        %777 = vmatpush.msra.mxu0 %v473
        %778 = vmatpush.msra.mxu0 %v465
        %779 = vmatpush.msra.mxu0 %v457
        %780 = vmatpush.msra.mxu0 %v449
        %781 = vmatpush.msra.mxu0 %v441
        %782 = vmatpush.msra.mxu0 %v433
        %783 = vmatpush.msra.mxu0 %v425
        %784 = vmatpush.msra.mxu0 %v417
        %785 = vmatpush.msra.mxu0 %v409
        %786 = vmatpush.msra.mxu0 %v401
        %787 = vmatpush.msra.mxu0 %v393
        %788 = vmatmul.f32.gmra.mxu0 %v648
        %v789 = vpop.f32.mrf.mxu0
        %v790 = vadd.f32 0.0, %v789
        %791 = vdwg.mxu0
        %792 = vmatpush.msra.mxu0 %v641
        %793 = vmatpush.msra.mxu0 %v633
        %794 = vmatpush.msra.mxu0 %v625
        %795 = vmatpush.msra.mxu0 %v617
        %796 = vmatpush.msra.mxu0 %v609
        %797 = vmatpush.msra.mxu0 %v601
        %798 = vmatpush.msra.mxu0 %v593
        %799 = vmatpush.msra.mxu0 %v585
        %800 = vmatpush.msra.mxu0 %v577
        %801 = vmatpush.msra.mxu0 %v569
        %802 = vmatpush.msra.mxu0 %v561
        %803 = vmatpush.msra.mxu0 %v553
        %804 = vmatpush.msra.mxu0 %v545
        %805 = vmatpush.msra.mxu0 %v537
        %806 = vmatpush.msra.mxu0 %v529
        %807 = vmatpush.msra.mxu0 %v521
        %808 = vmatmul.f32.gmra.mxu0 %v649
        %v809 = vpop.f32.mrf.mxu0
        %v810 = vadd.f32 %v790, %v809
        %811 = vdwg.mxu0
        %812 = vmatpush.msra.mxu0 %v514
        %813 = vmatpush.msra.mxu0 %v506
        %814 = vmatpush.msra.mxu0 %v498
        %815 = vmatpush.msra.mxu0 %v490
        %816 = vmatpush.msra.mxu0 %v482
        %817 = vmatpush.msra.mxu0 %v474
        %818 = vmatpush.msra.mxu0 %v466
        %819 = vmatpush.msra.mxu0 %v458
        %820 = vmatpush.msra.mxu0 %v450
        %821 = vmatpush.msra.mxu0 %v442
        %822 = vmatpush.msra.mxu0 %v434
        %823 = vmatpush.msra.mxu0 %v426
        %824 = vmatpush.msra.mxu0 %v418
        %825 = vmatpush.msra.mxu0 %v410
        %826 = vmatpush.msra.mxu0 %v402
        %827 = vmatpush.msra.mxu0 %v394
        %828 = vmatmul.f32.gmra.mxu0 %v648
        %v829 = vpop.f32.mrf.mxu0
        %v830 = vadd.f32 0.0, %v829
        %831 = vdwg.mxu0
        %832 = vmatpush.msra.mxu0 %v642
        %833 = vmatpush.msra.mxu0 %v634
        %834 = vmatpush.msra.mxu0 %v626
        %835 = vmatpush.msra.mxu0 %v618
        %836 = vmatpush.msra.mxu0 %v610
        %837 = vmatpush.msra.mxu0 %v602
        %838 = vmatpush.msra.mxu0 %v594
        %839 = vmatpush.msra.mxu0 %v586
        %840 = vmatpush.msra.mxu0 %v578
        %841 = vmatpush.msra.mxu0 %v570
        %842 = vmatpush.msra.mxu0 %v562
        %843 = vmatpush.msra.mxu0 %v554
        %844 = vmatpush.msra.mxu0 %v546
        %845 = vmatpush.msra.mxu0 %v538
        %846 = vmatpush.msra.mxu0 %v530
        %847 = vmatpush.msra.mxu0 %v522
        %848 = vmatmul.f32.gmra.mxu0 %v649
        %v849 = vpop.f32.mrf.mxu0
        %v850 = vadd.f32 %v830, %v849
        %851 = vdwg.mxu0
        %852 = vmatpush.msra.mxu0 %v515
        %853 = vmatpush.msra.mxu0 %v507
        %854 = vmatpush.msra.mxu0 %v499
        %855 = vmatpush.msra.mxu0 %v491
        %856 = vmatpush.msra.mxu0 %v483
        %857 = vmatpush.msra.mxu0 %v475
        %858 = vmatpush.msra.mxu0 %v467
        %859 = vmatpush.msra.mxu0 %v459
        %860 = vmatpush.msra.mxu0 %v451
        %861 = vmatpush.msra.mxu0 %v443
        %862 = vmatpush.msra.mxu0 %v435
        %863 = vmatpush.msra.mxu0 %v427
        %864 = vmatpush.msra.mxu0 %v419
        %865 = vmatpush.msra.mxu0 %v411
        %866 = vmatpush.msra.mxu0 %v403
        %867 = vmatpush.msra.mxu0 %v395
        %868 = vmatmul.f32.gmra.mxu0 %v648
        %v869 = vpop.f32.mrf.mxu0
        %v870 = vadd.f32 0.0, %v869
        %871 = vdwg.mxu0
        %872 = vmatpush.msra.mxu0 %v643
        %873 = vmatpush.msra.mxu0 %v635
        %874 = vmatpush.msra.mxu0 %v627
        %875 = vmatpush.msra.mxu0 %v619
        %876 = vmatpush.msra.mxu0 %v611
        %877 = vmatpush.msra.mxu0 %v603
        %878 = vmatpush.msra.mxu0 %v595
        %879 = vmatpush.msra.mxu0 %v587
        %880 = vmatpush.msra.mxu0 %v579
        %881 = vmatpush.msra.mxu0 %v571
        %882 = vmatpush.msra.mxu0 %v563
        %883 = vmatpush.msra.mxu0 %v555
        %884 = vmatpush.msra.mxu0 %v547
        %885 = vmatpush.msra.mxu0 %v539
        %886 = vmatpush.msra.mxu0 %v531
        %887 = vmatpush.msra.mxu0 %v523
        %888 = vmatmul.f32.gmra.mxu0 %v649
        %v889 = vpop.f32.mrf.mxu0
        %v890 = vadd.f32 %v870, %v889
        %891 = vdwg.mxu0
        %892 = vmatpush.msra.mxu0 %v516
        %893 = vmatpush.msra.mxu0 %v508
        %894 = vmatpush.msra.mxu0 %v500
        %895 = vmatpush.msra.mxu0 %v492
        %896 = vmatpush.msra.mxu0 %v484
        %897 = vmatpush.msra.mxu0 %v476
        %898 = vmatpush.msra.mxu0 %v468
        %899 = vmatpush.msra.mxu0 %v460
        %900 = vmatpush.msra.mxu0 %v452
        %901 = vmatpush.msra.mxu0 %v444
        %902 = vmatpush.msra.mxu0 %v436
        %903 = vmatpush.msra.mxu0 %v428
        %904 = vmatpush.msra.mxu0 %v420
        %905 = vmatpush.msra.mxu0 %v412
        %906 = vmatpush.msra.mxu0 %v404
        %907 = vmatpush.msra.mxu0 %v396
        %908 = vmatmul.f32.gmra.mxu0 %v648
        %v909 = vpop.f32.mrf.mxu0
        %v910 = vadd.f32 0.0, %v909
        %911 = vdwg.mxu0
        %912 = vmatpush.msra.mxu0 %v644
        %913 = vmatpush.msra.mxu0 %v636
        %914 = vmatpush.msra.mxu0 %v628
        %915 = vmatpush.msra.mxu0 %v620
        %916 = vmatpush.msra.mxu0 %v612
        %917 = vmatpush.msra.mxu0 %v604
        %918 = vmatpush.msra.mxu0 %v596
        %919 = vmatpush.msra.mxu0 %v588
        %920 = vmatpush.msra.mxu0 %v580
        %921 = vmatpush.msra.mxu0 %v572
        %922 = vmatpush.msra.mxu0 %v564
        %923 = vmatpush.msra.mxu0 %v556
        %924 = vmatpush.msra.mxu0 %v548
        %925 = vmatpush.msra.mxu0 %v540
        %926 = vmatpush.msra.mxu0 %v532
        %927 = vmatpush.msra.mxu0 %v524
        %928 = vmatmul.f32.gmra.mxu0 %v649
        %v929 = vpop.f32.mrf.mxu0
        %v930 = vadd.f32 %v910, %v929
        %931 = vdwg.mxu0
        %932 = vmatpush.msra.mxu0 %v517
        %933 = vmatpush.msra.mxu0 %v509
        %934 = vmatpush.msra.mxu0 %v501
        %935 = vmatpush.msra.mxu0 %v493
        %936 = vmatpush.msra.mxu0 %v485
        %937 = vmatpush.msra.mxu0 %v477
        %938 = vmatpush.msra.mxu0 %v469
        %939 = vmatpush.msra.mxu0 %v461
        %940 = vmatpush.msra.mxu0 %v453
        %941 = vmatpush.msra.mxu0 %v445
        %942 = vmatpush.msra.mxu0 %v437
        %943 = vmatpush.msra.mxu0 %v429
        %944 = vmatpush.msra.mxu0 %v421
        %945 = vmatpush.msra.mxu0 %v413
        %946 = vmatpush.msra.mxu0 %v405
        %947 = vmatpush.msra.mxu0 %v397
        %948 = vmatmul.f32.gmra.mxu0 %v648
        %v949 = vpop.f32.mrf.mxu0
        %v950 = vadd.f32 0.0, %v949
        %951 = vdwg.mxu0
        %952 = vmatpush.msra.mxu0 %v645
        %953 = vmatpush.msra.mxu0 %v637
        %954 = vmatpush.msra.mxu0 %v629
        %955 = vmatpush.msra.mxu0 %v621
        %956 = vmatpush.msra.mxu0 %v613
        %957 = vmatpush.msra.mxu0 %v605
        %958 = vmatpush.msra.mxu0 %v597
        %959 = vmatpush.msra.mxu0 %v589
        %960 = vmatpush.msra.mxu0 %v581
        %961 = vmatpush.msra.mxu0 %v573
        %962 = vmatpush.msra.mxu0 %v565
        %963 = vmatpush.msra.mxu0 %v557
        %964 = vmatpush.msra.mxu0 %v549
        %965 = vmatpush.msra.mxu0 %v541
        %966 = vmatpush.msra.mxu0 %v533
        %967 = vmatpush.msra.mxu0 %v525
        %968 = vmatmul.f32.gmra.mxu0 %v649
        %v969 = vpop.f32.mrf.mxu0
        %v970 = vadd.f32 %v950, %v969
        %971 = vdwg.mxu0
        %vm972 = vcmask 1043456
        %v973 = vsel %vm972, %v690, 0.0
        %v974 = vrot.slane %v973, 4
        %v975 = vadd.f32 %v973, %v974
        %v976 = vrot.slane %v975, 2
        %v977 = vadd.f32 %v975, %v976
        %v978 = vrot.slane %v977, 1
        %v979 = vadd.f32 %v977, %v978
        %v980 = vsel %vm972, %v730, 0.0
        %v981 = vrot.slane %v980, 4
        %v982 = vadd.f32 %v980, %v981
        %v983 = vrot.slane %v982, 2
        %v984 = vadd.f32 %v982, %v983
        %v985 = vrot.slane %v984, 1
        %v986 = vadd.f32 %v984, %v985
        %v987 = vsel %vm972, %v770, 0.0
        %v988 = vrot.slane %v987, 4
        %v989 = vadd.f32 %v987, %v988
        %v990 = vrot.slane %v989, 2
        %v991 = vadd.f32 %v989, %v990
        %v992 = vrot.slane %v991, 1
        %v993 = vadd.f32 %v991, %v992
        %v994 = vsel %vm972, %v810, 0.0
        %v995 = vrot.slane %v994, 4
        %v996 = vadd.f32 %v994, %v995
        %v997 = vrot.slane %v996, 2
        %v998 = vadd.f32 %v996, %v997
        %v999 = vrot.slane %v998, 1
        %v1000 = vadd.f32 %v998, %v999
        %v1001 = vsel %vm972, %v850, 0.0
        %v1002 = vrot.slane %v1001, 4
        %v1003 = vadd.f32 %v1001, %v1002
        %v1004 = vrot.slane %v1003, 2
        %v1005 = vadd.f32 %v1003, %v1004
        %v1006 = vrot.slane %v1005, 1
        %v1007 = vadd.f32 %v1005, %v1006
        %v1008 = vsel %vm972, %v890, 0.0
        %v1009 = vrot.slane %v1008, 4
        %v1010 = vadd.f32 %v1008, %v1009
        %v1011 = vrot.slane %v1010, 2
        %v1012 = vadd.f32 %v1010, %v1011
        %v1013 = vrot.slane %v1012, 1
        %v1014 = vadd.f32 %v1012, %v1013
        %v1015 = vsel %vm972, %v930, 0.0
        %v1016 = vrot.slane %v1015, 4
        %v1017 = vadd.f32 %v1015, %v1016
        %v1018 = vrot.slane %v1017, 2
        %v1019 = vadd.f32 %v1017, %v1018
        %v1020 = vrot.slane %v1019, 1
        %v1021 = vadd.f32 %v1019, %v1020
        %v1022 = vsel %vm972, %v970, 0.0
        %v1023 = vrot.slane %v1022, 4
        %v1024 = vadd.f32 %v1022, %v1023
        %v1025 = vrot.slane %v1024, 2
        %v1026 = vadd.f32 %v1024, %v1025
        %v1027 = vrot.slane %v1026, 1
        %v1028 = vadd.f32 %v1026, %v1027
        %v1029 = vrcp.pop 4.0
        %v1030 = vmul.f32 4.0, %v1029
        %v1031 = vsub.f32 1.0, %v1030
        %v1032 = vmul.f32 %v1029, %v1031
        %v1033 = vadd.f32 %v1029, %v1032
        %vm1034 = vweird.f32 %v1029
        %v1035 = vsel %vm1034, %v1029, %v1033
        %v1036 = vmul.f32 %v979, %v1035
        %v1037 = vmul.f32 %v986, %v1035
        %v1038 = vmul.f32 %v993, %v1035
        %v1039 = vmul.f32 %v1000, %v1035
        %v1040 = vmul.f32 %v1007, %v1035
        %v1041 = vmul.f32 %v1014, %v1035
        %v1042 = vmul.f32 %v1021, %v1035
        %v1043 = vmul.f32 %v1028, %v1035
        %v1044 = vsub.f32 %v690, %v1036
        %v1045 = vsub.f32 %v730, %v1037
        %v1046 = vsub.f32 %v770, %v1038
        %v1047 = vsub.f32 %v810, %v1039
        %v1048 = vsub.f32 %v850, %v1040
        %v1049 = vsub.f32 %v890, %v1041
        %v1050 = vsub.f32 %v930, %v1042
        %v1051 = vsub.f32 %v970, %v1043
        %v1052 = vmul.f32 %v1044, %v1044
        %v1053 = vmul.f32 %v1045, %v1045
        %v1054 = vmul.f32 %v1046, %v1046
        %v1055 = vmul.f32 %v1047, %v1047
        %v1056 = vmul.f32 %v1048, %v1048
        %v1057 = vmul.f32 %v1049, %v1049
        %v1058 = vmul.f32 %v1050, %v1050
        %v1059 = vmul.f32 %v1051, %v1051
        %v1060 = vsel %vm972, %v1052, 0.0
        %v1061 = vrot.slane %v1060, 4
        %v1062 = vadd.f32 %v1060, %v1061
        %v1063 = vrot.slane %v1062, 2
        %v1064 = vadd.f32 %v1062, %v1063
        %v1065 = vrot.slane %v1064, 1
        %v1066 = vadd.f32 %v1064, %v1065
        %v1067 = vsel %vm972, %v1053, 0.0
        %v1068 = vrot.slane %v1067, 4
        %v1069 = vadd.f32 %v1067, %v1068
        %v1070 = vrot.slane %v1069, 2
        %v1071 = vadd.f32 %v1069, %v1070
        %v1072 = vrot.slane %v1071, 1
        %v1073 = vadd.f32 %v1071, %v1072
        %v1074 = vsel %vm972, %v1054, 0.0
        %v1075 = vrot.slane %v1074, 4
        %v1076 = vadd.f32 %v1074, %v1075
        %v1077 = vrot.slane %v1076, 2
        %v1078 = vadd.f32 %v1076, %v1077
        %v1079 = vrot.slane %v1078, 1
        %v1080 = vadd.f32 %v1078, %v1079
        %v1081 = vsel %vm972, %v1055, 0.0
        %v1082 = vrot.slane %v1081, 4
        %v1083 = vadd.f32 %v1081, %v1082
        %v1084 = vrot.slane %v1083, 2
        %v1085 = vadd.f32 %v1083, %v1084
        %v1086 = vrot.slane %v1085, 1
        %v1087 = vadd.f32 %v1085, %v1086
        %v1088 = vsel %vm972, %v1056, 0.0
        %v1089 = vrot.slane %v1088, 4
        %v1090 = vadd.f32 %v1088, %v1089
        %v1091 = vrot.slane %v1090, 2
        %v1092 = vadd.f32 %v1090, %v1091
        %v1093 = vrot.slane %v1092, 1
        %v1094 = vadd.f32 %v1092, %v1093
        %v1095 = vsel %vm972, %v1057, 0.0
        %v1096 = vrot.slane %v1095, 4
        %v1097 = vadd.f32 %v1095, %v1096
        %v1098 = vrot.slane %v1097, 2
        %v1099 = vadd.f32 %v1097, %v1098
        %v1100 = vrot.slane %v1099, 1
        %v1101 = vadd.f32 %v1099, %v1100
        %v1102 = vsel %vm972, %v1058, 0.0
        %v1103 = vrot.slane %v1102, 4
        %v1104 = vadd.f32 %v1102, %v1103
        %v1105 = vrot.slane %v1104, 2
        %v1106 = vadd.f32 %v1104, %v1105
        %v1107 = vrot.slane %v1106, 1
        %v1108 = vadd.f32 %v1106, %v1107
        %v1109 = vsel %vm972, %v1059, 0.0
        %v1110 = vrot.slane %v1109, 4
        %v1111 = vadd.f32 %v1109, %v1110
        %v1112 = vrot.slane %v1111, 2
        %v1113 = vadd.f32 %v1111, %v1112
        %v1114 = vrot.slane %v1113, 1
        %v1115 = vadd.f32 %v1113, %v1114
        %v1116 = vmul.f32 %v1066, %v1035
        %v1117 = vmul.f32 %v1073, %v1035
        %v1118 = vmul.f32 %v1080, %v1035
        %v1119 = vmul.f32 %v1087, %v1035
        %v1120 = vmul.f32 %v1094, %v1035
        %v1121 = vmul.f32 %v1101, %v1035
        %v1122 = vmul.f32 %v1108, %v1035
        %v1123 = vmul.f32 %v1115, %v1035
        %v1124 = vadd.f32 %v1116, 1e-05
        %v1125 = vadd.f32 %v1117, 1e-05
        %v1126 = vadd.f32 %v1118, 1e-05
        %v1127 = vadd.f32 %v1119, 1e-05
        %v1128 = vadd.f32 %v1120, 1e-05
        %v1129 = vadd.f32 %v1121, 1e-05
        %v1130 = vadd.f32 %v1122, 1e-05
        %v1131 = vadd.f32 %v1123, 1e-05
        %v1132 = vrsqrt.pop %v1124
        %v1133 = vmul.f32 %v1132, %v1124
        %v1134 = vmul.f32 %v1133, %v1132
        %v1135 = vmul.f32 0.5, %v1134
        %v1136 = vsub.f32 1.5, %v1135
        %v1137 = vmul.f32 %v1132, %v1136
        %vm1138 = vweird.f32 %v1124
        %vm1139 = vweird.f32 %v1132
        %vm1140 = vmor %vm1138, %vm1139
        %v1141 = vsel %vm1140, %v1132, %v1137
        %v1142 = vrsqrt.pop %v1125
        %v1143 = vmul.f32 %v1142, %v1125
        %v1144 = vmul.f32 %v1143, %v1142
        %v1145 = vmul.f32 0.5, %v1144
        %v1146 = vsub.f32 1.5, %v1145
        %v1147 = vmul.f32 %v1142, %v1146
        %vm1148 = vweird.f32 %v1125
        %vm1149 = vweird.f32 %v1142
        %vm1150 = vmor %vm1148, %vm1149
        %v1151 = vsel %vm1150, %v1142, %v1147
        %v1152 = vrsqrt.pop %v1126
        %v1153 = vmul.f32 %v1152, %v1126
        %v1154 = vmul.f32 %v1153, %v1152
        %v1155 = vmul.f32 0.5, %v1154
        %v1156 = vsub.f32 1.5, %v1155
        %v1157 = vmul.f32 %v1152, %v1156
        %vm1158 = vweird.f32 %v1126
        %vm1159 = vweird.f32 %v1152
        %vm1160 = vmor %vm1158, %vm1159
        %v1161 = vsel %vm1160, %v1152, %v1157
        %v1162 = vrsqrt.pop %v1127
        %v1163 = vmul.f32 %v1162, %v1127
        %v1164 = vmul.f32 %v1163, %v1162
        %v1165 = vmul.f32 0.5, %v1164
        %v1166 = vsub.f32 1.5, %v1165
        %v1167 = vmul.f32 %v1162, %v1166
        %vm1168 = vweird.f32 %v1127
        %vm1169 = vweird.f32 %v1162
        %vm1170 = vmor %vm1168, %vm1169
        %v1171 = vsel %vm1170, %v1162, %v1167
        %v1172 = vrsqrt.pop %v1128
        %v1173 = vmul.f32 %v1172, %v1128
        %v1174 = vmul.f32 %v1173, %v1172
        %v1175 = vmul.f32 0.5, %v1174
        %v1176 = vsub.f32 1.5, %v1175
        %v1177 = vmul.f32 %v1172, %v1176
        %vm1178 = vweird.f32 %v1128
        %vm1179 = vweird.f32 %v1172
        %vm1180 = vmor %vm1178, %vm1179
        %v1181 = vsel %vm1180, %v1172, %v1177
        %v1182 = vrsqrt.pop %v1129
        %v1183 = vmul.f32 %v1182, %v1129
        %v1184 = vmul.f32 %v1183, %v1182
        %v1185 = vmul.f32 0.5, %v1184
        %v1186 = vsub.f32 1.5, %v1185
        %v1187 = vmul.f32 %v1182, %v1186
        %vm1188 = vweird.f32 %v1129
        %vm1189 = vweird.f32 %v1182
        %vm1190 = vmor %vm1188, %vm1189
        %v1191 = vsel %vm1190, %v1182, %v1187
        %v1192 = vrsqrt.pop %v1130
        %v1193 = vmul.f32 %v1192, %v1130
        %v1194 = vmul.f32 %v1193, %v1192
        %v1195 = vmul.f32 0.5, %v1194
        %v1196 = vsub.f32 1.5, %v1195
        %v1197 = vmul.f32 %v1192, %v1196
        %vm1198 = vweird.f32 %v1130
        %vm1199 = vweird.f32 %v1192
        %vm1200 = vmor %vm1198, %vm1199
        %v1201 = vsel %vm1200, %v1192, %v1197
        %v1202 = vrsqrt.pop %v1131
        %v1203 = vmul.f32 %v1202, %v1131
        %v1204 = vmul.f32 %v1203, %v1202
        %v1205 = vmul.f32 0.5, %v1204
        %v1206 = vsub.f32 1.5, %v1205
        %v1207 = vmul.f32 %v1202, %v1206
        %vm1208 = vweird.f32 %v1131
        %vm1209 = vweird.f32 %v1202
        %vm1210 = vmor %vm1208, %vm1209
        %v1211 = vsel %vm1210, %v1202, %v1207
        %v1212 = vmul.f32 %v1044, %v1141
        %v1213 = vmul.f32 %v1045, %v1151
        %v1214 = vmul.f32 %v1046, %v1161
        %v1215 = vmul.f32 %v1047, %v1171
        %v1216 = vmul.f32 %v1048, %v1181
        %v1217 = vmul.f32 %v1049, %v1191
        %v1218 = vmul.f32 %v1050, %v1201
        %v1219 = vmul.f32 %v1051, %v1211
        %1221 = vset.pattern.permute.xlu0 0
        %1222 = vperm.xlu0 %1221, %v322
        %v1223 = vpop.permute.xlu0 %1222
        %v1225 = vmul.f32 %v1212, %v1223
        %v1226 = vmul.f32 %v1213, %v1223
        %v1227 = vmul.f32 %v1214, %v1223
        %v1228 = vmul.f32 %v1215, %v1223
        %v1229 = vmul.f32 %v1216, %v1223
        %v1230 = vmul.f32 %v1217, %v1223
        %v1231 = vmul.f32 %v1218, %v1223
        %v1232 = vmul.f32 %v1219, %v1223
        %1234 = vset.pattern.permute.xlu0 0
        %1235 = vperm.xlu0 %1234, %v323
        %v1236 = vpop.permute.xlu0 %1235
        %v1238 = vadd.f32 %v1225, %v1236
        %v1239 = vadd.f32 %v1226, %v1236
        %v1240 = vadd.f32 %v1227, %v1236
        %v1241 = vadd.f32 %v1228, %v1236
        %v1242 = vadd.f32 %v1229, %v1236
        %v1243 = vadd.f32 %v1230, %v1236
        %v1244 = vadd.f32 %v1231, %v1236
        %v1245 = vadd.f32 %v1232, %v1236
        %v1246 = vld [vmem:[%s2] sm:$0xf]
        %v1247 = vld [vmem:[%s2 + $0x4] sm:$0xf]
        %v1248 = vld [vmem:[%s2 + $0x8] sm:$0xf]
        %v1249 = vld [vmem:[%s2 + $0xc] sm:$0xf]
        %v1250 = vld [vmem:[%s2 + $0x10] sm:$0xf]
        %v1251 = vld [vmem:[%s2 + $0x14] sm:$0xf]
        %v1252 = vld [vmem:[%s2 + $0x18] sm:$0xf]
        %v1253 = vld [vmem:[%s2 + $0x1c] sm:$0xf]
        %v1254 = vld [vmem:[%s2 + $0x20] sm:$0xf]
        %v1255 = vld [vmem:[%s2 + $0x24] sm:$0xf]
        %v1256 = vld [vmem:[%s2 + $0x28] sm:$0xf]
        %v1257 = vld [vmem:[%s2 + $0x2c] sm:$0xf]
        %v1258 = vld [vmem:[%s2 + $0x30] sm:$0xf]
        %v1259 = vld [vmem:[%s2 + $0x34] sm:$0xf]
        %v1260 = vld [vmem:[%s2 + $0x38] sm:$0xf]
        %v1261 = vld [vmem:[%s2 + $0x3c] sm:$0xf]
        %v1262 = vld [vmem:[%s2 + $0x40] sm:$0xf]
        %v1263 = vld [vmem:[%s2 + $0x44] sm:$0xf]
        %v1264 = vld [vmem:[%s2 + $0x48] sm:$0xf]
        %v1265 = vld [vmem:[%s2 + $0x4c] sm:$0xf]
        %v1266 = vld [vmem:[%s2 + $0x50] sm:$0xf]
        %v1267 = vld [vmem:[%s2 + $0x54] sm:$0xf]
        %v1268 = vld [vmem:[%s2 + $0x58] sm:$0xf]
        %v1269 = vld [vmem:[%s2 + $0x5c] sm:$0xf]
        %v1270 = vld [vmem:[%s2 + $0x60] sm:$0x1]
        %v1271 = vpack.c.bf16 %v1238, %v1238
        %v1272 = vpack.c.bf16 %v1239, %v1239
        %v1273 = vpack.c.bf16 %v1240, %v1240
        %v1274 = vpack.c.bf16 %v1241, %v1241
        %v1275 = vpack.c.bf16 %v1242, %v1242
        %v1276 = vpack.c.bf16 %v1243, %v1243
        %v1277 = vpack.c.bf16 %v1244, %v1244
        %v1278 = vpack.c.bf16 %v1245, %v1245
        %1280 = vset.pattern.permute.xlu0 0
        %1281 = vperm.xlu0 %1280, %v324
        %v1282 = vpop.permute.xlu0 %1281
        %1285 = vset.pattern.permute.xlu0 0
        %1286 = vperm.xlu0 %1285, %v325
        %v1287 = vpop.permute.xlu0 %1286
        %1290 = vset.pattern.permute.xlu0 0
        %1291 = vperm.xlu0 %1290, %v326
        %v1292 = vpop.permute.xlu0 %1291
        %1295 = vset.pattern.permute.xlu0 0
        %1296 = vperm.xlu0 %1295, %v327
        %v1297 = vpop.permute.xlu0 %1296
        %1300 = vset.pattern.permute.xlu0 0
        %1301 = vperm.xlu0 %1300, %v328
        %v1302 = vpop.permute.xlu0 %1301
        %1305 = vset.pattern.permute.xlu0 0
        %1306 = vperm.xlu0 %1305, %v329
        %v1307 = vpop.permute.xlu0 %1306
        %1310 = vset.pattern.permute.xlu0 0
        %1311 = vperm.xlu0 %1310, %v330
        %v1312 = vpop.permute.xlu0 %1311
        %1315 = vset.pattern.permute.xlu0 0
        %1316 = vperm.xlu0 %1315, %v331
        %v1317 = vpop.permute.xlu0 %1316
        %1320 = vset.pattern.permute.xlu0 0
        %1321 = vperm.xlu0 %1320, %v332
        %v1322 = vpop.permute.xlu0 %1321
        %1325 = vset.pattern.permute.xlu0 0
        %1326 = vperm.xlu0 %1325, %v333
        %v1327 = vpop.permute.xlu0 %1326
        %1330 = vset.pattern.permute.xlu0 0
        %1331 = vperm.xlu0 %1330, %v334
        %v1332 = vpop.permute.xlu0 %1331
        %1335 = vset.pattern.permute.xlu0 0
        %1336 = vperm.xlu0 %1335, %v335
        %v1337 = vpop.permute.xlu0 %1336
        %1340 = vset.pattern.permute.xlu0 0
        %1341 = vperm.xlu0 %1340, %v336
        %v1342 = vpop.permute.xlu0 %1341
        %1345 = vset.pattern.permute.xlu0 0
        %1346 = vperm.xlu0 %1345, %v337
        %v1347 = vpop.permute.xlu0 %1346
        %1350 = vset.pattern.permute.xlu0 0
        %1351 = vperm.xlu0 %1350, %v338
        %v1352 = vpop.permute.xlu0 %1351
        %1355 = vset.pattern.permute.xlu0 0
        %1356 = vperm.xlu0 %1355, %v339
        %v1357 = vpop.permute.xlu0 %1356
        %1360 = vset.pattern.permute.xlu0 0
        %1361 = vperm.xlu0 %1360, %v340
        %v1362 = vpop.permute.xlu0 %1361
        %1365 = vset.pattern.permute.xlu0 0
        %1366 = vperm.xlu0 %1365, %v341
        %v1367 = vpop.permute.xlu0 %1366
        %1370 = vset.pattern.permute.xlu0 0
        %1371 = vperm.xlu0 %1370, %v342
        %v1372 = vpop.permute.xlu0 %1371
        %1375 = vset.pattern.permute.xlu0 0
        %1376 = vperm.xlu0 %1375, %v343
        %v1377 = vpop.permute.xlu0 %1376
        %1380 = vset.pattern.permute.xlu0 0
        %1381 = vperm.xlu0 %1380, %v344
        %v1382 = vpop.permute.xlu0 %1381
        %1385 = vset.pattern.permute.xlu0 0
        %1386 = vperm.xlu0 %1385, %v345
        %v1387 = vpop.permute.xlu0 %1386
        %1390 = vset.pattern.permute.xlu0 0
        %1391 = vperm.xlu0 %1390, %v346
        %v1392 = vpop.permute.xlu0 %1391
        %1395 = vset.pattern.permute.xlu0 0
        %1396 = vperm.xlu0 %1395, %v347
        %v1397 = vpop.permute.xlu0 %1396
        %1400 = vset.pattern.permute.xlu0 0
        %1401 = vperm.xlu0 %1400, %v348
        %v1402 = vpop.permute.xlu0 %1401
        %v1429 = vunpack.c.l.b16 %v1246
        %v1430 = vunpack.c.l.b16 %v1247
        %v1431 = vunpack.c.l.b16 %v1248
        %v1432 = vunpack.c.l.b16 %v1249
        %v1433 = vunpack.c.l.b16 %v1250
        %v1434 = vunpack.c.l.b16 %v1251
        %v1435 = vunpack.c.l.b16 %v1252
        %v1436 = vunpack.c.l.b16 %v1253
        %v1437 = vunpack.c.l.b16 %v1254
        %v1438 = vunpack.c.l.b16 %v1255
        %v1439 = vunpack.c.l.b16 %v1256
        %v1440 = vunpack.c.l.b16 %v1257
        %v1441 = vunpack.c.l.b16 %v1258
        %v1442 = vunpack.c.l.b16 %v1259
        %v1443 = vunpack.c.l.b16 %v1260
        %v1444 = vunpack.c.l.b16 %v1261
        %v1445 = vunpack.c.l.b16 %v1262
        %v1446 = vunpack.c.l.b16 %v1263
        %v1447 = vunpack.c.l.b16 %v1264
        %v1448 = vunpack.c.l.b16 %v1265
        %v1449 = vunpack.c.l.b16 %v1266
        %v1450 = vunpack.c.l.b16 %v1267
        %v1451 = vunpack.c.l.b16 %v1268
        %v1452 = vunpack.c.l.b16 %v1269
        %v1453 = vunpack.c.l.b16 %v1270
        %v1454 = vpack.c.b16 %v1430, %v1429
        %v1455 = vpack.c.b16 %v1432, %v1431
        %v1456 = vpack.c.b16 %v1434, %v1433
        %v1457 = vpack.c.b16 %v1436, %v1435
        %v1458 = vpack.c.b16 %v1438, %v1437
        %v1459 = vpack.c.b16 %v1440, %v1439
        %v1460 = vpack.c.b16 %v1442, %v1441
        %v1461 = vpack.c.b16 %v1444, %v1443
        %v1462 = vpack.c.b16 %v1446, %v1445
        %v1463 = vpack.c.b16 %v1448, %v1447
        %v1464 = vpack.c.b16 %v1450, %v1449
        %v1465 = vpack.c.b16 %v1452, %v1451
        %v1466 = vpack.c.b16 %v1453, %v1453
        %vm1467 = vcmask 31744
        %v1469 = vsel %vm1467, %v1454, 0
        %v1472 = vsel %vm1467, %v1455, 0
        %v1475 = vsel %vm1467, %v1456, 0
        %v1478 = vsel %vm1467, %v1457, 0
        %v1481 = vsel %vm1467, %v1458, 0
        %v1484 = vsel %vm1467, %v1459, 0
        %v1487 = vsel %vm1467, %v1460, 0
        %v1490 = vsel %vm1467, %v1461, 0
        %v1493 = vsel %vm1467, %v1462, 0
        %v1496 = vsel %vm1467, %v1463, 0
        %v1499 = vsel %vm1467, %v1464, 0
        %v1502 = vsel %vm1467, %v1465, 0
        %v1505 = vsel %vm1467, %v1466, 0
        %vm1507 = vcmask 1041408
        %v1509 = vsel %vm1507, %v1271, 0
        %v1512 = vsel %vm1507, %v1272, 0
        %v1515 = vsel %vm1507, %v1273, 0
        %v1518 = vsel %vm1507, %v1274, 0
        %v1521 = vsel %vm1507, %v1275, 0
        %v1524 = vsel %vm1507, %v1276, 0
        %v1527 = vsel %vm1507, %v1277, 0
        %v1530 = vsel %vm1507, %v1278, 0
        %1532 = vmatpush.bf16.msra.mxu0 0
        %1533 = vmatpush.bf16.msra.mxu0 0
        %1534 = vmatpush.bf16.msra.mxu0 0
        %1535 = vmatpush.bf16.msra.mxu0 0
        %1536 = vmatpush.bf16.msra.mxu0 0
        %1537 = vmatpush.bf16.msra.mxu0 0
        %1538 = vmatpush.bf16.msra.mxu0 0
        %1539 = vmatpush.bf16.msra.mxu0 %v1509
        %1540 = vmatmul.bf16.gmra.mxu0 %v1469
        %v1541 = vpop.f32.mrf.mxu0
        %v1542 = vadd.f32 %v1282, %v1541
        %v1543 = vpop.f32.mrf.mxu0
        %v1544 = vadd.f32 %v1287, %v1543
        %1545 = vmatmul.bf16.gmra.mxu0 %v1472
        %v1546 = vpop.f32.mrf.mxu0
        %v1547 = vadd.f32 %v1292, %v1546
        %v1548 = vpop.f32.mrf.mxu0
        %v1549 = vadd.f32 %v1297, %v1548
        %1550 = vmatmul.bf16.gmra.mxu0 %v1475
        %v1551 = vpop.f32.mrf.mxu0
        %v1552 = vadd.f32 %v1302, %v1551
        %v1553 = vpop.f32.mrf.mxu0
        %v1554 = vadd.f32 %v1307, %v1553
        %1555 = vmatmul.bf16.gmra.mxu0 %v1478
        %v1556 = vpop.f32.mrf.mxu0
        %v1557 = vadd.f32 %v1312, %v1556
        %v1558 = vpop.f32.mrf.mxu0
        %v1559 = vadd.f32 %v1317, %v1558
        %1560 = vmatmul.bf16.gmra.mxu0 %v1481
        %v1561 = vpop.f32.mrf.mxu0
        %v1562 = vadd.f32 %v1322, %v1561
        %v1563 = vpop.f32.mrf.mxu0
        %v1564 = vadd.f32 %v1327, %v1563
        %1565 = vmatmul.bf16.gmra.mxu0 %v1484
        %v1566 = vpop.f32.mrf.mxu0
        %v1567 = vadd.f32 %v1332, %v1566
        %v1568 = vpop.f32.mrf.mxu0
        %v1569 = vadd.f32 %v1337, %v1568
        %1570 = vmatmul.bf16.gmra.mxu0 %v1487
        %v1571 = vpop.f32.mrf.mxu0
        %v1572 = vadd.f32 %v1342, %v1571
        %v1573 = vpop.f32.mrf.mxu0
        %v1574 = vadd.f32 %v1347, %v1573
        %1575 = vmatmul.bf16.gmra.mxu0 %v1490
        %v1576 = vpop.f32.mrf.mxu0
        %v1577 = vadd.f32 %v1352, %v1576
        %v1578 = vpop.f32.mrf.mxu0
        %v1579 = vadd.f32 %v1357, %v1578
        %1580 = vmatmul.bf16.gmra.mxu0 %v1493
        %v1581 = vpop.f32.mrf.mxu0
        %v1582 = vadd.f32 %v1362, %v1581
        %v1583 = vpop.f32.mrf.mxu0
        %v1584 = vadd.f32 %v1367, %v1583
        %1585 = vmatmul.bf16.gmra.mxu0 %v1496
        %v1586 = vpop.f32.mrf.mxu0
        %v1587 = vadd.f32 %v1372, %v1586
        %v1588 = vpop.f32.mrf.mxu0
        %v1589 = vadd.f32 %v1377, %v1588
        %1590 = vmatmul.bf16.gmra.mxu0 %v1499
        %v1591 = vpop.f32.mrf.mxu0
        %v1592 = vadd.f32 %v1382, %v1591
        %v1593 = vpop.f32.mrf.mxu0
        %v1594 = vadd.f32 %v1387, %v1593
        %1595 = vmatmul.bf16.gmra.mxu0 %v1502
        %v1596 = vpop.f32.mrf.mxu0
        %v1597 = vadd.f32 %v1392, %v1596
        %v1598 = vpop.f32.mrf.mxu0
        %v1599 = vadd.f32 %v1397, %v1598
        %1600 = vmatmul.bf16.gmra.mxu0 %v1505
        %v1601 = vpop.f32.mrf.mxu0
        %v1602 = vadd.f32 %v1402, %v1601
        %v1603 = vpop.f32.mrf.mxu0
        %1604 = vdwg.mxu0
        %1605 = vmatpush.bf16.msra.mxu0 0
        %1606 = vmatpush.bf16.msra.mxu0 0
        %1607 = vmatpush.bf16.msra.mxu0 0
        %1608 = vmatpush.bf16.msra.mxu0 0
        %1609 = vmatpush.bf16.msra.mxu0 0
        %1610 = vmatpush.bf16.msra.mxu0 0
        %1611 = vmatpush.bf16.msra.mxu0 0
        %1612 = vmatpush.bf16.msra.mxu0 %v1512
        %1613 = vmatmul.bf16.gmra.mxu0 %v1469
        %v1614 = vpop.f32.mrf.mxu0
        %v1615 = vadd.f32 %v1282, %v1614
        %v1616 = vpop.f32.mrf.mxu0
        %v1617 = vadd.f32 %v1287, %v1616
        %1618 = vmatmul.bf16.gmra.mxu0 %v1472
        %v1619 = vpop.f32.mrf.mxu0
        %v1620 = vadd.f32 %v1292, %v1619
        %v1621 = vpop.f32.mrf.mxu0
        %v1622 = vadd.f32 %v1297, %v1621
        %1623 = vmatmul.bf16.gmra.mxu0 %v1475
        %v1624 = vpop.f32.mrf.mxu0
        %v1625 = vadd.f32 %v1302, %v1624
        %v1626 = vpop.f32.mrf.mxu0
        %v1627 = vadd.f32 %v1307, %v1626
        %1628 = vmatmul.bf16.gmra.mxu0 %v1478
        %v1629 = vpop.f32.mrf.mxu0
        %v1630 = vadd.f32 %v1312, %v1629
        %v1631 = vpop.f32.mrf.mxu0
        %v1632 = vadd.f32 %v1317, %v1631
        %1633 = vmatmul.bf16.gmra.mxu0 %v1481
        %v1634 = vpop.f32.mrf.mxu0
        %v1635 = vadd.f32 %v1322, %v1634
        %v1636 = vpop.f32.mrf.mxu0
        %v1637 = vadd.f32 %v1327, %v1636
        %1638 = vmatmul.bf16.gmra.mxu0 %v1484
        %v1639 = vpop.f32.mrf.mxu0
        %v1640 = vadd.f32 %v1332, %v1639
        %v1641 = vpop.f32.mrf.mxu0
        %v1642 = vadd.f32 %v1337, %v1641
        %1643 = vmatmul.bf16.gmra.mxu0 %v1487
        %v1644 = vpop.f32.mrf.mxu0
        %v1645 = vadd.f32 %v1342, %v1644
        %v1646 = vpop.f32.mrf.mxu0
        %v1647 = vadd.f32 %v1347, %v1646
        %1648 = vmatmul.bf16.gmra.mxu0 %v1490
        %v1649 = vpop.f32.mrf.mxu0
        %v1650 = vadd.f32 %v1352, %v1649
        %v1651 = vpop.f32.mrf.mxu0
        %v1652 = vadd.f32 %v1357, %v1651
        %1653 = vmatmul.bf16.gmra.mxu0 %v1493
        %v1654 = vpop.f32.mrf.mxu0
        %v1655 = vadd.f32 %v1362, %v1654
        %v1656 = vpop.f32.mrf.mxu0
        %v1657 = vadd.f32 %v1367, %v1656
        %1658 = vmatmul.bf16.gmra.mxu0 %v1496
        %v1659 = vpop.f32.mrf.mxu0
        %v1660 = vadd.f32 %v1372, %v1659
        %v1661 = vpop.f32.mrf.mxu0
        %v1662 = vadd.f32 %v1377, %v1661
        %1663 = vmatmul.bf16.gmra.mxu0 %v1499
        %v1664 = vpop.f32.mrf.mxu0
        %v1665 = vadd.f32 %v1382, %v1664
        %v1666 = vpop.f32.mrf.mxu0
        %v1667 = vadd.f32 %v1387, %v1666
        %1668 = vmatmul.bf16.gmra.mxu0 %v1502
        %v1669 = vpop.f32.mrf.mxu0
        %v1670 = vadd.f32 %v1392, %v1669
        %v1671 = vpop.f32.mrf.mxu0
        %v1672 = vadd.f32 %v1397, %v1671
        %1673 = vmatmul.bf16.gmra.mxu0 %v1505
        %v1674 = vpop.f32.mrf.mxu0
        %v1675 = vadd.f32 %v1402, %v1674
        %v1676 = vpop.f32.mrf.mxu0
        %1677 = vdwg.mxu0
        %1678 = vmatpush.bf16.msra.mxu0 0
        %1679 = vmatpush.bf16.msra.mxu0 0
        %1680 = vmatpush.bf16.msra.mxu0 0
        %1681 = vmatpush.bf16.msra.mxu0 0
        %1682 = vmatpush.bf16.msra.mxu0 0
        %1683 = vmatpush.bf16.msra.mxu0 0
        %1684 = vmatpush.bf16.msra.mxu0 0
        %1685 = vmatpush.bf16.msra.mxu0 %v1515
        %1686 = vmatmul.bf16.gmra.mxu0 %v1469
        %v1687 = vpop.f32.mrf.mxu0
        %v1688 = vadd.f32 %v1282, %v1687
        %v1689 = vpop.f32.mrf.mxu0
        %v1690 = vadd.f32 %v1287, %v1689
        %1691 = vmatmul.bf16.gmra.mxu0 %v1472
        %v1692 = vpop.f32.mrf.mxu0
        %v1693 = vadd.f32 %v1292, %v1692
        %v1694 = vpop.f32.mrf.mxu0
        %v1695 = vadd.f32 %v1297, %v1694
        %1696 = vmatmul.bf16.gmra.mxu0 %v1475
        %v1697 = vpop.f32.mrf.mxu0
        %v1698 = vadd.f32 %v1302, %v1697
        %v1699 = vpop.f32.mrf.mxu0
        %v1700 = vadd.f32 %v1307, %v1699
        %1701 = vmatmul.bf16.gmra.mxu0 %v1478
        %v1702 = vpop.f32.mrf.mxu0
        %v1703 = vadd.f32 %v1312, %v1702
        %v1704 = vpop.f32.mrf.mxu0
        %v1705 = vadd.f32 %v1317, %v1704
        %1706 = vmatmul.bf16.gmra.mxu0 %v1481
        %v1707 = vpop.f32.mrf.mxu0
        %v1708 = vadd.f32 %v1322, %v1707
        %v1709 = vpop.f32.mrf.mxu0
        %v1710 = vadd.f32 %v1327, %v1709
        %1711 = vmatmul.bf16.gmra.mxu0 %v1484
        %v1712 = vpop.f32.mrf.mxu0
        %v1713 = vadd.f32 %v1332, %v1712
        %v1714 = vpop.f32.mrf.mxu0
        %v1715 = vadd.f32 %v1337, %v1714
        %1716 = vmatmul.bf16.gmra.mxu0 %v1487
        %v1717 = vpop.f32.mrf.mxu0
        %v1718 = vadd.f32 %v1342, %v1717
        %v1719 = vpop.f32.mrf.mxu0
        %v1720 = vadd.f32 %v1347, %v1719
        %1721 = vmatmul.bf16.gmra.mxu0 %v1490
        %v1722 = vpop.f32.mrf.mxu0
        %v1723 = vadd.f32 %v1352, %v1722
        %v1724 = vpop.f32.mrf.mxu0
        %v1725 = vadd.f32 %v1357, %v1724
        %1726 = vmatmul.bf16.gmra.mxu0 %v1493
        %v1727 = vpop.f32.mrf.mxu0
        %v1728 = vadd.f32 %v1362, %v1727
        %v1729 = vpop.f32.mrf.mxu0
        %v1730 = vadd.f32 %v1367, %v1729
        %1731 = vmatmul.bf16.gmra.mxu0 %v1496
        %v1732 = vpop.f32.mrf.mxu0
        %v1733 = vadd.f32 %v1372, %v1732
        %v1734 = vpop.f32.mrf.mxu0
        %v1735 = vadd.f32 %v1377, %v1734
        %1736 = vmatmul.bf16.gmra.mxu0 %v1499
        %v1737 = vpop.f32.mrf.mxu0
        %v1738 = vadd.f32 %v1382, %v1737
        %v1739 = vpop.f32.mrf.mxu0
        %v1740 = vadd.f32 %v1387, %v1739
        %1741 = vmatmul.bf16.gmra.mxu0 %v1502
        %v1742 = vpop.f32.mrf.mxu0
        %v1743 = vadd.f32 %v1392, %v1742
        %v1744 = vpop.f32.mrf.mxu0
        %v1745 = vadd.f32 %v1397, %v1744
        %1746 = vmatmul.bf16.gmra.mxu0 %v1505
        %v1747 = vpop.f32.mrf.mxu0
        %v1748 = vadd.f32 %v1402, %v1747
        %v1749 = vpop.f32.mrf.mxu0
        %1750 = vdwg.mxu0
        %1751 = vmatpush.bf16.msra.mxu0 0
        %1752 = vmatpush.bf16.msra.mxu0 0
        %1753 = vmatpush.bf16.msra.mxu0 0
        %1754 = vmatpush.bf16.msra.mxu0 0
        %1755 = vmatpush.bf16.msra.mxu0 0
        %1756 = vmatpush.bf16.msra.mxu0 0
        %1757 = vmatpush.bf16.msra.mxu0 0
        %1758 = vmatpush.bf16.msra.mxu0 %v1518
        %1759 = vmatmul.bf16.gmra.mxu0 %v1469
        %v1760 = vpop.f32.mrf.mxu0
        %v1761 = vadd.f32 %v1282, %v1760
        %v1762 = vpop.f32.mrf.mxu0
        %v1763 = vadd.f32 %v1287, %v1762
        %1764 = vmatmul.bf16.gmra.mxu0 %v1472
        %v1765 = vpop.f32.mrf.mxu0
        %v1766 = vadd.f32 %v1292, %v1765
        %v1767 = vpop.f32.mrf.mxu0
        %v1768 = vadd.f32 %v1297, %v1767
        %1769 = vmatmul.bf16.gmra.mxu0 %v1475
        %v1770 = vpop.f32.mrf.mxu0
        %v1771 = vadd.f32 %v1302, %v1770
        %v1772 = vpop.f32.mrf.mxu0
        %v1773 = vadd.f32 %v1307, %v1772
        %1774 = vmatmul.bf16.gmra.mxu0 %v1478
        %v1775 = vpop.f32.mrf.mxu0
        %v1776 = vadd.f32 %v1312, %v1775
        %v1777 = vpop.f32.mrf.mxu0
        %v1778 = vadd.f32 %v1317, %v1777
        %1779 = vmatmul.bf16.gmra.mxu0 %v1481
        %v1780 = vpop.f32.mrf.mxu0
        %v1781 = vadd.f32 %v1322, %v1780
        %v1782 = vpop.f32.mrf.mxu0
        %v1783 = vadd.f32 %v1327, %v1782
        %1784 = vmatmul.bf16.gmra.mxu0 %v1484
        %v1785 = vpop.f32.mrf.mxu0
        %v1786 = vadd.f32 %v1332, %v1785
        %v1787 = vpop.f32.mrf.mxu0
        %v1788 = vadd.f32 %v1337, %v1787
        %1789 = vmatmul.bf16.gmra.mxu0 %v1487
        %v1790 = vpop.f32.mrf.mxu0
        %v1791 = vadd.f32 %v1342, %v1790
        %v1792 = vpop.f32.mrf.mxu0
        %v1793 = vadd.f32 %v1347, %v1792
        %1794 = vmatmul.bf16.gmra.mxu0 %v1490
        %v1795 = vpop.f32.mrf.mxu0
        %v1796 = vadd.f32 %v1352, %v1795
        %v1797 = vpop.f32.mrf.mxu0
        %v1798 = vadd.f32 %v1357, %v1797
        %1799 = vmatmul.bf16.gmra.mxu0 %v1493
        %v1800 = vpop.f32.mrf.mxu0
        %v1801 = vadd.f32 %v1362, %v1800
        %v1802 = vpop.f32.mrf.mxu0
        %v1803 = vadd.f32 %v1367, %v1802
        %1804 = vmatmul.bf16.gmra.mxu0 %v1496
        %v1805 = vpop.f32.mrf.mxu0
        %v1806 = vadd.f32 %v1372, %v1805
        %v1807 = vpop.f32.mrf.mxu0
        %v1808 = vadd.f32 %v1377, %v1807
        %1809 = vmatmul.bf16.gmra.mxu0 %v1499
        %v1810 = vpop.f32.mrf.mxu0
        %v1811 = vadd.f32 %v1382, %v1810
        %v1812 = vpop.f32.mrf.mxu0
        %v1813 = vadd.f32 %v1387, %v1812
        %1814 = vmatmul.bf16.gmra.mxu0 %v1502
        %v1815 = vpop.f32.mrf.mxu0
        %v1816 = vadd.f32 %v1392, %v1815
        %v1817 = vpop.f32.mrf.mxu0
        %v1818 = vadd.f32 %v1397, %v1817
        %1819 = vmatmul.bf16.gmra.mxu0 %v1505
        %v1820 = vpop.f32.mrf.mxu0
        %v1821 = vadd.f32 %v1402, %v1820
        %v1822 = vpop.f32.mrf.mxu0
        %1823 = vdwg.mxu0
        %1824 = vmatpush.bf16.msra.mxu0 0
        %1825 = vmatpush.bf16.msra.mxu0 0
        %1826 = vmatpush.bf16.msra.mxu0 0
        %1827 = vmatpush.bf16.msra.mxu0 0
        %1828 = vmatpush.bf16.msra.mxu0 0
        %1829 = vmatpush.bf16.msra.mxu0 0
        %1830 = vmatpush.bf16.msra.mxu0 0
        %1831 = vmatpush.bf16.msra.mxu0 %v1521
        %1832 = vmatmul.bf16.gmra.mxu0 %v1469
        %v1833 = vpop.f32.mrf.mxu0
        %v1834 = vadd.f32 %v1282, %v1833
        %v1835 = vpop.f32.mrf.mxu0
        %v1836 = vadd.f32 %v1287, %v1835
        %1837 = vmatmul.bf16.gmra.mxu0 %v1472
        %v1838 = vpop.f32.mrf.mxu0
        %v1839 = vadd.f32 %v1292, %v1838
        %v1840 = vpop.f32.mrf.mxu0
        %v1841 = vadd.f32 %v1297, %v1840
        %1842 = vmatmul.bf16.gmra.mxu0 %v1475
        %v1843 = vpop.f32.mrf.mxu0
        %v1844 = vadd.f32 %v1302, %v1843
        %v1845 = vpop.f32.mrf.mxu0
        %v1846 = vadd.f32 %v1307, %v1845
        %1847 = vmatmul.bf16.gmra.mxu0 %v1478
        %v1848 = vpop.f32.mrf.mxu0
        %v1849 = vadd.f32 %v1312, %v1848
        %v1850 = vpop.f32.mrf.mxu0
        %v1851 = vadd.f32 %v1317, %v1850
        %1852 = vmatmul.bf16.gmra.mxu0 %v1481
        %v1853 = vpop.f32.mrf.mxu0
        %v1854 = vadd.f32 %v1322, %v1853
        %v1855 = vpop.f32.mrf.mxu0
        %v1856 = vadd.f32 %v1327, %v1855
        %1857 = vmatmul.bf16.gmra.mxu0 %v1484
        %v1858 = vpop.f32.mrf.mxu0
        %v1859 = vadd.f32 %v1332, %v1858
        %v1860 = vpop.f32.mrf.mxu0
        %v1861 = vadd.f32 %v1337, %v1860
        %1862 = vmatmul.bf16.gmra.mxu0 %v1487
        %v1863 = vpop.f32.mrf.mxu0
        %v1864 = vadd.f32 %v1342, %v1863
        %v1865 = vpop.f32.mrf.mxu0
        %v1866 = vadd.f32 %v1347, %v1865
        %1867 = vmatmul.bf16.gmra.mxu0 %v1490
        %v1868 = vpop.f32.mrf.mxu0
        %v1869 = vadd.f32 %v1352, %v1868
        %v1870 = vpop.f32.mrf.mxu0
        %v1871 = vadd.f32 %v1357, %v1870
        %1872 = vmatmul.bf16.gmra.mxu0 %v1493
        %v1873 = vpop.f32.mrf.mxu0
        %v1874 = vadd.f32 %v1362, %v1873
        %v1875 = vpop.f32.mrf.mxu0
        %v1876 = vadd.f32 %v1367, %v1875
        %1877 = vmatmul.bf16.gmra.mxu0 %v1496
        %v1878 = vpop.f32.mrf.mxu0
        %v1879 = vadd.f32 %v1372, %v1878
        %v1880 = vpop.f32.mrf.mxu0
        %v1881 = vadd.f32 %v1377, %v1880
        %1882 = vmatmul.bf16.gmra.mxu0 %v1499
        %v1883 = vpop.f32.mrf.mxu0
        %v1884 = vadd.f32 %v1382, %v1883
        %v1885 = vpop.f32.mrf.mxu0
        %v1886 = vadd.f32 %v1387, %v1885
        %1887 = vmatmul.bf16.gmra.mxu0 %v1502
        %v1888 = vpop.f32.mrf.mxu0
        %v1889 = vadd.f32 %v1392, %v1888
        %v1890 = vpop.f32.mrf.mxu0
        %v1891 = vadd.f32 %v1397, %v1890
        %1892 = vmatmul.bf16.gmra.mxu0 %v1505
        %v1893 = vpop.f32.mrf.mxu0
        %v1894 = vadd.f32 %v1402, %v1893
        %v1895 = vpop.f32.mrf.mxu0
        %1896 = vdwg.mxu0
        %1897 = vmatpush.bf16.msra.mxu0 0
        %1898 = vmatpush.bf16.msra.mxu0 0
        %1899 = vmatpush.bf16.msra.mxu0 0
        %1900 = vmatpush.bf16.msra.mxu0 0
        %1901 = vmatpush.bf16.msra.mxu0 0
        %1902 = vmatpush.bf16.msra.mxu0 0
        %1903 = vmatpush.bf16.msra.mxu0 0
        %1904 = vmatpush.bf16.msra.mxu0 %v1524
        %1905 = vmatmul.bf16.gmra.mxu0 %v1469
        %v1906 = vpop.f32.mrf.mxu0
        %v1907 = vadd.f32 %v1282, %v1906
        %v1908 = vpop.f32.mrf.mxu0
        %v1909 = vadd.f32 %v1287, %v1908
        %1910 = vmatmul.bf16.gmra.mxu0 %v1472
        %v1911 = vpop.f32.mrf.mxu0
        %v1912 = vadd.f32 %v1292, %v1911
        %v1913 = vpop.f32.mrf.mxu0
        %v1914 = vadd.f32 %v1297, %v1913
        %1915 = vmatmul.bf16.gmra.mxu0 %v1475
        %v1916 = vpop.f32.mrf.mxu0
        %v1917 = vadd.f32 %v1302, %v1916
        %v1918 = vpop.f32.mrf.mxu0
        %v1919 = vadd.f32 %v1307, %v1918
        %1920 = vmatmul.bf16.gmra.mxu0 %v1478
        %v1921 = vpop.f32.mrf.mxu0
        %v1922 = vadd.f32 %v1312, %v1921
        %v1923 = vpop.f32.mrf.mxu0
        %v1924 = vadd.f32 %v1317, %v1923
        %1925 = vmatmul.bf16.gmra.mxu0 %v1481
        %v1926 = vpop.f32.mrf.mxu0
        %v1927 = vadd.f32 %v1322, %v1926
        %v1928 = vpop.f32.mrf.mxu0
        %v1929 = vadd.f32 %v1327, %v1928
        %1930 = vmatmul.bf16.gmra.mxu0 %v1484
        %v1931 = vpop.f32.mrf.mxu0
        %v1932 = vadd.f32 %v1332, %v1931
        %v1933 = vpop.f32.mrf.mxu0
        %v1934 = vadd.f32 %v1337, %v1933
        %1935 = vmatmul.bf16.gmra.mxu0 %v1487
        %v1936 = vpop.f32.mrf.mxu0
        %v1937 = vadd.f32 %v1342, %v1936
        %v1938 = vpop.f32.mrf.mxu0
        %v1939 = vadd.f32 %v1347, %v1938
        %1940 = vmatmul.bf16.gmra.mxu0 %v1490
        %v1941 = vpop.f32.mrf.mxu0
        %v1942 = vadd.f32 %v1352, %v1941
        %v1943 = vpop.f32.mrf.mxu0
        %v1944 = vadd.f32 %v1357, %v1943
        %1945 = vmatmul.bf16.gmra.mxu0 %v1493
        %v1946 = vpop.f32.mrf.mxu0
        %v1947 = vadd.f32 %v1362, %v1946
        %v1948 = vpop.f32.mrf.mxu0
        %v1949 = vadd.f32 %v1367, %v1948
        %1950 = vmatmul.bf16.gmra.mxu0 %v1496
        %v1951 = vpop.f32.mrf.mxu0
        %v1952 = vadd.f32 %v1372, %v1951
        %v1953 = vpop.f32.mrf.mxu0
        %v1954 = vadd.f32 %v1377, %v1953
        %1955 = vmatmul.bf16.gmra.mxu0 %v1499
        %v1956 = vpop.f32.mrf.mxu0
        %v1957 = vadd.f32 %v1382, %v1956
        %v1958 = vpop.f32.mrf.mxu0
        %v1959 = vadd.f32 %v1387, %v1958
        %1960 = vmatmul.bf16.gmra.mxu0 %v1502
        %v1961 = vpop.f32.mrf.mxu0
        %v1962 = vadd.f32 %v1392, %v1961
        %v1963 = vpop.f32.mrf.mxu0
        %v1964 = vadd.f32 %v1397, %v1963
        %1965 = vmatmul.bf16.gmra.mxu0 %v1505
        %v1966 = vpop.f32.mrf.mxu0
        %v1967 = vadd.f32 %v1402, %v1966
        %v1968 = vpop.f32.mrf.mxu0
        %1969 = vdwg.mxu0
        %1970 = vmatpush.bf16.msra.mxu0 0
        %1971 = vmatpush.bf16.msra.mxu0 0
        %1972 = vmatpush.bf16.msra.mxu0 0
        %1973 = vmatpush.bf16.msra.mxu0 0
        %1974 = vmatpush.bf16.msra.mxu0 0
        %1975 = vmatpush.bf16.msra.mxu0 0
        %1976 = vmatpush.bf16.msra.mxu0 0
        %1977 = vmatpush.bf16.msra.mxu0 %v1527
        %1978 = vmatmul.bf16.gmra.mxu0 %v1469
        %v1979 = vpop.f32.mrf.mxu0
        %v1980 = vadd.f32 %v1282, %v1979
        %v1981 = vpop.f32.mrf.mxu0
        %v1982 = vadd.f32 %v1287, %v1981
        %1983 = vmatmul.bf16.gmra.mxu0 %v1472
        %v1984 = vpop.f32.mrf.mxu0
        %v1985 = vadd.f32 %v1292, %v1984
        %v1986 = vpop.f32.mrf.mxu0
        %v1987 = vadd.f32 %v1297, %v1986
        %1988 = vmatmul.bf16.gmra.mxu0 %v1475
        %v1989 = vpop.f32.mrf.mxu0
        %v1990 = vadd.f32 %v1302, %v1989
        %v1991 = vpop.f32.mrf.mxu0
        %v1992 = vadd.f32 %v1307, %v1991
        %1993 = vmatmul.bf16.gmra.mxu0 %v1478
        %v1994 = vpop.f32.mrf.mxu0
        %v1995 = vadd.f32 %v1312, %v1994
        %v1996 = vpop.f32.mrf.mxu0
        %v1997 = vadd.f32 %v1317, %v1996
        %1998 = vmatmul.bf16.gmra.mxu0 %v1481
        %v1999 = vpop.f32.mrf.mxu0
        %v2000 = vadd.f32 %v1322, %v1999
        %v2001 = vpop.f32.mrf.mxu0
        %v2002 = vadd.f32 %v1327, %v2001
        %2003 = vmatmul.bf16.gmra.mxu0 %v1484
        %v2004 = vpop.f32.mrf.mxu0
        %v2005 = vadd.f32 %v1332, %v2004
        %v2006 = vpop.f32.mrf.mxu0
        %v2007 = vadd.f32 %v1337, %v2006
        %2008 = vmatmul.bf16.gmra.mxu0 %v1487
        %v2009 = vpop.f32.mrf.mxu0
        %v2010 = vadd.f32 %v1342, %v2009
        %v2011 = vpop.f32.mrf.mxu0
        %v2012 = vadd.f32 %v1347, %v2011
        %2013 = vmatmul.bf16.gmra.mxu0 %v1490
        %v2014 = vpop.f32.mrf.mxu0
        %v2015 = vadd.f32 %v1352, %v2014
        %v2016 = vpop.f32.mrf.mxu0
        %v2017 = vadd.f32 %v1357, %v2016
        %2018 = vmatmul.bf16.gmra.mxu0 %v1493
        %v2019 = vpop.f32.mrf.mxu0
        %v2020 = vadd.f32 %v1362, %v2019
        %v2021 = vpop.f32.mrf.mxu0
        %v2022 = vadd.f32 %v1367, %v2021
        %2023 = vmatmul.bf16.gmra.mxu0 %v1496
        %v2024 = vpop.f32.mrf.mxu0
        %v2025 = vadd.f32 %v1372, %v2024
        %v2026 = vpop.f32.mrf.mxu0
        %v2027 = vadd.f32 %v1377, %v2026
        %2028 = vmatmul.bf16.gmra.mxu0 %v1499
        %v2029 = vpop.f32.mrf.mxu0
        %v2030 = vadd.f32 %v1382, %v2029
        %v2031 = vpop.f32.mrf.mxu0
        %v2032 = vadd.f32 %v1387, %v2031
        %2033 = vmatmul.bf16.gmra.mxu0 %v1502
        %v2034 = vpop.f32.mrf.mxu0
        %v2035 = vadd.f32 %v1392, %v2034
        %v2036 = vpop.f32.mrf.mxu0
        %v2037 = vadd.f32 %v1397, %v2036
        %2038 = vmatmul.bf16.gmra.mxu0 %v1505
        %v2039 = vpop.f32.mrf.mxu0
        %v2040 = vadd.f32 %v1402, %v2039
        %v2041 = vpop.f32.mrf.mxu0
        %2042 = vdwg.mxu0
        %2043 = vmatpush.bf16.msra.mxu0 0
        %2044 = vmatpush.bf16.msra.mxu0 0
        %2045 = vmatpush.bf16.msra.mxu0 0
        %2046 = vmatpush.bf16.msra.mxu0 0
        %2047 = vmatpush.bf16.msra.mxu0 0
        %2048 = vmatpush.bf16.msra.mxu0 0
        %2049 = vmatpush.bf16.msra.mxu0 0
        %2050 = vmatpush.bf16.msra.mxu0 %v1530
        %2051 = vmatmul.bf16.gmra.mxu0 %v1469
        %v2052 = vpop.f32.mrf.mxu0
        %v2053 = vadd.f32 %v1282, %v2052
        %v2054 = vpop.f32.mrf.mxu0
        %v2055 = vadd.f32 %v1287, %v2054
        %2056 = vmatmul.bf16.gmra.mxu0 %v1472
        %v2057 = vpop.f32.mrf.mxu0
        %v2058 = vadd.f32 %v1292, %v2057
        %v2059 = vpop.f32.mrf.mxu0
        %v2060 = vadd.f32 %v1297, %v2059
        %2061 = vmatmul.bf16.gmra.mxu0 %v1475
        %v2062 = vpop.f32.mrf.mxu0
        %v2063 = vadd.f32 %v1302, %v2062
        %v2064 = vpop.f32.mrf.mxu0
        %v2065 = vadd.f32 %v1307, %v2064
        %2066 = vmatmul.bf16.gmra.mxu0 %v1478
        %v2067 = vpop.f32.mrf.mxu0
        %v2068 = vadd.f32 %v1312, %v2067
        %v2069 = vpop.f32.mrf.mxu0
        %v2070 = vadd.f32 %v1317, %v2069
        %2071 = vmatmul.bf16.gmra.mxu0 %v1481
        %v2072 = vpop.f32.mrf.mxu0
        %v2073 = vadd.f32 %v1322, %v2072
        %v2074 = vpop.f32.mrf.mxu0
        %v2075 = vadd.f32 %v1327, %v2074
        %2076 = vmatmul.bf16.gmra.mxu0 %v1484
        %v2077 = vpop.f32.mrf.mxu0
        %v2078 = vadd.f32 %v1332, %v2077
        %v2079 = vpop.f32.mrf.mxu0
        %v2080 = vadd.f32 %v1337, %v2079
        %2081 = vmatmul.bf16.gmra.mxu0 %v1487
        %v2082 = vpop.f32.mrf.mxu0
        %v2083 = vadd.f32 %v1342, %v2082
        %v2084 = vpop.f32.mrf.mxu0
        %v2085 = vadd.f32 %v1347, %v2084
        %2086 = vmatmul.bf16.gmra.mxu0 %v1490
        %v2087 = vpop.f32.mrf.mxu0
        %v2088 = vadd.f32 %v1352, %v2087
        %v2089 = vpop.f32.mrf.mxu0
        %v2090 = vadd.f32 %v1357, %v2089
        %2091 = vmatmul.bf16.gmra.mxu0 %v1493
        %v2092 = vpop.f32.mrf.mxu0
        %v2093 = vadd.f32 %v1362, %v2092
        %v2094 = vpop.f32.mrf.mxu0
        %v2095 = vadd.f32 %v1367, %v2094
        %2096 = vmatmul.bf16.gmra.mxu0 %v1496
        %v2097 = vpop.f32.mrf.mxu0
        %v2098 = vadd.f32 %v1372, %v2097
        %v2099 = vpop.f32.mrf.mxu0
        %v2100 = vadd.f32 %v1377, %v2099
        %2101 = vmatmul.bf16.gmra.mxu0 %v1499
        %v2102 = vpop.f32.mrf.mxu0
        %v2103 = vadd.f32 %v1382, %v2102
        %v2104 = vpop.f32.mrf.mxu0
        %v2105 = vadd.f32 %v1387, %v2104
        %2106 = vmatmul.bf16.gmra.mxu0 %v1502
        %v2107 = vpop.f32.mrf.mxu0
        %v2108 = vadd.f32 %v1392, %v2107
        %v2109 = vpop.f32.mrf.mxu0
        %v2110 = vadd.f32 %v1397, %v2109
        %2111 = vmatmul.bf16.gmra.mxu0 %v1505
        %v2112 = vpop.f32.mrf.mxu0
        %v2113 = vadd.f32 %v1402, %v2112
        %v2114 = vpop.f32.mrf.mxu0
        %2115 = vdwg.mxu0
        %v2116 = vld [vmem:[%s3] sm:$0xf]
        %v2117 = vld [vmem:[%s3 + $0x4] sm:$0xf]
        %v2118 = vld [vmem:[%s3 + $0x8] sm:$0xf]
        %v2119 = vld [vmem:[%s3 + $0xc] sm:$0xf]
        %v2120 = vpack.c.bf16 %v1544, %v1542
        %v2121 = vpack.c.bf16 %v1617, %v1615
        %v2122 = vpack.c.bf16 %v1690, %v1688
        %v2123 = vpack.c.bf16 %v1763, %v1761
        %v2124 = vpack.c.bf16 %v1836, %v1834
        %v2125 = vpack.c.bf16 %v1909, %v1907
        %v2126 = vpack.c.bf16 %v1982, %v1980
        %v2127 = vpack.c.bf16 %v2055, %v2053
        %v2128 = vpack.c.bf16 %v1549, %v1547
        %v2129 = vpack.c.bf16 %v1622, %v1620
        %v2130 = vpack.c.bf16 %v1695, %v1693
        %v2131 = vpack.c.bf16 %v1768, %v1766
        %v2132 = vpack.c.bf16 %v1841, %v1839
        %v2133 = vpack.c.bf16 %v1914, %v1912
        %v2134 = vpack.c.bf16 %v1987, %v1985
        %v2135 = vpack.c.bf16 %v2060, %v2058
        %v2136 = vpack.c.bf16 %v1554, %v1552
        %v2137 = vpack.c.bf16 %v1627, %v1625
        %v2138 = vpack.c.bf16 %v1700, %v1698
        %v2139 = vpack.c.bf16 %v1773, %v1771
        %v2140 = vpack.c.bf16 %v1846, %v1844
        %v2141 = vpack.c.bf16 %v1919, %v1917
        %v2142 = vpack.c.bf16 %v1992, %v1990
        %v2143 = vpack.c.bf16 %v2065, %v2063
        %v2144 = vpack.c.bf16 %v1559, %v1557
        %v2145 = vpack.c.bf16 %v1632, %v1630
        %v2146 = vpack.c.bf16 %v1705, %v1703
        %v2147 = vpack.c.bf16 %v1778, %v1776
        %v2148 = vpack.c.bf16 %v1851, %v1849
        %v2149 = vpack.c.bf16 %v1924, %v1922
        %v2150 = vpack.c.bf16 %v1997, %v1995
        %v2151 = vpack.c.bf16 %v2070, %v2068
        %v2156 = vunpack.c.l.b16 %v2116
        %v2157 = vunpack.c.l.b16 %v2117
        %v2158 = vunpack.c.l.b16 %v2118
        %v2159 = vunpack.c.l.b16 %v2119
        %v2160 = vpack.c.b16 %v2157, %v2156
        %v2161 = vpack.c.b16 %v2159, %v2158
        %vm2162 = vcmask 523264
        %v2164 = vsel %vm2162, %v2160, 0
        %v2167 = vsel %vm2162, %v2161, 0
        %2169 = vmatpush.bf16.msra.mxu0 0
        %2170 = vmatpush.bf16.msra.mxu0 0
        %2171 = vmatpush.bf16.msra.mxu0 0
        %2172 = vmatpush.bf16.msra.mxu0 0
        %2173 = vmatpush.bf16.msra.mxu0 %v2144
        %2174 = vmatpush.bf16.msra.mxu0 %v2136
        %2175 = vmatpush.bf16.msra.mxu0 %v2128
        %2176 = vmatpush.bf16.msra.mxu0 %v2120
        %2177 = vmatmul.bf16.gmra.mxu0 %v2164
        %v2178 = vpop.f32.mrf.mxu0
        %v2179 = vadd.f32 0.0, %v2178
        %v2180 = vpop.f32.mrf.mxu0
        %v2181 = vadd.f32 0.0, %v2180
        %2182 = vmatmul.bf16.gmra.mxu0 %v2167
        %v2183 = vpop.f32.mrf.mxu0
        %v2184 = vadd.f32 0.0, %v2183
        %v2185 = vpop.f32.mrf.mxu0
        %v2186 = vadd.f32 0.0, %v2185
        %2187 = vdwg.mxu0
        %2188 = vmatpush.bf16.msra.mxu0 0
        %2189 = vmatpush.bf16.msra.mxu0 0
        %2190 = vmatpush.bf16.msra.mxu0 0
        %2191 = vmatpush.bf16.msra.mxu0 0
        %2192 = vmatpush.bf16.msra.mxu0 %v2145
        %2193 = vmatpush.bf16.msra.mxu0 %v2137
        %2194 = vmatpush.bf16.msra.mxu0 %v2129
        %2195 = vmatpush.bf16.msra.mxu0 %v2121
        %2196 = vmatmul.bf16.gmra.mxu0 %v2164
        %v2197 = vpop.f32.mrf.mxu0
        %v2198 = vadd.f32 0.0, %v2197
        %v2199 = vpop.f32.mrf.mxu0
        %v2200 = vadd.f32 0.0, %v2199
        %2201 = vmatmul.bf16.gmra.mxu0 %v2167
        %v2202 = vpop.f32.mrf.mxu0
        %v2203 = vadd.f32 0.0, %v2202
        %v2204 = vpop.f32.mrf.mxu0
        %v2205 = vadd.f32 0.0, %v2204
        %2206 = vdwg.mxu0
        %2207 = vmatpush.bf16.msra.mxu0 0
        %2208 = vmatpush.bf16.msra.mxu0 0
        %2209 = vmatpush.bf16.msra.mxu0 0
        %2210 = vmatpush.bf16.msra.mxu0 0
        %2211 = vmatpush.bf16.msra.mxu0 %v2146
        %2212 = vmatpush.bf16.msra.mxu0 %v2138
        %2213 = vmatpush.bf16.msra.mxu0 %v2130
        %2214 = vmatpush.bf16.msra.mxu0 %v2122
        %2215 = vmatmul.bf16.gmra.mxu0 %v2164
        %v2216 = vpop.f32.mrf.mxu0
        %v2217 = vadd.f32 0.0, %v2216
        %v2218 = vpop.f32.mrf.mxu0
        %v2219 = vadd.f32 0.0, %v2218
        %2220 = vmatmul.bf16.gmra.mxu0 %v2167
        %v2221 = vpop.f32.mrf.mxu0
        %v2222 = vadd.f32 0.0, %v2221
        %v2223 = vpop.f32.mrf.mxu0
        %v2224 = vadd.f32 0.0, %v2223
        %2225 = vdwg.mxu0
        %2226 = vmatpush.bf16.msra.mxu0 0
        %2227 = vmatpush.bf16.msra.mxu0 0
        %2228 = vmatpush.bf16.msra.mxu0 0
        %2229 = vmatpush.bf16.msra.mxu0 0
        %2230 = vmatpush.bf16.msra.mxu0 %v2147
        %2231 = vmatpush.bf16.msra.mxu0 %v2139
        %2232 = vmatpush.bf16.msra.mxu0 %v2131
        %2233 = vmatpush.bf16.msra.mxu0 %v2123
        %2234 = vmatmul.bf16.gmra.mxu0 %v2164
        %v2235 = vpop.f32.mrf.mxu0
        %v2236 = vadd.f32 0.0, %v2235
        %v2237 = vpop.f32.mrf.mxu0
        %v2238 = vadd.f32 0.0, %v2237
        %2239 = vmatmul.bf16.gmra.mxu0 %v2167
        %v2240 = vpop.f32.mrf.mxu0
        %v2241 = vadd.f32 0.0, %v2240
        %v2242 = vpop.f32.mrf.mxu0
        %v2243 = vadd.f32 0.0, %v2242
        %2244 = vdwg.mxu0
        %2245 = vmatpush.bf16.msra.mxu0 0
        %2246 = vmatpush.bf16.msra.mxu0 0
        %2247 = vmatpush.bf16.msra.mxu0 0
        %2248 = vmatpush.bf16.msra.mxu0 0
        %2249 = vmatpush.bf16.msra.mxu0 %v2148
        %2250 = vmatpush.bf16.msra.mxu0 %v2140
        %2251 = vmatpush.bf16.msra.mxu0 %v2132
        %2252 = vmatpush.bf16.msra.mxu0 %v2124
        %2253 = vmatmul.bf16.gmra.mxu0 %v2164
        %v2254 = vpop.f32.mrf.mxu0
        %v2255 = vadd.f32 0.0, %v2254
        %v2256 = vpop.f32.mrf.mxu0
        %v2257 = vadd.f32 0.0, %v2256
        %2258 = vmatmul.bf16.gmra.mxu0 %v2167
        %v2259 = vpop.f32.mrf.mxu0
        %v2260 = vadd.f32 0.0, %v2259
        %v2261 = vpop.f32.mrf.mxu0
        %v2262 = vadd.f32 0.0, %v2261
        %2263 = vdwg.mxu0
        %2264 = vmatpush.bf16.msra.mxu0 0
        %2265 = vmatpush.bf16.msra.mxu0 0
        %2266 = vmatpush.bf16.msra.mxu0 0
        %2267 = vmatpush.bf16.msra.mxu0 0
        %2268 = vmatpush.bf16.msra.mxu0 %v2149
        %2269 = vmatpush.bf16.msra.mxu0 %v2141
        %2270 = vmatpush.bf16.msra.mxu0 %v2133
        %2271 = vmatpush.bf16.msra.mxu0 %v2125
        %2272 = vmatmul.bf16.gmra.mxu0 %v2164
        %v2273 = vpop.f32.mrf.mxu0
        %v2274 = vadd.f32 0.0, %v2273
        %v2275 = vpop.f32.mrf.mxu0
        %v2276 = vadd.f32 0.0, %v2275
        %2277 = vmatmul.bf16.gmra.mxu0 %v2167
        %v2278 = vpop.f32.mrf.mxu0
        %v2279 = vadd.f32 0.0, %v2278
        %v2280 = vpop.f32.mrf.mxu0
        %v2281 = vadd.f32 0.0, %v2280
        %2282 = vdwg.mxu0
        %2283 = vmatpush.bf16.msra.mxu0 0
        %2284 = vmatpush.bf16.msra.mxu0 0
        %2285 = vmatpush.bf16.msra.mxu0 0
        %2286 = vmatpush.bf16.msra.mxu0 0
        %2287 = vmatpush.bf16.msra.mxu0 %v2150
        %2288 = vmatpush.bf16.msra.mxu0 %v2142
        %2289 = vmatpush.bf16.msra.mxu0 %v2134
        %2290 = vmatpush.bf16.msra.mxu0 %v2126
        %2291 = vmatmul.bf16.gmra.mxu0 %v2164
        %v2292 = vpop.f32.mrf.mxu0
        %v2293 = vadd.f32 0.0, %v2292
        %v2294 = vpop.f32.mrf.mxu0
        %v2295 = vadd.f32 0.0, %v2294
        %2296 = vmatmul.bf16.gmra.mxu0 %v2167
        %v2297 = vpop.f32.mrf.mxu0
        %v2298 = vadd.f32 0.0, %v2297
        %v2299 = vpop.f32.mrf.mxu0
        %v2300 = vadd.f32 0.0, %v2299
        %2301 = vdwg.mxu0
        %2302 = vmatpush.bf16.msra.mxu0 0
        %2303 = vmatpush.bf16.msra.mxu0 0
        %2304 = vmatpush.bf16.msra.mxu0 0
        %2305 = vmatpush.bf16.msra.mxu0 0
        %2306 = vmatpush.bf16.msra.mxu0 %v2151
        %2307 = vmatpush.bf16.msra.mxu0 %v2143
        %2308 = vmatpush.bf16.msra.mxu0 %v2135
        %2309 = vmatpush.bf16.msra.mxu0 %v2127
        %2310 = vmatmul.bf16.gmra.mxu0 %v2164
        %v2311 = vpop.f32.mrf.mxu0
        %v2312 = vadd.f32 0.0, %v2311
        %v2313 = vpop.f32.mrf.mxu0
        %v2314 = vadd.f32 0.0, %v2313
        %2315 = vmatmul.bf16.gmra.mxu0 %v2167
        %v2316 = vpop.f32.mrf.mxu0
        %v2317 = vadd.f32 0.0, %v2316
        %v2318 = vpop.f32.mrf.mxu0
        %v2319 = vadd.f32 0.0, %v2318
        %2320 = vdwg.mxu0
        %v2321 = vpack.c.bf16 %v1564, %v1562
        %v2322 = vpack.c.bf16 %v1637, %v1635
        %v2323 = vpack.c.bf16 %v1710, %v1708
        %v2324 = vpack.c.bf16 %v1783, %v1781
        %v2325 = vpack.c.bf16 %v1856, %v1854
        %v2326 = vpack.c.bf16 %v1929, %v1927
        %v2327 = vpack.c.bf16 %v2002, %v2000
        %v2328 = vpack.c.bf16 %v2075, %v2073
        %v2329 = vpack.c.bf16 %v1569, %v1567
        %v2330 = vpack.c.bf16 %v1642, %v1640
        %v2331 = vpack.c.bf16 %v1715, %v1713
        %v2332 = vpack.c.bf16 %v1788, %v1786
        %v2333 = vpack.c.bf16 %v1861, %v1859
        %v2334 = vpack.c.bf16 %v1934, %v1932
        %v2335 = vpack.c.bf16 %v2007, %v2005
        %v2336 = vpack.c.bf16 %v2080, %v2078
        %v2337 = vpack.c.bf16 %v1574, %v1572
        %v2338 = vpack.c.bf16 %v1647, %v1645
        %v2339 = vpack.c.bf16 %v1720, %v1718
        %v2340 = vpack.c.bf16 %v1793, %v1791
        %v2341 = vpack.c.bf16 %v1866, %v1864
        %v2342 = vpack.c.bf16 %v1939, %v1937
        %v2343 = vpack.c.bf16 %v2012, %v2010
        %v2344 = vpack.c.bf16 %v2085, %v2083
        %v2345 = vpack.c.bf16 %v1579, %v1577
        %v2346 = vpack.c.bf16 %v1652, %v1650
        %v2347 = vpack.c.bf16 %v1725, %v1723
        %v2348 = vpack.c.bf16 %v1798, %v1796
        %v2349 = vpack.c.bf16 %v1871, %v1869
        %v2350 = vpack.c.bf16 %v1944, %v1942
        %v2351 = vpack.c.bf16 %v2017, %v2015
        %v2352 = vpack.c.bf16 %v2090, %v2088
        %2353 = vmatpush.bf16.msra.mxu0 0
        %2354 = vmatpush.bf16.msra.mxu0 0
        %2355 = vmatpush.bf16.msra.mxu0 0
        %2356 = vmatpush.bf16.msra.mxu0 0
        %2357 = vmatpush.bf16.msra.mxu0 %v2345
        %2358 = vmatpush.bf16.msra.mxu0 %v2337
        %2359 = vmatpush.bf16.msra.mxu0 %v2329
        %2360 = vmatpush.bf16.msra.mxu0 %v2321
        %2361 = vmatmul.bf16.gmra.mxu0 %v2164
        %v2362 = vpop.f32.mrf.mxu0
        %v2363 = vadd.f32 0.0, %v2362
        %v2364 = vpop.f32.mrf.mxu0
        %v2365 = vadd.f32 0.0, %v2364
        %2366 = vmatmul.bf16.gmra.mxu0 %v2167
        %v2367 = vpop.f32.mrf.mxu0
        %v2368 = vadd.f32 0.0, %v2367
        %v2369 = vpop.f32.mrf.mxu0
        %v2370 = vadd.f32 0.0, %v2369
        %2371 = vdwg.mxu0
        %2372 = vmatpush.bf16.msra.mxu0 0
        %2373 = vmatpush.bf16.msra.mxu0 0
        %2374 = vmatpush.bf16.msra.mxu0 0
        %2375 = vmatpush.bf16.msra.mxu0 0
        %2376 = vmatpush.bf16.msra.mxu0 %v2346
        %2377 = vmatpush.bf16.msra.mxu0 %v2338
        %2378 = vmatpush.bf16.msra.mxu0 %v2330
        %2379 = vmatpush.bf16.msra.mxu0 %v2322
        %2380 = vmatmul.bf16.gmra.mxu0 %v2164
        %v2381 = vpop.f32.mrf.mxu0
        %v2382 = vadd.f32 0.0, %v2381
        %v2383 = vpop.f32.mrf.mxu0
        %v2384 = vadd.f32 0.0, %v2383
        %2385 = vmatmul.bf16.gmra.mxu0 %v2167
        %v2386 = vpop.f32.mrf.mxu0
        %v2387 = vadd.f32 0.0, %v2386
        %v2388 = vpop.f32.mrf.mxu0
        %v2389 = vadd.f32 0.0, %v2388
        %2390 = vdwg.mxu0
        %2391 = vmatpush.bf16.msra.mxu0 0
        %2392 = vmatpush.bf16.msra.mxu0 0
        %2393 = vmatpush.bf16.msra.mxu0 0
        %2394 = vmatpush.bf16.msra.mxu0 0
        %2395 = vmatpush.bf16.msra.mxu0 %v2347
        %2396 = vmatpush.bf16.msra.mxu0 %v2339
        %2397 = vmatpush.bf16.msra.mxu0 %v2331
        %2398 = vmatpush.bf16.msra.mxu0 %v2323
        %2399 = vmatmul.bf16.gmra.mxu0 %v2164
        %v2400 = vpop.f32.mrf.mxu0
        %v2401 = vadd.f32 0.0, %v2400
        %v2402 = vpop.f32.mrf.mxu0
        %v2403 = vadd.f32 0.0, %v2402
        %2404 = vmatmul.bf16.gmra.mxu0 %v2167
        %v2405 = vpop.f32.mrf.mxu0
        %v2406 = vadd.f32 0.0, %v2405
        %v2407 = vpop.f32.mrf.mxu0
        %v2408 = vadd.f32 0.0, %v2407
        %2409 = vdwg.mxu0
        %2410 = vmatpush.bf16.msra.mxu0 0
        %2411 = vmatpush.bf16.msra.mxu0 0
        %2412 = vmatpush.bf16.msra.mxu0 0
        %2413 = vmatpush.bf16.msra.mxu0 0
        %2414 = vmatpush.bf16.msra.mxu0 %v2348
        %2415 = vmatpush.bf16.msra.mxu0 %v2340
        %2416 = vmatpush.bf16.msra.mxu0 %v2332
        %2417 = vmatpush.bf16.msra.mxu0 %v2324
        %2418 = vmatmul.bf16.gmra.mxu0 %v2164
        %v2419 = vpop.f32.mrf.mxu0
        %v2420 = vadd.f32 0.0, %v2419
        %v2421 = vpop.f32.mrf.mxu0
        %v2422 = vadd.f32 0.0, %v2421
        %2423 = vmatmul.bf16.gmra.mxu0 %v2167
        %v2424 = vpop.f32.mrf.mxu0
        %v2425 = vadd.f32 0.0, %v2424
        %v2426 = vpop.f32.mrf.mxu0
        %v2427 = vadd.f32 0.0, %v2426
        %2428 = vdwg.mxu0
        %2429 = vmatpush.bf16.msra.mxu0 0
        %2430 = vmatpush.bf16.msra.mxu0 0
        %2431 = vmatpush.bf16.msra.mxu0 0
        %2432 = vmatpush.bf16.msra.mxu0 0
        %2433 = vmatpush.bf16.msra.mxu0 %v2349
        %2434 = vmatpush.bf16.msra.mxu0 %v2341
        %2435 = vmatpush.bf16.msra.mxu0 %v2333
        %2436 = vmatpush.bf16.msra.mxu0 %v2325
        %2437 = vmatmul.bf16.gmra.mxu0 %v2164
        %v2438 = vpop.f32.mrf.mxu0
        %v2439 = vadd.f32 0.0, %v2438
        %v2440 = vpop.f32.mrf.mxu0
        %v2441 = vadd.f32 0.0, %v2440
        %2442 = vmatmul.bf16.gmra.mxu0 %v2167
        %v2443 = vpop.f32.mrf.mxu0
        %v2444 = vadd.f32 0.0, %v2443
        %v2445 = vpop.f32.mrf.mxu0
        %v2446 = vadd.f32 0.0, %v2445
        %2447 = vdwg.mxu0
        %2448 = vmatpush.bf16.msra.mxu0 0
        %2449 = vmatpush.bf16.msra.mxu0 0
        %2450 = vmatpush.bf16.msra.mxu0 0
        %2451 = vmatpush.bf16.msra.mxu0 0
        %2452 = vmatpush.bf16.msra.mxu0 %v2350
        %2453 = vmatpush.bf16.msra.mxu0 %v2342
        %2454 = vmatpush.bf16.msra.mxu0 %v2334
        %2455 = vmatpush.bf16.msra.mxu0 %v2326
        %2456 = vmatmul.bf16.gmra.mxu0 %v2164
        %v2457 = vpop.f32.mrf.mxu0
        %v2458 = vadd.f32 0.0, %v2457
        %v2459 = vpop.f32.mrf.mxu0
        %v2460 = vadd.f32 0.0, %v2459
        %2461 = vmatmul.bf16.gmra.mxu0 %v2167
        %v2462 = vpop.f32.mrf.mxu0
        %v2463 = vadd.f32 0.0, %v2462
        %v2464 = vpop.f32.mrf.mxu0
        %v2465 = vadd.f32 0.0, %v2464
        %2466 = vdwg.mxu0
        %2467 = vmatpush.bf16.msra.mxu0 0
        %2468 = vmatpush.bf16.msra.mxu0 0
        %2469 = vmatpush.bf16.msra.mxu0 0
        %2470 = vmatpush.bf16.msra.mxu0 0
        %2471 = vmatpush.bf16.msra.mxu0 %v2351
        %2472 = vmatpush.bf16.msra.mxu0 %v2343
        %2473 = vmatpush.bf16.msra.mxu0 %v2335
        %2474 = vmatpush.bf16.msra.mxu0 %v2327
        %2475 = vmatmul.bf16.gmra.mxu0 %v2164
        %v2476 = vpop.f32.mrf.mxu0
        %v2477 = vadd.f32 0.0, %v2476
        %v2478 = vpop.f32.mrf.mxu0
        %v2479 = vadd.f32 0.0, %v2478
        %2480 = vmatmul.bf16.gmra.mxu0 %v2167
        %v2481 = vpop.f32.mrf.mxu0
        %v2482 = vadd.f32 0.0, %v2481
        %v2483 = vpop.f32.mrf.mxu0
        %v2484 = vadd.f32 0.0, %v2483
        %2485 = vdwg.mxu0
        %2486 = vmatpush.bf16.msra.mxu0 0
        %2487 = vmatpush.bf16.msra.mxu0 0
        %2488 = vmatpush.bf16.msra.mxu0 0
        %2489 = vmatpush.bf16.msra.mxu0 0
        %2490 = vmatpush.bf16.msra.mxu0 %v2352
        %2491 = vmatpush.bf16.msra.mxu0 %v2344
        %2492 = vmatpush.bf16.msra.mxu0 %v2336
        %2493 = vmatpush.bf16.msra.mxu0 %v2328
        %2494 = vmatmul.bf16.gmra.mxu0 %v2164
        %v2495 = vpop.f32.mrf.mxu0
        %v2496 = vadd.f32 0.0, %v2495
        %v2497 = vpop.f32.mrf.mxu0
        %v2498 = vadd.f32 0.0, %v2497
        %2499 = vmatmul.bf16.gmra.mxu0 %v2167
        %v2500 = vpop.f32.mrf.mxu0
        %v2501 = vadd.f32 0.0, %v2500
        %v2502 = vpop.f32.mrf.mxu0
        %v2503 = vadd.f32 0.0, %v2502
        %2504 = vdwg.mxu0
        %v2505 = vmul.f32 %v1542, %v1542
        %v2506 = vmul.f32 %v1615, %v1615
        %v2507 = vmul.f32 %v1688, %v1688
        %v2508 = vmul.f32 %v1761, %v1761
        %v2509 = vmul.f32 %v1834, %v1834
        %v2510 = vmul.f32 %v1907, %v1907
        %v2511 = vmul.f32 %v1980, %v1980
        %v2512 = vmul.f32 %v2053, %v2053
        %v2513 = vmul.f32 %v1544, %v1544
        %v2514 = vmul.f32 %v1617, %v1617
        %v2515 = vmul.f32 %v1690, %v1690
        %v2516 = vmul.f32 %v1763, %v1763
        %v2517 = vmul.f32 %v1836, %v1836
        %v2518 = vmul.f32 %v1909, %v1909
        %v2519 = vmul.f32 %v1982, %v1982
        %v2520 = vmul.f32 %v2055, %v2055
        %v2521 = vmul.f32 %v1547, %v1547
        %v2522 = vmul.f32 %v1620, %v1620
        %v2523 = vmul.f32 %v1693, %v1693
        %v2524 = vmul.f32 %v1766, %v1766
        %v2525 = vmul.f32 %v1839, %v1839
        %v2526 = vmul.f32 %v1912, %v1912
        %v2527 = vmul.f32 %v1985, %v1985
        %v2528 = vmul.f32 %v2058, %v2058
        %v2529 = vmul.f32 %v1549, %v1549
        %v2530 = vmul.f32 %v1622, %v1622
        %v2531 = vmul.f32 %v1695, %v1695
        %v2532 = vmul.f32 %v1768, %v1768
        %v2533 = vmul.f32 %v1841, %v1841
        %v2534 = vmul.f32 %v1914, %v1914
        %v2535 = vmul.f32 %v1987, %v1987
        %v2536 = vmul.f32 %v2060, %v2060
        %v2537 = vmul.f32 %v1552, %v1552
        %v2538 = vmul.f32 %v1625, %v1625
        %v2539 = vmul.f32 %v1698, %v1698
        %v2540 = vmul.f32 %v1771, %v1771
        %v2541 = vmul.f32 %v1844, %v1844
        %v2542 = vmul.f32 %v1917, %v1917
        %v2543 = vmul.f32 %v1990, %v1990
        %v2544 = vmul.f32 %v2063, %v2063
        %v2545 = vmul.f32 %v1554, %v1554
        %v2546 = vmul.f32 %v1627, %v1627
        %v2547 = vmul.f32 %v1700, %v1700
        %v2548 = vmul.f32 %v1773, %v1773
        %v2549 = vmul.f32 %v1846, %v1846
        %v2550 = vmul.f32 %v1919, %v1919
        %v2551 = vmul.f32 %v1992, %v1992
        %v2552 = vmul.f32 %v2065, %v2065
        %v2553 = vmul.f32 %v1557, %v1557
        %v2554 = vmul.f32 %v1630, %v1630
        %v2555 = vmul.f32 %v1703, %v1703
        %v2556 = vmul.f32 %v1776, %v1776
        %v2557 = vmul.f32 %v1849, %v1849
        %v2558 = vmul.f32 %v1922, %v1922
        %v2559 = vmul.f32 %v1995, %v1995
        %v2560 = vmul.f32 %v2068, %v2068
        %v2561 = vmul.f32 %v1559, %v1559
        %v2562 = vmul.f32 %v1632, %v1632
        %v2563 = vmul.f32 %v1705, %v1705
        %v2564 = vmul.f32 %v1778, %v1778
        %v2565 = vmul.f32 %v1851, %v1851
        %v2566 = vmul.f32 %v1924, %v1924
        %v2567 = vmul.f32 %v1997, %v1997
        %v2568 = vmul.f32 %v2070, %v2070
        %v2569 = vadd.f32 %v2505, %v2513
        %v2570 = vadd.f32 %v2569, %v2521
        %v2571 = vadd.f32 %v2570, %v2529
        %v2572 = vadd.f32 %v2571, %v2537
        %v2573 = vadd.f32 %v2572, %v2545
        %v2574 = vadd.f32 %v2573, %v2553
        %v2575 = vadd.f32 %v2574, %v2561
        %v2576 = vrot.slane %v2575, 4
        %v2577 = vadd.f32 %v2575, %v2576
        %v2578 = vrot.slane %v2577, 2
        %v2579 = vadd.f32 %v2577, %v2578
        %v2580 = vrot.slane %v2579, 1
        %v2581 = vadd.f32 %v2579, %v2580
        %v2582 = vadd.f32 %v2506, %v2514
        %v2583 = vadd.f32 %v2582, %v2522
        %v2584 = vadd.f32 %v2583, %v2530
        %v2585 = vadd.f32 %v2584, %v2538
        %v2586 = vadd.f32 %v2585, %v2546
        %v2587 = vadd.f32 %v2586, %v2554
        %v2588 = vadd.f32 %v2587, %v2562
        %v2589 = vrot.slane %v2588, 4
        %v2590 = vadd.f32 %v2588, %v2589
        %v2591 = vrot.slane %v2590, 2
        %v2592 = vadd.f32 %v2590, %v2591
        %v2593 = vrot.slane %v2592, 1
        %v2594 = vadd.f32 %v2592, %v2593
        %v2595 = vadd.f32 %v2507, %v2515
        %v2596 = vadd.f32 %v2595, %v2523
        %v2597 = vadd.f32 %v2596, %v2531
        %v2598 = vadd.f32 %v2597, %v2539
        %v2599 = vadd.f32 %v2598, %v2547
        %v2600 = vadd.f32 %v2599, %v2555
        %v2601 = vadd.f32 %v2600, %v2563
        %v2602 = vrot.slane %v2601, 4
        %v2603 = vadd.f32 %v2601, %v2602
        %v2604 = vrot.slane %v2603, 2
        %v2605 = vadd.f32 %v2603, %v2604
        %v2606 = vrot.slane %v2605, 1
        %v2607 = vadd.f32 %v2605, %v2606
        %v2608 = vadd.f32 %v2508, %v2516
        %v2609 = vadd.f32 %v2608, %v2524
        %v2610 = vadd.f32 %v2609, %v2532
        %v2611 = vadd.f32 %v2610, %v2540
        %v2612 = vadd.f32 %v2611, %v2548
        %v2613 = vadd.f32 %v2612, %v2556
        %v2614 = vadd.f32 %v2613, %v2564
        %v2615 = vrot.slane %v2614, 4
        %v2616 = vadd.f32 %v2614, %v2615
        %v2617 = vrot.slane %v2616, 2
        %v2618 = vadd.f32 %v2616, %v2617
        %v2619 = vrot.slane %v2618, 1
        %v2620 = vadd.f32 %v2618, %v2619
        %v2621 = vadd.f32 %v2509, %v2517
        %v2622 = vadd.f32 %v2621, %v2525
        %v2623 = vadd.f32 %v2622, %v2533
        %v2624 = vadd.f32 %v2623, %v2541
        %v2625 = vadd.f32 %v2624, %v2549
        %v2626 = vadd.f32 %v2625, %v2557
        %v2627 = vadd.f32 %v2626, %v2565
        %v2628 = vrot.slane %v2627, 4
        %v2629 = vadd.f32 %v2627, %v2628
        %v2630 = vrot.slane %v2629, 2
        %v2631 = vadd.f32 %v2629, %v2630
        %v2632 = vrot.slane %v2631, 1
        %v2633 = vadd.f32 %v2631, %v2632
        %v2634 = vadd.f32 %v2510, %v2518
        %v2635 = vadd.f32 %v2634, %v2526
        %v2636 = vadd.f32 %v2635, %v2534
        %v2637 = vadd.f32 %v2636, %v2542
        %v2638 = vadd.f32 %v2637, %v2550
        %v2639 = vadd.f32 %v2638, %v2558
        %v2640 = vadd.f32 %v2639, %v2566
        %v2641 = vrot.slane %v2640, 4
        %v2642 = vadd.f32 %v2640, %v2641
        %v2643 = vrot.slane %v2642, 2
        %v2644 = vadd.f32 %v2642, %v2643
        %v2645 = vrot.slane %v2644, 1
        %v2646 = vadd.f32 %v2644, %v2645
        %v2647 = vadd.f32 %v2511, %v2519
        %v2648 = vadd.f32 %v2647, %v2527
        %v2649 = vadd.f32 %v2648, %v2535
        %v2650 = vadd.f32 %v2649, %v2543
        %v2651 = vadd.f32 %v2650, %v2551
        %v2652 = vadd.f32 %v2651, %v2559
        %v2653 = vadd.f32 %v2652, %v2567
        %v2654 = vrot.slane %v2653, 4
        %v2655 = vadd.f32 %v2653, %v2654
        %v2656 = vrot.slane %v2655, 2
        %v2657 = vadd.f32 %v2655, %v2656
        %v2658 = vrot.slane %v2657, 1
        %v2659 = vadd.f32 %v2657, %v2658
        %v2660 = vadd.f32 %v2512, %v2520
        %v2661 = vadd.f32 %v2660, %v2528
        %v2662 = vadd.f32 %v2661, %v2536
        %v2663 = vadd.f32 %v2662, %v2544
        %v2664 = vadd.f32 %v2663, %v2552
        %v2665 = vadd.f32 %v2664, %v2560
        %v2666 = vadd.f32 %v2665, %v2568
        %v2667 = vrot.slane %v2666, 4
        %v2668 = vadd.f32 %v2666, %v2667
        %v2669 = vrot.slane %v2668, 2
        %v2670 = vadd.f32 %v2668, %v2669
        %v2671 = vrot.slane %v2670, 1
        %v2672 = vadd.f32 %v2670, %v2671
        %v2673 = vmul.f32 %v2581, 0.5
        %v2674 = vmul.f32 %v2594, 0.5
        %v2675 = vmul.f32 %v2607, 0.5
        %v2676 = vmul.f32 %v2620, 0.5
        %v2677 = vmul.f32 %v2633, 0.5
        %v2678 = vmul.f32 %v2646, 0.5
        %v2679 = vmul.f32 %v2659, 0.5
        %v2680 = vmul.f32 %v2672, 0.5
        %v2681 = vsub.f32 %v2179, %v2673
        %v2682 = vsub.f32 %v2198, %v2674
        %v2683 = vsub.f32 %v2217, %v2675
        %v2684 = vsub.f32 %v2236, %v2676
        %v2685 = vsub.f32 %v2255, %v2677
        %v2686 = vsub.f32 %v2274, %v2678
        %v2687 = vsub.f32 %v2293, %v2679
        %v2688 = vsub.f32 %v2312, %v2680
        %v2689 = vsub.f32 %v2181, %v2673
        %v2690 = vsub.f32 %v2200, %v2674
        %v2691 = vsub.f32 %v2219, %v2675
        %v2692 = vsub.f32 %v2238, %v2676
        %v2693 = vsub.f32 %v2257, %v2677
        %v2694 = vsub.f32 %v2276, %v2678
        %v2695 = vsub.f32 %v2295, %v2679
        %v2696 = vsub.f32 %v2314, %v2680
        %v2697 = vsub.f32 %v2184, %v2673
        %v2698 = vsub.f32 %v2203, %v2674
        %v2699 = vsub.f32 %v2222, %v2675
        %v2700 = vsub.f32 %v2241, %v2676
        %v2701 = vsub.f32 %v2260, %v2677
        %v2702 = vsub.f32 %v2279, %v2678
        %v2703 = vsub.f32 %v2298, %v2679
        %v2704 = vsub.f32 %v2317, %v2680
        %v2705 = vsub.f32 %v2186, %v2673
        %v2706 = vsub.f32 %v2205, %v2674
        %v2707 = vsub.f32 %v2224, %v2675
        %v2708 = vsub.f32 %v2243, %v2676
        %v2709 = vsub.f32 %v2262, %v2677
        %v2710 = vsub.f32 %v2281, %v2678
        %v2711 = vsub.f32 %v2300, %v2679
        %v2712 = vsub.f32 %v2319, %v2680
        %v2713 = vsub.f32 %v2681, 1.732868
        %v2714 = vsub.f32 %v2682, 1.732868
        %v2715 = vsub.f32 %v2683, 1.732868
        %v2716 = vsub.f32 %v2684, 1.732868
        %v2717 = vsub.f32 %v2685, 1.732868
        %v2718 = vsub.f32 %v2686, 1.732868
        %v2719 = vsub.f32 %v2687, 1.732868
        %v2720 = vsub.f32 %v2688, 1.732868
        %v2721 = vsub.f32 %v2689, 1.732868
        %v2722 = vsub.f32 %v2690, 1.732868
        %v2723 = vsub.f32 %v2691, 1.732868
        %v2724 = vsub.f32 %v2692, 1.732868
        %v2725 = vsub.f32 %v2693, 1.732868
        %v2726 = vsub.f32 %v2694, 1.732868
        %v2727 = vsub.f32 %v2695, 1.732868
        %v2728 = vsub.f32 %v2696, 1.732868
        %v2729 = vsub.f32 %v2697, 1.732868
        %v2730 = vsub.f32 %v2698, 1.732868
        %v2731 = vsub.f32 %v2699, 1.732868
        %v2732 = vsub.f32 %v2700, 1.732868
        %v2733 = vsub.f32 %v2701, 1.732868
        %v2734 = vsub.f32 %v2702, 1.732868
        %v2735 = vsub.f32 %v2703, 1.732868
        %v2736 = vsub.f32 %v2704, 1.732868
        %v2737 = vsub.f32 %v2705, 1.732868
        %v2738 = vsub.f32 %v2706, 1.732868
        %v2739 = vsub.f32 %v2707, 1.732868
        %v2740 = vsub.f32 %v2708, 1.732868
        %v2741 = vsub.f32 %v2709, 1.732868
        %v2742 = vsub.f32 %v2710, 1.732868
        %v2743 = vsub.f32 %v2711, 1.732868
        %v2744 = vsub.f32 %v2712, 1.732868
        %v2745 = vmul.f32 %v2713, 1.442695
        %v2746 = vpow.pop %v2745
        %v2747 = vmul.f32 %v2714, 1.442695
        %v2748 = vpow.pop %v2747
        %v2749 = vmul.f32 %v2715, 1.442695
        %v2750 = vpow.pop %v2749
        %v2751 = vmul.f32 %v2716, 1.442695
        %v2752 = vpow.pop %v2751
        %v2753 = vmul.f32 %v2717, 1.442695
        %v2754 = vpow.pop %v2753
        %v2755 = vmul.f32 %v2718, 1.442695
        %v2756 = vpow.pop %v2755
        %v2757 = vmul.f32 %v2719, 1.442695
        %v2758 = vpow.pop %v2757
        %v2759 = vmul.f32 %v2720, 1.442695
        %v2760 = vpow.pop %v2759
        %v2761 = vmul.f32 %v2721, 1.442695
        %v2762 = vpow.pop %v2761
        %v2763 = vmul.f32 %v2722, 1.442695
        %v2764 = vpow.pop %v2763
        %v2765 = vmul.f32 %v2723, 1.442695
        %v2766 = vpow.pop %v2765
        %v2767 = vmul.f32 %v2724, 1.442695
        %v2768 = vpow.pop %v2767
        %v2769 = vmul.f32 %v2725, 1.442695
        %v2770 = vpow.pop %v2769
        %v2771 = vmul.f32 %v2726, 1.442695
        %v2772 = vpow.pop %v2771
        %v2773 = vmul.f32 %v2727, 1.442695
        %v2774 = vpow.pop %v2773
        %v2775 = vmul.f32 %v2728, 1.442695
        %v2776 = vpow.pop %v2775
        %v2777 = vmul.f32 %v2729, 1.442695
        %v2778 = vpow.pop %v2777
        %v2779 = vmul.f32 %v2730, 1.442695
        %v2780 = vpow.pop %v2779
        %v2781 = vmul.f32 %v2731, 1.442695
        %v2782 = vpow.pop %v2781
        %v2783 = vmul.f32 %v2732, 1.442695
        %v2784 = vpow.pop %v2783
        %v2785 = vmul.f32 %v2733, 1.442695
        %v2786 = vpow.pop %v2785
        %v2787 = vmul.f32 %v2734, 1.442695
        %v2788 = vpow.pop %v2787
        %v2789 = vmul.f32 %v2735, 1.442695
        %v2790 = vpow.pop %v2789
        %v2791 = vmul.f32 %v2736, 1.442695
        %v2792 = vpow.pop %v2791
        %v2793 = vmul.f32 %v2737, 1.442695
        %v2794 = vpow.pop %v2793
        %v2795 = vmul.f32 %v2738, 1.442695
        %v2796 = vpow.pop %v2795
        %v2797 = vmul.f32 %v2739, 1.442695
        %v2798 = vpow.pop %v2797
        %v2799 = vmul.f32 %v2740, 1.442695
        %v2800 = vpow.pop %v2799
        %v2801 = vmul.f32 %v2741, 1.442695
        %v2802 = vpow.pop %v2801
        %v2803 = vmul.f32 %v2742, 1.442695
        %v2804 = vpow.pop %v2803
        %v2805 = vmul.f32 %v2743, 1.442695
        %v2806 = vpow.pop %v2805
        %v2807 = vmul.f32 %v2744, 1.442695
        %v2808 = vpow.pop %v2807
        %v2809 = vmul.f32 %v1562, %v1562
        %v2810 = vmul.f32 %v1635, %v1635
        %v2811 = vmul.f32 %v1708, %v1708
        %v2812 = vmul.f32 %v1781, %v1781
        %v2813 = vmul.f32 %v1854, %v1854
        %v2814 = vmul.f32 %v1927, %v1927
        %v2815 = vmul.f32 %v2000, %v2000
        %v2816 = vmul.f32 %v2073, %v2073
        %v2817 = vmul.f32 %v1564, %v1564
        %v2818 = vmul.f32 %v1637, %v1637
        %v2819 = vmul.f32 %v1710, %v1710
        %v2820 = vmul.f32 %v1783, %v1783
        %v2821 = vmul.f32 %v1856, %v1856
        %v2822 = vmul.f32 %v1929, %v1929
        %v2823 = vmul.f32 %v2002, %v2002
        %v2824 = vmul.f32 %v2075, %v2075
        %v2825 = vmul.f32 %v1567, %v1567
        %v2826 = vmul.f32 %v1640, %v1640
        %v2827 = vmul.f32 %v1713, %v1713
        %v2828 = vmul.f32 %v1786, %v1786
        %v2829 = vmul.f32 %v1859, %v1859
        %v2830 = vmul.f32 %v1932, %v1932
        %v2831 = vmul.f32 %v2005, %v2005
        %v2832 = vmul.f32 %v2078, %v2078
        %v2833 = vmul.f32 %v1569, %v1569
        %v2834 = vmul.f32 %v1642, %v1642
        %v2835 = vmul.f32 %v1715, %v1715
        %v2836 = vmul.f32 %v1788, %v1788
        %v2837 = vmul.f32 %v1861, %v1861
        %v2838 = vmul.f32 %v1934, %v1934
        %v2839 = vmul.f32 %v2007, %v2007
        %v2840 = vmul.f32 %v2080, %v2080
        %v2841 = vmul.f32 %v1572, %v1572
        %v2842 = vmul.f32 %v1645, %v1645
        %v2843 = vmul.f32 %v1718, %v1718
        %v2844 = vmul.f32 %v1791, %v1791
        %v2845 = vmul.f32 %v1864, %v1864
        %v2846 = vmul.f32 %v1937, %v1937
        %v2847 = vmul.f32 %v2010, %v2010
        %v2848 = vmul.f32 %v2083, %v2083
        %v2849 = vmul.f32 %v1574, %v1574
        %v2850 = vmul.f32 %v1647, %v1647
        %v2851 = vmul.f32 %v1720, %v1720
        %v2852 = vmul.f32 %v1793, %v1793
        %v2853 = vmul.f32 %v1866, %v1866
        %v2854 = vmul.f32 %v1939, %v1939
        %v2855 = vmul.f32 %v2012, %v2012
        %v2856 = vmul.f32 %v2085, %v2085
        %v2857 = vmul.f32 %v1577, %v1577
        %v2858 = vmul.f32 %v1650, %v1650
        %v2859 = vmul.f32 %v1723, %v1723
        %v2860 = vmul.f32 %v1796, %v1796
        %v2861 = vmul.f32 %v1869, %v1869
        %v2862 = vmul.f32 %v1942, %v1942
        %v2863 = vmul.f32 %v2015, %v2015
        %v2864 = vmul.f32 %v2088, %v2088
        %v2865 = vmul.f32 %v1579, %v1579
        %v2866 = vmul.f32 %v1652, %v1652
        %v2867 = vmul.f32 %v1725, %v1725
        %v2868 = vmul.f32 %v1798, %v1798
        %v2869 = vmul.f32 %v1871, %v1871
        %v2870 = vmul.f32 %v1944, %v1944
        %v2871 = vmul.f32 %v2017, %v2017
        %v2872 = vmul.f32 %v2090, %v2090
        %v2873 = vadd.f32 %v2809, %v2817
        %v2874 = vadd.f32 %v2873, %v2825
        %v2875 = vadd.f32 %v2874, %v2833
        %v2876 = vadd.f32 %v2875, %v2841
        %v2877 = vadd.f32 %v2876, %v2849
        %v2878 = vadd.f32 %v2877, %v2857
        %v2879 = vadd.f32 %v2878, %v2865
        %v2880 = vrot.slane %v2879, 4
        %v2881 = vadd.f32 %v2879, %v2880
        %v2882 = vrot.slane %v2881, 2
        %v2883 = vadd.f32 %v2881, %v2882
        %v2884 = vrot.slane %v2883, 1
        %v2885 = vadd.f32 %v2883, %v2884
        %v2886 = vadd.f32 %v2810, %v2818
        %v2887 = vadd.f32 %v2886, %v2826
        %v2888 = vadd.f32 %v2887, %v2834
        %v2889 = vadd.f32 %v2888, %v2842
        %v2890 = vadd.f32 %v2889, %v2850
        %v2891 = vadd.f32 %v2890, %v2858
        %v2892 = vadd.f32 %v2891, %v2866
        %v2893 = vrot.slane %v2892, 4
        %v2894 = vadd.f32 %v2892, %v2893
        %v2895 = vrot.slane %v2894, 2
        %v2896 = vadd.f32 %v2894, %v2895
        %v2897 = vrot.slane %v2896, 1
        %v2898 = vadd.f32 %v2896, %v2897
        %v2899 = vadd.f32 %v2811, %v2819
        %v2900 = vadd.f32 %v2899, %v2827
        %v2901 = vadd.f32 %v2900, %v2835
        %v2902 = vadd.f32 %v2901, %v2843
        %v2903 = vadd.f32 %v2902, %v2851
        %v2904 = vadd.f32 %v2903, %v2859
        %v2905 = vadd.f32 %v2904, %v2867
        %v2906 = vrot.slane %v2905, 4
        %v2907 = vadd.f32 %v2905, %v2906
        %v2908 = vrot.slane %v2907, 2
        %v2909 = vadd.f32 %v2907, %v2908
        %v2910 = vrot.slane %v2909, 1
        %v2911 = vadd.f32 %v2909, %v2910
        %v2912 = vadd.f32 %v2812, %v2820
        %v2913 = vadd.f32 %v2912, %v2828
        %v2914 = vadd.f32 %v2913, %v2836
        %v2915 = vadd.f32 %v2914, %v2844
        %v2916 = vadd.f32 %v2915, %v2852
        %v2917 = vadd.f32 %v2916, %v2860
        %v2918 = vadd.f32 %v2917, %v2868
        %v2919 = vrot.slane %v2918, 4
        %v2920 = vadd.f32 %v2918, %v2919
        %v2921 = vrot.slane %v2920, 2
        %v2922 = vadd.f32 %v2920, %v2921
        %v2923 = vrot.slane %v2922, 1
        %v2924 = vadd.f32 %v2922, %v2923
        %v2925 = vadd.f32 %v2813, %v2821
        %v2926 = vadd.f32 %v2925, %v2829
        %v2927 = vadd.f32 %v2926, %v2837
        %v2928 = vadd.f32 %v2927, %v2845
        %v2929 = vadd.f32 %v2928, %v2853
        %v2930 = vadd.f32 %v2929, %v2861
        %v2931 = vadd.f32 %v2930, %v2869
        %v2932 = vrot.slane %v2931, 4
        %v2933 = vadd.f32 %v2931, %v2932
        %v2934 = vrot.slane %v2933, 2
        %v2935 = vadd.f32 %v2933, %v2934
        %v2936 = vrot.slane %v2935, 1
        %v2937 = vadd.f32 %v2935, %v2936
        %v2938 = vadd.f32 %v2814, %v2822
        %v2939 = vadd.f32 %v2938, %v2830
        %v2940 = vadd.f32 %v2939, %v2838
        %v2941 = vadd.f32 %v2940, %v2846
        %v2942 = vadd.f32 %v2941, %v2854
        %v2943 = vadd.f32 %v2942, %v2862
        %v2944 = vadd.f32 %v2943, %v2870
        %v2945 = vrot.slane %v2944, 4
        %v2946 = vadd.f32 %v2944, %v2945
        %v2947 = vrot.slane %v2946, 2
        %v2948 = vadd.f32 %v2946, %v2947
        %v2949 = vrot.slane %v2948, 1
        %v2950 = vadd.f32 %v2948, %v2949
        %v2951 = vadd.f32 %v2815, %v2823
        %v2952 = vadd.f32 %v2951, %v2831
        %v2953 = vadd.f32 %v2952, %v2839
        %v2954 = vadd.f32 %v2953, %v2847
        %v2955 = vadd.f32 %v2954, %v2855
        %v2956 = vadd.f32 %v2955, %v2863
        %v2957 = vadd.f32 %v2956, %v2871
        %v2958 = vrot.slane %v2957, 4
        %v2959 = vadd.f32 %v2957, %v2958
        %v2960 = vrot.slane %v2959, 2
        %v2961 = vadd.f32 %v2959, %v2960
        %v2962 = vrot.slane %v2961, 1
        %v2963 = vadd.f32 %v2961, %v2962
        %v2964 = vadd.f32 %v2816, %v2824
        %v2965 = vadd.f32 %v2964, %v2832
        %v2966 = vadd.f32 %v2965, %v2840
        %v2967 = vadd.f32 %v2966, %v2848
        %v2968 = vadd.f32 %v2967, %v2856
        %v2969 = vadd.f32 %v2968, %v2864
        %v2970 = vadd.f32 %v2969, %v2872
        %v2971 = vrot.slane %v2970, 4
        %v2972 = vadd.f32 %v2970, %v2971
        %v2973 = vrot.slane %v2972, 2
        %v2974 = vadd.f32 %v2972, %v2973
        %v2975 = vrot.slane %v2974, 1
        %v2976 = vadd.f32 %v2974, %v2975
        %v2977 = vmul.f32 %v2885, 0.5
        %v2978 = vmul.f32 %v2898, 0.5
        %v2979 = vmul.f32 %v2911, 0.5
        %v2980 = vmul.f32 %v2924, 0.5
        %v2981 = vmul.f32 %v2937, 0.5
        %v2982 = vmul.f32 %v2950, 0.5
        %v2983 = vmul.f32 %v2963, 0.5
        %v2984 = vmul.f32 %v2976, 0.5
        %v2985 = vsub.f32 %v2363, %v2977
        %v2986 = vsub.f32 %v2382, %v2978
        %v2987 = vsub.f32 %v2401, %v2979
        %v2988 = vsub.f32 %v2420, %v2980
        %v2989 = vsub.f32 %v2439, %v2981
        %v2990 = vsub.f32 %v2458, %v2982
        %v2991 = vsub.f32 %v2477, %v2983
        %v2992 = vsub.f32 %v2496, %v2984
        %v2993 = vsub.f32 %v2365, %v2977
        %v2994 = vsub.f32 %v2384, %v2978
        %v2995 = vsub.f32 %v2403, %v2979
        %v2996 = vsub.f32 %v2422, %v2980
        %v2997 = vsub.f32 %v2441, %v2981
        %v2998 = vsub.f32 %v2460, %v2982
        %v2999 = vsub.f32 %v2479, %v2983
        %v3000 = vsub.f32 %v2498, %v2984
        %v3001 = vsub.f32 %v2368, %v2977
        %v3002 = vsub.f32 %v2387, %v2978
        %v3003 = vsub.f32 %v2406, %v2979
        %v3004 = vsub.f32 %v2425, %v2980
        %v3005 = vsub.f32 %v2444, %v2981
        %v3006 = vsub.f32 %v2463, %v2982
        %v3007 = vsub.f32 %v2482, %v2983
        %v3008 = vsub.f32 %v2501, %v2984
        %v3009 = vsub.f32 %v2370, %v2977
        %v3010 = vsub.f32 %v2389, %v2978
        %v3011 = vsub.f32 %v2408, %v2979
        %v3012 = vsub.f32 %v2427, %v2980
        %v3013 = vsub.f32 %v2446, %v2981
        %v3014 = vsub.f32 %v2465, %v2982
        %v3015 = vsub.f32 %v2484, %v2983
        %v3016 = vsub.f32 %v2503, %v2984
        %v3017 = vsub.f32 %v2985, 1.732868
        %v3018 = vsub.f32 %v2986, 1.732868
        %v3019 = vsub.f32 %v2987, 1.732868
        %v3020 = vsub.f32 %v2988, 1.732868
        %v3021 = vsub.f32 %v2989, 1.732868
        %v3022 = vsub.f32 %v2990, 1.732868
        %v3023 = vsub.f32 %v2991, 1.732868
        %v3024 = vsub.f32 %v2992, 1.732868
        %v3025 = vsub.f32 %v2993, 1.732868
        %v3026 = vsub.f32 %v2994, 1.732868
        %v3027 = vsub.f32 %v2995, 1.732868
        %v3028 = vsub.f32 %v2996, 1.732868
        %v3029 = vsub.f32 %v2997, 1.732868
        %v3030 = vsub.f32 %v2998, 1.732868
        %v3031 = vsub.f32 %v2999, 1.732868
        %v3032 = vsub.f32 %v3000, 1.732868
        %v3033 = vsub.f32 %v3001, 1.732868
        %v3034 = vsub.f32 %v3002, 1.732868
        %v3035 = vsub.f32 %v3003, 1.732868
        %v3036 = vsub.f32 %v3004, 1.732868
        %v3037 = vsub.f32 %v3005, 1.732868
        %v3038 = vsub.f32 %v3006, 1.732868
        %v3039 = vsub.f32 %v3007, 1.732868
        %v3040 = vsub.f32 %v3008, 1.732868
        %v3041 = vsub.f32 %v3009, 1.732868
        %v3042 = vsub.f32 %v3010, 1.732868
        %v3043 = vsub.f32 %v3011, 1.732868
        %v3044 = vsub.f32 %v3012, 1.732868
        %v3045 = vsub.f32 %v3013, 1.732868
        %v3046 = vsub.f32 %v3014, 1.732868
        %v3047 = vsub.f32 %v3015, 1.732868
        %v3048 = vsub.f32 %v3016, 1.732868
        %v3049 = vmul.f32 %v3017, 1.442695
        %v3050 = vpow.pop %v3049
        %v3051 = vmul.f32 %v3018, 1.442695
        %v3052 = vpow.pop %v3051
        %v3053 = vmul.f32 %v3019, 1.442695
        %v3054 = vpow.pop %v3053
        %v3055 = vmul.f32 %v3020, 1.442695
        %v3056 = vpow.pop %v3055
        %v3057 = vmul.f32 %v3021, 1.442695
        %v3058 = vpow.pop %v3057
        %v3059 = vmul.f32 %v3022, 1.442695
        %v3060 = vpow.pop %v3059
        %v3061 = vmul.f32 %v3023, 1.442695
        %v3062 = vpow.pop %v3061
        %v3063 = vmul.f32 %v3024, 1.442695
        %v3064 = vpow.pop %v3063
        %v3065 = vmul.f32 %v3025, 1.442695
        %v3066 = vpow.pop %v3065
        %v3067 = vmul.f32 %v3026, 1.442695
        %v3068 = vpow.pop %v3067
        %v3069 = vmul.f32 %v3027, 1.442695
        %v3070 = vpow.pop %v3069
        %v3071 = vmul.f32 %v3028, 1.442695
        %v3072 = vpow.pop %v3071
        %v3073 = vmul.f32 %v3029, 1.442695
        %v3074 = vpow.pop %v3073
        %v3075 = vmul.f32 %v3030, 1.442695
        %v3076 = vpow.pop %v3075
        %v3077 = vmul.f32 %v3031, 1.442695
        %v3078 = vpow.pop %v3077
        %v3079 = vmul.f32 %v3032, 1.442695
        %v3080 = vpow.pop %v3079
        %v3081 = vmul.f32 %v3033, 1.442695
        %v3082 = vpow.pop %v3081
        %v3083 = vmul.f32 %v3034, 1.442695
        %v3084 = vpow.pop %v3083
        %v3085 = vmul.f32 %v3035, 1.442695
        %v3086 = vpow.pop %v3085
        %v3087 = vmul.f32 %v3036, 1.442695
        %v3088 = vpow.pop %v3087
        %v3089 = vmul.f32 %v3037, 1.442695
        %v3090 = vpow.pop %v3089
        %v3091 = vmul.f32 %v3038, 1.442695
        %v3092 = vpow.pop %v3091
        %v3093 = vmul.f32 %v3039, 1.442695
        %v3094 = vpow.pop %v3093
        %v3095 = vmul.f32 %v3040, 1.442695
        %v3096 = vpow.pop %v3095
        %v3097 = vmul.f32 %v3041, 1.442695
        %v3098 = vpow.pop %v3097
        %v3099 = vmul.f32 %v3042, 1.442695
        %v3100 = vpow.pop %v3099
        %v3101 = vmul.f32 %v3043, 1.442695
        %v3102 = vpow.pop %v3101
        %v3103 = vmul.f32 %v3044, 1.442695
        %v3104 = vpow.pop %v3103
        %v3105 = vmul.f32 %v3045, 1.442695
        %v3106 = vpow.pop %v3105
        %v3107 = vmul.f32 %v3046, 1.442695
        %v3108 = vpow.pop %v3107
        %v3109 = vmul.f32 %v3047, 1.442695
        %v3110 = vpow.pop %v3109
        %v3111 = vmul.f32 %v3048, 1.442695
        %v3112 = vpow.pop %v3111
        %v3113 = vpack.c.bf16 %v2762, %v2746
        %v3114 = vpack.c.bf16 %v2764, %v2748
        %v3115 = vpack.c.bf16 %v2766, %v2750
        %v3116 = vpack.c.bf16 %v2768, %v2752
        %v3117 = vpack.c.bf16 %v2770, %v2754
        %v3118 = vpack.c.bf16 %v2772, %v2756
        %v3119 = vpack.c.bf16 %v2774, %v2758
        %v3120 = vpack.c.bf16 %v2776, %v2760
        %v3121 = vpack.c.bf16 %v2794, %v2778
        %v3122 = vpack.c.bf16 %v2796, %v2780
        %v3123 = vpack.c.bf16 %v2798, %v2782
        %v3124 = vpack.c.bf16 %v2800, %v2784
        %v3125 = vpack.c.bf16 %v2802, %v2786
        %v3126 = vpack.c.bf16 %v2804, %v2788
        %v3127 = vpack.c.bf16 %v2806, %v2790
        %v3128 = vpack.c.bf16 %v2808, %v2792
        %v3129 = vpack.c.bf16 %v3066, %v3050
        %v3130 = vpack.c.bf16 %v3068, %v3052
        %v3131 = vpack.c.bf16 %v3070, %v3054
        %v3132 = vpack.c.bf16 %v3072, %v3056
        %v3133 = vpack.c.bf16 %v3074, %v3058
        %v3134 = vpack.c.bf16 %v3076, %v3060
        %v3135 = vpack.c.bf16 %v3078, %v3062
        %v3136 = vpack.c.bf16 %v3080, %v3064
        %v3137 = vpack.c.bf16 %v3098, %v3082
        %v3138 = vpack.c.bf16 %v3100, %v3084
        %v3139 = vpack.c.bf16 %v3102, %v3086
        %v3140 = vpack.c.bf16 %v3104, %v3088
        %v3141 = vpack.c.bf16 %v3106, %v3090
        %v3142 = vpack.c.bf16 %v3108, %v3092
        %v3143 = vpack.c.bf16 %v3110, %v3094
        %v3144 = vpack.c.bf16 %v3112, %v3096
        %v3145 = vpack.c.bf16 %v1584, %v1582
        %v3146 = vpack.c.bf16 %v1657, %v1655
        %v3147 = vpack.c.bf16 %v1730, %v1728
        %v3148 = vpack.c.bf16 %v1803, %v1801
        %v3149 = vpack.c.bf16 %v1876, %v1874
        %v3150 = vpack.c.bf16 %v1949, %v1947
        %v3151 = vpack.c.bf16 %v2022, %v2020
        %v3152 = vpack.c.bf16 %v2095, %v2093
        %v3153 = vpack.c.bf16 %v1589, %v1587
        %v3154 = vpack.c.bf16 %v1662, %v1660
        %v3155 = vpack.c.bf16 %v1735, %v1733
        %v3156 = vpack.c.bf16 %v1808, %v1806
        %v3157 = vpack.c.bf16 %v1881, %v1879
        %v3158 = vpack.c.bf16 %v1954, %v1952
        %v3159 = vpack.c.bf16 %v2027, %v2025
        %v3160 = vpack.c.bf16 %v2100, %v2098
        %v3161 = vpack.c.bf16 %v1594, %v1592
        %v3162 = vpack.c.bf16 %v1667, %v1665
        %v3163 = vpack.c.bf16 %v1740, %v1738
        %v3164 = vpack.c.bf16 %v1813, %v1811
        %v3165 = vpack.c.bf16 %v1886, %v1884
        %v3166 = vpack.c.bf16 %v1959, %v1957
        %v3167 = vpack.c.bf16 %v2032, %v2030
        %v3168 = vpack.c.bf16 %v2105, %v2103
        %v3169 = vpack.c.bf16 %v1599, %v1597
        %v3170 = vpack.c.bf16 %v1672, %v1670
        %v3171 = vpack.c.bf16 %v1745, %v1743
        %v3172 = vpack.c.bf16 %v1818, %v1816
        %v3173 = vpack.c.bf16 %v1891, %v1889
        %v3174 = vpack.c.bf16 %v1964, %v1962
        %v3175 = vpack.c.bf16 %v2037, %v2035
        %v3176 = vpack.c.bf16 %v2110, %v2108
        %v3177 = vpack.c.bf16 %v1602, %v1602
        %v3178 = vpack.c.bf16 %v1675, %v1675
        %v3179 = vpack.c.bf16 %v1748, %v1748
        %v3180 = vpack.c.bf16 %v1821, %v1821
        %v3181 = vpack.c.bf16 %v1894, %v1894
        %v3182 = vpack.c.bf16 %v1967, %v1967
        %v3183 = vpack.c.bf16 %v2040, %v2040
        %v3184 = vpack.c.bf16 %v2113, %v2113
        %3185 = vmatpush.bf16.xpose.msra.mxu0 0
        %3186 = vmatpush.bf16.xpose.msra.mxu0 0
        %3187 = vmatpush.bf16.xpose.msra.mxu0 0
        %3188 = vmatpush.bf16.xpose.msra.mxu0 0
        %3189 = vmatpush.bf16.xpose.msra.mxu0 0
        %3190 = vmatpush.bf16.xpose.msra.mxu0 0
        %3191 = vmatpush.bf16.xpose.msra.mxu0 %v3121
        %3192 = vmatpush.bf16.xpose.msra.mxu0 %v3113
        %3193 = vmatmul.bf16.gmra.mxu0 %v3145
        %v3194 = vpop.f32.mrf.mxu0
        %v3195 = vadd.f32 0.0, %v3194
        %v3196 = vpop.f32.mrf.mxu0
        %v3197 = vadd.f32 0.0, %v3196
        %3198 = vmatmul.bf16.gmra.mxu0 %v3153
        %v3199 = vpop.f32.mrf.mxu0
        %v3200 = vadd.f32 0.0, %v3199
        %v3201 = vpop.f32.mrf.mxu0
        %v3202 = vadd.f32 0.0, %v3201
        %3203 = vmatmul.bf16.gmra.mxu0 %v3161
        %v3204 = vpop.f32.mrf.mxu0
        %v3205 = vadd.f32 0.0, %v3204
        %v3206 = vpop.f32.mrf.mxu0
        %v3207 = vadd.f32 0.0, %v3206
        %3208 = vmatmul.bf16.gmra.mxu0 %v3169
        %v3209 = vpop.f32.mrf.mxu0
        %v3210 = vadd.f32 0.0, %v3209
        %v3211 = vpop.f32.mrf.mxu0
        %v3212 = vadd.f32 0.0, %v3211
        %3213 = vmatmul.bf16.gmra.mxu0 %v3177
        %v3214 = vpop.f32.mrf.mxu0
        %v3215 = vadd.f32 0.0, %v3214
        %v3216 = vpop.f32.mrf.mxu0
        %3217 = vdwg.mxu0
        %3218 = vmatpush.bf16.xpose.msra.mxu0 0
        %3219 = vmatpush.bf16.xpose.msra.mxu0 0
        %3220 = vmatpush.bf16.xpose.msra.mxu0 0
        %3221 = vmatpush.bf16.xpose.msra.mxu0 0
        %3222 = vmatpush.bf16.xpose.msra.mxu0 0
        %3223 = vmatpush.bf16.xpose.msra.mxu0 0
        %3224 = vmatpush.bf16.xpose.msra.mxu0 %v3122
        %3225 = vmatpush.bf16.xpose.msra.mxu0 %v3114
        %3226 = vmatmul.bf16.gmra.mxu0 %v3146
        %v3227 = vpop.f32.mrf.mxu0
        %v3228 = vadd.f32 %v3195, %v3227
        %v3229 = vpop.f32.mrf.mxu0
        %v3230 = vadd.f32 %v3197, %v3229
        %3231 = vmatmul.bf16.gmra.mxu0 %v3154
        %v3232 = vpop.f32.mrf.mxu0
        %v3233 = vadd.f32 %v3200, %v3232
        %v3234 = vpop.f32.mrf.mxu0
        %v3235 = vadd.f32 %v3202, %v3234
        %3236 = vmatmul.bf16.gmra.mxu0 %v3162
        %v3237 = vpop.f32.mrf.mxu0
        %v3238 = vadd.f32 %v3205, %v3237
        %v3239 = vpop.f32.mrf.mxu0
        %v3240 = vadd.f32 %v3207, %v3239
        %3241 = vmatmul.bf16.gmra.mxu0 %v3170
        %v3242 = vpop.f32.mrf.mxu0
        %v3243 = vadd.f32 %v3210, %v3242
        %v3244 = vpop.f32.mrf.mxu0
        %v3245 = vadd.f32 %v3212, %v3244
        %3246 = vmatmul.bf16.gmra.mxu0 %v3178
        %v3247 = vpop.f32.mrf.mxu0
        %v3248 = vadd.f32 %v3215, %v3247
        %v3249 = vpop.f32.mrf.mxu0
        %3250 = vdwg.mxu0
        %3251 = vmatpush.bf16.xpose.msra.mxu0 0
        %3252 = vmatpush.bf16.xpose.msra.mxu0 0
        %3253 = vmatpush.bf16.xpose.msra.mxu0 0
        %3254 = vmatpush.bf16.xpose.msra.mxu0 0
        %3255 = vmatpush.bf16.xpose.msra.mxu0 0
        %3256 = vmatpush.bf16.xpose.msra.mxu0 0
        %3257 = vmatpush.bf16.xpose.msra.mxu0 %v3123
        %3258 = vmatpush.bf16.xpose.msra.mxu0 %v3115
        %3259 = vmatmul.bf16.gmra.mxu0 %v3147
        %v3260 = vpop.f32.mrf.mxu0
        %v3261 = vadd.f32 %v3228, %v3260
        %v3262 = vpop.f32.mrf.mxu0
        %v3263 = vadd.f32 %v3230, %v3262
        %3264 = vmatmul.bf16.gmra.mxu0 %v3155
        %v3265 = vpop.f32.mrf.mxu0
        %v3266 = vadd.f32 %v3233, %v3265
        %v3267 = vpop.f32.mrf.mxu0
        %v3268 = vadd.f32 %v3235, %v3267
        %3269 = vmatmul.bf16.gmra.mxu0 %v3163
        %v3270 = vpop.f32.mrf.mxu0
        %v3271 = vadd.f32 %v3238, %v3270
        %v3272 = vpop.f32.mrf.mxu0
        %v3273 = vadd.f32 %v3240, %v3272
        %3274 = vmatmul.bf16.gmra.mxu0 %v3171
        %v3275 = vpop.f32.mrf.mxu0
        %v3276 = vadd.f32 %v3243, %v3275
        %v3277 = vpop.f32.mrf.mxu0
        %v3278 = vadd.f32 %v3245, %v3277
        %3279 = vmatmul.bf16.gmra.mxu0 %v3179
        %v3280 = vpop.f32.mrf.mxu0
        %v3281 = vadd.f32 %v3248, %v3280
        %v3282 = vpop.f32.mrf.mxu0
        %3283 = vdwg.mxu0
        %3284 = vmatpush.bf16.xpose.msra.mxu0 0
        %3285 = vmatpush.bf16.xpose.msra.mxu0 0
        %3286 = vmatpush.bf16.xpose.msra.mxu0 0
        %3287 = vmatpush.bf16.xpose.msra.mxu0 0
        %3288 = vmatpush.bf16.xpose.msra.mxu0 0
        %3289 = vmatpush.bf16.xpose.msra.mxu0 0
        %3290 = vmatpush.bf16.xpose.msra.mxu0 %v3124
        %3291 = vmatpush.bf16.xpose.msra.mxu0 %v3116
        %3292 = vmatmul.bf16.gmra.mxu0 %v3148
        %v3293 = vpop.f32.mrf.mxu0
        %v3294 = vadd.f32 %v3261, %v3293
        %v3295 = vpop.f32.mrf.mxu0
        %v3296 = vadd.f32 %v3263, %v3295
        %3297 = vmatmul.bf16.gmra.mxu0 %v3156
        %v3298 = vpop.f32.mrf.mxu0
        %v3299 = vadd.f32 %v3266, %v3298
        %v3300 = vpop.f32.mrf.mxu0
        %v3301 = vadd.f32 %v3268, %v3300
        %3302 = vmatmul.bf16.gmra.mxu0 %v3164
        %v3303 = vpop.f32.mrf.mxu0
        %v3304 = vadd.f32 %v3271, %v3303
        %v3305 = vpop.f32.mrf.mxu0
        %v3306 = vadd.f32 %v3273, %v3305
        %3307 = vmatmul.bf16.gmra.mxu0 %v3172
        %v3308 = vpop.f32.mrf.mxu0
        %v3309 = vadd.f32 %v3276, %v3308
        %v3310 = vpop.f32.mrf.mxu0
        %v3311 = vadd.f32 %v3278, %v3310
        %3312 = vmatmul.bf16.gmra.mxu0 %v3180
        %v3313 = vpop.f32.mrf.mxu0
        %v3314 = vadd.f32 %v3281, %v3313
        %v3315 = vpop.f32.mrf.mxu0
        %3316 = vdwg.mxu0
        %3317 = vmatpush.bf16.xpose.msra.mxu0 0
        %3318 = vmatpush.bf16.xpose.msra.mxu0 0
        %3319 = vmatpush.bf16.xpose.msra.mxu0 0
        %3320 = vmatpush.bf16.xpose.msra.mxu0 0
        %3321 = vmatpush.bf16.xpose.msra.mxu0 0
        %3322 = vmatpush.bf16.xpose.msra.mxu0 0
        %3323 = vmatpush.bf16.xpose.msra.mxu0 %v3125
        %3324 = vmatpush.bf16.xpose.msra.mxu0 %v3117
        %3325 = vmatmul.bf16.gmra.mxu0 %v3149
        %v3326 = vpop.f32.mrf.mxu0
        %v3327 = vadd.f32 %v3294, %v3326
        %v3328 = vpop.f32.mrf.mxu0
        %v3329 = vadd.f32 %v3296, %v3328
        %3330 = vmatmul.bf16.gmra.mxu0 %v3157
        %v3331 = vpop.f32.mrf.mxu0
        %v3332 = vadd.f32 %v3299, %v3331
        %v3333 = vpop.f32.mrf.mxu0
        %v3334 = vadd.f32 %v3301, %v3333
        %3335 = vmatmul.bf16.gmra.mxu0 %v3165
        %v3336 = vpop.f32.mrf.mxu0
        %v3337 = vadd.f32 %v3304, %v3336
        %v3338 = vpop.f32.mrf.mxu0
        %v3339 = vadd.f32 %v3306, %v3338
        %3340 = vmatmul.bf16.gmra.mxu0 %v3173
        %v3341 = vpop.f32.mrf.mxu0
        %v3342 = vadd.f32 %v3309, %v3341
        %v3343 = vpop.f32.mrf.mxu0
        %v3344 = vadd.f32 %v3311, %v3343
        %3345 = vmatmul.bf16.gmra.mxu0 %v3181
        %v3346 = vpop.f32.mrf.mxu0
        %v3347 = vadd.f32 %v3314, %v3346
        %v3348 = vpop.f32.mrf.mxu0
        %3349 = vdwg.mxu0
        %3350 = vmatpush.bf16.xpose.msra.mxu0 0
        %3351 = vmatpush.bf16.xpose.msra.mxu0 0
        %3352 = vmatpush.bf16.xpose.msra.mxu0 0
        %3353 = vmatpush.bf16.xpose.msra.mxu0 0
        %3354 = vmatpush.bf16.xpose.msra.mxu0 0
        %3355 = vmatpush.bf16.xpose.msra.mxu0 0
        %3356 = vmatpush.bf16.xpose.msra.mxu0 %v3126
        %3357 = vmatpush.bf16.xpose.msra.mxu0 %v3118
        %3358 = vmatmul.bf16.gmra.mxu0 %v3150
        %v3359 = vpop.f32.mrf.mxu0
        %v3360 = vadd.f32 %v3327, %v3359
        %v3361 = vpop.f32.mrf.mxu0
        %v3362 = vadd.f32 %v3329, %v3361
        %3363 = vmatmul.bf16.gmra.mxu0 %v3158
        %v3364 = vpop.f32.mrf.mxu0
        %v3365 = vadd.f32 %v3332, %v3364
        %v3366 = vpop.f32.mrf.mxu0
        %v3367 = vadd.f32 %v3334, %v3366
        %3368 = vmatmul.bf16.gmra.mxu0 %v3166
        %v3369 = vpop.f32.mrf.mxu0
        %v3370 = vadd.f32 %v3337, %v3369
        %v3371 = vpop.f32.mrf.mxu0
        %v3372 = vadd.f32 %v3339, %v3371
        %3373 = vmatmul.bf16.gmra.mxu0 %v3174
        %v3374 = vpop.f32.mrf.mxu0
        %v3375 = vadd.f32 %v3342, %v3374
        %v3376 = vpop.f32.mrf.mxu0
        %v3377 = vadd.f32 %v3344, %v3376
        %3378 = vmatmul.bf16.gmra.mxu0 %v3182
        %v3379 = vpop.f32.mrf.mxu0
        %v3380 = vadd.f32 %v3347, %v3379
        %v3381 = vpop.f32.mrf.mxu0
        %3382 = vdwg.mxu0
        %3383 = vmatpush.bf16.xpose.msra.mxu0 0
        %3384 = vmatpush.bf16.xpose.msra.mxu0 0
        %3385 = vmatpush.bf16.xpose.msra.mxu0 0
        %3386 = vmatpush.bf16.xpose.msra.mxu0 0
        %3387 = vmatpush.bf16.xpose.msra.mxu0 0
        %3388 = vmatpush.bf16.xpose.msra.mxu0 0
        %3389 = vmatpush.bf16.xpose.msra.mxu0 %v3127
        %3390 = vmatpush.bf16.xpose.msra.mxu0 %v3119
        %3391 = vmatmul.bf16.gmra.mxu0 %v3151
        %v3392 = vpop.f32.mrf.mxu0
        %v3393 = vadd.f32 %v3360, %v3392
        %v3394 = vpop.f32.mrf.mxu0
        %v3395 = vadd.f32 %v3362, %v3394
        %3396 = vmatmul.bf16.gmra.mxu0 %v3159
        %v3397 = vpop.f32.mrf.mxu0
        %v3398 = vadd.f32 %v3365, %v3397
        %v3399 = vpop.f32.mrf.mxu0
        %v3400 = vadd.f32 %v3367, %v3399
        %3401 = vmatmul.bf16.gmra.mxu0 %v3167
        %v3402 = vpop.f32.mrf.mxu0
        %v3403 = vadd.f32 %v3370, %v3402
        %v3404 = vpop.f32.mrf.mxu0
        %v3405 = vadd.f32 %v3372, %v3404
        %3406 = vmatmul.bf16.gmra.mxu0 %v3175
        %v3407 = vpop.f32.mrf.mxu0
        %v3408 = vadd.f32 %v3375, %v3407
        %v3409 = vpop.f32.mrf.mxu0
        %v3410 = vadd.f32 %v3377, %v3409
        %3411 = vmatmul.bf16.gmra.mxu0 %v3183
        %v3412 = vpop.f32.mrf.mxu0
        %v3413 = vadd.f32 %v3380, %v3412
        %v3414 = vpop.f32.mrf.mxu0
        %3415 = vdwg.mxu0
        %3416 = vmatpush.bf16.xpose.msra.mxu0 0
        %3417 = vmatpush.bf16.xpose.msra.mxu0 0
        %3418 = vmatpush.bf16.xpose.msra.mxu0 0
        %3419 = vmatpush.bf16.xpose.msra.mxu0 0
        %3420 = vmatpush.bf16.xpose.msra.mxu0 0
        %3421 = vmatpush.bf16.xpose.msra.mxu0 0
        %3422 = vmatpush.bf16.xpose.msra.mxu0 %v3128
        %3423 = vmatpush.bf16.xpose.msra.mxu0 %v3120
        %3424 = vmatmul.bf16.gmra.mxu0 %v3152
        %v3425 = vpop.f32.mrf.mxu0
        %v3426 = vadd.f32 %v3393, %v3425
        %v3427 = vpop.f32.mrf.mxu0
        %v3428 = vadd.f32 %v3395, %v3427
        %3429 = vmatmul.bf16.gmra.mxu0 %v3160
        %v3430 = vpop.f32.mrf.mxu0
        %v3431 = vadd.f32 %v3398, %v3430
        %v3432 = vpop.f32.mrf.mxu0
        %v3433 = vadd.f32 %v3400, %v3432
        %3434 = vmatmul.bf16.gmra.mxu0 %v3168
        %v3435 = vpop.f32.mrf.mxu0
        %v3436 = vadd.f32 %v3403, %v3435
        %v3437 = vpop.f32.mrf.mxu0
        %v3438 = vadd.f32 %v3405, %v3437
        %3439 = vmatmul.bf16.gmra.mxu0 %v3176
        %v3440 = vpop.f32.mrf.mxu0
        %v3441 = vadd.f32 %v3408, %v3440
        %v3442 = vpop.f32.mrf.mxu0
        %v3443 = vadd.f32 %v3410, %v3442
        %3444 = vmatmul.bf16.gmra.mxu0 %v3184
        %v3445 = vpop.f32.mrf.mxu0
        %v3446 = vadd.f32 %v3413, %v3445
        %v3447 = vpop.f32.mrf.mxu0
        %3448 = vdwg.mxu0
        %v3449 = vpack.c.bf16 %v3428, %v3426
        %v3450 = vpack.c.bf16 %v3433, %v3431
        %v3451 = vpack.c.bf16 %v3438, %v3436
        %v3452 = vpack.c.bf16 %v3443, %v3441
        %v3453 = vpack.c.bf16 %v3446, %v3446
        %vm3454 = vcmask 261120
        %v3456 = vsel %vm3454, %v3449, 0
        %v3459 = vsel %vm3454, %v3450, 0
        %v3462 = vsel %vm3454, %v3451, 0
        %v3465 = vsel %vm3454, %v3452, 0
        %v3468 = vsel %vm3454, %v3453, 0
        %3470 = vmatpush.bf16.msra.mxu0 0
        %3471 = vmatpush.bf16.msra.mxu0 0
        %3472 = vmatpush.bf16.msra.mxu0 0
        %3473 = vmatpush.bf16.msra.mxu0 0
        %3474 = vmatpush.bf16.msra.mxu0 0
        %3475 = vmatpush.bf16.msra.mxu0 0
        %3476 = vmatpush.bf16.msra.mxu0 %v3137
        %3477 = vmatpush.bf16.msra.mxu0 %v3129
        %3478 = vmatmul.bf16.gmra.mxu0 %v3456
        %v3479 = vpop.f32.mrf.mxu0
        %v3480 = vadd.f32 0.0, %v3479
        %v3481 = vpop.f32.mrf.mxu0
        %v3482 = vadd.f32 0.0, %v3481
        %3483 = vmatmul.bf16.gmra.mxu0 %v3459
        %v3484 = vpop.f32.mrf.mxu0
        %v3485 = vadd.f32 0.0, %v3484
        %v3486 = vpop.f32.mrf.mxu0
        %v3487 = vadd.f32 0.0, %v3486
        %3488 = vmatmul.bf16.gmra.mxu0 %v3462
        %v3489 = vpop.f32.mrf.mxu0
        %v3490 = vadd.f32 0.0, %v3489
        %v3491 = vpop.f32.mrf.mxu0
        %v3492 = vadd.f32 0.0, %v3491
        %3493 = vmatmul.bf16.gmra.mxu0 %v3465
        %v3494 = vpop.f32.mrf.mxu0
        %v3495 = vadd.f32 0.0, %v3494
        %v3496 = vpop.f32.mrf.mxu0
        %v3497 = vadd.f32 0.0, %v3496
        %3498 = vmatmul.bf16.gmra.mxu0 %v3468
        %v3499 = vpop.f32.mrf.mxu0
        %v3500 = vadd.f32 0.0, %v3499
        %v3501 = vpop.f32.mrf.mxu0
        %3502 = vdwg.mxu0
        %3503 = vmatpush.bf16.msra.mxu0 0
        %3504 = vmatpush.bf16.msra.mxu0 0
        %3505 = vmatpush.bf16.msra.mxu0 0
        %3506 = vmatpush.bf16.msra.mxu0 0
        %3507 = vmatpush.bf16.msra.mxu0 0
        %3508 = vmatpush.bf16.msra.mxu0 0
        %3509 = vmatpush.bf16.msra.mxu0 %v3138
        %3510 = vmatpush.bf16.msra.mxu0 %v3130
        %3511 = vmatmul.bf16.gmra.mxu0 %v3456
        %v3512 = vpop.f32.mrf.mxu0
        %v3513 = vadd.f32 0.0, %v3512
        %v3514 = vpop.f32.mrf.mxu0
        %v3515 = vadd.f32 0.0, %v3514
        %3516 = vmatmul.bf16.gmra.mxu0 %v3459
        %v3517 = vpop.f32.mrf.mxu0
        %v3518 = vadd.f32 0.0, %v3517
        %v3519 = vpop.f32.mrf.mxu0
        %v3520 = vadd.f32 0.0, %v3519
        %3521 = vmatmul.bf16.gmra.mxu0 %v3462
        %v3522 = vpop.f32.mrf.mxu0
        %v3523 = vadd.f32 0.0, %v3522
        %v3524 = vpop.f32.mrf.mxu0
        %v3525 = vadd.f32 0.0, %v3524
        %3526 = vmatmul.bf16.gmra.mxu0 %v3465
        %v3527 = vpop.f32.mrf.mxu0
        %v3528 = vadd.f32 0.0, %v3527
        %v3529 = vpop.f32.mrf.mxu0
        %v3530 = vadd.f32 0.0, %v3529
        %3531 = vmatmul.bf16.gmra.mxu0 %v3468
        %v3532 = vpop.f32.mrf.mxu0
        %v3533 = vadd.f32 0.0, %v3532
        %v3534 = vpop.f32.mrf.mxu0
        %3535 = vdwg.mxu0
        %3536 = vmatpush.bf16.msra.mxu0 0
        %3537 = vmatpush.bf16.msra.mxu0 0
        %3538 = vmatpush.bf16.msra.mxu0 0
        %3539 = vmatpush.bf16.msra.mxu0 0
        %3540 = vmatpush.bf16.msra.mxu0 0
        %3541 = vmatpush.bf16.msra.mxu0 0
        %3542 = vmatpush.bf16.msra.mxu0 %v3139
        %3543 = vmatpush.bf16.msra.mxu0 %v3131
        %3544 = vmatmul.bf16.gmra.mxu0 %v3456
        %v3545 = vpop.f32.mrf.mxu0
        %v3546 = vadd.f32 0.0, %v3545
        %v3547 = vpop.f32.mrf.mxu0
        %v3548 = vadd.f32 0.0, %v3547
        %3549 = vmatmul.bf16.gmra.mxu0 %v3459
        %v3550 = vpop.f32.mrf.mxu0
        %v3551 = vadd.f32 0.0, %v3550
        %v3552 = vpop.f32.mrf.mxu0
        %v3553 = vadd.f32 0.0, %v3552
        %3554 = vmatmul.bf16.gmra.mxu0 %v3462
        %v3555 = vpop.f32.mrf.mxu0
        %v3556 = vadd.f32 0.0, %v3555
        %v3557 = vpop.f32.mrf.mxu0
        %v3558 = vadd.f32 0.0, %v3557
        %3559 = vmatmul.bf16.gmra.mxu0 %v3465
        %v3560 = vpop.f32.mrf.mxu0
        %v3561 = vadd.f32 0.0, %v3560
        %v3562 = vpop.f32.mrf.mxu0
        %v3563 = vadd.f32 0.0, %v3562
        %3564 = vmatmul.bf16.gmra.mxu0 %v3468
        %v3565 = vpop.f32.mrf.mxu0
        %v3566 = vadd.f32 0.0, %v3565
        %v3567 = vpop.f32.mrf.mxu0
        %3568 = vdwg.mxu0
        %3569 = vmatpush.bf16.msra.mxu0 0
        %3570 = vmatpush.bf16.msra.mxu0 0
        %3571 = vmatpush.bf16.msra.mxu0 0
        %3572 = vmatpush.bf16.msra.mxu0 0
        %3573 = vmatpush.bf16.msra.mxu0 0
        %3574 = vmatpush.bf16.msra.mxu0 0
        %3575 = vmatpush.bf16.msra.mxu0 %v3140
        %3576 = vmatpush.bf16.msra.mxu0 %v3132
        %3577 = vmatmul.bf16.gmra.mxu0 %v3456
        %v3578 = vpop.f32.mrf.mxu0
        %v3579 = vadd.f32 0.0, %v3578
        %v3580 = vpop.f32.mrf.mxu0
        %v3581 = vadd.f32 0.0, %v3580
        %3582 = vmatmul.bf16.gmra.mxu0 %v3459
        %v3583 = vpop.f32.mrf.mxu0
        %v3584 = vadd.f32 0.0, %v3583
        %v3585 = vpop.f32.mrf.mxu0
        %v3586 = vadd.f32 0.0, %v3585
        %3587 = vmatmul.bf16.gmra.mxu0 %v3462
        %v3588 = vpop.f32.mrf.mxu0
        %v3589 = vadd.f32 0.0, %v3588
        %v3590 = vpop.f32.mrf.mxu0
        %v3591 = vadd.f32 0.0, %v3590
        %3592 = vmatmul.bf16.gmra.mxu0 %v3465
        %v3593 = vpop.f32.mrf.mxu0
        %v3594 = vadd.f32 0.0, %v3593
        %v3595 = vpop.f32.mrf.mxu0
        %v3596 = vadd.f32 0.0, %v3595
        %3597 = vmatmul.bf16.gmra.mxu0 %v3468
        %v3598 = vpop.f32.mrf.mxu0
        %v3599 = vadd.f32 0.0, %v3598
        %v3600 = vpop.f32.mrf.mxu0
        %3601 = vdwg.mxu0
        %3602 = vmatpush.bf16.msra.mxu0 0
        %3603 = vmatpush.bf16.msra.mxu0 0
        %3604 = vmatpush.bf16.msra.mxu0 0
        %3605 = vmatpush.bf16.msra.mxu0 0
        %3606 = vmatpush.bf16.msra.mxu0 0
        %3607 = vmatpush.bf16.msra.mxu0 0
        %3608 = vmatpush.bf16.msra.mxu0 %v3141
        %3609 = vmatpush.bf16.msra.mxu0 %v3133
        %3610 = vmatmul.bf16.gmra.mxu0 %v3456
        %v3611 = vpop.f32.mrf.mxu0
        %v3612 = vadd.f32 0.0, %v3611
        %v3613 = vpop.f32.mrf.mxu0
        %v3614 = vadd.f32 0.0, %v3613
        %3615 = vmatmul.bf16.gmra.mxu0 %v3459
        %v3616 = vpop.f32.mrf.mxu0
        %v3617 = vadd.f32 0.0, %v3616
        %v3618 = vpop.f32.mrf.mxu0
        %v3619 = vadd.f32 0.0, %v3618
        %3620 = vmatmul.bf16.gmra.mxu0 %v3462
        %v3621 = vpop.f32.mrf.mxu0
        %v3622 = vadd.f32 0.0, %v3621
        %v3623 = vpop.f32.mrf.mxu0
        %v3624 = vadd.f32 0.0, %v3623
        %3625 = vmatmul.bf16.gmra.mxu0 %v3465
        %v3626 = vpop.f32.mrf.mxu0
        %v3627 = vadd.f32 0.0, %v3626
        %v3628 = vpop.f32.mrf.mxu0
        %v3629 = vadd.f32 0.0, %v3628
        %3630 = vmatmul.bf16.gmra.mxu0 %v3468
        %v3631 = vpop.f32.mrf.mxu0
        %v3632 = vadd.f32 0.0, %v3631
        %v3633 = vpop.f32.mrf.mxu0
        %3634 = vdwg.mxu0
        %3635 = vmatpush.bf16.msra.mxu0 0
        %3636 = vmatpush.bf16.msra.mxu0 0
        %3637 = vmatpush.bf16.msra.mxu0 0
        %3638 = vmatpush.bf16.msra.mxu0 0
        %3639 = vmatpush.bf16.msra.mxu0 0
        %3640 = vmatpush.bf16.msra.mxu0 0
        %3641 = vmatpush.bf16.msra.mxu0 %v3142
        %3642 = vmatpush.bf16.msra.mxu0 %v3134
        %3643 = vmatmul.bf16.gmra.mxu0 %v3456
        %v3644 = vpop.f32.mrf.mxu0
        %v3645 = vadd.f32 0.0, %v3644
        %v3646 = vpop.f32.mrf.mxu0
        %v3647 = vadd.f32 0.0, %v3646
        %3648 = vmatmul.bf16.gmra.mxu0 %v3459
        %v3649 = vpop.f32.mrf.mxu0
        %v3650 = vadd.f32 0.0, %v3649
        %v3651 = vpop.f32.mrf.mxu0
        %v3652 = vadd.f32 0.0, %v3651
        %3653 = vmatmul.bf16.gmra.mxu0 %v3462
        %v3654 = vpop.f32.mrf.mxu0
        %v3655 = vadd.f32 0.0, %v3654
        %v3656 = vpop.f32.mrf.mxu0
        %v3657 = vadd.f32 0.0, %v3656
        %3658 = vmatmul.bf16.gmra.mxu0 %v3465
        %v3659 = vpop.f32.mrf.mxu0
        %v3660 = vadd.f32 0.0, %v3659
        %v3661 = vpop.f32.mrf.mxu0
        %v3662 = vadd.f32 0.0, %v3661
        %3663 = vmatmul.bf16.gmra.mxu0 %v3468
        %v3664 = vpop.f32.mrf.mxu0
        %v3665 = vadd.f32 0.0, %v3664
        %v3666 = vpop.f32.mrf.mxu0
        %3667 = vdwg.mxu0
        %3668 = vmatpush.bf16.msra.mxu0 0
        %3669 = vmatpush.bf16.msra.mxu0 0
        %3670 = vmatpush.bf16.msra.mxu0 0
        %3671 = vmatpush.bf16.msra.mxu0 0
        %3672 = vmatpush.bf16.msra.mxu0 0
        %3673 = vmatpush.bf16.msra.mxu0 0
        %3674 = vmatpush.bf16.msra.mxu0 %v3143
        %3675 = vmatpush.bf16.msra.mxu0 %v3135
        %3676 = vmatmul.bf16.gmra.mxu0 %v3456
        %v3677 = vpop.f32.mrf.mxu0
        %v3678 = vadd.f32 0.0, %v3677
        %v3679 = vpop.f32.mrf.mxu0
        %v3680 = vadd.f32 0.0, %v3679
        %3681 = vmatmul.bf16.gmra.mxu0 %v3459
        %v3682 = vpop.f32.mrf.mxu0
        %v3683 = vadd.f32 0.0, %v3682
        %v3684 = vpop.f32.mrf.mxu0
        %v3685 = vadd.f32 0.0, %v3684
        %3686 = vmatmul.bf16.gmra.mxu0 %v3462
        %v3687 = vpop.f32.mrf.mxu0
        %v3688 = vadd.f32 0.0, %v3687
        %v3689 = vpop.f32.mrf.mxu0
        %v3690 = vadd.f32 0.0, %v3689
        %3691 = vmatmul.bf16.gmra.mxu0 %v3465
        %v3692 = vpop.f32.mrf.mxu0
        %v3693 = vadd.f32 0.0, %v3692
        %v3694 = vpop.f32.mrf.mxu0
        %v3695 = vadd.f32 0.0, %v3694
        %3696 = vmatmul.bf16.gmra.mxu0 %v3468
        %v3697 = vpop.f32.mrf.mxu0
        %v3698 = vadd.f32 0.0, %v3697
        %v3699 = vpop.f32.mrf.mxu0
        %3700 = vdwg.mxu0
        %3701 = vmatpush.bf16.msra.mxu0 0
        %3702 = vmatpush.bf16.msra.mxu0 0
        %3703 = vmatpush.bf16.msra.mxu0 0
        %3704 = vmatpush.bf16.msra.mxu0 0
        %3705 = vmatpush.bf16.msra.mxu0 0
        %3706 = vmatpush.bf16.msra.mxu0 0
        %3707 = vmatpush.bf16.msra.mxu0 %v3144
        %3708 = vmatpush.bf16.msra.mxu0 %v3136
        %3709 = vmatmul.bf16.gmra.mxu0 %v3456
        %v3710 = vpop.f32.mrf.mxu0
        %v3711 = vadd.f32 0.0, %v3710
        %v3712 = vpop.f32.mrf.mxu0
        %v3713 = vadd.f32 0.0, %v3712
        %3714 = vmatmul.bf16.gmra.mxu0 %v3459
        %v3715 = vpop.f32.mrf.mxu0
        %v3716 = vadd.f32 0.0, %v3715
        %v3717 = vpop.f32.mrf.mxu0
        %v3718 = vadd.f32 0.0, %v3717
        %3719 = vmatmul.bf16.gmra.mxu0 %v3462
        %v3720 = vpop.f32.mrf.mxu0
        %v3721 = vadd.f32 0.0, %v3720
        %v3722 = vpop.f32.mrf.mxu0
        %v3723 = vadd.f32 0.0, %v3722
        %3724 = vmatmul.bf16.gmra.mxu0 %v3465
        %v3725 = vpop.f32.mrf.mxu0
        %v3726 = vadd.f32 0.0, %v3725
        %v3727 = vpop.f32.mrf.mxu0
        %v3728 = vadd.f32 0.0, %v3727
        %3729 = vmatmul.bf16.gmra.mxu0 %v3468
        %v3730 = vpop.f32.mrf.mxu0
        %v3731 = vadd.f32 0.0, %v3730
        %v3732 = vpop.f32.mrf.mxu0
        %3733 = vdwg.mxu0
        %v3734 = vadd.f32 %v3500, 1e-08
        %v3735 = vadd.f32 %v3533, 1e-08
        %v3736 = vadd.f32 %v3566, 1e-08
        %v3737 = vadd.f32 %v3599, 1e-08
        %v3738 = vadd.f32 %v3632, 1e-08
        %v3739 = vadd.f32 %v3665, 1e-08
        %v3740 = vadd.f32 %v3698, 1e-08
        %v3741 = vadd.f32 %v3731, 1e-08
        %v3742 = vrcp.pop %v3734
        %v3743 = vrcp.pop %v3735
        %v3744 = vrcp.pop %v3736
        %v3745 = vrcp.pop %v3737
        %v3746 = vrcp.pop %v3738
        %v3747 = vrcp.pop %v3739
        %v3748 = vrcp.pop %v3740
        %v3749 = vrcp.pop %v3741
        %v3750 = vperm.slane %v3742, 0
        %v3751 = vperm.slane %v3743, 0
        %v3752 = vperm.slane %v3744, 0
        %v3753 = vperm.slane %v3745, 0
        %v3754 = vperm.slane %v3746, 0
        %v3755 = vperm.slane %v3747, 0
        %v3756 = vperm.slane %v3748, 0
        %v3757 = vperm.slane %v3749, 0
        %v3758 = vmul.f32 %v3480, %v3750
        %v3759 = vmul.f32 %v3513, %v3751
        %v3760 = vmul.f32 %v3546, %v3752
        %v3761 = vmul.f32 %v3579, %v3753
        %v3762 = vmul.f32 %v3612, %v3754
        %v3763 = vmul.f32 %v3645, %v3755
        %v3764 = vmul.f32 %v3678, %v3756
        %v3765 = vmul.f32 %v3711, %v3757
        %v3766 = vmul.f32 %v3482, %v3750
        %v3767 = vmul.f32 %v3515, %v3751
        %v3768 = vmul.f32 %v3548, %v3752
        %v3769 = vmul.f32 %v3581, %v3753
        %v3770 = vmul.f32 %v3614, %v3754
        %v3771 = vmul.f32 %v3647, %v3755
        %v3772 = vmul.f32 %v3680, %v3756
        %v3773 = vmul.f32 %v3713, %v3757
        %v3774 = vmul.f32 %v3485, %v3750
        %v3775 = vmul.f32 %v3518, %v3751
        %v3776 = vmul.f32 %v3551, %v3752
        %v3777 = vmul.f32 %v3584, %v3753
        %v3778 = vmul.f32 %v3617, %v3754
        %v3779 = vmul.f32 %v3650, %v3755
        %v3780 = vmul.f32 %v3683, %v3756
        %v3781 = vmul.f32 %v3716, %v3757
        %v3782 = vmul.f32 %v3487, %v3750
        %v3783 = vmul.f32 %v3520, %v3751
        %v3784 = vmul.f32 %v3553, %v3752
        %v3785 = vmul.f32 %v3586, %v3753
        %v3786 = vmul.f32 %v3619, %v3754
        %v3787 = vmul.f32 %v3652, %v3755
        %v3788 = vmul.f32 %v3685, %v3756
        %v3789 = vmul.f32 %v3718, %v3757
        %v3790 = vmul.f32 %v3490, %v3750
        %v3791 = vmul.f32 %v3523, %v3751
        %v3792 = vmul.f32 %v3556, %v3752
        %v3793 = vmul.f32 %v3589, %v3753
        %v3794 = vmul.f32 %v3622, %v3754
        %v3795 = vmul.f32 %v3655, %v3755
        %v3796 = vmul.f32 %v3688, %v3756
        %v3797 = vmul.f32 %v3721, %v3757
        %v3798 = vmul.f32 %v3492, %v3750
        %v3799 = vmul.f32 %v3525, %v3751
        %v3800 = vmul.f32 %v3558, %v3752
        %v3801 = vmul.f32 %v3591, %v3753
        %v3802 = vmul.f32 %v3624, %v3754
        %v3803 = vmul.f32 %v3657, %v3755
        %v3804 = vmul.f32 %v3690, %v3756
        %v3805 = vmul.f32 %v3723, %v3757
        %v3806 = vmul.f32 %v3495, %v3750
        %v3807 = vmul.f32 %v3528, %v3751
        %v3808 = vmul.f32 %v3561, %v3752
        %v3809 = vmul.f32 %v3594, %v3753
        %v3810 = vmul.f32 %v3627, %v3754
        %v3811 = vmul.f32 %v3660, %v3755
        %v3812 = vmul.f32 %v3693, %v3756
        %v3813 = vmul.f32 %v3726, %v3757
        %v3814 = vmul.f32 %v3497, %v3750
        %v3815 = vmul.f32 %v3530, %v3751
        %v3816 = vmul.f32 %v3563, %v3752
        %v3817 = vmul.f32 %v3596, %v3753
        %v3818 = vmul.f32 %v3629, %v3754
        %v3819 = vmul.f32 %v3662, %v3755
        %v3820 = vmul.f32 %v3695, %v3756
        %v3821 = vmul.f32 %v3728, %v3757
        %v3822 = vld [vmem:[%s4] sm:$0xf]
        %v3823 = vld [vmem:[%s4 + $0x4] sm:$0xf]
        %v3824 = vld [vmem:[%s4 + $0x8] sm:$0xf]
        %v3825 = vld [vmem:[%s4 + $0xc] sm:$0xf]
        %v3826 = vld [vmem:[%s4 + $0x10] sm:$0xf]
        %v3827 = vld [vmem:[%s4 + $0x14] sm:$0xf]
        %v3828 = vld [vmem:[%s4 + $0x18] sm:$0xf]
        %v3829 = vld [vmem:[%s4 + $0x1c] sm:$0xf]
        %v3830 = vpack.c.bf16 %v3766, %v3758
        %v3831 = vpack.c.bf16 %v3767, %v3759
        %v3832 = vpack.c.bf16 %v3768, %v3760
        %v3833 = vpack.c.bf16 %v3769, %v3761
        %v3834 = vpack.c.bf16 %v3770, %v3762
        %v3835 = vpack.c.bf16 %v3771, %v3763
        %v3836 = vpack.c.bf16 %v3772, %v3764
        %v3837 = vpack.c.bf16 %v3773, %v3765
        %v3838 = vpack.c.bf16 %v3782, %v3774
        %v3839 = vpack.c.bf16 %v3783, %v3775
        %v3840 = vpack.c.bf16 %v3784, %v3776
        %v3841 = vpack.c.bf16 %v3785, %v3777
        %v3842 = vpack.c.bf16 %v3786, %v3778
        %v3843 = vpack.c.bf16 %v3787, %v3779
        %v3844 = vpack.c.bf16 %v3788, %v3780
        %v3845 = vpack.c.bf16 %v3789, %v3781
        %v3846 = vpack.c.bf16 %v3798, %v3790
        %v3847 = vpack.c.bf16 %v3799, %v3791
        %v3848 = vpack.c.bf16 %v3800, %v3792
        %v3849 = vpack.c.bf16 %v3801, %v3793
        %v3850 = vpack.c.bf16 %v3802, %v3794
        %v3851 = vpack.c.bf16 %v3803, %v3795
        %v3852 = vpack.c.bf16 %v3804, %v3796
        %v3853 = vpack.c.bf16 %v3805, %v3797
        %v3854 = vpack.c.bf16 %v3814, %v3806
        %v3855 = vpack.c.bf16 %v3815, %v3807
        %v3856 = vpack.c.bf16 %v3816, %v3808
        %v3857 = vpack.c.bf16 %v3817, %v3809
        %v3858 = vpack.c.bf16 %v3818, %v3810
        %v3859 = vpack.c.bf16 %v3819, %v3811
        %v3860 = vpack.c.bf16 %v3820, %v3812
        %v3861 = vpack.c.bf16 %v3821, %v3813
        %3863 = vset.pattern.permute.xlu0 0
        %3864 = vperm.xlu0 %3863, %v349
        %v3865 = vpop.permute.xlu0 %3864
        %3868 = vset.pattern.permute.xlu0 0
        %3869 = vperm.xlu0 %3868, %v350
        %v3870 = vpop.permute.xlu0 %3869
        %3873 = vset.pattern.permute.xlu0 0
        %3874 = vperm.xlu0 %3873, %v351
        %v3875 = vpop.permute.xlu0 %3874
        %3878 = vset.pattern.permute.xlu0 0
        %3879 = vperm.xlu0 %3878, %v352
        %v3880 = vpop.permute.xlu0 %3879
        %3883 = vset.pattern.permute.xlu0 0
        %3884 = vperm.xlu0 %3883, %v353
        %v3885 = vpop.permute.xlu0 %3884
        %3888 = vset.pattern.permute.xlu0 0
        %3889 = vperm.xlu0 %3888, %v354
        %v3890 = vpop.permute.xlu0 %3889
        %3893 = vset.pattern.permute.xlu0 0
        %3894 = vperm.xlu0 %3893, %v355
        %v3895 = vpop.permute.xlu0 %3894
        %3898 = vset.pattern.permute.xlu0 0
        %3899 = vperm.xlu0 %3898, %v356
        %v3900 = vpop.permute.xlu0 %3899
        %v3910 = vunpack.c.l.b16 %v3822
        %v3911 = vunpack.c.l.b16 %v3823
        %v3912 = vunpack.c.l.b16 %v3824
        %v3913 = vunpack.c.l.b16 %v3825
        %v3914 = vunpack.c.l.b16 %v3826
        %v3915 = vunpack.c.l.b16 %v3827
        %v3916 = vunpack.c.l.b16 %v3828
        %v3917 = vunpack.c.l.b16 %v3829
        %v3918 = vpack.c.b16 %v3911, %v3910
        %v3919 = vpack.c.b16 %v3913, %v3912
        %v3920 = vpack.c.b16 %v3915, %v3914
        %v3921 = vpack.c.b16 %v3917, %v3916
        %v3923 = vsel %vm2162, %v3918, 0
        %v3926 = vsel %vm2162, %v3919, 0
        %v3929 = vsel %vm2162, %v3920, 0
        %v3932 = vsel %vm2162, %v3921, 0
        %3934 = vmatpush.bf16.msra.mxu0 0
        %3935 = vmatpush.bf16.msra.mxu0 0
        %3936 = vmatpush.bf16.msra.mxu0 0
        %3937 = vmatpush.bf16.msra.mxu0 0
        %3938 = vmatpush.bf16.msra.mxu0 %v3854
        %3939 = vmatpush.bf16.msra.mxu0 %v3846
        %3940 = vmatpush.bf16.msra.mxu0 %v3838
        %3941 = vmatpush.bf16.msra.mxu0 %v3830
        %3942 = vmatmul.bf16.gmra.mxu0 %v3923
        %v3943 = vpop.f32.mrf.mxu0
        %v3944 = vadd.f32 %v3865, %v3943
        %v3945 = vpop.f32.mrf.mxu0
        %v3946 = vadd.f32 %v3870, %v3945
        %3947 = vmatmul.bf16.gmra.mxu0 %v3926
        %v3948 = vpop.f32.mrf.mxu0
        %v3949 = vadd.f32 %v3875, %v3948
        %v3950 = vpop.f32.mrf.mxu0
        %v3951 = vadd.f32 %v3880, %v3950
        %3952 = vmatmul.bf16.gmra.mxu0 %v3929
        %v3953 = vpop.f32.mrf.mxu0
        %v3954 = vadd.f32 %v3885, %v3953
        %v3955 = vpop.f32.mrf.mxu0
        %v3956 = vadd.f32 %v3890, %v3955
        %3957 = vmatmul.bf16.gmra.mxu0 %v3932
        %v3958 = vpop.f32.mrf.mxu0
        %v3959 = vadd.f32 %v3895, %v3958
        %v3960 = vpop.f32.mrf.mxu0
        %v3961 = vadd.f32 %v3900, %v3960
        %3962 = vdwg.mxu0
        %3963 = vmatpush.bf16.msra.mxu0 0
        %3964 = vmatpush.bf16.msra.mxu0 0
        %3965 = vmatpush.bf16.msra.mxu0 0
        %3966 = vmatpush.bf16.msra.mxu0 0
        %3967 = vmatpush.bf16.msra.mxu0 %v3855
        %3968 = vmatpush.bf16.msra.mxu0 %v3847
        %3969 = vmatpush.bf16.msra.mxu0 %v3839
        %3970 = vmatpush.bf16.msra.mxu0 %v3831
        %3971 = vmatmul.bf16.gmra.mxu0 %v3923
        %v3972 = vpop.f32.mrf.mxu0
        %v3973 = vadd.f32 %v3865, %v3972
        %v3974 = vpop.f32.mrf.mxu0
        %v3975 = vadd.f32 %v3870, %v3974
        %3976 = vmatmul.bf16.gmra.mxu0 %v3926
        %v3977 = vpop.f32.mrf.mxu0
        %v3978 = vadd.f32 %v3875, %v3977
        %v3979 = vpop.f32.mrf.mxu0
        %v3980 = vadd.f32 %v3880, %v3979
        %3981 = vmatmul.bf16.gmra.mxu0 %v3929
        %v3982 = vpop.f32.mrf.mxu0
        %v3983 = vadd.f32 %v3885, %v3982
        %v3984 = vpop.f32.mrf.mxu0
        %v3985 = vadd.f32 %v3890, %v3984
        %3986 = vmatmul.bf16.gmra.mxu0 %v3932
        %v3987 = vpop.f32.mrf.mxu0
        %v3988 = vadd.f32 %v3895, %v3987
        %v3989 = vpop.f32.mrf.mxu0
        %v3990 = vadd.f32 %v3900, %v3989
        %3991 = vdwg.mxu0
        %3992 = vmatpush.bf16.msra.mxu0 0
        %3993 = vmatpush.bf16.msra.mxu0 0
        %3994 = vmatpush.bf16.msra.mxu0 0
        %3995 = vmatpush.bf16.msra.mxu0 0
        %3996 = vmatpush.bf16.msra.mxu0 %v3856
        %3997 = vmatpush.bf16.msra.mxu0 %v3848
        %3998 = vmatpush.bf16.msra.mxu0 %v3840
        %3999 = vmatpush.bf16.msra.mxu0 %v3832
        %4000 = vmatmul.bf16.gmra.mxu0 %v3923
        %v4001 = vpop.f32.mrf.mxu0
        %v4002 = vadd.f32 %v3865, %v4001
        %v4003 = vpop.f32.mrf.mxu0
        %v4004 = vadd.f32 %v3870, %v4003
        %4005 = vmatmul.bf16.gmra.mxu0 %v3926
        %v4006 = vpop.f32.mrf.mxu0
        %v4007 = vadd.f32 %v3875, %v4006
        %v4008 = vpop.f32.mrf.mxu0
        %v4009 = vadd.f32 %v3880, %v4008
        %4010 = vmatmul.bf16.gmra.mxu0 %v3929
        %v4011 = vpop.f32.mrf.mxu0
        %v4012 = vadd.f32 %v3885, %v4011
        %v4013 = vpop.f32.mrf.mxu0
        %v4014 = vadd.f32 %v3890, %v4013
        %4015 = vmatmul.bf16.gmra.mxu0 %v3932
        %v4016 = vpop.f32.mrf.mxu0
        %v4017 = vadd.f32 %v3895, %v4016
        %v4018 = vpop.f32.mrf.mxu0
        %v4019 = vadd.f32 %v3900, %v4018
        %4020 = vdwg.mxu0
        %4021 = vmatpush.bf16.msra.mxu0 0
        %4022 = vmatpush.bf16.msra.mxu0 0
        %4023 = vmatpush.bf16.msra.mxu0 0
        %4024 = vmatpush.bf16.msra.mxu0 0
        %4025 = vmatpush.bf16.msra.mxu0 %v3857
        %4026 = vmatpush.bf16.msra.mxu0 %v3849
        %4027 = vmatpush.bf16.msra.mxu0 %v3841
        %4028 = vmatpush.bf16.msra.mxu0 %v3833
        %4029 = vmatmul.bf16.gmra.mxu0 %v3923
        %v4030 = vpop.f32.mrf.mxu0
        %v4031 = vadd.f32 %v3865, %v4030
        %v4032 = vpop.f32.mrf.mxu0
        %v4033 = vadd.f32 %v3870, %v4032
        %4034 = vmatmul.bf16.gmra.mxu0 %v3926
        %v4035 = vpop.f32.mrf.mxu0
        %v4036 = vadd.f32 %v3875, %v4035
        %v4037 = vpop.f32.mrf.mxu0
        %v4038 = vadd.f32 %v3880, %v4037
        %4039 = vmatmul.bf16.gmra.mxu0 %v3929
        %v4040 = vpop.f32.mrf.mxu0
        %v4041 = vadd.f32 %v3885, %v4040
        %v4042 = vpop.f32.mrf.mxu0
        %v4043 = vadd.f32 %v3890, %v4042
        %4044 = vmatmul.bf16.gmra.mxu0 %v3932
        %v4045 = vpop.f32.mrf.mxu0
        %v4046 = vadd.f32 %v3895, %v4045
        %v4047 = vpop.f32.mrf.mxu0
        %v4048 = vadd.f32 %v3900, %v4047
        %4049 = vdwg.mxu0
        %4050 = vmatpush.bf16.msra.mxu0 0
        %4051 = vmatpush.bf16.msra.mxu0 0
        %4052 = vmatpush.bf16.msra.mxu0 0
        %4053 = vmatpush.bf16.msra.mxu0 0
        %4054 = vmatpush.bf16.msra.mxu0 %v3858
        %4055 = vmatpush.bf16.msra.mxu0 %v3850
        %4056 = vmatpush.bf16.msra.mxu0 %v3842
        %4057 = vmatpush.bf16.msra.mxu0 %v3834
        %4058 = vmatmul.bf16.gmra.mxu0 %v3923
        %v4059 = vpop.f32.mrf.mxu0
        %v4060 = vadd.f32 %v3865, %v4059
        %v4061 = vpop.f32.mrf.mxu0
        %v4062 = vadd.f32 %v3870, %v4061
        %4063 = vmatmul.bf16.gmra.mxu0 %v3926
        %v4064 = vpop.f32.mrf.mxu0
        %v4065 = vadd.f32 %v3875, %v4064
        %v4066 = vpop.f32.mrf.mxu0
        %v4067 = vadd.f32 %v3880, %v4066
        %4068 = vmatmul.bf16.gmra.mxu0 %v3929
        %v4069 = vpop.f32.mrf.mxu0
        %v4070 = vadd.f32 %v3885, %v4069
        %v4071 = vpop.f32.mrf.mxu0
        %v4072 = vadd.f32 %v3890, %v4071
        %4073 = vmatmul.bf16.gmra.mxu0 %v3932
        %v4074 = vpop.f32.mrf.mxu0
        %v4075 = vadd.f32 %v3895, %v4074
        %v4076 = vpop.f32.mrf.mxu0
        %v4077 = vadd.f32 %v3900, %v4076
        %4078 = vdwg.mxu0
        %4079 = vmatpush.bf16.msra.mxu0 0
        %4080 = vmatpush.bf16.msra.mxu0 0
        %4081 = vmatpush.bf16.msra.mxu0 0
        %4082 = vmatpush.bf16.msra.mxu0 0
        %4083 = vmatpush.bf16.msra.mxu0 %v3859
        %4084 = vmatpush.bf16.msra.mxu0 %v3851
        %4085 = vmatpush.bf16.msra.mxu0 %v3843
        %4086 = vmatpush.bf16.msra.mxu0 %v3835
        %4087 = vmatmul.bf16.gmra.mxu0 %v3923
        %v4088 = vpop.f32.mrf.mxu0
        %v4089 = vadd.f32 %v3865, %v4088
        %v4090 = vpop.f32.mrf.mxu0
        %v4091 = vadd.f32 %v3870, %v4090
        %4092 = vmatmul.bf16.gmra.mxu0 %v3926
        %v4093 = vpop.f32.mrf.mxu0
        %v4094 = vadd.f32 %v3875, %v4093
        %v4095 = vpop.f32.mrf.mxu0
        %v4096 = vadd.f32 %v3880, %v4095
        %4097 = vmatmul.bf16.gmra.mxu0 %v3929
        %v4098 = vpop.f32.mrf.mxu0
        %v4099 = vadd.f32 %v3885, %v4098
        %v4100 = vpop.f32.mrf.mxu0
        %v4101 = vadd.f32 %v3890, %v4100
        %4102 = vmatmul.bf16.gmra.mxu0 %v3932
        %v4103 = vpop.f32.mrf.mxu0
        %v4104 = vadd.f32 %v3895, %v4103
        %v4105 = vpop.f32.mrf.mxu0
        %v4106 = vadd.f32 %v3900, %v4105
        %4107 = vdwg.mxu0
        %4108 = vmatpush.bf16.msra.mxu0 0
        %4109 = vmatpush.bf16.msra.mxu0 0
        %4110 = vmatpush.bf16.msra.mxu0 0
        %4111 = vmatpush.bf16.msra.mxu0 0
        %4112 = vmatpush.bf16.msra.mxu0 %v3860
        %4113 = vmatpush.bf16.msra.mxu0 %v3852
        %4114 = vmatpush.bf16.msra.mxu0 %v3844
        %4115 = vmatpush.bf16.msra.mxu0 %v3836
        %4116 = vmatmul.bf16.gmra.mxu0 %v3923
        %v4117 = vpop.f32.mrf.mxu0
        %v4118 = vadd.f32 %v3865, %v4117
        %v4119 = vpop.f32.mrf.mxu0
        %v4120 = vadd.f32 %v3870, %v4119
        %4121 = vmatmul.bf16.gmra.mxu0 %v3926
        %v4122 = vpop.f32.mrf.mxu0
        %v4123 = vadd.f32 %v3875, %v4122
        %v4124 = vpop.f32.mrf.mxu0
        %v4125 = vadd.f32 %v3880, %v4124
        %4126 = vmatmul.bf16.gmra.mxu0 %v3929
        %v4127 = vpop.f32.mrf.mxu0
        %v4128 = vadd.f32 %v3885, %v4127
        %v4129 = vpop.f32.mrf.mxu0
        %v4130 = vadd.f32 %v3890, %v4129
        %4131 = vmatmul.bf16.gmra.mxu0 %v3932
        %v4132 = vpop.f32.mrf.mxu0
        %v4133 = vadd.f32 %v3895, %v4132
        %v4134 = vpop.f32.mrf.mxu0
        %v4135 = vadd.f32 %v3900, %v4134
        %4136 = vdwg.mxu0
        %4137 = vmatpush.bf16.msra.mxu0 0
        %4138 = vmatpush.bf16.msra.mxu0 0
        %4139 = vmatpush.bf16.msra.mxu0 0
        %4140 = vmatpush.bf16.msra.mxu0 0
        %4141 = vmatpush.bf16.msra.mxu0 %v3861
        %4142 = vmatpush.bf16.msra.mxu0 %v3853
        %4143 = vmatpush.bf16.msra.mxu0 %v3845
        %4144 = vmatpush.bf16.msra.mxu0 %v3837
        %4145 = vmatmul.bf16.gmra.mxu0 %v3923
        %v4146 = vpop.f32.mrf.mxu0
        %v4147 = vadd.f32 %v3865, %v4146
        %v4148 = vpop.f32.mrf.mxu0
        %v4149 = vadd.f32 %v3870, %v4148
        %4150 = vmatmul.bf16.gmra.mxu0 %v3926
        %v4151 = vpop.f32.mrf.mxu0
        %v4152 = vadd.f32 %v3875, %v4151
        %v4153 = vpop.f32.mrf.mxu0
        %v4154 = vadd.f32 %v3880, %v4153
        %4155 = vmatmul.bf16.gmra.mxu0 %v3929
        %v4156 = vpop.f32.mrf.mxu0
        %v4157 = vadd.f32 %v3885, %v4156
        %v4158 = vpop.f32.mrf.mxu0
        %v4159 = vadd.f32 %v3890, %v4158
        %4160 = vmatmul.bf16.gmra.mxu0 %v3932
        %v4161 = vpop.f32.mrf.mxu0
        %v4162 = vadd.f32 %v3895, %v4161
        %v4163 = vpop.f32.mrf.mxu0
        %v4164 = vadd.f32 %v3900, %v4163
        %4165 = vdwg.mxu0
        %v4166 = vadd.f32 %v1582, %v3944
        %v4167 = vadd.f32 %v1655, %v3973
        %v4168 = vadd.f32 %v1728, %v4002
        %v4169 = vadd.f32 %v1801, %v4031
        %v4170 = vadd.f32 %v1874, %v4060
        %v4171 = vadd.f32 %v1947, %v4089
        %v4172 = vadd.f32 %v2020, %v4118
        %v4173 = vadd.f32 %v2093, %v4147
        %v4174 = vadd.f32 %v1584, %v3946
        %v4175 = vadd.f32 %v1657, %v3975
        %v4176 = vadd.f32 %v1730, %v4004
        %v4177 = vadd.f32 %v1803, %v4033
        %v4178 = vadd.f32 %v1876, %v4062
        %v4179 = vadd.f32 %v1949, %v4091
        %v4180 = vadd.f32 %v2022, %v4120
        %v4181 = vadd.f32 %v2095, %v4149
        %v4182 = vadd.f32 %v1587, %v3949
        %v4183 = vadd.f32 %v1660, %v3978
        %v4184 = vadd.f32 %v1733, %v4007
        %v4185 = vadd.f32 %v1806, %v4036
        %v4186 = vadd.f32 %v1879, %v4065
        %v4187 = vadd.f32 %v1952, %v4094
        %v4188 = vadd.f32 %v2025, %v4123
        %v4189 = vadd.f32 %v2098, %v4152
        %v4190 = vadd.f32 %v1589, %v3951
        %v4191 = vadd.f32 %v1662, %v3980
        %v4192 = vadd.f32 %v1735, %v4009
        %v4193 = vadd.f32 %v1808, %v4038
        %v4194 = vadd.f32 %v1881, %v4067
        %v4195 = vadd.f32 %v1954, %v4096
        %v4196 = vadd.f32 %v2027, %v4125
        %v4197 = vadd.f32 %v2100, %v4154
        %v4198 = vadd.f32 %v1592, %v3954
        %v4199 = vadd.f32 %v1665, %v3983
        %v4200 = vadd.f32 %v1738, %v4012
        %v4201 = vadd.f32 %v1811, %v4041
        %v4202 = vadd.f32 %v1884, %v4070
        %v4203 = vadd.f32 %v1957, %v4099
        %v4204 = vadd.f32 %v2030, %v4128
        %v4205 = vadd.f32 %v2103, %v4157
        %v4206 = vadd.f32 %v1594, %v3956
        %v4207 = vadd.f32 %v1667, %v3985
        %v4208 = vadd.f32 %v1740, %v4014
        %v4209 = vadd.f32 %v1813, %v4043
        %v4210 = vadd.f32 %v1886, %v4072
        %v4211 = vadd.f32 %v1959, %v4101
        %v4212 = vadd.f32 %v2032, %v4130
        %v4213 = vadd.f32 %v2105, %v4159
        %v4214 = vadd.f32 %v1597, %v3959
        %v4215 = vadd.f32 %v1670, %v3988
        %v4216 = vadd.f32 %v1743, %v4017
        %v4217 = vadd.f32 %v1816, %v4046
        %v4218 = vadd.f32 %v1889, %v4075
        %v4219 = vadd.f32 %v1962, %v4104
        %v4220 = vadd.f32 %v2035, %v4133
        %v4221 = vadd.f32 %v2108, %v4162
        %v4222 = vadd.f32 %v1599, %v3961
        %v4223 = vadd.f32 %v1672, %v3990
        %v4224 = vadd.f32 %v1745, %v4019
        %v4225 = vadd.f32 %v1818, %v4048
        %v4226 = vadd.f32 %v1891, %v4077
        %v4227 = vadd.f32 %v1964, %v4106
        %v4228 = vadd.f32 %v2037, %v4135
        %v4229 = vadd.f32 %v2110, %v4164
        %v4230 = vadd.f32 %v4166, %v4174
        %v4231 = vadd.f32 %v4230, %v4182
        %v4232 = vadd.f32 %v4231, %v4190
        %v4233 = vadd.f32 %v4232, %v4198
        %v4234 = vadd.f32 %v4233, %v4206
        %v4235 = vadd.f32 %v4234, %v4214
        %v4236 = vadd.f32 %v4235, %v4222
        %v4237 = vrot.slane %v4236, 4
        %v4238 = vadd.f32 %v4236, %v4237
        %v4239 = vrot.slane %v4238, 2
        %v4240 = vadd.f32 %v4238, %v4239
        %v4241 = vrot.slane %v4240, 1
        %v4242 = vadd.f32 %v4240, %v4241
        %v4243 = vadd.f32 %v4167, %v4175
        %v4244 = vadd.f32 %v4243, %v4183
        %v4245 = vadd.f32 %v4244, %v4191
        %v4246 = vadd.f32 %v4245, %v4199
        %v4247 = vadd.f32 %v4246, %v4207
        %v4248 = vadd.f32 %v4247, %v4215
        %v4249 = vadd.f32 %v4248, %v4223
        %v4250 = vrot.slane %v4249, 4
        %v4251 = vadd.f32 %v4249, %v4250
        %v4252 = vrot.slane %v4251, 2
        %v4253 = vadd.f32 %v4251, %v4252
        %v4254 = vrot.slane %v4253, 1
        %v4255 = vadd.f32 %v4253, %v4254
        %v4256 = vadd.f32 %v4168, %v4176
        %v4257 = vadd.f32 %v4256, %v4184
        %v4258 = vadd.f32 %v4257, %v4192
        %v4259 = vadd.f32 %v4258, %v4200
        %v4260 = vadd.f32 %v4259, %v4208
        %v4261 = vadd.f32 %v4260, %v4216
        %v4262 = vadd.f32 %v4261, %v4224
        %v4263 = vrot.slane %v4262, 4
        %v4264 = vadd.f32 %v4262, %v4263
        %v4265 = vrot.slane %v4264, 2
        %v4266 = vadd.f32 %v4264, %v4265
        %v4267 = vrot.slane %v4266, 1
        %v4268 = vadd.f32 %v4266, %v4267
        %v4269 = vadd.f32 %v4169, %v4177
        %v4270 = vadd.f32 %v4269, %v4185
        %v4271 = vadd.f32 %v4270, %v4193
        %v4272 = vadd.f32 %v4271, %v4201
        %v4273 = vadd.f32 %v4272, %v4209
        %v4274 = vadd.f32 %v4273, %v4217
        %v4275 = vadd.f32 %v4274, %v4225
        %v4276 = vrot.slane %v4275, 4
        %v4277 = vadd.f32 %v4275, %v4276
        %v4278 = vrot.slane %v4277, 2
        %v4279 = vadd.f32 %v4277, %v4278
        %v4280 = vrot.slane %v4279, 1
        %v4281 = vadd.f32 %v4279, %v4280
        %v4282 = vadd.f32 %v4170, %v4178
        %v4283 = vadd.f32 %v4282, %v4186
        %v4284 = vadd.f32 %v4283, %v4194
        %v4285 = vadd.f32 %v4284, %v4202
        %v4286 = vadd.f32 %v4285, %v4210
        %v4287 = vadd.f32 %v4286, %v4218
        %v4288 = vadd.f32 %v4287, %v4226
        %v4289 = vrot.slane %v4288, 4
        %v4290 = vadd.f32 %v4288, %v4289
        %v4291 = vrot.slane %v4290, 2
        %v4292 = vadd.f32 %v4290, %v4291
        %v4293 = vrot.slane %v4292, 1
        %v4294 = vadd.f32 %v4292, %v4293
        %v4295 = vadd.f32 %v4171, %v4179
        %v4296 = vadd.f32 %v4295, %v4187
        %v4297 = vadd.f32 %v4296, %v4195
        %v4298 = vadd.f32 %v4297, %v4203
        %v4299 = vadd.f32 %v4298, %v4211
        %v4300 = vadd.f32 %v4299, %v4219
        %v4301 = vadd.f32 %v4300, %v4227
        %v4302 = vrot.slane %v4301, 4
        %v4303 = vadd.f32 %v4301, %v4302
        %v4304 = vrot.slane %v4303, 2
        %v4305 = vadd.f32 %v4303, %v4304
        %v4306 = vrot.slane %v4305, 1
        %v4307 = vadd.f32 %v4305, %v4306
        %v4308 = vadd.f32 %v4172, %v4180
        %v4309 = vadd.f32 %v4308, %v4188
        %v4310 = vadd.f32 %v4309, %v4196
        %v4311 = vadd.f32 %v4310, %v4204
        %v4312 = vadd.f32 %v4311, %v4212
        %v4313 = vadd.f32 %v4312, %v4220
        %v4314 = vadd.f32 %v4313, %v4228
        %v4315 = vrot.slane %v4314, 4
        %v4316 = vadd.f32 %v4314, %v4315
        %v4317 = vrot.slane %v4316, 2
        %v4318 = vadd.f32 %v4316, %v4317
        %v4319 = vrot.slane %v4318, 1
        %v4320 = vadd.f32 %v4318, %v4319
        %v4321 = vadd.f32 %v4173, %v4181
        %v4322 = vadd.f32 %v4321, %v4189
        %v4323 = vadd.f32 %v4322, %v4197
        %v4324 = vadd.f32 %v4323, %v4205
        %v4325 = vadd.f32 %v4324, %v4213
        %v4326 = vadd.f32 %v4325, %v4221
        %v4327 = vadd.f32 %v4326, %v4229
        %v4328 = vrot.slane %v4327, 4
        %v4329 = vadd.f32 %v4327, %v4328
        %v4330 = vrot.slane %v4329, 2
        %v4331 = vadd.f32 %v4329, %v4330
        %v4332 = vrot.slane %v4331, 1
        %v4333 = vadd.f32 %v4331, %v4332
        %v4334 = vrcp.pop 64.0
        %v4335 = vmul.f32 64.0, %v4334
        %v4336 = vsub.f32 1.0, %v4335
        %v4337 = vmul.f32 %v4334, %v4336
        %v4338 = vadd.f32 %v4334, %v4337
        %vm4339 = vweird.f32 %v4334
        %v4340 = vsel %vm4339, %v4334, %v4338
        %v4341 = vmul.f32 %v4242, %v4340
        %v4342 = vmul.f32 %v4255, %v4340
        %v4343 = vmul.f32 %v4268, %v4340
        %v4344 = vmul.f32 %v4281, %v4340
        %v4345 = vmul.f32 %v4294, %v4340
        %v4346 = vmul.f32 %v4307, %v4340
        %v4347 = vmul.f32 %v4320, %v4340
        %v4348 = vmul.f32 %v4333, %v4340
        %v4349 = vsub.f32 %v4166, %v4341
        %v4350 = vsub.f32 %v4167, %v4342
        %v4351 = vsub.f32 %v4168, %v4343
        %v4352 = vsub.f32 %v4169, %v4344
        %v4353 = vsub.f32 %v4170, %v4345
        %v4354 = vsub.f32 %v4171, %v4346
        %v4355 = vsub.f32 %v4172, %v4347
        %v4356 = vsub.f32 %v4173, %v4348
        %v4357 = vsub.f32 %v4174, %v4341
        %v4358 = vsub.f32 %v4175, %v4342
        %v4359 = vsub.f32 %v4176, %v4343
        %v4360 = vsub.f32 %v4177, %v4344
        %v4361 = vsub.f32 %v4178, %v4345
        %v4362 = vsub.f32 %v4179, %v4346
        %v4363 = vsub.f32 %v4180, %v4347
        %v4364 = vsub.f32 %v4181, %v4348
        %v4365 = vsub.f32 %v4182, %v4341
        %v4366 = vsub.f32 %v4183, %v4342
        %v4367 = vsub.f32 %v4184, %v4343
        %v4368 = vsub.f32 %v4185, %v4344
        %v4369 = vsub.f32 %v4186, %v4345
        %v4370 = vsub.f32 %v4187, %v4346
        %v4371 = vsub.f32 %v4188, %v4347
        %v4372 = vsub.f32 %v4189, %v4348
        %v4373 = vsub.f32 %v4190, %v4341
        %v4374 = vsub.f32 %v4191, %v4342
        %v4375 = vsub.f32 %v4192, %v4343
        %v4376 = vsub.f32 %v4193, %v4344
        %v4377 = vsub.f32 %v4194, %v4345
        %v4378 = vsub.f32 %v4195, %v4346
        %v4379 = vsub.f32 %v4196, %v4347
        %v4380 = vsub.f32 %v4197, %v4348
        %v4381 = vsub.f32 %v4198, %v4341
        %v4382 = vsub.f32 %v4199, %v4342
        %v4383 = vsub.f32 %v4200, %v4343
        %v4384 = vsub.f32 %v4201, %v4344
        %v4385 = vsub.f32 %v4202, %v4345
        %v4386 = vsub.f32 %v4203, %v4346
        %v4387 = vsub.f32 %v4204, %v4347
        %v4388 = vsub.f32 %v4205, %v4348
        %v4389 = vsub.f32 %v4206, %v4341
        %v4390 = vsub.f32 %v4207, %v4342
        %v4391 = vsub.f32 %v4208, %v4343
        %v4392 = vsub.f32 %v4209, %v4344
        %v4393 = vsub.f32 %v4210, %v4345
        %v4394 = vsub.f32 %v4211, %v4346
        %v4395 = vsub.f32 %v4212, %v4347
        %v4396 = vsub.f32 %v4213, %v4348
        %v4397 = vsub.f32 %v4214, %v4341
        %v4398 = vsub.f32 %v4215, %v4342
        %v4399 = vsub.f32 %v4216, %v4343
        %v4400 = vsub.f32 %v4217, %v4344
        %v4401 = vsub.f32 %v4218, %v4345
        %v4402 = vsub.f32 %v4219, %v4346
        %v4403 = vsub.f32 %v4220, %v4347
        %v4404 = vsub.f32 %v4221, %v4348
        %v4405 = vsub.f32 %v4222, %v4341
        %v4406 = vsub.f32 %v4223, %v4342
        %v4407 = vsub.f32 %v4224, %v4343
        %v4408 = vsub.f32 %v4225, %v4344
        %v4409 = vsub.f32 %v4226, %v4345
        %v4410 = vsub.f32 %v4227, %v4346
        %v4411 = vsub.f32 %v4228, %v4347
        %v4412 = vsub.f32 %v4229, %v4348
        %v4413 = vmul.f32 %v4349, %v4349
        %v4414 = vmul.f32 %v4350, %v4350
        %v4415 = vmul.f32 %v4351, %v4351
        %v4416 = vmul.f32 %v4352, %v4352
        %v4417 = vmul.f32 %v4353, %v4353
        %v4418 = vmul.f32 %v4354, %v4354
        %v4419 = vmul.f32 %v4355, %v4355
        %v4420 = vmul.f32 %v4356, %v4356
        %v4421 = vmul.f32 %v4357, %v4357
        %v4422 = vmul.f32 %v4358, %v4358
        %v4423 = vmul.f32 %v4359, %v4359
        %v4424 = vmul.f32 %v4360, %v4360
        %v4425 = vmul.f32 %v4361, %v4361
        %v4426 = vmul.f32 %v4362, %v4362
        %v4427 = vmul.f32 %v4363, %v4363
        %v4428 = vmul.f32 %v4364, %v4364
        %v4429 = vmul.f32 %v4365, %v4365
        %v4430 = vmul.f32 %v4366, %v4366
        %v4431 = vmul.f32 %v4367, %v4367
        %v4432 = vmul.f32 %v4368, %v4368
        %v4433 = vmul.f32 %v4369, %v4369
        %v4434 = vmul.f32 %v4370, %v4370
        %v4435 = vmul.f32 %v4371, %v4371
        %v4436 = vmul.f32 %v4372, %v4372
        %v4437 = vmul.f32 %v4373, %v4373
        %v4438 = vmul.f32 %v4374, %v4374
        %v4439 = vmul.f32 %v4375, %v4375
        %v4440 = vmul.f32 %v4376, %v4376
        %v4441 = vmul.f32 %v4377, %v4377
        %v4442 = vmul.f32 %v4378, %v4378
        %v4443 = vmul.f32 %v4379, %v4379
        %v4444 = vmul.f32 %v4380, %v4380
        %v4445 = vmul.f32 %v4381, %v4381
        %v4446 = vmul.f32 %v4382, %v4382
        %v4447 = vmul.f32 %v4383, %v4383
        %v4448 = vmul.f32 %v4384, %v4384
        %v4449 = vmul.f32 %v4385, %v4385
        %v4450 = vmul.f32 %v4386, %v4386
        %v4451 = vmul.f32 %v4387, %v4387
        %v4452 = vmul.f32 %v4388, %v4388
        %v4453 = vmul.f32 %v4389, %v4389
        %v4454 = vmul.f32 %v4390, %v4390
        %v4455 = vmul.f32 %v4391, %v4391
        %v4456 = vmul.f32 %v4392, %v4392
        %v4457 = vmul.f32 %v4393, %v4393
        %v4458 = vmul.f32 %v4394, %v4394
        %v4459 = vmul.f32 %v4395, %v4395
        %v4460 = vmul.f32 %v4396, %v4396
        %v4461 = vmul.f32 %v4397, %v4397
        %v4462 = vmul.f32 %v4398, %v4398
        %v4463 = vmul.f32 %v4399, %v4399
        %v4464 = vmul.f32 %v4400, %v4400
        %v4465 = vmul.f32 %v4401, %v4401
        %v4466 = vmul.f32 %v4402, %v4402
        %v4467 = vmul.f32 %v4403, %v4403
        %v4468 = vmul.f32 %v4404, %v4404
        %v4469 = vmul.f32 %v4405, %v4405
        %v4470 = vmul.f32 %v4406, %v4406
        %v4471 = vmul.f32 %v4407, %v4407
        %v4472 = vmul.f32 %v4408, %v4408
        %v4473 = vmul.f32 %v4409, %v4409
        %v4474 = vmul.f32 %v4410, %v4410
        %v4475 = vmul.f32 %v4411, %v4411
        %v4476 = vmul.f32 %v4412, %v4412
        %v4477 = vadd.f32 %v4413, %v4421
        %v4478 = vadd.f32 %v4477, %v4429
        %v4479 = vadd.f32 %v4478, %v4437
        %v4480 = vadd.f32 %v4479, %v4445
        %v4481 = vadd.f32 %v4480, %v4453
        %v4482 = vadd.f32 %v4481, %v4461
        %v4483 = vadd.f32 %v4482, %v4469
        %v4484 = vrot.slane %v4483, 4
        %v4485 = vadd.f32 %v4483, %v4484
        %v4486 = vrot.slane %v4485, 2
        %v4487 = vadd.f32 %v4485, %v4486
        %v4488 = vrot.slane %v4487, 1
        %v4489 = vadd.f32 %v4487, %v4488
        %v4490 = vadd.f32 %v4414, %v4422
        %v4491 = vadd.f32 %v4490, %v4430
        %v4492 = vadd.f32 %v4491, %v4438
        %v4493 = vadd.f32 %v4492, %v4446
        %v4494 = vadd.f32 %v4493, %v4454
        %v4495 = vadd.f32 %v4494, %v4462
        %v4496 = vadd.f32 %v4495, %v4470
        %v4497 = vrot.slane %v4496, 4
        %v4498 = vadd.f32 %v4496, %v4497
        %v4499 = vrot.slane %v4498, 2
        %v4500 = vadd.f32 %v4498, %v4499
        %v4501 = vrot.slane %v4500, 1
        %v4502 = vadd.f32 %v4500, %v4501
        %v4503 = vadd.f32 %v4415, %v4423
        %v4504 = vadd.f32 %v4503, %v4431
        %v4505 = vadd.f32 %v4504, %v4439
        %v4506 = vadd.f32 %v4505, %v4447
        %v4507 = vadd.f32 %v4506, %v4455
        %v4508 = vadd.f32 %v4507, %v4463
        %v4509 = vadd.f32 %v4508, %v4471
        %v4510 = vrot.slane %v4509, 4
        %v4511 = vadd.f32 %v4509, %v4510
        %v4512 = vrot.slane %v4511, 2
        %v4513 = vadd.f32 %v4511, %v4512
        %v4514 = vrot.slane %v4513, 1
        %v4515 = vadd.f32 %v4513, %v4514
        %v4516 = vadd.f32 %v4416, %v4424
        %v4517 = vadd.f32 %v4516, %v4432
        %v4518 = vadd.f32 %v4517, %v4440
        %v4519 = vadd.f32 %v4518, %v4448
        %v4520 = vadd.f32 %v4519, %v4456
        %v4521 = vadd.f32 %v4520, %v4464
        %v4522 = vadd.f32 %v4521, %v4472
        %v4523 = vrot.slane %v4522, 4
        %v4524 = vadd.f32 %v4522, %v4523
        %v4525 = vrot.slane %v4524, 2
        %v4526 = vadd.f32 %v4524, %v4525
        %v4527 = vrot.slane %v4526, 1
        %v4528 = vadd.f32 %v4526, %v4527
        %v4529 = vadd.f32 %v4417, %v4425
        %v4530 = vadd.f32 %v4529, %v4433
        %v4531 = vadd.f32 %v4530, %v4441
        %v4532 = vadd.f32 %v4531, %v4449
        %v4533 = vadd.f32 %v4532, %v4457
        %v4534 = vadd.f32 %v4533, %v4465
        %v4535 = vadd.f32 %v4534, %v4473
        %v4536 = vrot.slane %v4535, 4
        %v4537 = vadd.f32 %v4535, %v4536
        %v4538 = vrot.slane %v4537, 2
        %v4539 = vadd.f32 %v4537, %v4538
        %v4540 = vrot.slane %v4539, 1
        %v4541 = vadd.f32 %v4539, %v4540
        %v4542 = vadd.f32 %v4418, %v4426
        %v4543 = vadd.f32 %v4542, %v4434
        %v4544 = vadd.f32 %v4543, %v4442
        %v4545 = vadd.f32 %v4544, %v4450
        %v4546 = vadd.f32 %v4545, %v4458
        %v4547 = vadd.f32 %v4546, %v4466
        %v4548 = vadd.f32 %v4547, %v4474
        %v4549 = vrot.slane %v4548, 4
        %v4550 = vadd.f32 %v4548, %v4549
        %v4551 = vrot.slane %v4550, 2
        %v4552 = vadd.f32 %v4550, %v4551
        %v4553 = vrot.slane %v4552, 1
        %v4554 = vadd.f32 %v4552, %v4553
        %v4555 = vadd.f32 %v4419, %v4427
        %v4556 = vadd.f32 %v4555, %v4435
        %v4557 = vadd.f32 %v4556, %v4443
        %v4558 = vadd.f32 %v4557, %v4451
        %v4559 = vadd.f32 %v4558, %v4459
        %v4560 = vadd.f32 %v4559, %v4467
        %v4561 = vadd.f32 %v4560, %v4475
        %v4562 = vrot.slane %v4561, 4
        %v4563 = vadd.f32 %v4561, %v4562
        %v4564 = vrot.slane %v4563, 2
        %v4565 = vadd.f32 %v4563, %v4564
        %v4566 = vrot.slane %v4565, 1
        %v4567 = vadd.f32 %v4565, %v4566
        %v4568 = vadd.f32 %v4420, %v4428
        %v4569 = vadd.f32 %v4568, %v4436
        %v4570 = vadd.f32 %v4569, %v4444
        %v4571 = vadd.f32 %v4570, %v4452
        %v4572 = vadd.f32 %v4571, %v4460
        %v4573 = vadd.f32 %v4572, %v4468
        %v4574 = vadd.f32 %v4573, %v4476
        %v4575 = vrot.slane %v4574, 4
        %v4576 = vadd.f32 %v4574, %v4575
        %v4577 = vrot.slane %v4576, 2
        %v4578 = vadd.f32 %v4576, %v4577
        %v4579 = vrot.slane %v4578, 1
        %v4580 = vadd.f32 %v4578, %v4579
        %v4581 = vmul.f32 %v4489, %v4340
        %v4582 = vmul.f32 %v4502, %v4340
        %v4583 = vmul.f32 %v4515, %v4340
        %v4584 = vmul.f32 %v4528, %v4340
        %v4585 = vmul.f32 %v4541, %v4340
        %v4586 = vmul.f32 %v4554, %v4340
        %v4587 = vmul.f32 %v4567, %v4340
        %v4588 = vmul.f32 %v4580, %v4340
        %v4589 = vadd.f32 %v4581, 1e-05
        %v4590 = vadd.f32 %v4582, 1e-05
        %v4591 = vadd.f32 %v4583, 1e-05
        %v4592 = vadd.f32 %v4584, 1e-05
        %v4593 = vadd.f32 %v4585, 1e-05
        %v4594 = vadd.f32 %v4586, 1e-05
        %v4595 = vadd.f32 %v4587, 1e-05
        %v4596 = vadd.f32 %v4588, 1e-05
        %v4597 = vrsqrt.pop %v4589
        %v4598 = vmul.f32 %v4597, %v4589
        %v4599 = vmul.f32 %v4598, %v4597
        %v4600 = vmul.f32 0.5, %v4599
        %v4601 = vsub.f32 1.5, %v4600
        %v4602 = vmul.f32 %v4597, %v4601
        %vm4603 = vweird.f32 %v4589
        %vm4604 = vweird.f32 %v4597
        %vm4605 = vmor %vm4603, %vm4604
        %v4606 = vsel %vm4605, %v4597, %v4602
        %v4607 = vrsqrt.pop %v4590
        %v4608 = vmul.f32 %v4607, %v4590
        %v4609 = vmul.f32 %v4608, %v4607
        %v4610 = vmul.f32 0.5, %v4609
        %v4611 = vsub.f32 1.5, %v4610
        %v4612 = vmul.f32 %v4607, %v4611
        %vm4613 = vweird.f32 %v4590
        %vm4614 = vweird.f32 %v4607
        %vm4615 = vmor %vm4613, %vm4614
        %v4616 = vsel %vm4615, %v4607, %v4612
        %v4617 = vrsqrt.pop %v4591
        %v4618 = vmul.f32 %v4617, %v4591
        %v4619 = vmul.f32 %v4618, %v4617
        %v4620 = vmul.f32 0.5, %v4619
        %v4621 = vsub.f32 1.5, %v4620
        %v4622 = vmul.f32 %v4617, %v4621
        %vm4623 = vweird.f32 %v4591
        %vm4624 = vweird.f32 %v4617
        %vm4625 = vmor %vm4623, %vm4624
        %v4626 = vsel %vm4625, %v4617, %v4622
        %v4627 = vrsqrt.pop %v4592
        %v4628 = vmul.f32 %v4627, %v4592
        %v4629 = vmul.f32 %v4628, %v4627
        %v4630 = vmul.f32 0.5, %v4629
        %v4631 = vsub.f32 1.5, %v4630
        %v4632 = vmul.f32 %v4627, %v4631
        %vm4633 = vweird.f32 %v4592
        %vm4634 = vweird.f32 %v4627
        %vm4635 = vmor %vm4633, %vm4634
        %v4636 = vsel %vm4635, %v4627, %v4632
        %v4637 = vrsqrt.pop %v4593
        %v4638 = vmul.f32 %v4637, %v4593
        %v4639 = vmul.f32 %v4638, %v4637
        %v4640 = vmul.f32 0.5, %v4639
        %v4641 = vsub.f32 1.5, %v4640
        %v4642 = vmul.f32 %v4637, %v4641
        %vm4643 = vweird.f32 %v4593
        %vm4644 = vweird.f32 %v4637
        %vm4645 = vmor %vm4643, %vm4644
        %v4646 = vsel %vm4645, %v4637, %v4642
        %v4647 = vrsqrt.pop %v4594
        %v4648 = vmul.f32 %v4647, %v4594
        %v4649 = vmul.f32 %v4648, %v4647
        %v4650 = vmul.f32 0.5, %v4649
        %v4651 = vsub.f32 1.5, %v4650
        %v4652 = vmul.f32 %v4647, %v4651
        %vm4653 = vweird.f32 %v4594
        %vm4654 = vweird.f32 %v4647
        %vm4655 = vmor %vm4653, %vm4654
        %v4656 = vsel %vm4655, %v4647, %v4652
        %v4657 = vrsqrt.pop %v4595
        %v4658 = vmul.f32 %v4657, %v4595
        %v4659 = vmul.f32 %v4658, %v4657
        %v4660 = vmul.f32 0.5, %v4659
        %v4661 = vsub.f32 1.5, %v4660
        %v4662 = vmul.f32 %v4657, %v4661
        %vm4663 = vweird.f32 %v4595
        %vm4664 = vweird.f32 %v4657
        %vm4665 = vmor %vm4663, %vm4664
        %v4666 = vsel %vm4665, %v4657, %v4662
        %v4667 = vrsqrt.pop %v4596
        %v4668 = vmul.f32 %v4667, %v4596
        %v4669 = vmul.f32 %v4668, %v4667
        %v4670 = vmul.f32 0.5, %v4669
        %v4671 = vsub.f32 1.5, %v4670
        %v4672 = vmul.f32 %v4667, %v4671
        %vm4673 = vweird.f32 %v4596
        %vm4674 = vweird.f32 %v4667
        %vm4675 = vmor %vm4673, %vm4674
        %v4676 = vsel %vm4675, %v4667, %v4672
        %v4677 = vmul.f32 %v4349, %v4606
        %v4678 = vmul.f32 %v4350, %v4616
        %v4679 = vmul.f32 %v4351, %v4626
        %v4680 = vmul.f32 %v4352, %v4636
        %v4681 = vmul.f32 %v4353, %v4646
        %v4682 = vmul.f32 %v4354, %v4656
        %v4683 = vmul.f32 %v4355, %v4666
        %v4684 = vmul.f32 %v4356, %v4676
        %v4685 = vmul.f32 %v4357, %v4606
        %v4686 = vmul.f32 %v4358, %v4616
        %v4687 = vmul.f32 %v4359, %v4626
        %v4688 = vmul.f32 %v4360, %v4636
        %v4689 = vmul.f32 %v4361, %v4646
        %v4690 = vmul.f32 %v4362, %v4656
        %v4691 = vmul.f32 %v4363, %v4666
        %v4692 = vmul.f32 %v4364, %v4676
        %v4693 = vmul.f32 %v4365, %v4606
        %v4694 = vmul.f32 %v4366, %v4616
        %v4695 = vmul.f32 %v4367, %v4626
        %v4696 = vmul.f32 %v4368, %v4636
        %v4697 = vmul.f32 %v4369, %v4646
        %v4698 = vmul.f32 %v4370, %v4656
        %v4699 = vmul.f32 %v4371, %v4666
        %v4700 = vmul.f32 %v4372, %v4676
        %v4701 = vmul.f32 %v4373, %v4606
        %v4702 = vmul.f32 %v4374, %v4616
        %v4703 = vmul.f32 %v4375, %v4626
        %v4704 = vmul.f32 %v4376, %v4636
        %v4705 = vmul.f32 %v4377, %v4646
        %v4706 = vmul.f32 %v4378, %v4656
        %v4707 = vmul.f32 %v4379, %v4666
        %v4708 = vmul.f32 %v4380, %v4676
        %v4709 = vmul.f32 %v4381, %v4606
        %v4710 = vmul.f32 %v4382, %v4616
        %v4711 = vmul.f32 %v4383, %v4626
        %v4712 = vmul.f32 %v4384, %v4636
        %v4713 = vmul.f32 %v4385, %v4646
        %v4714 = vmul.f32 %v4386, %v4656
        %v4715 = vmul.f32 %v4387, %v4666
        %v4716 = vmul.f32 %v4388, %v4676
        %v4717 = vmul.f32 %v4389, %v4606
        %v4718 = vmul.f32 %v4390, %v4616
        %v4719 = vmul.f32 %v4391, %v4626
        %v4720 = vmul.f32 %v4392, %v4636
        %v4721 = vmul.f32 %v4393, %v4646
        %v4722 = vmul.f32 %v4394, %v4656
        %v4723 = vmul.f32 %v4395, %v4666
        %v4724 = vmul.f32 %v4396, %v4676
        %v4725 = vmul.f32 %v4397, %v4606
        %v4726 = vmul.f32 %v4398, %v4616
        %v4727 = vmul.f32 %v4399, %v4626
        %v4728 = vmul.f32 %v4400, %v4636
        %v4729 = vmul.f32 %v4401, %v4646
        %v4730 = vmul.f32 %v4402, %v4656
        %v4731 = vmul.f32 %v4403, %v4666
        %v4732 = vmul.f32 %v4404, %v4676
        %v4733 = vmul.f32 %v4405, %v4606
        %v4734 = vmul.f32 %v4406, %v4616
        %v4735 = vmul.f32 %v4407, %v4626
        %v4736 = vmul.f32 %v4408, %v4636
        %v4737 = vmul.f32 %v4409, %v4646
        %v4738 = vmul.f32 %v4410, %v4656
        %v4739 = vmul.f32 %v4411, %v4666
        %v4740 = vmul.f32 %v4412, %v4676
        %4742 = vset.pattern.permute.xlu0 0
        %4743 = vperm.xlu0 %4742, %v357
        %v4744 = vpop.permute.xlu0 %4743
        %4747 = vset.pattern.permute.xlu0 0
        %4748 = vperm.xlu0 %4747, %v358
        %v4749 = vpop.permute.xlu0 %4748
        %4752 = vset.pattern.permute.xlu0 0
        %4753 = vperm.xlu0 %4752, %v359
        %v4754 = vpop.permute.xlu0 %4753
        %4757 = vset.pattern.permute.xlu0 0
        %4758 = vperm.xlu0 %4757, %v360
        %v4759 = vpop.permute.xlu0 %4758
        %4762 = vset.pattern.permute.xlu0 0
        %4763 = vperm.xlu0 %4762, %v361
        %v4764 = vpop.permute.xlu0 %4763
        %4767 = vset.pattern.permute.xlu0 0
        %4768 = vperm.xlu0 %4767, %v362
        %v4769 = vpop.permute.xlu0 %4768
        %4772 = vset.pattern.permute.xlu0 0
        %4773 = vperm.xlu0 %4772, %v363
        %v4774 = vpop.permute.xlu0 %4773
        %4777 = vset.pattern.permute.xlu0 0
        %4778 = vperm.xlu0 %4777, %v364
        %v4779 = vpop.permute.xlu0 %4778
        %v4781 = vmul.f32 %v4677, %v4744
        %v4782 = vmul.f32 %v4678, %v4744
        %v4783 = vmul.f32 %v4679, %v4744
        %v4784 = vmul.f32 %v4680, %v4744
        %v4785 = vmul.f32 %v4681, %v4744
        %v4786 = vmul.f32 %v4682, %v4744
        %v4787 = vmul.f32 %v4683, %v4744
        %v4788 = vmul.f32 %v4684, %v4744
        %v4789 = vmul.f32 %v4685, %v4749
        %v4790 = vmul.f32 %v4686, %v4749
        %v4791 = vmul.f32 %v4687, %v4749
        %v4792 = vmul.f32 %v4688, %v4749
        %v4793 = vmul.f32 %v4689, %v4749
        %v4794 = vmul.f32 %v4690, %v4749
        %v4795 = vmul.f32 %v4691, %v4749
        %v4796 = vmul.f32 %v4692, %v4749
        %v4797 = vmul.f32 %v4693, %v4754
        %v4798 = vmul.f32 %v4694, %v4754
        %v4799 = vmul.f32 %v4695, %v4754
        %v4800 = vmul.f32 %v4696, %v4754
        %v4801 = vmul.f32 %v4697, %v4754
        %v4802 = vmul.f32 %v4698, %v4754
        %v4803 = vmul.f32 %v4699, %v4754
        %v4804 = vmul.f32 %v4700, %v4754
        %v4805 = vmul.f32 %v4701, %v4759
        %v4806 = vmul.f32 %v4702, %v4759
        %v4807 = vmul.f32 %v4703, %v4759
        %v4808 = vmul.f32 %v4704, %v4759
        %v4809 = vmul.f32 %v4705, %v4759
        %v4810 = vmul.f32 %v4706, %v4759
        %v4811 = vmul.f32 %v4707, %v4759
        %v4812 = vmul.f32 %v4708, %v4759
        %v4813 = vmul.f32 %v4709, %v4764
        %v4814 = vmul.f32 %v4710, %v4764
        %v4815 = vmul.f32 %v4711, %v4764
        %v4816 = vmul.f32 %v4712, %v4764
        %v4817 = vmul.f32 %v4713, %v4764
        %v4818 = vmul.f32 %v4714, %v4764
        %v4819 = vmul.f32 %v4715, %v4764
        %v4820 = vmul.f32 %v4716, %v4764
        %v4821 = vmul.f32 %v4717, %v4769
        %v4822 = vmul.f32 %v4718, %v4769
        %v4823 = vmul.f32 %v4719, %v4769
        %v4824 = vmul.f32 %v4720, %v4769
        %v4825 = vmul.f32 %v4721, %v4769
        %v4826 = vmul.f32 %v4722, %v4769
        %v4827 = vmul.f32 %v4723, %v4769
        %v4828 = vmul.f32 %v4724, %v4769
        %v4829 = vmul.f32 %v4725, %v4774
        %v4830 = vmul.f32 %v4726, %v4774
        %v4831 = vmul.f32 %v4727, %v4774
        %v4832 = vmul.f32 %v4728, %v4774
        %v4833 = vmul.f32 %v4729, %v4774
        %v4834 = vmul.f32 %v4730, %v4774
        %v4835 = vmul.f32 %v4731, %v4774
        %v4836 = vmul.f32 %v4732, %v4774
        %v4837 = vmul.f32 %v4733, %v4779
        %v4838 = vmul.f32 %v4734, %v4779
        %v4839 = vmul.f32 %v4735, %v4779
        %v4840 = vmul.f32 %v4736, %v4779
        %v4841 = vmul.f32 %v4737, %v4779
        %v4842 = vmul.f32 %v4738, %v4779
        %v4843 = vmul.f32 %v4739, %v4779
        %v4844 = vmul.f32 %v4740, %v4779
        %4846 = vset.pattern.permute.xlu0 0
        %4847 = vperm.xlu0 %4846, %v365
        %v4848 = vpop.permute.xlu0 %4847
        %4851 = vset.pattern.permute.xlu0 0
        %4852 = vperm.xlu0 %4851, %v366
        %v4853 = vpop.permute.xlu0 %4852
        %4856 = vset.pattern.permute.xlu0 0
        %4857 = vperm.xlu0 %4856, %v367
        %v4858 = vpop.permute.xlu0 %4857
        %4861 = vset.pattern.permute.xlu0 0
        %4862 = vperm.xlu0 %4861, %v368
        %v4863 = vpop.permute.xlu0 %4862
        %4866 = vset.pattern.permute.xlu0 0
        %4867 = vperm.xlu0 %4866, %v369
        %v4868 = vpop.permute.xlu0 %4867
        %4871 = vset.pattern.permute.xlu0 0
        %4872 = vperm.xlu0 %4871, %v370
        %v4873 = vpop.permute.xlu0 %4872
        %4876 = vset.pattern.permute.xlu0 0
        %4877 = vperm.xlu0 %4876, %v371
        %v4878 = vpop.permute.xlu0 %4877
        %4881 = vset.pattern.permute.xlu0 0
        %4882 = vperm.xlu0 %4881, %v372
        %v4883 = vpop.permute.xlu0 %4882
        %v4885 = vadd.f32 %v4781, %v4848
        %v4886 = vadd.f32 %v4782, %v4848
        %v4887 = vadd.f32 %v4783, %v4848
        %v4888 = vadd.f32 %v4784, %v4848
        %v4889 = vadd.f32 %v4785, %v4848
        %v4890 = vadd.f32 %v4786, %v4848
        %v4891 = vadd.f32 %v4787, %v4848
        %v4892 = vadd.f32 %v4788, %v4848
        %v4893 = vadd.f32 %v4789, %v4853
        %v4894 = vadd.f32 %v4790, %v4853
        %v4895 = vadd.f32 %v4791, %v4853
        %v4896 = vadd.f32 %v4792, %v4853
        %v4897 = vadd.f32 %v4793, %v4853
        %v4898 = vadd.f32 %v4794, %v4853
        %v4899 = vadd.f32 %v4795, %v4853
        %v4900 = vadd.f32 %v4796, %v4853
        %v4901 = vadd.f32 %v4797, %v4858
        %v4902 = vadd.f32 %v4798, %v4858
        %v4903 = vadd.f32 %v4799, %v4858
        %v4904 = vadd.f32 %v4800, %v4858
        %v4905 = vadd.f32 %v4801, %v4858
        %v4906 = vadd.f32 %v4802, %v4858
        %v4907 = vadd.f32 %v4803, %v4858
        %v4908 = vadd.f32 %v4804, %v4858
        %v4909 = vadd.f32 %v4805, %v4863
        %v4910 = vadd.f32 %v4806, %v4863
        %v4911 = vadd.f32 %v4807, %v4863
        %v4912 = vadd.f32 %v4808, %v4863
        %v4913 = vadd.f32 %v4809, %v4863
        %v4914 = vadd.f32 %v4810, %v4863
        %v4915 = vadd.f32 %v4811, %v4863
        %v4916 = vadd.f32 %v4812, %v4863
        %v4917 = vadd.f32 %v4813, %v4868
        %v4918 = vadd.f32 %v4814, %v4868
        %v4919 = vadd.f32 %v4815, %v4868
        %v4920 = vadd.f32 %v4816, %v4868
        %v4921 = vadd.f32 %v4817, %v4868
        %v4922 = vadd.f32 %v4818, %v4868
        %v4923 = vadd.f32 %v4819, %v4868
        %v4924 = vadd.f32 %v4820, %v4868
        %v4925 = vadd.f32 %v4821, %v4873
        %v4926 = vadd.f32 %v4822, %v4873
        %v4927 = vadd.f32 %v4823, %v4873
        %v4928 = vadd.f32 %v4824, %v4873
        %v4929 = vadd.f32 %v4825, %v4873
        %v4930 = vadd.f32 %v4826, %v4873
        %v4931 = vadd.f32 %v4827, %v4873
        %v4932 = vadd.f32 %v4828, %v4873
        %v4933 = vadd.f32 %v4829, %v4878
        %v4934 = vadd.f32 %v4830, %v4878
        %v4935 = vadd.f32 %v4831, %v4878
        %v4936 = vadd.f32 %v4832, %v4878
        %v4937 = vadd.f32 %v4833, %v4878
        %v4938 = vadd.f32 %v4834, %v4878
        %v4939 = vadd.f32 %v4835, %v4878
        %v4940 = vadd.f32 %v4836, %v4878
        %v4941 = vadd.f32 %v4837, %v4883
        %v4942 = vadd.f32 %v4838, %v4883
        %v4943 = vadd.f32 %v4839, %v4883
        %v4944 = vadd.f32 %v4840, %v4883
        %v4945 = vadd.f32 %v4841, %v4883
        %v4946 = vadd.f32 %v4842, %v4883
        %v4947 = vadd.f32 %v4843, %v4883
        %v4948 = vadd.f32 %v4844, %v4883
        %v4949 = vld [vmem:[%s5] sm:$0xf]
        %v4950 = vld [vmem:[%s5 + $0x4] sm:$0xf]
        %v4951 = vld [vmem:[%s5 + $0x8] sm:$0xf]
        %v4952 = vld [vmem:[%s5 + $0xc] sm:$0xf]
        %v4953 = vld [vmem:[%s5 + $0x10] sm:$0xf]
        %v4954 = vld [vmem:[%s5 + $0x14] sm:$0xf]
        %v4955 = vld [vmem:[%s5 + $0x18] sm:$0xf]
        %v4956 = vld [vmem:[%s5 + $0x1c] sm:$0xf]
        %v4957 = vpack.c.bf16 %v4893, %v4885
        %v4958 = vpack.c.bf16 %v4894, %v4886
        %v4959 = vpack.c.bf16 %v4895, %v4887
        %v4960 = vpack.c.bf16 %v4896, %v4888
        %v4961 = vpack.c.bf16 %v4897, %v4889
        %v4962 = vpack.c.bf16 %v4898, %v4890
        %v4963 = vpack.c.bf16 %v4899, %v4891
        %v4964 = vpack.c.bf16 %v4900, %v4892
        %v4965 = vpack.c.bf16 %v4909, %v4901
        %v4966 = vpack.c.bf16 %v4910, %v4902
        %v4967 = vpack.c.bf16 %v4911, %v4903
        %v4968 = vpack.c.bf16 %v4912, %v4904
        %v4969 = vpack.c.bf16 %v4913, %v4905
        %v4970 = vpack.c.bf16 %v4914, %v4906
        %v4971 = vpack.c.bf16 %v4915, %v4907
        %v4972 = vpack.c.bf16 %v4916, %v4908
        %v4973 = vpack.c.bf16 %v4925, %v4917
        %v4974 = vpack.c.bf16 %v4926, %v4918
        %v4975 = vpack.c.bf16 %v4927, %v4919
        %v4976 = vpack.c.bf16 %v4928, %v4920
        %v4977 = vpack.c.bf16 %v4929, %v4921
        %v4978 = vpack.c.bf16 %v4930, %v4922
        %v4979 = vpack.c.bf16 %v4931, %v4923
        %v4980 = vpack.c.bf16 %v4932, %v4924
        %v4981 = vpack.c.bf16 %v4941, %v4933
        %v4982 = vpack.c.bf16 %v4942, %v4934
        %v4983 = vpack.c.bf16 %v4943, %v4935
        %v4984 = vpack.c.bf16 %v4944, %v4936
        %v4985 = vpack.c.bf16 %v4945, %v4937
        %v4986 = vpack.c.bf16 %v4946, %v4938
        %v4987 = vpack.c.bf16 %v4947, %v4939
        %v4988 = vpack.c.bf16 %v4948, %v4940
        %4990 = vset.pattern.permute.xlu0 0
        %4991 = vperm.xlu0 %4990, %v373
        %v4992 = vpop.permute.xlu0 %4991
        %4995 = vset.pattern.permute.xlu0 0
        %4996 = vperm.xlu0 %4995, %v374
        %v4997 = vpop.permute.xlu0 %4996
        %5000 = vset.pattern.permute.xlu0 0
        %5001 = vperm.xlu0 %5000, %v375
        %v5002 = vpop.permute.xlu0 %5001
        %5005 = vset.pattern.permute.xlu0 0
        %5006 = vperm.xlu0 %5005, %v376
        %v5007 = vpop.permute.xlu0 %5006
        %5010 = vset.pattern.permute.xlu0 0
        %5011 = vperm.xlu0 %5010, %v377
        %v5012 = vpop.permute.xlu0 %5011
        %5015 = vset.pattern.permute.xlu0 0
        %5016 = vperm.xlu0 %5015, %v378
        %v5017 = vpop.permute.xlu0 %5016
        %5020 = vset.pattern.permute.xlu0 0
        %5021 = vperm.xlu0 %5020, %v379
        %v5022 = vpop.permute.xlu0 %5021
        %5025 = vset.pattern.permute.xlu0 0
        %5026 = vperm.xlu0 %5025, %v380
        %v5027 = vpop.permute.xlu0 %5026
        %v5037 = vunpack.c.l.b16 %v4949
        %v5038 = vunpack.c.l.b16 %v4950
        %v5039 = vunpack.c.l.b16 %v4951
        %v5040 = vunpack.c.l.b16 %v4952
        %v5041 = vunpack.c.l.b16 %v4953
        %v5042 = vunpack.c.l.b16 %v4954
        %v5043 = vunpack.c.l.b16 %v4955
        %v5044 = vunpack.c.l.b16 %v4956
        %v5045 = vpack.c.b16 %v5038, %v5037
        %v5046 = vpack.c.b16 %v5040, %v5039
        %v5047 = vpack.c.b16 %v5042, %v5041
        %v5048 = vpack.c.b16 %v5044, %v5043
        %v5050 = vsel %vm2162, %v5045, 0
        %v5053 = vsel %vm2162, %v5046, 0
        %v5056 = vsel %vm2162, %v5047, 0
        %v5059 = vsel %vm2162, %v5048, 0
        %5061 = vmatpush.bf16.msra.mxu0 0
        %5062 = vmatpush.bf16.msra.mxu0 0
        %5063 = vmatpush.bf16.msra.mxu0 0
        %5064 = vmatpush.bf16.msra.mxu0 0
        %5065 = vmatpush.bf16.msra.mxu0 %v4981
        %5066 = vmatpush.bf16.msra.mxu0 %v4973
        %5067 = vmatpush.bf16.msra.mxu0 %v4965
        %5068 = vmatpush.bf16.msra.mxu0 %v4957
        %5069 = vmatmul.bf16.gmra.mxu0 %v5050
        %v5070 = vpop.f32.mrf.mxu0
        %v5071 = vadd.f32 %v4992, %v5070
        %v5072 = vpop.f32.mrf.mxu0
        %v5073 = vadd.f32 %v4997, %v5072
        %5074 = vmatmul.bf16.gmra.mxu0 %v5053
        %v5075 = vpop.f32.mrf.mxu0
        %v5076 = vadd.f32 %v5002, %v5075
        %v5077 = vpop.f32.mrf.mxu0
        %v5078 = vadd.f32 %v5007, %v5077
        %5079 = vmatmul.bf16.gmra.mxu0 %v5056
        %v5080 = vpop.f32.mrf.mxu0
        %v5081 = vadd.f32 %v5012, %v5080
        %v5082 = vpop.f32.mrf.mxu0
        %v5083 = vadd.f32 %v5017, %v5082
        %5084 = vmatmul.bf16.gmra.mxu0 %v5059
        %v5085 = vpop.f32.mrf.mxu0
        %v5086 = vadd.f32 %v5022, %v5085
        %v5087 = vpop.f32.mrf.mxu0
        %v5088 = vadd.f32 %v5027, %v5087
        %5089 = vdwg.mxu0
        %5090 = vmatpush.bf16.msra.mxu0 0
        %5091 = vmatpush.bf16.msra.mxu0 0
        %5092 = vmatpush.bf16.msra.mxu0 0
        %5093 = vmatpush.bf16.msra.mxu0 0
        %5094 = vmatpush.bf16.msra.mxu0 %v4982
        %5095 = vmatpush.bf16.msra.mxu0 %v4974
        %5096 = vmatpush.bf16.msra.mxu0 %v4966
        %5097 = vmatpush.bf16.msra.mxu0 %v4958
        %5098 = vmatmul.bf16.gmra.mxu0 %v5050
        %v5099 = vpop.f32.mrf.mxu0
        %v5100 = vadd.f32 %v4992, %v5099
        %v5101 = vpop.f32.mrf.mxu0
        %v5102 = vadd.f32 %v4997, %v5101
        %5103 = vmatmul.bf16.gmra.mxu0 %v5053
        %v5104 = vpop.f32.mrf.mxu0
        %v5105 = vadd.f32 %v5002, %v5104
        %v5106 = vpop.f32.mrf.mxu0
        %v5107 = vadd.f32 %v5007, %v5106
        %5108 = vmatmul.bf16.gmra.mxu0 %v5056
        %v5109 = vpop.f32.mrf.mxu0
        %v5110 = vadd.f32 %v5012, %v5109
        %v5111 = vpop.f32.mrf.mxu0
        %v5112 = vadd.f32 %v5017, %v5111
        %5113 = vmatmul.bf16.gmra.mxu0 %v5059
        %v5114 = vpop.f32.mrf.mxu0
        %v5115 = vadd.f32 %v5022, %v5114
        %v5116 = vpop.f32.mrf.mxu0
        %v5117 = vadd.f32 %v5027, %v5116
        %5118 = vdwg.mxu0
        %5119 = vmatpush.bf16.msra.mxu0 0
        %5120 = vmatpush.bf16.msra.mxu0 0
        %5121 = vmatpush.bf16.msra.mxu0 0
        %5122 = vmatpush.bf16.msra.mxu0 0
        %5123 = vmatpush.bf16.msra.mxu0 %v4983
        %5124 = vmatpush.bf16.msra.mxu0 %v4975
        %5125 = vmatpush.bf16.msra.mxu0 %v4967
        %5126 = vmatpush.bf16.msra.mxu0 %v4959
        %5127 = vmatmul.bf16.gmra.mxu0 %v5050
        %v5128 = vpop.f32.mrf.mxu0
        %v5129 = vadd.f32 %v4992, %v5128
        %v5130 = vpop.f32.mrf.mxu0
        %v5131 = vadd.f32 %v4997, %v5130
        %5132 = vmatmul.bf16.gmra.mxu0 %v5053
        %v5133 = vpop.f32.mrf.mxu0
        %v5134 = vadd.f32 %v5002, %v5133
        %v5135 = vpop.f32.mrf.mxu0
        %v5136 = vadd.f32 %v5007, %v5135
        %5137 = vmatmul.bf16.gmra.mxu0 %v5056
        %v5138 = vpop.f32.mrf.mxu0
        %v5139 = vadd.f32 %v5012, %v5138
        %v5140 = vpop.f32.mrf.mxu0
        %v5141 = vadd.f32 %v5017, %v5140
        %5142 = vmatmul.bf16.gmra.mxu0 %v5059
        %v5143 = vpop.f32.mrf.mxu0
        %v5144 = vadd.f32 %v5022, %v5143
        %v5145 = vpop.f32.mrf.mxu0
        %v5146 = vadd.f32 %v5027, %v5145
        %5147 = vdwg.mxu0
        %5148 = vmatpush.bf16.msra.mxu0 0
        %5149 = vmatpush.bf16.msra.mxu0 0
        %5150 = vmatpush.bf16.msra.mxu0 0
        %5151 = vmatpush.bf16.msra.mxu0 0
        %5152 = vmatpush.bf16.msra.mxu0 %v4984
        %5153 = vmatpush.bf16.msra.mxu0 %v4976
        %5154 = vmatpush.bf16.msra.mxu0 %v4968
        %5155 = vmatpush.bf16.msra.mxu0 %v4960
        %5156 = vmatmul.bf16.gmra.mxu0 %v5050
        %v5157 = vpop.f32.mrf.mxu0
        %v5158 = vadd.f32 %v4992, %v5157
        %v5159 = vpop.f32.mrf.mxu0
        %v5160 = vadd.f32 %v4997, %v5159
        %5161 = vmatmul.bf16.gmra.mxu0 %v5053
        %v5162 = vpop.f32.mrf.mxu0
        %v5163 = vadd.f32 %v5002, %v5162
        %v5164 = vpop.f32.mrf.mxu0
        %v5165 = vadd.f32 %v5007, %v5164
        %5166 = vmatmul.bf16.gmra.mxu0 %v5056
        %v5167 = vpop.f32.mrf.mxu0
        %v5168 = vadd.f32 %v5012, %v5167
        %v5169 = vpop.f32.mrf.mxu0
        %v5170 = vadd.f32 %v5017, %v5169
        %5171 = vmatmul.bf16.gmra.mxu0 %v5059
        %v5172 = vpop.f32.mrf.mxu0
        %v5173 = vadd.f32 %v5022, %v5172
        %v5174 = vpop.f32.mrf.mxu0
        %v5175 = vadd.f32 %v5027, %v5174
        %5176 = vdwg.mxu0
        %5177 = vmatpush.bf16.msra.mxu0 0
        %5178 = vmatpush.bf16.msra.mxu0 0
        %5179 = vmatpush.bf16.msra.mxu0 0
        %5180 = vmatpush.bf16.msra.mxu0 0
        %5181 = vmatpush.bf16.msra.mxu0 %v4985
        %5182 = vmatpush.bf16.msra.mxu0 %v4977
        %5183 = vmatpush.bf16.msra.mxu0 %v4969
        %5184 = vmatpush.bf16.msra.mxu0 %v4961
        %5185 = vmatmul.bf16.gmra.mxu0 %v5050
        %v5186 = vpop.f32.mrf.mxu0
        %v5187 = vadd.f32 %v4992, %v5186
        %v5188 = vpop.f32.mrf.mxu0
        %v5189 = vadd.f32 %v4997, %v5188
        %5190 = vmatmul.bf16.gmra.mxu0 %v5053
        %v5191 = vpop.f32.mrf.mxu0
        %v5192 = vadd.f32 %v5002, %v5191
        %v5193 = vpop.f32.mrf.mxu0
        %v5194 = vadd.f32 %v5007, %v5193
        %5195 = vmatmul.bf16.gmra.mxu0 %v5056
        %v5196 = vpop.f32.mrf.mxu0
        %v5197 = vadd.f32 %v5012, %v5196
        %v5198 = vpop.f32.mrf.mxu0
        %v5199 = vadd.f32 %v5017, %v5198
        %5200 = vmatmul.bf16.gmra.mxu0 %v5059
        %v5201 = vpop.f32.mrf.mxu0
        %v5202 = vadd.f32 %v5022, %v5201
        %v5203 = vpop.f32.mrf.mxu0
        %v5204 = vadd.f32 %v5027, %v5203
        %5205 = vdwg.mxu0
        %5206 = vmatpush.bf16.msra.mxu0 0
        %5207 = vmatpush.bf16.msra.mxu0 0
        %5208 = vmatpush.bf16.msra.mxu0 0
        %5209 = vmatpush.bf16.msra.mxu0 0
        %5210 = vmatpush.bf16.msra.mxu0 %v4986
        %5211 = vmatpush.bf16.msra.mxu0 %v4978
        %5212 = vmatpush.bf16.msra.mxu0 %v4970
        %5213 = vmatpush.bf16.msra.mxu0 %v4962
        %5214 = vmatmul.bf16.gmra.mxu0 %v5050
        %v5215 = vpop.f32.mrf.mxu0
        %v5216 = vadd.f32 %v4992, %v5215
        %v5217 = vpop.f32.mrf.mxu0
        %v5218 = vadd.f32 %v4997, %v5217
        %5219 = vmatmul.bf16.gmra.mxu0 %v5053
        %v5220 = vpop.f32.mrf.mxu0
        %v5221 = vadd.f32 %v5002, %v5220
        %v5222 = vpop.f32.mrf.mxu0
        %v5223 = vadd.f32 %v5007, %v5222
        %5224 = vmatmul.bf16.gmra.mxu0 %v5056
        %v5225 = vpop.f32.mrf.mxu0
        %v5226 = vadd.f32 %v5012, %v5225
        %v5227 = vpop.f32.mrf.mxu0
        %v5228 = vadd.f32 %v5017, %v5227
        %5229 = vmatmul.bf16.gmra.mxu0 %v5059
        %v5230 = vpop.f32.mrf.mxu0
        %v5231 = vadd.f32 %v5022, %v5230
        %v5232 = vpop.f32.mrf.mxu0
        %v5233 = vadd.f32 %v5027, %v5232
        %5234 = vdwg.mxu0
        %5235 = vmatpush.bf16.msra.mxu0 0
        %5236 = vmatpush.bf16.msra.mxu0 0
        %5237 = vmatpush.bf16.msra.mxu0 0
        %5238 = vmatpush.bf16.msra.mxu0 0
        %5239 = vmatpush.bf16.msra.mxu0 %v4987
        %5240 = vmatpush.bf16.msra.mxu0 %v4979
        %5241 = vmatpush.bf16.msra.mxu0 %v4971
        %5242 = vmatpush.bf16.msra.mxu0 %v4963
        %5243 = vmatmul.bf16.gmra.mxu0 %v5050
        %v5244 = vpop.f32.mrf.mxu0
        %v5245 = vadd.f32 %v4992, %v5244
        %v5246 = vpop.f32.mrf.mxu0
        %v5247 = vadd.f32 %v4997, %v5246
        %5248 = vmatmul.bf16.gmra.mxu0 %v5053
        %v5249 = vpop.f32.mrf.mxu0
        %v5250 = vadd.f32 %v5002, %v5249
        %v5251 = vpop.f32.mrf.mxu0
        %v5252 = vadd.f32 %v5007, %v5251
        %5253 = vmatmul.bf16.gmra.mxu0 %v5056
        %v5254 = vpop.f32.mrf.mxu0
        %v5255 = vadd.f32 %v5012, %v5254
        %v5256 = vpop.f32.mrf.mxu0
        %v5257 = vadd.f32 %v5017, %v5256
        %5258 = vmatmul.bf16.gmra.mxu0 %v5059
        %v5259 = vpop.f32.mrf.mxu0
        %v5260 = vadd.f32 %v5022, %v5259
        %v5261 = vpop.f32.mrf.mxu0
        %v5262 = vadd.f32 %v5027, %v5261
        %5263 = vdwg.mxu0
        %5264 = vmatpush.bf16.msra.mxu0 0
        %5265 = vmatpush.bf16.msra.mxu0 0
        %5266 = vmatpush.bf16.msra.mxu0 0
        %5267 = vmatpush.bf16.msra.mxu0 0
        %5268 = vmatpush.bf16.msra.mxu0 %v4988
        %5269 = vmatpush.bf16.msra.mxu0 %v4980
        %5270 = vmatpush.bf16.msra.mxu0 %v4972
        %5271 = vmatpush.bf16.msra.mxu0 %v4964
        %5272 = vmatmul.bf16.gmra.mxu0 %v5050
        %v5273 = vpop.f32.mrf.mxu0
        %v5274 = vadd.f32 %v4992, %v5273
        %v5275 = vpop.f32.mrf.mxu0
        %v5276 = vadd.f32 %v4997, %v5275
        %5277 = vmatmul.bf16.gmra.mxu0 %v5053
        %v5278 = vpop.f32.mrf.mxu0
        %v5279 = vadd.f32 %v5002, %v5278
        %v5280 = vpop.f32.mrf.mxu0
        %v5281 = vadd.f32 %v5007, %v5280
        %5282 = vmatmul.bf16.gmra.mxu0 %v5056
        %v5283 = vpop.f32.mrf.mxu0
        %v5284 = vadd.f32 %v5012, %v5283
        %v5285 = vpop.f32.mrf.mxu0
        %v5286 = vadd.f32 %v5017, %v5285
        %5287 = vmatmul.bf16.gmra.mxu0 %v5059
        %v5288 = vpop.f32.mrf.mxu0
        %v5289 = vadd.f32 %v5022, %v5288
        %v5290 = vpop.f32.mrf.mxu0
        %v5291 = vadd.f32 %v5027, %v5290
        %5292 = vdwg.mxu0
        %v5293 = vmul.f32 %v5071, %v5071
        %v5294 = vmul.f32 %v5100, %v5100
        %v5295 = vmul.f32 %v5129, %v5129
        %v5296 = vmul.f32 %v5158, %v5158
        %v5297 = vmul.f32 %v5187, %v5187
        %v5298 = vmul.f32 %v5216, %v5216
        %v5299 = vmul.f32 %v5245, %v5245
        %v5300 = vmul.f32 %v5274, %v5274
        %v5301 = vmul.f32 %v5073, %v5073
        %v5302 = vmul.f32 %v5102, %v5102
        %v5303 = vmul.f32 %v5131, %v5131
        %v5304 = vmul.f32 %v5160, %v5160
        %v5305 = vmul.f32 %v5189, %v5189
        %v5306 = vmul.f32 %v5218, %v5218
        %v5307 = vmul.f32 %v5247, %v5247
        %v5308 = vmul.f32 %v5276, %v5276
        %v5309 = vmul.f32 %v5076, %v5076
        %v5310 = vmul.f32 %v5105, %v5105
        %v5311 = vmul.f32 %v5134, %v5134
        %v5312 = vmul.f32 %v5163, %v5163
        %v5313 = vmul.f32 %v5192, %v5192
        %v5314 = vmul.f32 %v5221, %v5221
        %v5315 = vmul.f32 %v5250, %v5250
        %v5316 = vmul.f32 %v5279, %v5279
        %v5317 = vmul.f32 %v5078, %v5078
        %v5318 = vmul.f32 %v5107, %v5107
        %v5319 = vmul.f32 %v5136, %v5136
        %v5320 = vmul.f32 %v5165, %v5165
        %v5321 = vmul.f32 %v5194, %v5194
        %v5322 = vmul.f32 %v5223, %v5223
        %v5323 = vmul.f32 %v5252, %v5252
        %v5324 = vmul.f32 %v5281, %v5281
        %v5325 = vmul.f32 %v5081, %v5081
        %v5326 = vmul.f32 %v5110, %v5110
        %v5327 = vmul.f32 %v5139, %v5139
        %v5328 = vmul.f32 %v5168, %v5168
        %v5329 = vmul.f32 %v5197, %v5197
        %v5330 = vmul.f32 %v5226, %v5226
        %v5331 = vmul.f32 %v5255, %v5255
        %v5332 = vmul.f32 %v5284, %v5284
        %v5333 = vmul.f32 %v5083, %v5083
        %v5334 = vmul.f32 %v5112, %v5112
        %v5335 = vmul.f32 %v5141, %v5141
        %v5336 = vmul.f32 %v5170, %v5170
        %v5337 = vmul.f32 %v5199, %v5199
        %v5338 = vmul.f32 %v5228, %v5228
        %v5339 = vmul.f32 %v5257, %v5257
        %v5340 = vmul.f32 %v5286, %v5286
        %v5341 = vmul.f32 %v5086, %v5086
        %v5342 = vmul.f32 %v5115, %v5115
        %v5343 = vmul.f32 %v5144, %v5144
        %v5344 = vmul.f32 %v5173, %v5173
        %v5345 = vmul.f32 %v5202, %v5202
        %v5346 = vmul.f32 %v5231, %v5231
        %v5347 = vmul.f32 %v5260, %v5260
        %v5348 = vmul.f32 %v5289, %v5289
        %v5349 = vmul.f32 %v5088, %v5088
        %v5350 = vmul.f32 %v5117, %v5117
        %v5351 = vmul.f32 %v5146, %v5146
        %v5352 = vmul.f32 %v5175, %v5175
        %v5353 = vmul.f32 %v5204, %v5204
        %v5354 = vmul.f32 %v5233, %v5233
        %v5355 = vmul.f32 %v5262, %v5262
        %v5356 = vmul.f32 %v5291, %v5291
        %v5357 = vmul.f32 %v5071, %v5293
        %v5358 = vmul.f32 %v5100, %v5294
        %v5359 = vmul.f32 %v5129, %v5295
        %v5360 = vmul.f32 %v5158, %v5296
        %v5361 = vmul.f32 %v5187, %v5297
        %v5362 = vmul.f32 %v5216, %v5298
        %v5363 = vmul.f32 %v5245, %v5299
        %v5364 = vmul.f32 %v5274, %v5300
        %v5365 = vmul.f32 %v5073, %v5301
        %v5366 = vmul.f32 %v5102, %v5302
        %v5367 = vmul.f32 %v5131, %v5303
        %v5368 = vmul.f32 %v5160, %v5304
        %v5369 = vmul.f32 %v5189, %v5305
        %v5370 = vmul.f32 %v5218, %v5306
        %v5371 = vmul.f32 %v5247, %v5307
        %v5372 = vmul.f32 %v5276, %v5308
        %v5373 = vmul.f32 %v5076, %v5309
        %v5374 = vmul.f32 %v5105, %v5310
        %v5375 = vmul.f32 %v5134, %v5311
        %v5376 = vmul.f32 %v5163, %v5312
        %v5377 = vmul.f32 %v5192, %v5313
        %v5378 = vmul.f32 %v5221, %v5314
        %v5379 = vmul.f32 %v5250, %v5315
        %v5380 = vmul.f32 %v5279, %v5316
        %v5381 = vmul.f32 %v5078, %v5317
        %v5382 = vmul.f32 %v5107, %v5318
        %v5383 = vmul.f32 %v5136, %v5319
        %v5384 = vmul.f32 %v5165, %v5320
        %v5385 = vmul.f32 %v5194, %v5321
        %v5386 = vmul.f32 %v5223, %v5322
        %v5387 = vmul.f32 %v5252, %v5323
        %v5388 = vmul.f32 %v5281, %v5324
        %v5389 = vmul.f32 %v5081, %v5325
        %v5390 = vmul.f32 %v5110, %v5326
        %v5391 = vmul.f32 %v5139, %v5327
        %v5392 = vmul.f32 %v5168, %v5328
        %v5393 = vmul.f32 %v5197, %v5329
        %v5394 = vmul.f32 %v5226, %v5330
        %v5395 = vmul.f32 %v5255, %v5331
        %v5396 = vmul.f32 %v5284, %v5332
        %v5397 = vmul.f32 %v5083, %v5333
        %v5398 = vmul.f32 %v5112, %v5334
        %v5399 = vmul.f32 %v5141, %v5335
        %v5400 = vmul.f32 %v5170, %v5336
        %v5401 = vmul.f32 %v5199, %v5337
        %v5402 = vmul.f32 %v5228, %v5338
        %v5403 = vmul.f32 %v5257, %v5339
        %v5404 = vmul.f32 %v5286, %v5340
        %v5405 = vmul.f32 %v5086, %v5341
        %v5406 = vmul.f32 %v5115, %v5342
        %v5407 = vmul.f32 %v5144, %v5343
        %v5408 = vmul.f32 %v5173, %v5344
        %v5409 = vmul.f32 %v5202, %v5345
        %v5410 = vmul.f32 %v5231, %v5346
        %v5411 = vmul.f32 %v5260, %v5347
        %v5412 = vmul.f32 %v5289, %v5348
        %v5413 = vmul.f32 %v5088, %v5349
        %v5414 = vmul.f32 %v5117, %v5350
        %v5415 = vmul.f32 %v5146, %v5351
        %v5416 = vmul.f32 %v5175, %v5352
        %v5417 = vmul.f32 %v5204, %v5353
        %v5418 = vmul.f32 %v5233, %v5354
        %v5419 = vmul.f32 %v5262, %v5355
        %v5420 = vmul.f32 %v5291, %v5356
        %v5421 = vmul.f32 %v5357, 0.044715
        %v5422 = vmul.f32 %v5358, 0.044715
        %v5423 = vmul.f32 %v5359, 0.044715
        %v5424 = vmul.f32 %v5360, 0.044715
        %v5425 = vmul.f32 %v5361, 0.044715
        %v5426 = vmul.f32 %v5362, 0.044715
        %v5427 = vmul.f32 %v5363, 0.044715
        %v5428 = vmul.f32 %v5364, 0.044715
        %v5429 = vmul.f32 %v5365, 0.044715
        %v5430 = vmul.f32 %v5366, 0.044715
        %v5431 = vmul.f32 %v5367, 0.044715
        %v5432 = vmul.f32 %v5368, 0.044715
        %v5433 = vmul.f32 %v5369, 0.044715
        %v5434 = vmul.f32 %v5370, 0.044715
        %v5435 = vmul.f32 %v5371, 0.044715
        %v5436 = vmul.f32 %v5372, 0.044715
        %v5437 = vmul.f32 %v5373, 0.044715
        %v5438 = vmul.f32 %v5374, 0.044715
        %v5439 = vmul.f32 %v5375, 0.044715
        %v5440 = vmul.f32 %v5376, 0.044715
        %v5441 = vmul.f32 %v5377, 0.044715
        %v5442 = vmul.f32 %v5378, 0.044715
        %v5443 = vmul.f32 %v5379, 0.044715
        %v5444 = vmul.f32 %v5380, 0.044715
        %v5445 = vmul.f32 %v5381, 0.044715
        %v5446 = vmul.f32 %v5382, 0.044715
        %v5447 = vmul.f32 %v5383, 0.044715
        %v5448 = vmul.f32 %v5384, 0.044715
        %v5449 = vmul.f32 %v5385, 0.044715
        %v5450 = vmul.f32 %v5386, 0.044715
        %v5451 = vmul.f32 %v5387, 0.044715
        %v5452 = vmul.f32 %v5388, 0.044715
        %v5453 = vmul.f32 %v5389, 0.044715
        %v5454 = vmul.f32 %v5390, 0.044715
        %v5455 = vmul.f32 %v5391, 0.044715
        %v5456 = vmul.f32 %v5392, 0.044715
        %v5457 = vmul.f32 %v5393, 0.044715
        %v5458 = vmul.f32 %v5394, 0.044715
        %v5459 = vmul.f32 %v5395, 0.044715
        %v5460 = vmul.f32 %v5396, 0.044715
        %v5461 = vmul.f32 %v5397, 0.044715
        %v5462 = vmul.f32 %v5398, 0.044715
        %v5463 = vmul.f32 %v5399, 0.044715
        %v5464 = vmul.f32 %v5400, 0.044715
        %v5465 = vmul.f32 %v5401, 0.044715
        %v5466 = vmul.f32 %v5402, 0.044715
        %v5467 = vmul.f32 %v5403, 0.044715
        %v5468 = vmul.f32 %v5404, 0.044715
        %v5469 = vmul.f32 %v5405, 0.044715
        %v5470 = vmul.f32 %v5406, 0.044715
        %v5471 = vmul.f32 %v5407, 0.044715
        %v5472 = vmul.f32 %v5408, 0.044715
        %v5473 = vmul.f32 %v5409, 0.044715
        %v5474 = vmul.f32 %v5410, 0.044715
        %v5475 = vmul.f32 %v5411, 0.044715
        %v5476 = vmul.f32 %v5412, 0.044715
        %v5477 = vmul.f32 %v5413, 0.044715
        %v5478 = vmul.f32 %v5414, 0.044715
        %v5479 = vmul.f32 %v5415, 0.044715
        %v5480 = vmul.f32 %v5416, 0.044715
        %v5481 = vmul.f32 %v5417, 0.044715
        %v5482 = vmul.f32 %v5418, 0.044715
        %v5483 = vmul.f32 %v5419, 0.044715
        %v5484 = vmul.f32 %v5420, 0.044715
        %v5485 = vadd.f32 %v5071, %v5421
        %v5486 = vadd.f32 %v5100, %v5422
        %v5487 = vadd.f32 %v5129, %v5423
        %v5488 = vadd.f32 %v5158, %v5424
        %v5489 = vadd.f32 %v5187, %v5425
        %v5490 = vadd.f32 %v5216, %v5426
        %v5491 = vadd.f32 %v5245, %v5427
        %v5492 = vadd.f32 %v5274, %v5428
        %v5493 = vadd.f32 %v5073, %v5429
        %v5494 = vadd.f32 %v5102, %v5430
        %v5495 = vadd.f32 %v5131, %v5431
        %v5496 = vadd.f32 %v5160, %v5432
        %v5497 = vadd.f32 %v5189, %v5433
        %v5498 = vadd.f32 %v5218, %v5434
        %v5499 = vadd.f32 %v5247, %v5435
        %v5500 = vadd.f32 %v5276, %v5436
        %v5501 = vadd.f32 %v5076, %v5437
        %v5502 = vadd.f32 %v5105, %v5438
        %v5503 = vadd.f32 %v5134, %v5439
        %v5504 = vadd.f32 %v5163, %v5440
        %v5505 = vadd.f32 %v5192, %v5441
        %v5506 = vadd.f32 %v5221, %v5442
        %v5507 = vadd.f32 %v5250, %v5443
        %v5508 = vadd.f32 %v5279, %v5444
        %v5509 = vadd.f32 %v5078, %v5445
        %v5510 = vadd.f32 %v5107, %v5446
        %v5511 = vadd.f32 %v5136, %v5447
        %v5512 = vadd.f32 %v5165, %v5448
        %v5513 = vadd.f32 %v5194, %v5449
        %v5514 = vadd.f32 %v5223, %v5450
        %v5515 = vadd.f32 %v5252, %v5451
        %v5516 = vadd.f32 %v5281, %v5452
        %v5517 = vadd.f32 %v5081, %v5453
        %v5518 = vadd.f32 %v5110, %v5454
        %v5519 = vadd.f32 %v5139, %v5455
        %v5520 = vadd.f32 %v5168, %v5456
        %v5521 = vadd.f32 %v5197, %v5457
        %v5522 = vadd.f32 %v5226, %v5458
        %v5523 = vadd.f32 %v5255, %v5459
        %v5524 = vadd.f32 %v5284, %v5460
        %v5525 = vadd.f32 %v5083, %v5461
        %v5526 = vadd.f32 %v5112, %v5462
        %v5527 = vadd.f32 %v5141, %v5463
        %v5528 = vadd.f32 %v5170, %v5464
        %v5529 = vadd.f32 %v5199, %v5465
        %v5530 = vadd.f32 %v5228, %v5466
        %v5531 = vadd.f32 %v5257, %v5467
        %v5532 = vadd.f32 %v5286, %v5468
        %v5533 = vadd.f32 %v5086, %v5469
        %v5534 = vadd.f32 %v5115, %v5470
        %v5535 = vadd.f32 %v5144, %v5471
        %v5536 = vadd.f32 %v5173, %v5472
        %v5537 = vadd.f32 %v5202, %v5473
        %v5538 = vadd.f32 %v5231, %v5474
        %v5539 = vadd.f32 %v5260, %v5475
        %v5540 = vadd.f32 %v5289, %v5476
        %v5541 = vadd.f32 %v5088, %v5477
        %v5542 = vadd.f32 %v5117, %v5478
        %v5543 = vadd.f32 %v5146, %v5479
        %v5544 = vadd.f32 %v5175, %v5480
        %v5545 = vadd.f32 %v5204, %v5481
        %v5546 = vadd.f32 %v5233, %v5482
        %v5547 = vadd.f32 %v5262, %v5483
        %v5548 = vadd.f32 %v5291, %v5484
        %v5549 = vmul.f32 %v5485, 0.7978846
        %v5550 = vmul.f32 %v5486, 0.7978846
        %v5551 = vmul.f32 %v5487, 0.7978846
        %v5552 = vmul.f32 %v5488, 0.7978846
        %v5553 = vmul.f32 %v5489, 0.7978846
        %v5554 = vmul.f32 %v5490, 0.7978846
        %v5555 = vmul.f32 %v5491, 0.7978846
        %v5556 = vmul.f32 %v5492, 0.7978846
        %v5557 = vmul.f32 %v5493, 0.7978846
        %v5558 = vmul.f32 %v5494, 0.7978846
        %v5559 = vmul.f32 %v5495, 0.7978846
        %v5560 = vmul.f32 %v5496, 0.7978846
        %v5561 = vmul.f32 %v5497, 0.7978846
        %v5562 = vmul.f32 %v5498, 0.7978846
        %v5563 = vmul.f32 %v5499, 0.7978846
        %v5564 = vmul.f32 %v5500, 0.7978846
        %v5565 = vmul.f32 %v5501, 0.7978846
        %v5566 = vmul.f32 %v5502, 0.7978846
        %v5567 = vmul.f32 %v5503, 0.7978846
        %v5568 = vmul.f32 %v5504, 0.7978846
        %v5569 = vmul.f32 %v5505, 0.7978846
        %v5570 = vmul.f32 %v5506, 0.7978846
        %v5571 = vmul.f32 %v5507, 0.7978846
        %v5572 = vmul.f32 %v5508, 0.7978846
        %v5573 = vmul.f32 %v5509, 0.7978846
        %v5574 = vmul.f32 %v5510, 0.7978846
        %v5575 = vmul.f32 %v5511, 0.7978846
        %v5576 = vmul.f32 %v5512, 0.7978846
        %v5577 = vmul.f32 %v5513, 0.7978846
        %v5578 = vmul.f32 %v5514, 0.7978846
        %v5579 = vmul.f32 %v5515, 0.7978846
        %v5580 = vmul.f32 %v5516, 0.7978846
        %v5581 = vmul.f32 %v5517, 0.7978846
        %v5582 = vmul.f32 %v5518, 0.7978846
        %v5583 = vmul.f32 %v5519, 0.7978846
        %v5584 = vmul.f32 %v5520, 0.7978846
        %v5585 = vmul.f32 %v5521, 0.7978846
        %v5586 = vmul.f32 %v5522, 0.7978846
        %v5587 = vmul.f32 %v5523, 0.7978846
        %v5588 = vmul.f32 %v5524, 0.7978846
        %v5589 = vmul.f32 %v5525, 0.7978846
        %v5590 = vmul.f32 %v5526, 0.7978846
        %v5591 = vmul.f32 %v5527, 0.7978846
        %v5592 = vmul.f32 %v5528, 0.7978846
        %v5593 = vmul.f32 %v5529, 0.7978846
        %v5594 = vmul.f32 %v5530, 0.7978846
        %v5595 = vmul.f32 %v5531, 0.7978846
        %v5596 = vmul.f32 %v5532, 0.7978846
        %v5597 = vmul.f32 %v5533, 0.7978846
        %v5598 = vmul.f32 %v5534, 0.7978846
        %v5599 = vmul.f32 %v5535, 0.7978846
        %v5600 = vmul.f32 %v5536, 0.7978846
        %v5601 = vmul.f32 %v5537, 0.7978846
        %v5602 = vmul.f32 %v5538, 0.7978846
        %v5603 = vmul.f32 %v5539, 0.7978846
        %v5604 = vmul.f32 %v5540, 0.7978846
        %v5605 = vmul.f32 %v5541, 0.7978846
        %v5606 = vmul.f32 %v5542, 0.7978846
        %v5607 = vmul.f32 %v5543, 0.7978846
        %v5608 = vmul.f32 %v5544, 0.7978846
        %v5609 = vmul.f32 %v5545, 0.7978846
        %v5610 = vmul.f32 %v5546, 0.7978846
        %v5611 = vmul.f32 %v5547, 0.7978846
        %v5612 = vmul.f32 %v5548, 0.7978846
        %v5613 = vtanh.pop %v5549
        %v5614 = vtanh.pop %v5550
        %v5615 = vtanh.pop %v5551
        %v5616 = vtanh.pop %v5552
        %v5617 = vtanh.pop %v5553
        %v5618 = vtanh.pop %v5554
        %v5619 = vtanh.pop %v5555
        %v5620 = vtanh.pop %v5556
        %v5621 = vtanh.pop %v5557
        %v5622 = vtanh.pop %v5558
        %v5623 = vtanh.pop %v5559
        %v5624 = vtanh.pop %v5560
        %v5625 = vtanh.pop %v5561
        %v5626 = vtanh.pop %v5562
        %v5627 = vtanh.pop %v5563
        %v5628 = vtanh.pop %v5564
        %v5629 = vtanh.pop %v5565
        %v5630 = vtanh.pop %v5566
        %v5631 = vtanh.pop %v5567
        %v5632 = vtanh.pop %v5568
        %v5633 = vtanh.pop %v5569
        %v5634 = vtanh.pop %v5570
        %v5635 = vtanh.pop %v5571
        %v5636 = vtanh.pop %v5572
        %v5637 = vtanh.pop %v5573
        %v5638 = vtanh.pop %v5574
        %v5639 = vtanh.pop %v5575
        %v5640 = vtanh.pop %v5576
        %v5641 = vtanh.pop %v5577
        %v5642 = vtanh.pop %v5578
        %v5643 = vtanh.pop %v5579
        %v5644 = vtanh.pop %v5580
        %v5645 = vtanh.pop %v5581
        %v5646 = vtanh.pop %v5582
        %v5647 = vtanh.pop %v5583
        %v5648 = vtanh.pop %v5584
        %v5649 = vtanh.pop %v5585
        %v5650 = vtanh.pop %v5586
        %v5651 = vtanh.pop %v5587
        %v5652 = vtanh.pop %v5588
        %v5653 = vtanh.pop %v5589
        %v5654 = vtanh.pop %v5590
        %v5655 = vtanh.pop %v5591
        %v5656 = vtanh.pop %v5592
        %v5657 = vtanh.pop %v5593
        %v5658 = vtanh.pop %v5594
        %v5659 = vtanh.pop %v5595
        %v5660 = vtanh.pop %v5596
        %v5661 = vtanh.pop %v5597
        %v5662 = vtanh.pop %v5598
        %v5663 = vtanh.pop %v5599
        %v5664 = vtanh.pop %v5600
        %v5665 = vtanh.pop %v5601
        %v5666 = vtanh.pop %v5602
        %v5667 = vtanh.pop %v5603
        %v5668 = vtanh.pop %v5604
        %v5669 = vtanh.pop %v5605
        %v5670 = vtanh.pop %v5606
        %v5671 = vtanh.pop %v5607
        %v5672 = vtanh.pop %v5608
        %v5673 = vtanh.pop %v5609
        %v5674 = vtanh.pop %v5610
        %v5675 = vtanh.pop %v5611
        %v5676 = vtanh.pop %v5612
        %v5677 = vadd.f32 %v5613, 1.0
        %v5678 = vadd.f32 %v5614, 1.0
        %v5679 = vadd.f32 %v5615, 1.0
        %v5680 = vadd.f32 %v5616, 1.0
        %v5681 = vadd.f32 %v5617, 1.0
        %v5682 = vadd.f32 %v5618, 1.0
        %v5683 = vadd.f32 %v5619, 1.0
        %v5684 = vadd.f32 %v5620, 1.0
        %v5685 = vadd.f32 %v5621, 1.0
        %v5686 = vadd.f32 %v5622, 1.0
        %v5687 = vadd.f32 %v5623, 1.0
        %v5688 = vadd.f32 %v5624, 1.0
        %v5689 = vadd.f32 %v5625, 1.0
        %v5690 = vadd.f32 %v5626, 1.0
        %v5691 = vadd.f32 %v5627, 1.0
        %v5692 = vadd.f32 %v5628, 1.0
        %v5693 = vadd.f32 %v5629, 1.0
        %v5694 = vadd.f32 %v5630, 1.0
        %v5695 = vadd.f32 %v5631, 1.0
        %v5696 = vadd.f32 %v5632, 1.0
        %v5697 = vadd.f32 %v5633, 1.0
        %v5698 = vadd.f32 %v5634, 1.0
        %v5699 = vadd.f32 %v5635, 1.0
        %v5700 = vadd.f32 %v5636, 1.0
        %v5701 = vadd.f32 %v5637, 1.0
        %v5702 = vadd.f32 %v5638, 1.0
        %v5703 = vadd.f32 %v5639, 1.0
        %v5704 = vadd.f32 %v5640, 1.0
        %v5705 = vadd.f32 %v5641, 1.0
        %v5706 = vadd.f32 %v5642, 1.0
        %v5707 = vadd.f32 %v5643, 1.0
        %v5708 = vadd.f32 %v5644, 1.0
        %v5709 = vadd.f32 %v5645, 1.0
        %v5710 = vadd.f32 %v5646, 1.0
        %v5711 = vadd.f32 %v5647, 1.0
        %v5712 = vadd.f32 %v5648, 1.0
        %v5713 = vadd.f32 %v5649, 1.0
        %v5714 = vadd.f32 %v5650, 1.0
        %v5715 = vadd.f32 %v5651, 1.0
        %v5716 = vadd.f32 %v5652, 1.0
        %v5717 = vadd.f32 %v5653, 1.0
        %v5718 = vadd.f32 %v5654, 1.0
        %v5719 = vadd.f32 %v5655, 1.0
        %v5720 = vadd.f32 %v5656, 1.0
        %v5721 = vadd.f32 %v5657, 1.0
        %v5722 = vadd.f32 %v5658, 1.0
        %v5723 = vadd.f32 %v5659, 1.0
        %v5724 = vadd.f32 %v5660, 1.0
        %v5725 = vadd.f32 %v5661, 1.0
        %v5726 = vadd.f32 %v5662, 1.0
        %v5727 = vadd.f32 %v5663, 1.0
        %v5728 = vadd.f32 %v5664, 1.0
        %v5729 = vadd.f32 %v5665, 1.0
        %v5730 = vadd.f32 %v5666, 1.0
        %v5731 = vadd.f32 %v5667, 1.0
        %v5732 = vadd.f32 %v5668, 1.0
        %v5733 = vadd.f32 %v5669, 1.0
        %v5734 = vadd.f32 %v5670, 1.0
        %v5735 = vadd.f32 %v5671, 1.0
        %v5736 = vadd.f32 %v5672, 1.0
        %v5737 = vadd.f32 %v5673, 1.0
        %v5738 = vadd.f32 %v5674, 1.0
        %v5739 = vadd.f32 %v5675, 1.0
        %v5740 = vadd.f32 %v5676, 1.0
        %v5741 = vmul.f32 %v5677, 0.5
        %v5742 = vmul.f32 %v5678, 0.5
        %v5743 = vmul.f32 %v5679, 0.5
        %v5744 = vmul.f32 %v5680, 0.5
        %v5745 = vmul.f32 %v5681, 0.5
        %v5746 = vmul.f32 %v5682, 0.5
        %v5747 = vmul.f32 %v5683, 0.5
        %v5748 = vmul.f32 %v5684, 0.5
        %v5749 = vmul.f32 %v5685, 0.5
        %v5750 = vmul.f32 %v5686, 0.5
        %v5751 = vmul.f32 %v5687, 0.5
        %v5752 = vmul.f32 %v5688, 0.5
        %v5753 = vmul.f32 %v5689, 0.5
        %v5754 = vmul.f32 %v5690, 0.5
        %v5755 = vmul.f32 %v5691, 0.5
        %v5756 = vmul.f32 %v5692, 0.5
        %v5757 = vmul.f32 %v5693, 0.5
        %v5758 = vmul.f32 %v5694, 0.5
        %v5759 = vmul.f32 %v5695, 0.5
        %v5760 = vmul.f32 %v5696, 0.5
        %v5761 = vmul.f32 %v5697, 0.5
        %v5762 = vmul.f32 %v5698, 0.5
        %v5763 = vmul.f32 %v5699, 0.5
        %v5764 = vmul.f32 %v5700, 0.5
        %v5765 = vmul.f32 %v5701, 0.5
        %v5766 = vmul.f32 %v5702, 0.5
        %v5767 = vmul.f32 %v5703, 0.5
        %v5768 = vmul.f32 %v5704, 0.5
        %v5769 = vmul.f32 %v5705, 0.5
        %v5770 = vmul.f32 %v5706, 0.5
        %v5771 = vmul.f32 %v5707, 0.5
        %v5772 = vmul.f32 %v5708, 0.5
        %v5773 = vmul.f32 %v5709, 0.5
        %v5774 = vmul.f32 %v5710, 0.5
        %v5775 = vmul.f32 %v5711, 0.5
        %v5776 = vmul.f32 %v5712, 0.5
        %v5777 = vmul.f32 %v5713, 0.5
        %v5778 = vmul.f32 %v5714, 0.5
        %v5779 = vmul.f32 %v5715, 0.5
        %v5780 = vmul.f32 %v5716, 0.5
        %v5781 = vmul.f32 %v5717, 0.5
        %v5782 = vmul.f32 %v5718, 0.5
        %v5783 = vmul.f32 %v5719, 0.5
        %v5784 = vmul.f32 %v5720, 0.5
        %v5785 = vmul.f32 %v5721, 0.5
        %v5786 = vmul.f32 %v5722, 0.5
        %v5787 = vmul.f32 %v5723, 0.5
        %v5788 = vmul.f32 %v5724, 0.5
        %v5789 = vmul.f32 %v5725, 0.5
        %v5790 = vmul.f32 %v5726, 0.5
        %v5791 = vmul.f32 %v5727, 0.5
        %v5792 = vmul.f32 %v5728, 0.5
        %v5793 = vmul.f32 %v5729, 0.5
        %v5794 = vmul.f32 %v5730, 0.5
        %v5795 = vmul.f32 %v5731, 0.5
        %v5796 = vmul.f32 %v5732, 0.5
        %v5797 = vmul.f32 %v5733, 0.5
        %v5798 = vmul.f32 %v5734, 0.5
        %v5799 = vmul.f32 %v5735, 0.5
        %v5800 = vmul.f32 %v5736, 0.5
        %v5801 = vmul.f32 %v5737, 0.5
        %v5802 = vmul.f32 %v5738, 0.5
        %v5803 = vmul.f32 %v5739, 0.5
        %v5804 = vmul.f32 %v5740, 0.5
        %v5805 = vmul.f32 %v5071, %v5741
        %v5806 = vmul.f32 %v5100, %v5742
        %v5807 = vmul.f32 %v5129, %v5743
        %v5808 = vmul.f32 %v5158, %v5744
        %v5809 = vmul.f32 %v5187, %v5745
        %v5810 = vmul.f32 %v5216, %v5746
        %v5811 = vmul.f32 %v5245, %v5747
        %v5812 = vmul.f32 %v5274, %v5748
        %v5813 = vmul.f32 %v5073, %v5749
        %v5814 = vmul.f32 %v5102, %v5750
        %v5815 = vmul.f32 %v5131, %v5751
        %v5816 = vmul.f32 %v5160, %v5752
        %v5817 = vmul.f32 %v5189, %v5753
        %v5818 = vmul.f32 %v5218, %v5754
        %v5819 = vmul.f32 %v5247, %v5755
        %v5820 = vmul.f32 %v5276, %v5756
        %v5821 = vmul.f32 %v5076, %v5757
        %v5822 = vmul.f32 %v5105, %v5758
        %v5823 = vmul.f32 %v5134, %v5759
        %v5824 = vmul.f32 %v5163, %v5760
        %v5825 = vmul.f32 %v5192, %v5761
        %v5826 = vmul.f32 %v5221, %v5762
        %v5827 = vmul.f32 %v5250, %v5763
        %v5828 = vmul.f32 %v5279, %v5764
        %v5829 = vmul.f32 %v5078, %v5765
        %v5830 = vmul.f32 %v5107, %v5766
        %v5831 = vmul.f32 %v5136, %v5767
        %v5832 = vmul.f32 %v5165, %v5768
        %v5833 = vmul.f32 %v5194, %v5769
        %v5834 = vmul.f32 %v5223, %v5770
        %v5835 = vmul.f32 %v5252, %v5771
        %v5836 = vmul.f32 %v5281, %v5772
        %v5837 = vmul.f32 %v5081, %v5773
        %v5838 = vmul.f32 %v5110, %v5774
        %v5839 = vmul.f32 %v5139, %v5775
        %v5840 = vmul.f32 %v5168, %v5776
        %v5841 = vmul.f32 %v5197, %v5777
        %v5842 = vmul.f32 %v5226, %v5778
        %v5843 = vmul.f32 %v5255, %v5779
        %v5844 = vmul.f32 %v5284, %v5780
        %v5845 = vmul.f32 %v5083, %v5781
        %v5846 = vmul.f32 %v5112, %v5782
        %v5847 = vmul.f32 %v5141, %v5783
        %v5848 = vmul.f32 %v5170, %v5784
        %v5849 = vmul.f32 %v5199, %v5785
        %v5850 = vmul.f32 %v5228, %v5786
        %v5851 = vmul.f32 %v5257, %v5787
        %v5852 = vmul.f32 %v5286, %v5788
        %v5853 = vmul.f32 %v5086, %v5789
        %v5854 = vmul.f32 %v5115, %v5790
        %v5855 = vmul.f32 %v5144, %v5791
        %v5856 = vmul.f32 %v5173, %v5792
        %v5857 = vmul.f32 %v5202, %v5793
        %v5858 = vmul.f32 %v5231, %v5794
        %v5859 = vmul.f32 %v5260, %v5795
        %v5860 = vmul.f32 %v5289, %v5796
        %v5861 = vmul.f32 %v5088, %v5797
        %v5862 = vmul.f32 %v5117, %v5798
        %v5863 = vmul.f32 %v5146, %v5799
        %v5864 = vmul.f32 %v5175, %v5800
        %v5865 = vmul.f32 %v5204, %v5801
        %v5866 = vmul.f32 %v5233, %v5802
        %v5867 = vmul.f32 %v5262, %v5803
        %v5868 = vmul.f32 %v5291, %v5804
        %v5869 = vld [vmem:[%s6] sm:$0xf]
        %v5870 = vld [vmem:[%s6 + $0x4] sm:$0xf]
        %v5871 = vld [vmem:[%s6 + $0x8] sm:$0xf]
        %v5872 = vld [vmem:[%s6 + $0xc] sm:$0xf]
        %v5873 = vld [vmem:[%s6 + $0x10] sm:$0xf]
        %v5874 = vld [vmem:[%s6 + $0x14] sm:$0xf]
        %v5875 = vld [vmem:[%s6 + $0x18] sm:$0xf]
        %v5876 = vld [vmem:[%s6 + $0x1c] sm:$0xf]
        %v5877 = vpack.c.bf16 %v5813, %v5805
        %v5878 = vpack.c.bf16 %v5814, %v5806
        %v5879 = vpack.c.bf16 %v5815, %v5807
        %v5880 = vpack.c.bf16 %v5816, %v5808
        %v5881 = vpack.c.bf16 %v5817, %v5809
        %v5882 = vpack.c.bf16 %v5818, %v5810
        %v5883 = vpack.c.bf16 %v5819, %v5811
        %v5884 = vpack.c.bf16 %v5820, %v5812
        %v5885 = vpack.c.bf16 %v5829, %v5821
        %v5886 = vpack.c.bf16 %v5830, %v5822
        %v5887 = vpack.c.bf16 %v5831, %v5823
        %v5888 = vpack.c.bf16 %v5832, %v5824
        %v5889 = vpack.c.bf16 %v5833, %v5825
        %v5890 = vpack.c.bf16 %v5834, %v5826
        %v5891 = vpack.c.bf16 %v5835, %v5827
        %v5892 = vpack.c.bf16 %v5836, %v5828
        %v5893 = vpack.c.bf16 %v5845, %v5837
        %v5894 = vpack.c.bf16 %v5846, %v5838
        %v5895 = vpack.c.bf16 %v5847, %v5839
        %v5896 = vpack.c.bf16 %v5848, %v5840
        %v5897 = vpack.c.bf16 %v5849, %v5841
        %v5898 = vpack.c.bf16 %v5850, %v5842
        %v5899 = vpack.c.bf16 %v5851, %v5843
        %v5900 = vpack.c.bf16 %v5852, %v5844
        %v5901 = vpack.c.bf16 %v5861, %v5853
        %v5902 = vpack.c.bf16 %v5862, %v5854
        %v5903 = vpack.c.bf16 %v5863, %v5855
        %v5904 = vpack.c.bf16 %v5864, %v5856
        %v5905 = vpack.c.bf16 %v5865, %v5857
        %v5906 = vpack.c.bf16 %v5866, %v5858
        %v5907 = vpack.c.bf16 %v5867, %v5859
        %v5908 = vpack.c.bf16 %v5868, %v5860
        %5910 = vset.pattern.permute.xlu0 0
        %5911 = vperm.xlu0 %5910, %v381
        %v5912 = vpop.permute.xlu0 %5911
        %5915 = vset.pattern.permute.xlu0 0
        %5916 = vperm.xlu0 %5915, %v382
        %v5917 = vpop.permute.xlu0 %5916
        %5920 = vset.pattern.permute.xlu0 0
        %5921 = vperm.xlu0 %5920, %v383
        %v5922 = vpop.permute.xlu0 %5921
        %5925 = vset.pattern.permute.xlu0 0
        %5926 = vperm.xlu0 %5925, %v384
        %v5927 = vpop.permute.xlu0 %5926
        %5930 = vset.pattern.permute.xlu0 0
        %5931 = vperm.xlu0 %5930, %v385
        %v5932 = vpop.permute.xlu0 %5931
        %5935 = vset.pattern.permute.xlu0 0
        %5936 = vperm.xlu0 %5935, %v386
        %v5937 = vpop.permute.xlu0 %5936
        %5940 = vset.pattern.permute.xlu0 0
        %5941 = vperm.xlu0 %5940, %v387
        %v5942 = vpop.permute.xlu0 %5941
        %5945 = vset.pattern.permute.xlu0 0
        %5946 = vperm.xlu0 %5945, %v388
        %v5947 = vpop.permute.xlu0 %5946
        %v5957 = vunpack.c.l.b16 %v5869
        %v5958 = vunpack.c.l.b16 %v5870
        %v5959 = vunpack.c.l.b16 %v5871
        %v5960 = vunpack.c.l.b16 %v5872
        %v5961 = vunpack.c.l.b16 %v5873
        %v5962 = vunpack.c.l.b16 %v5874
        %v5963 = vunpack.c.l.b16 %v5875
        %v5964 = vunpack.c.l.b16 %v5876
        %v5965 = vpack.c.b16 %v5958, %v5957
        %v5966 = vpack.c.b16 %v5960, %v5959
        %v5967 = vpack.c.b16 %v5962, %v5961
        %v5968 = vpack.c.b16 %v5964, %v5963
        %v5970 = vsel %vm2162, %v5965, 0
        %v5973 = vsel %vm2162, %v5966, 0
        %v5976 = vsel %vm2162, %v5967, 0
        %v5979 = vsel %vm2162, %v5968, 0
        %5981 = vmatpush.bf16.msra.mxu0 0
        %5982 = vmatpush.bf16.msra.mxu0 0
        %5983 = vmatpush.bf16.msra.mxu0 0
        %5984 = vmatpush.bf16.msra.mxu0 0
        %5985 = vmatpush.bf16.msra.mxu0 %v5901
        %5986 = vmatpush.bf16.msra.mxu0 %v5893
        %5987 = vmatpush.bf16.msra.mxu0 %v5885
        %5988 = vmatpush.bf16.msra.mxu0 %v5877
        %5989 = vmatmul.bf16.gmra.mxu0 %v5970
        %v5990 = vpop.f32.mrf.mxu0
        %v5991 = vadd.f32 %v5912, %v5990
        %v5992 = vpop.f32.mrf.mxu0
        %v5993 = vadd.f32 %v5917, %v5992
        %5994 = vmatmul.bf16.gmra.mxu0 %v5973
        %v5995 = vpop.f32.mrf.mxu0
        %v5996 = vadd.f32 %v5922, %v5995
        %v5997 = vpop.f32.mrf.mxu0
        %v5998 = vadd.f32 %v5927, %v5997
        %5999 = vmatmul.bf16.gmra.mxu0 %v5976
        %v6000 = vpop.f32.mrf.mxu0
        %v6001 = vadd.f32 %v5932, %v6000
        %v6002 = vpop.f32.mrf.mxu0
        %v6003 = vadd.f32 %v5937, %v6002
        %6004 = vmatmul.bf16.gmra.mxu0 %v5979
        %v6005 = vpop.f32.mrf.mxu0
        %v6006 = vadd.f32 %v5942, %v6005
        %v6007 = vpop.f32.mrf.mxu0
        %v6008 = vadd.f32 %v5947, %v6007
        %6009 = vdwg.mxu0
        %6010 = vmatpush.bf16.msra.mxu0 0
        %6011 = vmatpush.bf16.msra.mxu0 0
        %6012 = vmatpush.bf16.msra.mxu0 0
        %6013 = vmatpush.bf16.msra.mxu0 0
        %6014 = vmatpush.bf16.msra.mxu0 %v5902
        %6015 = vmatpush.bf16.msra.mxu0 %v5894
        %6016 = vmatpush.bf16.msra.mxu0 %v5886
        %6017 = vmatpush.bf16.msra.mxu0 %v5878
        %6018 = vmatmul.bf16.gmra.mxu0 %v5970
        %v6019 = vpop.f32.mrf.mxu0
        %v6020 = vadd.f32 %v5912, %v6019
        %v6021 = vpop.f32.mrf.mxu0
        %v6022 = vadd.f32 %v5917, %v6021
        %6023 = vmatmul.bf16.gmra.mxu0 %v5973
        %v6024 = vpop.f32.mrf.mxu0
        %v6025 = vadd.f32 %v5922, %v6024
        %v6026 = vpop.f32.mrf.mxu0
        %v6027 = vadd.f32 %v5927, %v6026
        %6028 = vmatmul.bf16.gmra.mxu0 %v5976
        %v6029 = vpop.f32.mrf.mxu0
        %v6030 = vadd.f32 %v5932, %v6029
        %v6031 = vpop.f32.mrf.mxu0
        %v6032 = vadd.f32 %v5937, %v6031
        %6033 = vmatmul.bf16.gmra.mxu0 %v5979
        %v6034 = vpop.f32.mrf.mxu0
        %v6035 = vadd.f32 %v5942, %v6034
        %v6036 = vpop.f32.mrf.mxu0
        %v6037 = vadd.f32 %v5947, %v6036
        %6038 = vdwg.mxu0
        %6039 = vmatpush.bf16.msra.mxu0 0
        %6040 = vmatpush.bf16.msra.mxu0 0
        %6041 = vmatpush.bf16.msra.mxu0 0
        %6042 = vmatpush.bf16.msra.mxu0 0
        %6043 = vmatpush.bf16.msra.mxu0 %v5903
        %6044 = vmatpush.bf16.msra.mxu0 %v5895
        %6045 = vmatpush.bf16.msra.mxu0 %v5887
        %6046 = vmatpush.bf16.msra.mxu0 %v5879
        %6047 = vmatmul.bf16.gmra.mxu0 %v5970
        %v6048 = vpop.f32.mrf.mxu0
        %v6049 = vadd.f32 %v5912, %v6048
        %v6050 = vpop.f32.mrf.mxu0
        %v6051 = vadd.f32 %v5917, %v6050
        %6052 = vmatmul.bf16.gmra.mxu0 %v5973
        %v6053 = vpop.f32.mrf.mxu0
        %v6054 = vadd.f32 %v5922, %v6053
        %v6055 = vpop.f32.mrf.mxu0
        %v6056 = vadd.f32 %v5927, %v6055
        %6057 = vmatmul.bf16.gmra.mxu0 %v5976
        %v6058 = vpop.f32.mrf.mxu0
        %v6059 = vadd.f32 %v5932, %v6058
        %v6060 = vpop.f32.mrf.mxu0
        %v6061 = vadd.f32 %v5937, %v6060
        %6062 = vmatmul.bf16.gmra.mxu0 %v5979
        %v6063 = vpop.f32.mrf.mxu0
        %v6064 = vadd.f32 %v5942, %v6063
        %v6065 = vpop.f32.mrf.mxu0
        %v6066 = vadd.f32 %v5947, %v6065
        %6067 = vdwg.mxu0
        %6068 = vmatpush.bf16.msra.mxu0 0
        %6069 = vmatpush.bf16.msra.mxu0 0
        %6070 = vmatpush.bf16.msra.mxu0 0
        %6071 = vmatpush.bf16.msra.mxu0 0
        %6072 = vmatpush.bf16.msra.mxu0 %v5904
        %6073 = vmatpush.bf16.msra.mxu0 %v5896
        %6074 = vmatpush.bf16.msra.mxu0 %v5888
        %6075 = vmatpush.bf16.msra.mxu0 %v5880
        %6076 = vmatmul.bf16.gmra.mxu0 %v5970
        %v6077 = vpop.f32.mrf.mxu0
        %v6078 = vadd.f32 %v5912, %v6077
        %v6079 = vpop.f32.mrf.mxu0
        %v6080 = vadd.f32 %v5917, %v6079
        %6081 = vmatmul.bf16.gmra.mxu0 %v5973
        %v6082 = vpop.f32.mrf.mxu0
        %v6083 = vadd.f32 %v5922, %v6082
        %v6084 = vpop.f32.mrf.mxu0
        %v6085 = vadd.f32 %v5927, %v6084
        %6086 = vmatmul.bf16.gmra.mxu0 %v5976
        %v6087 = vpop.f32.mrf.mxu0
        %v6088 = vadd.f32 %v5932, %v6087
        %v6089 = vpop.f32.mrf.mxu0
        %v6090 = vadd.f32 %v5937, %v6089
        %6091 = vmatmul.bf16.gmra.mxu0 %v5979
        %v6092 = vpop.f32.mrf.mxu0
        %v6093 = vadd.f32 %v5942, %v6092
        %v6094 = vpop.f32.mrf.mxu0
        %v6095 = vadd.f32 %v5947, %v6094
        %6096 = vdwg.mxu0
        %6097 = vmatpush.bf16.msra.mxu0 0
        %6098 = vmatpush.bf16.msra.mxu0 0
        %6099 = vmatpush.bf16.msra.mxu0 0
        %6100 = vmatpush.bf16.msra.mxu0 0
        %6101 = vmatpush.bf16.msra.mxu0 %v5905
        %6102 = vmatpush.bf16.msra.mxu0 %v5897
        %6103 = vmatpush.bf16.msra.mxu0 %v5889
        %6104 = vmatpush.bf16.msra.mxu0 %v5881
        %6105 = vmatmul.bf16.gmra.mxu0 %v5970
        %v6106 = vpop.f32.mrf.mxu0
        %v6107 = vadd.f32 %v5912, %v6106
        %v6108 = vpop.f32.mrf.mxu0
        %v6109 = vadd.f32 %v5917, %v6108
        %6110 = vmatmul.bf16.gmra.mxu0 %v5973
        %v6111 = vpop.f32.mrf.mxu0
        %v6112 = vadd.f32 %v5922, %v6111
        %v6113 = vpop.f32.mrf.mxu0
        %v6114 = vadd.f32 %v5927, %v6113
        %6115 = vmatmul.bf16.gmra.mxu0 %v5976
        %v6116 = vpop.f32.mrf.mxu0
        %v6117 = vadd.f32 %v5932, %v6116
        %v6118 = vpop.f32.mrf.mxu0
        %v6119 = vadd.f32 %v5937, %v6118
        %6120 = vmatmul.bf16.gmra.mxu0 %v5979
        %v6121 = vpop.f32.mrf.mxu0
        %v6122 = vadd.f32 %v5942, %v6121
        %v6123 = vpop.f32.mrf.mxu0
        %v6124 = vadd.f32 %v5947, %v6123
        %6125 = vdwg.mxu0
        %6126 = vmatpush.bf16.msra.mxu0 0
        %6127 = vmatpush.bf16.msra.mxu0 0
        %6128 = vmatpush.bf16.msra.mxu0 0
        %6129 = vmatpush.bf16.msra.mxu0 0
        %6130 = vmatpush.bf16.msra.mxu0 %v5906
        %6131 = vmatpush.bf16.msra.mxu0 %v5898
        %6132 = vmatpush.bf16.msra.mxu0 %v5890
        %6133 = vmatpush.bf16.msra.mxu0 %v5882
        %6134 = vmatmul.bf16.gmra.mxu0 %v5970
        %v6135 = vpop.f32.mrf.mxu0
        %v6136 = vadd.f32 %v5912, %v6135
        %v6137 = vpop.f32.mrf.mxu0
        %v6138 = vadd.f32 %v5917, %v6137
        %6139 = vmatmul.bf16.gmra.mxu0 %v5973
        %v6140 = vpop.f32.mrf.mxu0
        %v6141 = vadd.f32 %v5922, %v6140
        %v6142 = vpop.f32.mrf.mxu0
        %v6143 = vadd.f32 %v5927, %v6142
        %6144 = vmatmul.bf16.gmra.mxu0 %v5976
        %v6145 = vpop.f32.mrf.mxu0
        %v6146 = vadd.f32 %v5932, %v6145
        %v6147 = vpop.f32.mrf.mxu0
        %v6148 = vadd.f32 %v5937, %v6147
        %6149 = vmatmul.bf16.gmra.mxu0 %v5979
        %v6150 = vpop.f32.mrf.mxu0
        %v6151 = vadd.f32 %v5942, %v6150
        %v6152 = vpop.f32.mrf.mxu0
        %v6153 = vadd.f32 %v5947, %v6152
        %6154 = vdwg.mxu0
        %6155 = vmatpush.bf16.msra.mxu0 0
        %6156 = vmatpush.bf16.msra.mxu0 0
        %6157 = vmatpush.bf16.msra.mxu0 0
        %6158 = vmatpush.bf16.msra.mxu0 0
        %6159 = vmatpush.bf16.msra.mxu0 %v5907
        %6160 = vmatpush.bf16.msra.mxu0 %v5899
        %6161 = vmatpush.bf16.msra.mxu0 %v5891
        %6162 = vmatpush.bf16.msra.mxu0 %v5883
        %6163 = vmatmul.bf16.gmra.mxu0 %v5970
        %v6164 = vpop.f32.mrf.mxu0
        %v6165 = vadd.f32 %v5912, %v6164
        %v6166 = vpop.f32.mrf.mxu0
        %v6167 = vadd.f32 %v5917, %v6166
        %6168 = vmatmul.bf16.gmra.mxu0 %v5973
        %v6169 = vpop.f32.mrf.mxu0
        %v6170 = vadd.f32 %v5922, %v6169
        %v6171 = vpop.f32.mrf.mxu0
        %v6172 = vadd.f32 %v5927, %v6171
        %6173 = vmatmul.bf16.gmra.mxu0 %v5976
        %v6174 = vpop.f32.mrf.mxu0
        %v6175 = vadd.f32 %v5932, %v6174
        %v6176 = vpop.f32.mrf.mxu0
        %v6177 = vadd.f32 %v5937, %v6176
        %6178 = vmatmul.bf16.gmra.mxu0 %v5979
        %v6179 = vpop.f32.mrf.mxu0
        %v6180 = vadd.f32 %v5942, %v6179
        %v6181 = vpop.f32.mrf.mxu0
        %v6182 = vadd.f32 %v5947, %v6181
        %6183 = vdwg.mxu0
        %6184 = vmatpush.bf16.msra.mxu0 0
        %6185 = vmatpush.bf16.msra.mxu0 0
        %6186 = vmatpush.bf16.msra.mxu0 0
        %6187 = vmatpush.bf16.msra.mxu0 0
        %6188 = vmatpush.bf16.msra.mxu0 %v5908
        %6189 = vmatpush.bf16.msra.mxu0 %v5900
        %6190 = vmatpush.bf16.msra.mxu0 %v5892
        %6191 = vmatpush.bf16.msra.mxu0 %v5884
        %6192 = vmatmul.bf16.gmra.mxu0 %v5970
        %v6193 = vpop.f32.mrf.mxu0
        %v6194 = vadd.f32 %v5912, %v6193
        %v6195 = vpop.f32.mrf.mxu0
        %v6196 = vadd.f32 %v5917, %v6195
        %6197 = vmatmul.bf16.gmra.mxu0 %v5973
        %v6198 = vpop.f32.mrf.mxu0
        %v6199 = vadd.f32 %v5922, %v6198
        %v6200 = vpop.f32.mrf.mxu0
        %v6201 = vadd.f32 %v5927, %v6200
        %6202 = vmatmul.bf16.gmra.mxu0 %v5976
        %v6203 = vpop.f32.mrf.mxu0
        %v6204 = vadd.f32 %v5932, %v6203
        %v6205 = vpop.f32.mrf.mxu0
        %v6206 = vadd.f32 %v5937, %v6205
        %6207 = vmatmul.bf16.gmra.mxu0 %v5979
        %v6208 = vpop.f32.mrf.mxu0
        %v6209 = vadd.f32 %v5942, %v6208
        %v6210 = vpop.f32.mrf.mxu0
        %v6211 = vadd.f32 %v5947, %v6210
        %6212 = vdwg.mxu0
        %v6213 = vadd.f32 %v4166, %v5991
        %v6214 = vadd.f32 %v4167, %v6020
        %v6215 = vadd.f32 %v4168, %v6049
        %v6216 = vadd.f32 %v4169, %v6078
        %v6217 = vadd.f32 %v4170, %v6107
        %v6218 = vadd.f32 %v4171, %v6136
        %v6219 = vadd.f32 %v4172, %v6165
        %v6220 = vadd.f32 %v4173, %v6194
        %v6221 = vadd.f32 %v4174, %v5993
        %v6222 = vadd.f32 %v4175, %v6022
        %v6223 = vadd.f32 %v4176, %v6051
        %v6224 = vadd.f32 %v4177, %v6080
        %v6225 = vadd.f32 %v4178, %v6109
        %v6226 = vadd.f32 %v4179, %v6138
        %v6227 = vadd.f32 %v4180, %v6167
        %v6228 = vadd.f32 %v4181, %v6196
        %v6229 = vadd.f32 %v4182, %v5996
        %v6230 = vadd.f32 %v4183, %v6025
        %v6231 = vadd.f32 %v4184, %v6054
        %v6232 = vadd.f32 %v4185, %v6083
        %v6233 = vadd.f32 %v4186, %v6112
        %v6234 = vadd.f32 %v4187, %v6141
        %v6235 = vadd.f32 %v4188, %v6170
        %v6236 = vadd.f32 %v4189, %v6199
        %v6237 = vadd.f32 %v4190, %v5998
        %v6238 = vadd.f32 %v4191, %v6027
        %v6239 = vadd.f32 %v4192, %v6056
        %v6240 = vadd.f32 %v4193, %v6085
        %v6241 = vadd.f32 %v4194, %v6114
        %v6242 = vadd.f32 %v4195, %v6143
        %v6243 = vadd.f32 %v4196, %v6172
        %v6244 = vadd.f32 %v4197, %v6201
        %v6245 = vadd.f32 %v4198, %v6001
        %v6246 = vadd.f32 %v4199, %v6030
        %v6247 = vadd.f32 %v4200, %v6059
        %v6248 = vadd.f32 %v4201, %v6088
        %v6249 = vadd.f32 %v4202, %v6117
        %v6250 = vadd.f32 %v4203, %v6146
        %v6251 = vadd.f32 %v4204, %v6175
        %v6252 = vadd.f32 %v4205, %v6204
        %v6253 = vadd.f32 %v4206, %v6003
        %v6254 = vadd.f32 %v4207, %v6032
        %v6255 = vadd.f32 %v4208, %v6061
        %v6256 = vadd.f32 %v4209, %v6090
        %v6257 = vadd.f32 %v4210, %v6119
        %v6258 = vadd.f32 %v4211, %v6148
        %v6259 = vadd.f32 %v4212, %v6177
        %v6260 = vadd.f32 %v4213, %v6206
        %v6261 = vadd.f32 %v4214, %v6006
        %v6262 = vadd.f32 %v4215, %v6035
        %v6263 = vadd.f32 %v4216, %v6064
        %v6264 = vadd.f32 %v4217, %v6093
        %v6265 = vadd.f32 %v4218, %v6122
        %v6266 = vadd.f32 %v4219, %v6151
        %v6267 = vadd.f32 %v4220, %v6180
        %v6268 = vadd.f32 %v4221, %v6209
        %v6269 = vadd.f32 %v4222, %v6008
        %v6270 = vadd.f32 %v4223, %v6037
        %v6271 = vadd.f32 %v4224, %v6066
        %v6272 = vadd.f32 %v4225, %v6095
        %v6273 = vadd.f32 %v4226, %v6124
        %v6274 = vadd.f32 %v4227, %v6153
        %v6275 = vadd.f32 %v4228, %v6182
        %v6276 = vadd.f32 %v4229, %v6211
        %6277 = vst [vmem:[%s315] sm:$0xff] %v6213
        %6278 = vst [vmem:[%s315 + $0x8] sm:$0xff] %v6214
        %6279 = vst [vmem:[%s315 + $0x10] sm:$0xff] %v6215
        %6280 = vst [vmem:[%s315 + $0x18] sm:$0xff] %v6216
        %6281 = vst [vmem:[%s315 + $0x20] sm:$0xff] %v6217
        %6282 = vst [vmem:[%s315 + $0x28] sm:$0xff] %v6218
        %6283 = vst [vmem:[%s315 + $0x30] sm:$0xff] %v6219
        %6284 = vst [vmem:[%s315 + $0x38] sm:$0xff] %v6220
        %6285 = vst [vmem:[%s315 + $0x40] sm:$0xff] %v6221
        %6286 = vst [vmem:[%s315 + $0x48] sm:$0xff] %v6222
        %6287 = vst [vmem:[%s315 + $0x50] sm:$0xff] %v6223
        %6288 = vst [vmem:[%s315 + $0x58] sm:$0xff] %v6224
        %6289 = vst [vmem:[%s315 + $0x60] sm:$0xff] %v6225
        %6290 = vst [vmem:[%s315 + $0x68] sm:$0xff] %v6226
        %6291 = vst [vmem:[%s315 + $0x70] sm:$0xff] %v6227
        %6292 = vst [vmem:[%s315 + $0x78] sm:$0xff] %v6228
        %6293 = vst [vmem:[%s315 + $0x80] sm:$0xff] %v6229
        %6294 = vst [vmem:[%s315 + $0x88] sm:$0xff] %v6230
        %6295 = vst [vmem:[%s315 + $0x90] sm:$0xff] %v6231
        %6296 = vst [vmem:[%s315 + $0x98] sm:$0xff] %v6232
        %6297 = vst [vmem:[%s315 + $0xa0] sm:$0xff] %v6233
        %6298 = vst [vmem:[%s315 + $0xa8] sm:$0xff] %v6234
        %6299 = vst [vmem:[%s315 + $0xb0] sm:$0xff] %v6235
        %6300 = vst [vmem:[%s315 + $0xb8] sm:$0xff] %v6236
        %6301 = vst [vmem:[%s315 + $0xc0] sm:$0xff] %v6237
        %6302 = vst [vmem:[%s315 + $0xc8] sm:$0xff] %v6238
        %6303 = vst [vmem:[%s315 + $0xd0] sm:$0xff] %v6239
        %6304 = vst [vmem:[%s315 + $0xd8] sm:$0xff] %v6240
        %6305 = vst [vmem:[%s315 + $0xe0] sm:$0xff] %v6241
        %6306 = vst [vmem:[%s315 + $0xe8] sm:$0xff] %v6242
        %6307 = vst [vmem:[%s315 + $0xf0] sm:$0xff] %v6243
        %6308 = vst [vmem:[%s315 + $0xf8] sm:$0xff] %v6244
        %6309 = vst [vmem:[%s315 + $0x100] sm:$0xff] %v6245
        %6310 = vst [vmem:[%s315 + $0x108] sm:$0xff] %v6246
        %6311 = vst [vmem:[%s315 + $0x110] sm:$0xff] %v6247
        %6312 = vst [vmem:[%s315 + $0x118] sm:$0xff] %v6248
        %6313 = vst [vmem:[%s315 + $0x120] sm:$0xff] %v6249
        %6314 = vst [vmem:[%s315 + $0x128] sm:$0xff] %v6250
        %6315 = vst [vmem:[%s315 + $0x130] sm:$0xff] %v6251
        %6316 = vst [vmem:[%s315 + $0x138] sm:$0xff] %v6252
        %6317 = vst [vmem:[%s315 + $0x140] sm:$0xff] %v6253
        %6318 = vst [vmem:[%s315 + $0x148] sm:$0xff] %v6254
        %6319 = vst [vmem:[%s315 + $0x150] sm:$0xff] %v6255
        %6320 = vst [vmem:[%s315 + $0x158] sm:$0xff] %v6256
        %6321 = vst [vmem:[%s315 + $0x160] sm:$0xff] %v6257
        %6322 = vst [vmem:[%s315 + $0x168] sm:$0xff] %v6258
        %6323 = vst [vmem:[%s315 + $0x170] sm:$0xff] %v6259
        %6324 = vst [vmem:[%s315 + $0x178] sm:$0xff] %v6260
        %6325 = vst [vmem:[%s315 + $0x180] sm:$0xff] %v6261
        %6326 = vst [vmem:[%s315 + $0x188] sm:$0xff] %v6262
        %6327 = vst [vmem:[%s315 + $0x190] sm:$0xff] %v6263
        %6328 = vst [vmem:[%s315 + $0x198] sm:$0xff] %v6264
        %6329 = vst [vmem:[%s315 + $0x1a0] sm:$0xff] %v6265
        %6330 = vst [vmem:[%s315 + $0x1a8] sm:$0xff] %v6266
        %6331 = vst [vmem:[%s315 + $0x1b0] sm:$0xff] %v6267
        %6332 = vst [vmem:[%s315 + $0x1b8] sm:$0xff] %v6268
        %6333 = vst [vmem:[%s315 + $0x1c0] sm:$0xff] %v6269
        %6334 = vst [vmem:[%s315 + $0x1c8] sm:$0xff] %v6270
        %6335 = vst [vmem:[%s315 + $0x1d0] sm:$0xff] %v6271
        %6336 = vst [vmem:[%s315 + $0x1d8] sm:$0xff] %v6272
        %6337 = vst [vmem:[%s315 + $0x1e0] sm:$0xff] %v6273
        %6338 = vst [vmem:[%s315 + $0x1e8] sm:$0xff] %v6274
        %6339 = vst [vmem:[%s315 + $0x1f0] sm:$0xff] %v6275
        %6340 = vst [vmem:[%s315 + $0x1f8] sm:$0xff] %v6276
        %s6341 = sand.u32 %s204, 1
        %s6342 = scalar_lea.sflag [#allocation4], %s6341
        %s6343 = sand.u32 %s204, 1
        %s6344 = smul.addr %s6343, 512
        %s6345 = scalar_lea.vmem [#allocation5], %s6344
        // Predicated region
        $region57: #{tpu_custom_call.1} parent=51 // pred_check
          %p6346 = pneg %p214
        $region58: #{tpu_custom_call.1} parent=51 // pred_check_branch
          %6348 = sbr.rel (%p6346) target = $region60
        $region59: #{tpu_custom_call.1} parent=51 // pred_region
          %6350 = vsyncadd %s6342, 0
          %s6351 = smul.addr %s23, 64
          %s6352 = smul.addr %s6351, 8
          %s6353 = scalar_lea.hbm %s8, %s6352
          %s6354 = sshll.u32 %s6345, 4
          %s6355 = int_to_ptr.vmem [resolvable:$true] %s6354
          %s6356 = sshll.u32 %s6353, 4
          %s6357 = int_to_ptr.hbm [resolvable:$true] %s6356
          %6362 = dma.vmem_to_hbm [thread:$0]  %s6355, 8192, %s6357, %s6342, 1024, 1024, 64
        $region60: #{tpu_custom_call.1} parent=51 // pred_fallthru
          _
      $region52: #{tpu_custom_call.1} parent=5 // pred_fallthru
        _
      %p6363 = scmp.le.s32.totalorder 2, %s18
      // Predicated region
      $region61: #{tpu_custom_call.1} parent=5 // pred_check
        %p6364 = pneg %p6363
      $region62: #{tpu_custom_call.1} parent=5 // pred_check_branch
        %6366 = sbr.rel (%p6364) target = $region64
      $region63: #{tpu_custom_call.1} parent=5 // pred_region
        %s6367 = ssub.s32 %s18, 2
        // Predicated region
        $region65: #{tpu_custom_call.1} parent=63 // pred_check
          %p6368 = pneg %p220
        $region66: #{tpu_custom_call.1} parent=63 // pred_check_branch
          %6370 = sbr.rel (%p6368) target = $region68
        $region67: #{tpu_custom_call.1} parent=63 // pred_region
          %s6371 = sand.u32 %s205, 1
          %s6372 = scalar_lea.sflag [#allocation4], %s6371
          %s6373 = sand.u32 %s205, 1
          %s6374 = smul.addr %s6373, 512
          %s6375 = scalar_lea.vmem [#allocation5], %s6374
          %6377 = dma.done %s6372, 8192
        $region68: #{tpu_custom_call.1} parent=63 // pred_fallthru
          _
      $region64: #{tpu_custom_call.1} parent=5 // pred_fallthru
        _
    $region6: #{tpu_custom_call.1} parent=1 // loop_footer
      %s22 = sadd.s32 1, %s18
    $region7: #{tpu_custom_call.1} parent=1 // loop_footer_branch
      %17 = sbr.rel target = $region3
    $region8: #{tpu_custom_call.1} parent=1 // loop_exit
      _
    %6378 = vsyncpa [#allocation3], 1
    %s6379 = scalar_lea.sflag [#allocation3], 1
    %6380 = vsyncpa %s6379, 1
    %6381 = vsyncpa [#allocation4], 1
    %s6382 = scalar_lea.sflag [#allocation4], 1
    %6383 = vsyncpa %s6382, 1

</llo_original>
